<compile_context>
chip_gen: v5e
topology: v5e:2x2
jax: 0.10.0
libtpu: 0.0.40
codegen_flags: <defaults>
</compile_context>

<pallas_src>
import functools

import jax
import jax.numpy as jnp
from jax.experimental import pallas as pl
from jax.experimental.pallas import tpu as pltpu

# (in_features, out_features) of the 10 Linear layers, encoder then decoder.
LAYER_DIMS = [
    (11520, 128), (128, 64), (64, 36), (36, 18), (18, 9),      # encoder
    (9, 18), (18, 36), (36, 64), (64, 128), (128, 11520),      # decoder
]
N_LAYERS = len(LAYER_DIMS)
SAMPLE_SHAPE = (10, 3, 128, 3)          # 10*3*128*3 == 11520
FLAT = 10 * 3 * 128 * 3
N_MID = 8                                # layers 1..8 -> padded 128x128 blocks
MID_PAD = 128
OUT_CHUNK = 1152                         # 9 * 128 lanes; 10 chunks cover 11520
N_OUT_CHUNKS = FLAT // OUT_CHUNK


def _cdiv(a, b):
    return (a + b - 1) // b


def _round_up(x, m):
    return _cdiv(x, m) * m


def _ae_kernel(x_ref, w0_ref, wmid_ref, w9_ref, bsml_ref, blast_ref, out_ref):
    """One batch tile of the full 10-layer MLP.

    x_ref    : (TB, 11520) bf16  -- streamed per grid step
    w0_ref   : (11520, 128) bf16 -- resident
    wmid_ref : (8*128, 128) bf16 -- layers 1..8, each zero-padded to 128x128
    w9_ref   : (128, 11520) bf16 -- resident
    bsml_ref : (16, 128) f32     -- rows 0..8 = biases of layers 0..8 (0-padded)
    blast_ref: (1, 11520) f32    -- bias of layer 9
    out_ref  : (TB, 11520) f32
    """
    # Layer 0: (TB, 11520) @ (11520, 128); bf16 MXU inputs, f32 accumulation.
    h = jnp.dot(x_ref[...], w0_ref[...], preferred_element_type=jnp.float32)
    h = jnp.maximum(h + bsml_ref[0:1, :], 0.0)

    # Layers 1..8: uniform zero-padded (128, 128) matmuls.  Padded weight
    # rows/columns and biases are 0, so the padded activation columns stay
    # exactly 0 (even through the no-ReLU bottleneck) and the valid columns
    # match the unpadded computation bit-for-bit.
    for layer in range(1, 1 + N_MID):
        w = wmid_ref[(layer - 1) * MID_PAD:layer * MID_PAD, :]       # (128, 128)
        h = jnp.dot(h.astype(jnp.bfloat16), w,
                    preferred_element_type=jnp.float32)
        h = h + bsml_ref[layer:layer + 1, :]
        if layer != 4:          # no ReLU after the 18->9 encoder bottleneck
            h = jnp.maximum(h, 0.0)

    # Layer 9, fused per output-column chunk: dot -> bias -> sigmoid -> store.
    # Never materializes the full (TB, 11520) f32 result before the epilogue.
    h9 = h.astype(jnp.bfloat16)                                      # (TB, 128)
    for c in range(N_OUT_CHUNKS):
        lo = c * OUT_CHUNK                       # static, 128-lane-aligned slice
        y = jnp.dot(h9, w9_ref[:, lo:lo + OUT_CHUNK],
                    preferred_element_type=jnp.float32)
        y = y + blast_ref[0:1, lo:lo + OUT_CHUNK]
        # sigmoid(y) == 0.5 * tanh(0.5 * y) + 0.5  (one EUP push per element)
        out_ref[:, lo:lo + OUT_CHUNK] = 0.5 * jnp.tanh(0.5 * y) + 0.5


def pack_params(params):
    """Pack the 10 (w, b) pairs (w stored as (in, out), b as (out,)) into the
    5 kernel operands: bf16 weights + packed f32 biases.  Call once."""
    ws = [w for w, _ in params]
    bs = [jnp.reshape(b, (-1,)) for _, b in params]

    w0 = ws[0].astype(jnp.bfloat16)                                   # (11520, 128)
    w9 = ws[9].astype(jnp.bfloat16)                                   # (128, 11520)

    mids = []
    for i in range(1, 1 + N_MID):
        fan_in, fan_out = LAYER_DIMS[i]
        mids.append(jnp.pad(ws[i],
                            ((0, MID_PAD - fan_in), (0, MID_PAD - fan_out))))
    w_mid = jnp.concatenate(mids, axis=0).astype(jnp.bfloat16)        # (1024, 128)

    b_small = jnp.zeros((16, MID_PAD), jnp.float32)
    for i in range(9):
        b_small = b_small.at[i, :bs[i].shape[0]].set(bs[i].astype(jnp.float32))
    b_last = bs[9].astype(jnp.float32).reshape(1, FLAT)               # (1, 11520)
    return w0, w_mid, w9, b_small, b_last


def _resident(shape):
    """Grid-invariant operand: constant index_map + single buffer (no point
    double-buffering a block that never changes)."""
    return pl.BlockSpec(shape, lambda i: (0,) * len(shape),
                        pipeline_mode=pl.Buffered(1))


@functools.partial(jax.jit, static_argnames=("batch_tile",))
def conv2d_ae_forward(x, packed_params, *, batch_tile=128):
    """x: (B, 10, 3, 128, 3) batch, or a single (10, 3, 128, 3) sample.
    packed_params: output of pack_params().  Applies the module per sample."""
    w0, w_mid, w9, b_small, b_last = packed_params

    single = (x.ndim == len(SAMPLE_SHAPE))
    if single:
        x = x[None]
    batch = x.shape[0]
    # bf16 activation I/O: halves the streamed HBM traffic; matmuls still
    # accumulate in f32 inside the kernel.
    x_flat = x.reshape(batch, FLAT).astype(jnp.bfloat16)

    b_pad8 = _round_up(batch, 8)
    tb = min(batch_tile, b_pad8)
    # Prefer >= 2 grid steps when the batch allows it so the "parallel" batch
    # axis can be split across both v7x TensorCores.
    if b_pad8 // tb < 2 and b_pad8 >= 16:
        tb = _round_up(_cdiv(b_pad8, 2), 8)
    b_pad = _round_up(batch, tb)
    if b_pad != batch:
        x_flat = jnp.pad(x_flat, ((0, b_pad - batch), (0, 0)))

    out = pl.pallas_call(
        _ae_kernel,
        out_shape=jax.ShapeDtypeStruct((b_pad, FLAT), jnp.float32),
        grid_spec=pltpu.PrefetchScalarGridSpec(
            num_scalar_prefetch=0,
            grid=(b_pad // tb,),
            in_specs=[
                pl.BlockSpec((tb, FLAT), lambda i: (i, 0)),   # x tile (streamed)
                _resident((FLAT, 128)),                        # w0
                _resident((N_MID * MID_PAD, MID_PAD)),         # w_mid (layers 1..8)
                _resident((128, FLAT)),                        # w9
                _resident((16, MID_PAD)),                      # packed small biases
                _resident((1, FLAT)),                          # last bias
            ],
            out_specs=pl.BlockSpec((tb, FLAT), lambda i: (i, 0)),
        ),
        compiler_params=pltpu.CompilerParams(
            dimension_semantics=("parallel",),     # batch tiles -> v7x dual-TC
            vmem_limit_bytes=48 << 20,             # fits v7x 64 MiB physical
        ),
    )(x_flat, w0, w_mid, w9, b_small, b_last)

    out = out[:batch].reshape((batch,) + SAMPLE_SHAPE)
    if single:
        out = out[0]
    return out


def init_params(key):
    """Deterministic init mimicking torch.nn.Linear default U(-1/sqrt(in), 1/sqrt(in)).
    Weights stored pre-transposed as (in_features, out_features)."""
    params = []
    for i, (fan_in, fan_out) in enumerate(LAYER_DIMS):
        kw, kb = jax.random.split(jax.random.fold_in(key, i))
        bound = 1.0 / (fan_in ** 0.5)
        w = jax.random.uniform(kw, (fan_in, fan_out), jnp.float32, -bound, bound)
        b = jax.random.uniform(kb, (fan_out,), jnp.float32, -bound, bound)
        params.append((w, b))
    return params


def _reference_forward(x, params):
    """Pure-JAX reference with the same bf16 matmul inputs / f32 accumulation."""
    batch = x.shape[0]
    h = x.reshape(batch, FLAT).astype(jnp.float32)
    for layer, (w, b) in enumerate(params):
        h = jnp.dot(h.astype(jnp.bfloat16), w.astype(jnp.bfloat16),
                    preferred_element_type=jnp.float32)
        h = h + b.reshape(1, -1).astype(jnp.float32)
        if layer < N_LAYERS - 1 and layer != 4:
            h = jnp.maximum(h, 0.0)
    return jax.nn.sigmoid(h).reshape((batch,) + SAMPLE_SHAPE)


if __name__ == "__main__":
    key = jax.random.PRNGKey(0)
    k_x, k_p = jax.random.split(key)

    B = 16   # -> 2 batch tiles of 8: exercises weight residency + dual-TC split
    x = jax.random.normal(k_x, (B,) + SAMPLE_SHAPE, dtype=jnp.float32)
    params = init_params(k_p)
    packed = pack_params(params)

    y = conv2d_ae_forward(x, packed)
    y = jax.block_until_ready(y)

    assert y.shape == (B,) + SAMPLE_SHAPE, y.shape
    assert y.dtype == jnp.float32
    assert bool(jnp.all(jnp.isfinite(y)))
    assert bool(jnp.all((y >= 0.0) & (y <= 1.0)))   # sigmoid range

    y_ref = _reference_forward(x, params)
    max_err = float(jnp.max(jnp.abs(y - y_ref)))
    assert max_err < 5e-3, f"max abs error vs reference: {max_err}"

    print("KERNEL_OK")
</pallas_src>

<mosaic_0001>
module attributes {stable_mosaic.version = 11 : i64} {
  func.func @_ae_kernel(%arg0: i32, %arg1: memref<8x11520xbf16, #tpu.memory_space<vmem>>, %arg2: memref<11520x128xbf16, #tpu.memory_space<vmem>>, %arg3: memref<1024x128xbf16, #tpu.memory_space<vmem>>, %arg4: memref<128x11520xbf16, #tpu.memory_space<vmem>>, %arg5: memref<16x128xf32, #tpu.memory_space<vmem>>, %arg6: memref<1x11520xf32, #tpu.memory_space<vmem>>, %arg7: memref<8x11520xf32, #tpu.memory_space<vmem>>) attributes {dimension_semantics = [#tpu.dimension_semantics<parallel>], iteration_bounds = array<i64: 2>, scalar_prefetch = 0 : i64, scratch_operands = 0 : i64, tpu.core_type = #tpu.core_type<tc>, window_params = [{transform_indices = @transform_0, window_bounds = array<i64: 8, 11520>}, {pipeline_mode = #tpu.pipeline_mode<synchronous>, transform_indices = @transform_1, window_bounds = array<i64: 11520, 128>}, {pipeline_mode = #tpu.pipeline_mode<synchronous>, transform_indices = @transform_2, window_bounds = array<i64: 1024, 128>}, {pipeline_mode = #tpu.pipeline_mode<synchronous>, transform_indices = @transform_3, window_bounds = array<i64: 128, 11520>}, {pipeline_mode = #tpu.pipeline_mode<synchronous>, transform_indices = @transform_4, window_bounds = array<i64: 16, 128>}, {pipeline_mode = #tpu.pipeline_mode<synchronous>, transform_indices = @transform_5, window_bounds = array<i64: 1, 11520>}, {transform_indices = @transform_6, window_bounds = array<i64: 8, 11520>}]} {
    %c0 = arith.constant 0 : index
    %c0_0 = arith.constant 0 : index
    %0 = vector.load %arg1[%c0, %c0_0] : memref<8x11520xbf16, #tpu.memory_space<vmem>>, vector<8x11520xbf16>
    %c0_1 = arith.constant 0 : index
    %c0_2 = arith.constant 0 : index
    %1 = vector.load %arg2[%c0_1, %c0_2] : memref<11520x128xbf16, #tpu.memory_space<vmem>>, vector<11520x128xbf16>
    %cst = arith.constant dense<0.000000e+00> : vector<8x128xf32>
    %2 = tpu.matmul %0, %1, %cst {dimension_numbers = #tpu.dot_dimension_numbers<[1], [0], [0], [1], [0, 0, 1, 1], [], []>} : vector<8x11520xbf16>, vector<11520x128xbf16>, vector<8x128xf32> -> vector<8x128xf32>
    %c0_3 = arith.constant 0 : index
    %c0_4 = arith.constant 0 : index
    %3 = vector.load %arg5[%c0_3, %c0_4] : memref<16x128xf32, #tpu.memory_space<vmem>>, vector<1x128xf32>
    %4 = vector.broadcast %3 : vector<1x128xf32> to vector<8x128xf32>
    %5 = arith.addf %2, %4 : vector<8x128xf32>
    %cst_5 = arith.constant 0.000000e+00 : f32
    %6 = vector.broadcast %cst_5 : f32 to vector<8x128xf32>
    %7 = arith.maximumf %5, %6 : vector<8x128xf32>
    %c0_6 = arith.constant 0 : index
    %c0_7 = arith.constant 0 : index
    %8 = vector.load %arg3[%c0_6, %c0_7] : memref<1024x128xbf16, #tpu.memory_space<vmem>>, vector<128x128xbf16>
    %9 = arith.truncf %7 : vector<8x128xf32> to vector<8x128xbf16>
    %cst_8 = arith.constant dense<0.000000e+00> : vector<8x128xf32>
    %10 = tpu.matmul %9, %8, %cst_8 {dimension_numbers = #tpu.dot_dimension_numbers<[1], [0], [0], [1], [0, 0, 1, 1], [], []>} : vector<8x128xbf16>, vector<128x128xbf16>, vector<8x128xf32> -> vector<8x128xf32>
    %c1 = arith.constant 1 : index
    %c0_9 = arith.constant 0 : index
    %11 = vector.load %arg5[%c1, %c0_9] : memref<16x128xf32, #tpu.memory_space<vmem>>, vector<1x128xf32>
    %12 = vector.broadcast %11 : vector<1x128xf32> to vector<8x128xf32>
    %13 = arith.addf %10, %12 : vector<8x128xf32>
    %cst_10 = arith.constant 0.000000e+00 : f32
    %14 = vector.broadcast %cst_10 : f32 to vector<8x128xf32>
    %15 = arith.maximumf %13, %14 : vector<8x128xf32>
    %c128 = arith.constant 128 : index
    %c0_11 = arith.constant 0 : index
    %16 = vector.load %arg3[%c128, %c0_11] : memref<1024x128xbf16, #tpu.memory_space<vmem>>, vector<128x128xbf16>
    %17 = arith.truncf %15 : vector<8x128xf32> to vector<8x128xbf16>
    %cst_12 = arith.constant dense<0.000000e+00> : vector<8x128xf32>
    %18 = tpu.matmul %17, %16, %cst_12 {dimension_numbers = #tpu.dot_dimension_numbers<[1], [0], [0], [1], [0, 0, 1, 1], [], []>} : vector<8x128xbf16>, vector<128x128xbf16>, vector<8x128xf32> -> vector<8x128xf32>
    %c2 = arith.constant 2 : index
    %c0_13 = arith.constant 0 : index
    %19 = vector.load %arg5[%c2, %c0_13] : memref<16x128xf32, #tpu.memory_space<vmem>>, vector<1x128xf32>
    %20 = vector.broadcast %19 : vector<1x128xf32> to vector<8x128xf32>
    %21 = arith.addf %18, %20 : vector<8x128xf32>
    %cst_14 = arith.constant 0.000000e+00 : f32
    %22 = vector.broadcast %cst_14 : f32 to vector<8x128xf32>
    %23 = arith.maximumf %21, %22 : vector<8x128xf32>
    %c256 = arith.constant 256 : index
    %c0_15 = arith.constant 0 : index
    %24 = vector.load %arg3[%c256, %c0_15] : memref<1024x128xbf16, #tpu.memory_space<vmem>>, vector<128x128xbf16>
    %25 = arith.truncf %23 : vector<8x128xf32> to vector<8x128xbf16>
    %cst_16 = arith.constant dense<0.000000e+00> : vector<8x128xf32>
    %26 = tpu.matmul %25, %24, %cst_16 {dimension_numbers = #tpu.dot_dimension_numbers<[1], [0], [0], [1], [0, 0, 1, 1], [], []>} : vector<8x128xbf16>, vector<128x128xbf16>, vector<8x128xf32> -> vector<8x128xf32>
    %c3 = arith.constant 3 : index
    %c0_17 = arith.constant 0 : index
    %27 = vector.load %arg5[%c3, %c0_17] : memref<16x128xf32, #tpu.memory_space<vmem>>, vector<1x128xf32>
    %28 = vector.broadcast %27 : vector<1x128xf32> to vector<8x128xf32>
    %29 = arith.addf %26, %28 : vector<8x128xf32>
    %cst_18 = arith.constant 0.000000e+00 : f32
    %30 = vector.broadcast %cst_18 : f32 to vector<8x128xf32>
    %31 = arith.maximumf %29, %30 : vector<8x128xf32>
    %c384 = arith.constant 384 : index
    %c0_19 = arith.constant 0 : index
    %32 = vector.load %arg3[%c384, %c0_19] : memref<1024x128xbf16, #tpu.memory_space<vmem>>, vector<128x128xbf16>
    %33 = arith.truncf %31 : vector<8x128xf32> to vector<8x128xbf16>
    %cst_20 = arith.constant dense<0.000000e+00> : vector<8x128xf32>
    %34 = tpu.matmul %33, %32, %cst_20 {dimension_numbers = #tpu.dot_dimension_numbers<[1], [0], [0], [1], [0, 0, 1, 1], [], []>} : vector<8x128xbf16>, vector<128x128xbf16>, vector<8x128xf32> -> vector<8x128xf32>
    %c4 = arith.constant 4 : index
    %c0_21 = arith.constant 0 : index
    %35 = vector.load %arg5[%c4, %c0_21] : memref<16x128xf32, #tpu.memory_space<vmem>>, vector<1x128xf32>
    %36 = vector.broadcast %35 : vector<1x128xf32> to vector<8x128xf32>
    %37 = arith.addf %34, %36 : vector<8x128xf32>
    %c512 = arith.constant 512 : index
    %c0_22 = arith.constant 0 : index
    %38 = vector.load %arg3[%c512, %c0_22] : memref<1024x128xbf16, #tpu.memory_space<vmem>>, vector<128x128xbf16>
    %39 = arith.truncf %37 : vector<8x128xf32> to vector<8x128xbf16>
    %cst_23 = arith.constant dense<0.000000e+00> : vector<8x128xf32>
    %40 = tpu.matmul %39, %38, %cst_23 {dimension_numbers = #tpu.dot_dimension_numbers<[1], [0], [0], [1], [0, 0, 1, 1], [], []>} : vector<8x128xbf16>, vector<128x128xbf16>, vector<8x128xf32> -> vector<8x128xf32>
    %c5 = arith.constant 5 : index
    %c0_24 = arith.constant 0 : index
    %41 = vector.load %arg5[%c5, %c0_24] : memref<16x128xf32, #tpu.memory_space<vmem>>, vector<1x128xf32>
    %42 = vector.broadcast %41 : vector<1x128xf32> to vector<8x128xf32>
    %43 = arith.addf %40, %42 : vector<8x128xf32>
    %cst_25 = arith.constant 0.000000e+00 : f32
    %44 = vector.broadcast %cst_25 : f32 to vector<8x128xf32>
    %45 = arith.maximumf %43, %44 : vector<8x128xf32>
    %c640 = arith.constant 640 : index
    %c0_26 = arith.constant 0 : index
    %46 = vector.load %arg3[%c640, %c0_26] : memref<1024x128xbf16, #tpu.memory_space<vmem>>, vector<128x128xbf16>
    %47 = arith.truncf %45 : vector<8x128xf32> to vector<8x128xbf16>
    %cst_27 = arith.constant dense<0.000000e+00> : vector<8x128xf32>
    %48 = tpu.matmul %47, %46, %cst_27 {dimension_numbers = #tpu.dot_dimension_numbers<[1], [0], [0], [1], [0, 0, 1, 1], [], []>} : vector<8x128xbf16>, vector<128x128xbf16>, vector<8x128xf32> -> vector<8x128xf32>
    %c6 = arith.constant 6 : index
    %c0_28 = arith.constant 0 : index
    %49 = vector.load %arg5[%c6, %c0_28] : memref<16x128xf32, #tpu.memory_space<vmem>>, vector<1x128xf32>
    %50 = vector.broadcast %49 : vector<1x128xf32> to vector<8x128xf32>
    %51 = arith.addf %48, %50 : vector<8x128xf32>
    %cst_29 = arith.constant 0.000000e+00 : f32
    %52 = vector.broadcast %cst_29 : f32 to vector<8x128xf32>
    %53 = arith.maximumf %51, %52 : vector<8x128xf32>
    %c768 = arith.constant 768 : index
    %c0_30 = arith.constant 0 : index
    %54 = vector.load %arg3[%c768, %c0_30] : memref<1024x128xbf16, #tpu.memory_space<vmem>>, vector<128x128xbf16>
    %55 = arith.truncf %53 : vector<8x128xf32> to vector<8x128xbf16>
    %cst_31 = arith.constant dense<0.000000e+00> : vector<8x128xf32>
    %56 = tpu.matmul %55, %54, %cst_31 {dimension_numbers = #tpu.dot_dimension_numbers<[1], [0], [0], [1], [0, 0, 1, 1], [], []>} : vector<8x128xbf16>, vector<128x128xbf16>, vector<8x128xf32> -> vector<8x128xf32>
    %c7 = arith.constant 7 : index
    %c0_32 = arith.constant 0 : index
    %57 = vector.load %arg5[%c7, %c0_32] : memref<16x128xf32, #tpu.memory_space<vmem>>, vector<1x128xf32>
    %58 = vector.broadcast %57 : vector<1x128xf32> to vector<8x128xf32>
    %59 = arith.addf %56, %58 : vector<8x128xf32>
    %cst_33 = arith.constant 0.000000e+00 : f32
    %60 = vector.broadcast %cst_33 : f32 to vector<8x128xf32>
    %61 = arith.maximumf %59, %60 : vector<8x128xf32>
    %c896 = arith.constant 896 : index
    %c0_34 = arith.constant 0 : index
    %62 = vector.load %arg3[%c896, %c0_34] : memref<1024x128xbf16, #tpu.memory_space<vmem>>, vector<128x128xbf16>
    %63 = arith.truncf %61 : vector<8x128xf32> to vector<8x128xbf16>
    %cst_35 = arith.constant dense<0.000000e+00> : vector<8x128xf32>
    %64 = tpu.matmul %63, %62, %cst_35 {dimension_numbers = #tpu.dot_dimension_numbers<[1], [0], [0], [1], [0, 0, 1, 1], [], []>} : vector<8x128xbf16>, vector<128x128xbf16>, vector<8x128xf32> -> vector<8x128xf32>
    %c8 = arith.constant 8 : index
    %c0_36 = arith.constant 0 : index
    %65 = vector.load %arg5[%c8, %c0_36] : memref<16x128xf32, #tpu.memory_space<vmem>>, vector<1x128xf32>
    %66 = vector.broadcast %65 : vector<1x128xf32> to vector<8x128xf32>
    %67 = arith.addf %64, %66 : vector<8x128xf32>
    %cst_37 = arith.constant 0.000000e+00 : f32
    %68 = vector.broadcast %cst_37 : f32 to vector<8x128xf32>
    %69 = arith.maximumf %67, %68 : vector<8x128xf32>
    %70 = arith.truncf %69 : vector<8x128xf32> to vector<8x128xbf16>
    %c0_38 = arith.constant 0 : index
    %c0_39 = arith.constant 0 : index
    %71 = vector.load %arg4[%c0_38, %c0_39] : memref<128x11520xbf16, #tpu.memory_space<vmem>>, vector<128x1152xbf16>
    %cst_40 = arith.constant dense<0.000000e+00> : vector<8x1152xf32>
    %72 = tpu.matmul %70, %71, %cst_40 {dimension_numbers = #tpu.dot_dimension_numbers<[1], [0], [0], [1], [0, 0, 1, 1], [], []>} : vector<8x128xbf16>, vector<128x1152xbf16>, vector<8x1152xf32> -> vector<8x1152xf32>
    %c0_41 = arith.constant 0 : index
    %c0_42 = arith.constant 0 : index
    %73 = vector.load %arg6[%c0_41, %c0_42] : memref<1x11520xf32, #tpu.memory_space<vmem>>, vector<1x1152xf32>
    %74 = vector.broadcast %73 : vector<1x1152xf32> to vector<8x1152xf32>
    %75 = arith.addf %72, %74 : vector<8x1152xf32>
    %cst_43 = arith.constant 5.000000e-01 : f32
    %76 = vector.broadcast %cst_43 : f32 to vector<8x1152xf32>
    %77 = arith.mulf %76, %75 : vector<8x1152xf32>
    %78 = math.tanh %77 : vector<8x1152xf32>
    %cst_44 = arith.constant 5.000000e-01 : f32
    %79 = vector.broadcast %cst_44 : f32 to vector<8x1152xf32>
    %80 = arith.mulf %79, %78 : vector<8x1152xf32>
    %cst_45 = arith.constant 5.000000e-01 : f32
    %81 = vector.broadcast %cst_45 : f32 to vector<8x1152xf32>
    %82 = arith.addf %80, %81 : vector<8x1152xf32>
    %c0_46 = arith.constant 0 : index
    %c0_47 = arith.constant 0 : index
    %83 = vector.load %arg7[%c0_46, %c0_47] : memref<8x11520xf32, #tpu.memory_space<vmem>>, vector<8x1152xf32>
    tpu.vector_store %arg7[%c0_46, %c0_47], %82 {strides = array<i32>} : memref<8x11520xf32, #tpu.memory_space<vmem>>, vector<8x1152xf32>,
    %c0_48 = arith.constant 0 : index
    %c1152 = arith.constant 1152 : index
    %84 = vector.load %arg4[%c0_48, %c1152] : memref<128x11520xbf16, #tpu.memory_space<vmem>>, vector<128x1152xbf16>
    %cst_49 = arith.constant dense<0.000000e+00> : vector<8x1152xf32>
    %85 = tpu.matmul %70, %84, %cst_49 {dimension_numbers = #tpu.dot_dimension_numbers<[1], [0], [0], [1], [0, 0, 1, 1], [], []>} : vector<8x128xbf16>, vector<128x1152xbf16>, vector<8x1152xf32> -> vector<8x1152xf32>
    %c0_50 = arith.constant 0 : index
    %c1152_51 = arith.constant 1152 : index
    %86 = vector.load %arg6[%c0_50, %c1152_51] : memref<1x11520xf32, #tpu.memory_space<vmem>>, vector<1x1152xf32>
    %87 = vector.broadcast %86 : vector<1x1152xf32> to vector<8x1152xf32>
    %88 = arith.addf %85, %87 : vector<8x1152xf32>
    %cst_52 = arith.constant 5.000000e-01 : f32
    %89 = vector.broadcast %cst_52 : f32 to vector<8x1152xf32>
    %90 = arith.mulf %89, %88 : vector<8x1152xf32>
    %91 = math.tanh %90 : vector<8x1152xf32>
    %cst_53 = arith.constant 5.000000e-01 : f32
    %92 = vector.broadcast %cst_53 : f32 to vector<8x1152xf32>
    %93 = arith.mulf %92, %91 : vector<8x1152xf32>
    %cst_54 = arith.constant 5.000000e-01 : f32
    %94 = vector.broadcast %cst_54 : f32 to vector<8x1152xf32>
    %95 = arith.addf %93, %94 : vector<8x1152xf32>
    %c0_55 = arith.constant 0 : index
    %c1152_56 = arith.constant 1152 : index
    %96 = vector.load %arg7[%c0_55, %c1152_56] : memref<8x11520xf32, #tpu.memory_space<vmem>>, vector<8x1152xf32>
    tpu.vector_store %arg7[%c0_55, %c1152_56], %95 {strides = array<i32>} : memref<8x11520xf32, #tpu.memory_space<vmem>>, vector<8x1152xf32>,
    %c0_57 = arith.constant 0 : index
    %c2304 = arith.constant 2304 : index
    %97 = vector.load %arg4[%c0_57, %c2304] : memref<128x11520xbf16, #tpu.memory_space<vmem>>, vector<128x1152xbf16>
    %cst_58 = arith.constant dense<0.000000e+00> : vector<8x1152xf32>
    %98 = tpu.matmul %70, %97, %cst_58 {dimension_numbers = #tpu.dot_dimension_numbers<[1], [0], [0], [1], [0, 0, 1, 1], [], []>} : vector<8x128xbf16>, vector<128x1152xbf16>, vector<8x1152xf32> -> vector<8x1152xf32>
    %c0_59 = arith.constant 0 : index
    %c2304_60 = arith.constant 2304 : index
    %99 = vector.load %arg6[%c0_59, %c2304_60] : memref<1x11520xf32, #tpu.memory_space<vmem>>, vector<1x1152xf32>
    %100 = vector.broadcast %99 : vector<1x1152xf32> to vector<8x1152xf32>
    %101 = arith.addf %98, %100 : vector<8x1152xf32>
    %cst_61 = arith.constant 5.000000e-01 : f32
    %102 = vector.broadcast %cst_61 : f32 to vector<8x1152xf32>
    %103 = arith.mulf %102, %101 : vector<8x1152xf32>
    %104 = math.tanh %103 : vector<8x1152xf32>
    %cst_62 = arith.constant 5.000000e-01 : f32
    %105 = vector.broadcast %cst_62 : f32 to vector<8x1152xf32>
    %106 = arith.mulf %105, %104 : vector<8x1152xf32>
    %cst_63 = arith.constant 5.000000e-01 : f32
    %107 = vector.broadcast %cst_63 : f32 to vector<8x1152xf32>
    %108 = arith.addf %106, %107 : vector<8x1152xf32>
    %c0_64 = arith.constant 0 : index
    %c2304_65 = arith.constant 2304 : index
    %109 = vector.load %arg7[%c0_64, %c2304_65] : memref<8x11520xf32, #tpu.memory_space<vmem>>, vector<8x1152xf32>
    tpu.vector_store %arg7[%c0_64, %c2304_65], %108 {strides = array<i32>} : memref<8x11520xf32, #tpu.memory_space<vmem>>, vector<8x1152xf32>,
    %c0_66 = arith.constant 0 : index
    %c3456 = arith.constant 3456 : index
    %110 = vector.load %arg4[%c0_66, %c3456] : memref<128x11520xbf16, #tpu.memory_space<vmem>>, vector<128x1152xbf16>
    %cst_67 = arith.constant dense<0.000000e+00> : vector<8x1152xf32>
    %111 = tpu.matmul %70, %110, %cst_67 {dimension_numbers = #tpu.dot_dimension_numbers<[1], [0], [0], [1], [0, 0, 1, 1], [], []>} : vector<8x128xbf16>, vector<128x1152xbf16>, vector<8x1152xf32> -> vector<8x1152xf32>
    %c0_68 = arith.constant 0 : index
    %c3456_69 = arith.constant 3456 : index
    %112 = vector.load %arg6[%c0_68, %c3456_69] : memref<1x11520xf32, #tpu.memory_space<vmem>>, vector<1x1152xf32>
    %113 = vector.broadcast %112 : vector<1x1152xf32> to vector<8x1152xf32>
    %114 = arith.addf %111, %113 : vector<8x1152xf32>
    %cst_70 = arith.constant 5.000000e-01 : f32
    %115 = vector.broadcast %cst_70 : f32 to vector<8x1152xf32>
    %116 = arith.mulf %115, %114 : vector<8x1152xf32>
    %117 = math.tanh %116 : vector<8x1152xf32>
    %cst_71 = arith.constant 5.000000e-01 : f32
    %118 = vector.broadcast %cst_71 : f32 to vector<8x1152xf32>
    %119 = arith.mulf %118, %117 : vector<8x1152xf32>
    %cst_72 = arith.constant 5.000000e-01 : f32
    %120 = vector.broadcast %cst_72 : f32 to vector<8x1152xf32>
    %121 = arith.addf %119, %120 : vector<8x1152xf32>
    %c0_73 = arith.constant 0 : index
    %c3456_74 = arith.constant 3456 : index
    %122 = vector.load %arg7[%c0_73, %c3456_74] : memref<8x11520xf32, #tpu.memory_space<vmem>>, vector<8x1152xf32>
    tpu.vector_store %arg7[%c0_73, %c3456_74], %121 {strides = array<i32>} : memref<8x11520xf32, #tpu.memory_space<vmem>>, vector<8x1152xf32>,
    %c0_75 = arith.constant 0 : index
    %c4608 = arith.constant 4608 : index
    %123 = vector.load %arg4[%c0_75, %c4608] : memref<128x11520xbf16, #tpu.memory_space<vmem>>, vector<128x1152xbf16>
    %cst_76 = arith.constant dense<0.000000e+00> : vector<8x1152xf32>
    %124 = tpu.matmul %70, %123, %cst_76 {dimension_numbers = #tpu.dot_dimension_numbers<[1], [0], [0], [1], [0, 0, 1, 1], [], []>} : vector<8x128xbf16>, vector<128x1152xbf16>, vector<8x1152xf32> -> vector<8x1152xf32>
    %c0_77 = arith.constant 0 : index
    %c4608_78 = arith.constant 4608 : index
    %125 = vector.load %arg6[%c0_77, %c4608_78] : memref<1x11520xf32, #tpu.memory_space<vmem>>, vector<1x1152xf32>
    %126 = vector.broadcast %125 : vector<1x1152xf32> to vector<8x1152xf32>
    %127 = arith.addf %124, %126 : vector<8x1152xf32>
    %cst_79 = arith.constant 5.000000e-01 : f32
    %128 = vector.broadcast %cst_79 : f32 to vector<8x1152xf32>
    %129 = arith.mulf %128, %127 : vector<8x1152xf32>
    %130 = math.tanh %129 : vector<8x1152xf32>
    %cst_80 = arith.constant 5.000000e-01 : f32
    %131 = vector.broadcast %cst_80 : f32 to vector<8x1152xf32>
    %132 = arith.mulf %131, %130 : vector<8x1152xf32>
    %cst_81 = arith.constant 5.000000e-01 : f32
    %133 = vector.broadcast %cst_81 : f32 to vector<8x1152xf32>
    %134 = arith.addf %132, %133 : vector<8x1152xf32>
    %c0_82 = arith.constant 0 : index
    %c4608_83 = arith.constant 4608 : index
    %135 = vector.load %arg7[%c0_82, %c4608_83] : memref<8x11520xf32, #tpu.memory_space<vmem>>, vector<8x1152xf32>
    tpu.vector_store %arg7[%c0_82, %c4608_83], %134 {strides = array<i32>} : memref<8x11520xf32, #tpu.memory_space<vmem>>, vector<8x1152xf32>,
    %c0_84 = arith.constant 0 : index
    %c5760 = arith.constant 5760 : index
    %136 = vector.load %arg4[%c0_84, %c5760] : memref<128x11520xbf16, #tpu.memory_space<vmem>>, vector<128x1152xbf16>
    %cst_85 = arith.constant dense<0.000000e+00> : vector<8x1152xf32>
    %137 = tpu.matmul %70, %136, %cst_85 {dimension_numbers = #tpu.dot_dimension_numbers<[1], [0], [0], [1], [0, 0, 1, 1], [], []>} : vector<8x128xbf16>, vector<128x1152xbf16>, vector<8x1152xf32> -> vector<8x1152xf32>
    %c0_86 = arith.constant 0 : index
    %c5760_87 = arith.constant 5760 : index
    %138 = vector.load %arg6[%c0_86, %c5760_87] : memref<1x11520xf32, #tpu.memory_space<vmem>>, vector<1x1152xf32>
    %139 = vector.broadcast %138 : vector<1x1152xf32> to vector<8x1152xf32>
    %140 = arith.addf %137, %139 : vector<8x1152xf32>
    %cst_88 = arith.constant 5.000000e-01 : f32
    %141 = vector.broadcast %cst_88 : f32 to vector<8x1152xf32>
    %142 = arith.mulf %141, %140 : vector<8x1152xf32>
    %143 = math.tanh %142 : vector<8x1152xf32>
    %cst_89 = arith.constant 5.000000e-01 : f32
    %144 = vector.broadcast %cst_89 : f32 to vector<8x1152xf32>
    %145 = arith.mulf %144, %143 : vector<8x1152xf32>
    %cst_90 = arith.constant 5.000000e-01 : f32
    %146 = vector.broadcast %cst_90 : f32 to vector<8x1152xf32>
    %147 = arith.addf %145, %146 : vector<8x1152xf32>
    %c0_91 = arith.constant 0 : index
    %c5760_92 = arith.constant 5760 : index
    %148 = vector.load %arg7[%c0_91, %c5760_92] : memref<8x11520xf32, #tpu.memory_space<vmem>>, vector<8x1152xf32>
    tpu.vector_store %arg7[%c0_91, %c5760_92], %147 {strides = array<i32>} : memref<8x11520xf32, #tpu.memory_space<vmem>>, vector<8x1152xf32>,
    %c0_93 = arith.constant 0 : index
    %c6912 = arith.constant 6912 : index
    %149 = vector.load %arg4[%c0_93, %c6912] : memref<128x11520xbf16, #tpu.memory_space<vmem>>, vector<128x1152xbf16>
    %cst_94 = arith.constant dense<0.000000e+00> : vector<8x1152xf32>
    %150 = tpu.matmul %70, %149, %cst_94 {dimension_numbers = #tpu.dot_dimension_numbers<[1], [0], [0], [1], [0, 0, 1, 1], [], []>} : vector<8x128xbf16>, vector<128x1152xbf16>, vector<8x1152xf32> -> vector<8x1152xf32>
    %c0_95 = arith.constant 0 : index
    %c6912_96 = arith.constant 6912 : index
    %151 = vector.load %arg6[%c0_95, %c6912_96] : memref<1x11520xf32, #tpu.memory_space<vmem>>, vector<1x1152xf32>
    %152 = vector.broadcast %151 : vector<1x1152xf32> to vector<8x1152xf32>
    %153 = arith.addf %150, %152 : vector<8x1152xf32>
    %cst_97 = arith.constant 5.000000e-01 : f32
    %154 = vector.broadcast %cst_97 : f32 to vector<8x1152xf32>
    %155 = arith.mulf %154, %153 : vector<8x1152xf32>
    %156 = math.tanh %155 : vector<8x1152xf32>
    %cst_98 = arith.constant 5.000000e-01 : f32
    %157 = vector.broadcast %cst_98 : f32 to vector<8x1152xf32>
    %158 = arith.mulf %157, %156 : vector<8x1152xf32>
    %cst_99 = arith.constant 5.000000e-01 : f32
    %159 = vector.broadcast %cst_99 : f32 to vector<8x1152xf32>
    %160 = arith.addf %158, %159 : vector<8x1152xf32>
    %c0_100 = arith.constant 0 : index
    %c6912_101 = arith.constant 6912 : index
    %161 = vector.load %arg7[%c0_100, %c6912_101] : memref<8x11520xf32, #tpu.memory_space<vmem>>, vector<8x1152xf32>
    tpu.vector_store %arg7[%c0_100, %c6912_101], %160 {strides = array<i32>} : memref<8x11520xf32, #tpu.memory_space<vmem>>, vector<8x1152xf32>,
    %c0_102 = arith.constant 0 : index
    %c8064 = arith.constant 8064 : index
    %162 = vector.load %arg4[%c0_102, %c8064] : memref<128x11520xbf16, #tpu.memory_space<vmem>>, vector<128x1152xbf16>
    %cst_103 = arith.constant dense<0.000000e+00> : vector<8x1152xf32>
    %163 = tpu.matmul %70, %162, %cst_103 {dimension_numbers = #tpu.dot_dimension_numbers<[1], [0], [0], [1], [0, 0, 1, 1], [], []>} : vector<8x128xbf16>, vector<128x1152xbf16>, vector<8x1152xf32> -> vector<8x1152xf32>
    %c0_104 = arith.constant 0 : index
    %c8064_105 = arith.constant 8064 : index
    %164 = vector.load %arg6[%c0_104, %c8064_105] : memref<1x11520xf32, #tpu.memory_space<vmem>>, vector<1x1152xf32>
    %165 = vector.broadcast %164 : vector<1x1152xf32> to vector<8x1152xf32>
    %166 = arith.addf %163, %165 : vector<8x1152xf32>
    %cst_106 = arith.constant 5.000000e-01 : f32
    %167 = vector.broadcast %cst_106 : f32 to vector<8x1152xf32>
    %168 = arith.mulf %167, %166 : vector<8x1152xf32>
    %169 = math.tanh %168 : vector<8x1152xf32>
    %cst_107 = arith.constant 5.000000e-01 : f32
    %170 = vector.broadcast %cst_107 : f32 to vector<8x1152xf32>
    %171 = arith.mulf %170, %169 : vector<8x1152xf32>
    %cst_108 = arith.constant 5.000000e-01 : f32
    %172 = vector.broadcast %cst_108 : f32 to vector<8x1152xf32>
    %173 = arith.addf %171, %172 : vector<8x1152xf32>
    %c0_109 = arith.constant 0 : index
    %c8064_110 = arith.constant 8064 : index
    %174 = vector.load %arg7[%c0_109, %c8064_110] : memref<8x11520xf32, #tpu.memory_space<vmem>>, vector<8x1152xf32>
    tpu.vector_store %arg7[%c0_109, %c8064_110], %173 {strides = array<i32>} : memref<8x11520xf32, #tpu.memory_space<vmem>>, vector<8x1152xf32>,
    %c0_111 = arith.constant 0 : index
    %c9216 = arith.constant 9216 : index
    %175 = vector.load %arg4[%c0_111, %c9216] : memref<128x11520xbf16, #tpu.memory_space<vmem>>, vector<128x1152xbf16>
    %cst_112 = arith.constant dense<0.000000e+00> : vector<8x1152xf32>
    %176 = tpu.matmul %70, %175, %cst_112 {dimension_numbers = #tpu.dot_dimension_numbers<[1], [0], [0], [1], [0, 0, 1, 1], [], []>} : vector<8x128xbf16>, vector<128x1152xbf16>, vector<8x1152xf32> -> vector<8x1152xf32>
    %c0_113 = arith.constant 0 : index
    %c9216_114 = arith.constant 9216 : index
    %177 = vector.load %arg6[%c0_113, %c9216_114] : memref<1x11520xf32, #tpu.memory_space<vmem>>, vector<1x1152xf32>
    %178 = vector.broadcast %177 : vector<1x1152xf32> to vector<8x1152xf32>
    %179 = arith.addf %176, %178 : vector<8x1152xf32>
    %cst_115 = arith.constant 5.000000e-01 : f32
    %180 = vector.broadcast %cst_115 : f32 to vector<8x1152xf32>
    %181 = arith.mulf %180, %179 : vector<8x1152xf32>
    %182 = math.tanh %181 : vector<8x1152xf32>
    %cst_116 = arith.constant 5.000000e-01 : f32
    %183 = vector.broadcast %cst_116 : f32 to vector<8x1152xf32>
    %184 = arith.mulf %183, %182 : vector<8x1152xf32>
    %cst_117 = arith.constant 5.000000e-01 : f32
    %185 = vector.broadcast %cst_117 : f32 to vector<8x1152xf32>
    %186 = arith.addf %184, %185 : vector<8x1152xf32>
    %c0_118 = arith.constant 0 : index
    %c9216_119 = arith.constant 9216 : index
    %187 = vector.load %arg7[%c0_118, %c9216_119] : memref<8x11520xf32, #tpu.memory_space<vmem>>, vector<8x1152xf32>
    tpu.vector_store %arg7[%c0_118, %c9216_119], %186 {strides = array<i32>} : memref<8x11520xf32, #tpu.memory_space<vmem>>, vector<8x1152xf32>,
    %c0_120 = arith.constant 0 : index
    %c10368 = arith.constant 10368 : index
    %188 = vector.load %arg4[%c0_120, %c10368] : memref<128x11520xbf16, #tpu.memory_space<vmem>>, vector<128x1152xbf16>
    %cst_121 = arith.constant dense<0.000000e+00> : vector<8x1152xf32>
    %189 = tpu.matmul %70, %188, %cst_121 {dimension_numbers = #tpu.dot_dimension_numbers<[1], [0], [0], [1], [0, 0, 1, 1], [], []>} : vector<8x128xbf16>, vector<128x1152xbf16>, vector<8x1152xf32> -> vector<8x1152xf32>
    %c0_122 = arith.constant 0 : index
    %c10368_123 = arith.constant 10368 : index
    %190 = vector.load %arg6[%c0_122, %c10368_123] : memref<1x11520xf32, #tpu.memory_space<vmem>>, vector<1x1152xf32>
    %191 = vector.broadcast %190 : vector<1x1152xf32> to vector<8x1152xf32>
    %192 = arith.addf %189, %191 : vector<8x1152xf32>
    %cst_124 = arith.constant 5.000000e-01 : f32
    %193 = vector.broadcast %cst_124 : f32 to vector<8x1152xf32>
    %194 = arith.mulf %193, %192 : vector<8x1152xf32>
    %195 = math.tanh %194 : vector<8x1152xf32>
    %cst_125 = arith.constant 5.000000e-01 : f32
    %196 = vector.broadcast %cst_125 : f32 to vector<8x1152xf32>
    %197 = arith.mulf %196, %195 : vector<8x1152xf32>
    %cst_126 = arith.constant 5.000000e-01 : f32
    %198 = vector.broadcast %cst_126 : f32 to vector<8x1152xf32>
    %199 = arith.addf %197, %198 : vector<8x1152xf32>
    %c0_127 = arith.constant 0 : index
    %c10368_128 = arith.constant 10368 : index
    %200 = vector.load %arg7[%c0_127, %c10368_128] : memref<8x11520xf32, #tpu.memory_space<vmem>>, vector<8x1152xf32>
    tpu.vector_store %arg7[%c0_127, %c10368_128], %199 {strides = array<i32>} : memref<8x11520xf32, #tpu.memory_space<vmem>>, vector<8x1152xf32>,
    return
  }
  func.func @transform_0(%arg0: i32) -> (i32, i32) {
    %c0_i32 = arith.constant 0 : i32
    %c0_i32_0 = arith.constant 0 : i32
    return %arg0, %c0_i32 : i32, i32
  }
  func.func @transform_1(%arg0: i32) -> (i32, i32) {
    %c0_i32 = arith.constant 0 : i32
    %c0_i32_0 = arith.constant 0 : i32
    %c0_i32_1 = arith.constant 0 : i32
    return %c0_i32, %c0_i32_0 : i32, i32
  }
  func.func @transform_2(%arg0: i32) -> (i32, i32) {
    %c0_i32 = arith.constant 0 : i32
    %c0_i32_0 = arith.constant 0 : i32
    %c0_i32_1 = arith.constant 0 : i32
    return %c0_i32, %c0_i32_0 : i32, i32
  }
  func.func @transform_3(%arg0: i32) -> (i32, i32) {
    %c0_i32 = arith.constant 0 : i32
    %c0_i32_0 = arith.constant 0 : i32
    %c0_i32_1 = arith.constant 0 : i32
    return %c0_i32, %c0_i32_0 : i32, i32
  }
  func.func @transform_4(%arg0: i32) -> (i32, i32) {
    %c0_i32 = arith.constant 0 : i32
    %c0_i32_0 = arith.constant 0 : i32
    %c0_i32_1 = arith.constant 0 : i32
    return %c0_i32, %c0_i32_0 : i32, i32
  }
  func.func @transform_5(%arg0: i32) -> (i32, i32) {
    %c0_i32 = arith.constant 0 : i32
    %c0_i32_0 = arith.constant 0 : i32
    %c0_i32_1 = arith.constant 0 : i32
    return %c0_i32, %c0_i32_0 : i32, i32
  }
  func.func @transform_6(%arg0: i32) -> (i32, i32) {
    %c0_i32 = arith.constant 0 : i32
    %c0_i32_0 = arith.constant 0 : i32
    return %arg0, %c0_i32 : i32, i32
  }
}

</mosaic_0001>

<llo_original>
// kernel: conv2d_ae_forward.1
$region0: #{conv2d_ae_forward.1}
  #allocation0 [shape = 'u32[]', space=smem, size = 0x4, offset = 0x4, fixed_abs, tag = 'smem constant byte address 0x4 - core index']
  #allocation1 [shape = 'u32[72,128]{1,0:T(1,128)}', space=vmem, size = 0x9000, scoped, tag = 'internal scratch']
  %s0 = inlined_call_operand.vmem [shape: bf16[16,11520], index: 0, kind: input, shape index: {}]
  %s1 = inlined_call_operand.vmem [shape: bf16[11520,128], index: 1, kind: input, shape index: {}]
  %s2 = inlined_call_operand.vmem [shape: bf16[1024,128], index: 2, kind: input, shape index: {}]
  %s3 = inlined_call_operand.vmem [shape: bf16[128,11520], index: 3, kind: input, shape index: {}]
  %s4 = inlined_call_operand.vmem [shape: f32[16,128], index: 4, kind: input, shape index: {}]
  %s5 = inlined_call_operand.vmem [shape: f32[1,11520], index: 5, kind: input, shape index: {}]
  %s6 = inlined_call_operand.vmem [shape: f32[16,11520], index: 6, kind: output, shape index: {}]
  %s7 = sld [smem:[#allocation0]]
  $region57: #{conv2d_ae_forward.1} parent=0
    _
  %s9 = ssub.s32 1, %s7
  %s10 = scalar_select 0, %s9, %s7
  loop: start=0, step=1, limit=4
  $region2: #{conv2d_ae_forward.1} parent=0 // loop_pre_header
    _
  $region3: #{conv2d_ae_forward.1} parent=0 // loop_header
    %s12 = sphi 0, %s16
    %p13 = scmp.ge.s32.totalorder %s12, 4
    %s22 = sphi 0, %s24
    %s25 = sphi 0, %s22
    %s26 = sphi 0, %s25
    %s42 = sphi 0, %s26
    %s46 = sphi 0, %s46
    %s48 = sphi 0, %s46
    %s49 = sphi 0, %s48
    %s63 = sphi 0, %s49
    %s67 = sphi 0, %s67
    %s69 = sphi 0, %s67
    %s70 = sphi 0, %s69
    %s84 = sphi 0, %s70
    %s88 = sphi 0, %s88
    %s90 = sphi 0, %s88
    %s91 = sphi 0, %s90
    %s105 = sphi 0, %s91
    %s109 = sphi 0, %s109
    %s111 = sphi 0, %s109
    %s112 = sphi 0, %s111
    %s126 = sphi 0, %s112
    %s130 = sphi 0, %s130
    %s132 = sphi 0, %s130
    %s133 = sphi 0, %s132
    %s147 = sphi 0, %s133
    %s153 = sphi 0, %s155
    %s156 = sphi 0, %s153
    %s157 = sphi 0, %s156
    %s173 = sphi 0, %s157
  $region4: #{conv2d_ae_forward.1} parent=0 // loop_header_branch
    %15 = sbr.rel (%p13) target = $region8
  $region5: #{conv2d_ae_forward.1} parent=0 // loop_body
    %s17 = ssub.s32 %s12, 1
    %s18 = ssub.s32 %s12, 2
    %s19 = sadd.s32 %s12, 1
    %s20 = ssub.s32 %s12, %s19
    %p21 = scmp.eq.s32.totalorder %s20, 0
    %s23 = sadd.s32 %s22, 1
    %s24 = scalar_select %p21, %s22, %s23
    %p27 = pneg %p21
    %p28 = scmp.eq.s32.totalorder %s12, 1
    %p29 = por %p27, %p28
    %p30 = scmp.ne.s32.totalorder %s22, %s25
    %p31 = scmp.eq.s32.totalorder %s12, 0
    %p32 = por %p30, %p31
    %p33 = scmp.ne.s32.totalorder %s22, %s25
    %p34 = scmp.eq.s32.totalorder %s17, 1
    %p35 = por %p33, %p34
    %p36 = scmp.ne.s32.totalorder %s25, %s26
    %p37 = scmp.eq.s32.totalorder %s17, 0
    %p38 = por %p36, %p37
    %p39 = scmp.ne.s32.totalorder %s25, %s26
    %p40 = scmp.eq.s32.totalorder %s18, 1
    %p41 = por %p39, %p40
    %p43 = scmp.ne.s32.totalorder %s26, %s42
    %p44 = scmp.eq.s32.totalorder %s18, 0
    %p45 = por %p43, %p44
    %s47 = sadd.s32 %s46, 1
    %p50 = scmp.eq.s32.totalorder %s12, 1
    %p51 = scmp.ne.s32.totalorder %s46, %s48
    %p52 = scmp.eq.s32.totalorder %s12, 0
    %p53 = por %p51, %p52
    %p54 = scmp.ne.s32.totalorder %s46, %s48
    %p55 = scmp.eq.s32.totalorder %s17, 1
    %p56 = por %p54, %p55
    %p57 = scmp.ne.s32.totalorder %s48, %s49
    %p58 = scmp.eq.s32.totalorder %s17, 0
    %p59 = por %p57, %p58
    %p60 = scmp.ne.s32.totalorder %s48, %s49
    %p61 = scmp.eq.s32.totalorder %s18, 1
    %p62 = por %p60, %p61
    %p64 = scmp.ne.s32.totalorder %s49, %s63
    %p65 = scmp.eq.s32.totalorder %s18, 0
    %p66 = por %p64, %p65
    %s68 = sadd.s32 %s67, 1
    %p71 = scmp.eq.s32.totalorder %s12, 1
    %p72 = scmp.ne.s32.totalorder %s67, %s69
    %p73 = scmp.eq.s32.totalorder %s12, 0
    %p74 = por %p72, %p73
    %p75 = scmp.ne.s32.totalorder %s67, %s69
    %p76 = scmp.eq.s32.totalorder %s17, 1
    %p77 = por %p75, %p76
    %p78 = scmp.ne.s32.totalorder %s69, %s70
    %p79 = scmp.eq.s32.totalorder %s17, 0
    %p80 = por %p78, %p79
    %p81 = scmp.ne.s32.totalorder %s69, %s70
    %p82 = scmp.eq.s32.totalorder %s18, 1
    %p83 = por %p81, %p82
    %p85 = scmp.ne.s32.totalorder %s70, %s84
    %p86 = scmp.eq.s32.totalorder %s18, 0
    %p87 = por %p85, %p86
    %s89 = sadd.s32 %s88, 1
    %p92 = scmp.eq.s32.totalorder %s12, 1
    %p93 = scmp.ne.s32.totalorder %s88, %s90
    %p94 = scmp.eq.s32.totalorder %s12, 0
    %p95 = por %p93, %p94
    %p96 = scmp.ne.s32.totalorder %s88, %s90
    %p97 = scmp.eq.s32.totalorder %s17, 1
    %p98 = por %p96, %p97
    %p99 = scmp.ne.s32.totalorder %s90, %s91
    %p100 = scmp.eq.s32.totalorder %s17, 0
    %p101 = por %p99, %p100
    %p102 = scmp.ne.s32.totalorder %s90, %s91
    %p103 = scmp.eq.s32.totalorder %s18, 1
    %p104 = por %p102, %p103
    %p106 = scmp.ne.s32.totalorder %s91, %s105
    %p107 = scmp.eq.s32.totalorder %s18, 0
    %p108 = por %p106, %p107
    %s110 = sadd.s32 %s109, 1
    %p113 = scmp.eq.s32.totalorder %s12, 1
    %p114 = scmp.ne.s32.totalorder %s109, %s111
    %p115 = scmp.eq.s32.totalorder %s12, 0
    %p116 = por %p114, %p115
    %p117 = scmp.ne.s32.totalorder %s109, %s111
    %p118 = scmp.eq.s32.totalorder %s17, 1
    %p119 = por %p117, %p118
    %p120 = scmp.ne.s32.totalorder %s111, %s112
    %p121 = scmp.eq.s32.totalorder %s17, 0
    %p122 = por %p120, %p121
    %p123 = scmp.ne.s32.totalorder %s111, %s112
    %p124 = scmp.eq.s32.totalorder %s18, 1
    %p125 = por %p123, %p124
    %p127 = scmp.ne.s32.totalorder %s112, %s126
    %p128 = scmp.eq.s32.totalorder %s18, 0
    %p129 = por %p127, %p128
    %s131 = sadd.s32 %s130, 1
    %p134 = scmp.eq.s32.totalorder %s12, 1
    %p135 = scmp.ne.s32.totalorder %s130, %s132
    %p136 = scmp.eq.s32.totalorder %s12, 0
    %p137 = por %p135, %p136
    %p138 = scmp.ne.s32.totalorder %s130, %s132
    %p139 = scmp.eq.s32.totalorder %s17, 1
    %p140 = por %p138, %p139
    %p141 = scmp.ne.s32.totalorder %s132, %s133
    %p142 = scmp.eq.s32.totalorder %s17, 0
    %p143 = por %p141, %p142
    %p144 = scmp.ne.s32.totalorder %s132, %s133
    %p145 = scmp.eq.s32.totalorder %s18, 1
    %p146 = por %p144, %p145
    %p148 = scmp.ne.s32.totalorder %s133, %s147
    %p149 = scmp.eq.s32.totalorder %s18, 0
    %p150 = por %p148, %p149
    %s151 = ssub.s32 %s12, %s19
    %p152 = scmp.eq.s32.totalorder %s151, 0
    %s154 = sadd.s32 %s153, 1
    %s155 = scalar_select %p152, %s153, %s154
    %p158 = pneg %p152
    %p159 = scmp.eq.s32.totalorder %s12, 1
    %p160 = por %p158, %p159
    %p161 = scmp.ne.s32.totalorder %s153, %s156
    %p162 = scmp.eq.s32.totalorder %s12, 0
    %p163 = por %p161, %p162
    %p164 = scmp.ne.s32.totalorder %s153, %s156
    %p165 = scmp.eq.s32.totalorder %s17, 1
    %p166 = por %p164, %p165
    %p167 = scmp.ne.s32.totalorder %s156, %s157
    %p168 = scmp.eq.s32.totalorder %s17, 0
    %p169 = por %p167, %p168
    %p170 = scmp.ne.s32.totalorder %s156, %s157
    %p171 = scmp.eq.s32.totalorder %s18, 1
    %p172 = por %p170, %p171
    %p174 = scmp.ne.s32.totalorder %s157, %s173
    %p175 = scmp.eq.s32.totalorder %s18, 0
    %p176 = por %p174, %p175
    %p177 = scmp.le.s32.totalorder 1, %s12
    %p178 = scmp.lt.s32.totalorder %s12, 3
    %p179 = pnand %p177, %p178
    %p180 = pneg %p179
    // Predicated region
    $region9: #{conv2d_ae_forward.1} parent=5 // pred_check
      _
    $region10: #{conv2d_ae_forward.1} parent=5 // pred_check_branch
      %182 = sbr.rel (%p179) target = $region12
    $region11: #{conv2d_ae_forward.1} parent=5 // pred_region
      %s183 = ssub.s32 %s12, 1
      // Predicated region
      $region13: #{conv2d_ae_forward.1} parent=11 // pred_check
        %p184 = pneg %p59
      $region14: #{conv2d_ae_forward.1} parent=11 // pred_check_branch
        %186 = sbr.rel (%p184) target = $region16
      $region15: #{conv2d_ae_forward.1} parent=11 // pred_region
        _
      $region16: #{conv2d_ae_forward.1} parent=11 // pred_fallthru
        _
      // Predicated region
      $region17: #{conv2d_ae_forward.1} parent=11 // pred_check
        %p187 = pneg %p80
      $region18: #{conv2d_ae_forward.1} parent=11 // pred_check_branch
        %189 = sbr.rel (%p187) target = $region20
      $region19: #{conv2d_ae_forward.1} parent=11 // pred_region
        _
      $region20: #{conv2d_ae_forward.1} parent=11 // pred_fallthru
        _
      // Predicated region
      $region21: #{conv2d_ae_forward.1} parent=11 // pred_check
        %p190 = pneg %p101
      $region22: #{conv2d_ae_forward.1} parent=11 // pred_check_branch
        %192 = sbr.rel (%p190) target = $region24
      $region23: #{conv2d_ae_forward.1} parent=11 // pred_region
        _
      $region24: #{conv2d_ae_forward.1} parent=11 // pred_fallthru
        _
      // Predicated region
      $region25: #{conv2d_ae_forward.1} parent=11 // pred_check
        %p193 = pneg %p122
      $region26: #{conv2d_ae_forward.1} parent=11 // pred_check_branch
        %195 = sbr.rel (%p193) target = $region28
      $region27: #{conv2d_ae_forward.1} parent=11 // pred_region
        _
      $region28: #{conv2d_ae_forward.1} parent=11 // pred_fallthru
        _
      // Predicated region
      $region29: #{conv2d_ae_forward.1} parent=11 // pred_check
        %p196 = pneg %p143
      $region30: #{conv2d_ae_forward.1} parent=11 // pred_check_branch
        %198 = sbr.rel (%p196) target = $region32
      $region31: #{conv2d_ae_forward.1} parent=11 // pred_region
        _
      $region32: #{conv2d_ae_forward.1} parent=11 // pred_fallthru
        _
    $region12: #{conv2d_ae_forward.1} parent=5 // pred_fallthru
      _
    %p199 = scmp.lt.s32.totalorder %s12, 2
    // Predicated region
    $region33: #{conv2d_ae_forward.1} parent=5 // pred_check
      %p200 = pneg %p199
    $region34: #{conv2d_ae_forward.1} parent=5 // pred_check_branch
      %202 = sbr.rel (%p200) target = $region36
    $region35: #{conv2d_ae_forward.1} parent=5 // pred_region
      // Predicated region
      $region37: #{conv2d_ae_forward.1} parent=35 // pred_check
        %p203 = pneg %p32
      $region38: #{conv2d_ae_forward.1} parent=35 // pred_check_branch
        %205 = sbr.rel (%p203) target = $region40
      $region39: #{conv2d_ae_forward.1} parent=35 // pred_region
        %p206 = scmp.lt.s32.totalorder %s12, 1
        %s207 = scalar_select %p206, %s12, 1
        %s208 = smul.addr %s207, 90
        %s209 = smul.addr %s208, 4
        %s210 = scalar_lea.vmem %s0, %s209
      $region40: #{conv2d_ae_forward.1} parent=35 // pred_fallthru
        _
    $region36: #{conv2d_ae_forward.1} parent=5 // pred_fallthru
      _
    %p211 = scmp.le.s32.totalorder 1, %s12
    %p212 = scmp.lt.s32.totalorder %s12, 3
    %p213 = pnand %p211, %p212
    %p214 = pneg %p213
    // Predicated region
    $region41: #{conv2d_ae_forward.1} parent=5 // pred_check
      _
    $region42: #{conv2d_ae_forward.1} parent=5 // pred_check_branch
      %216 = sbr.rel (%p213) target = $region44
    $region43: #{conv2d_ae_forward.1} parent=5 // pred_region
      %s217 = ssub.s32 %s12, 1
      %p218 = scmp.lt.s32.totalorder %s17, 1
      %s219 = scalar_select %p218, %s17, 1
      %s220 = smul.addr %s219, 90
      %s221 = smul.addr %s220, 4
      %s222 = scalar_lea.vmem %s0, %s221
      %p223 = pneg %p38
      %p224 = pneg %p35
      %p225 = pneg %p59
      %p226 = pneg %p56
      %p227 = pneg %p80
      %p228 = pneg %p77
      %p229 = pneg %p101
      %p230 = pneg %p98
      %p231 = pneg %p122
      %p232 = pneg %p119
      %p233 = pneg %p143
      %p234 = pneg %p140
      %p235 = pneg %p169
      %p236 = pneg %p166
      %p237 = scmp.lt.s32.totalorder %s17, 1
      %s238 = scalar_select %p237, %s17, 1
      %s239 = smul.addr %s238, 90
      %s240 = smul.addr %s239, 8
      %s241 = scalar_lea.vmem %s6, %s240
      %p242 = scmp.lt.s32.totalorder %s17, 1
      %s243 = scalar_select %p242, %s17, 1
      %s244 = smul.addr %s243, 90
      %s245 = smul.addr %s244, 4
      %s246 = scalar_lea.vmem %s0, %s245
      %p247 = scmp.lt.s32.totalorder %s17, 1
      %s248 = scalar_select %p247, %s17, 1
      %s249 = smul.addr %s248, 90
      %s250 = smul.addr %s249, 8
      %s251 = scalar_lea.vmem %s6, %s250
      %v252 = vld [vmem:[%s246] sm:$0xff]
      %v253 = vld [vmem:[%s246 + $0x8] sm:$0xff]
      %v254 = vld [vmem:[%s246 + $0x10] sm:$0xff]
      %v255 = vld [vmem:[%s246 + $0x18] sm:$0xff]
      %v256 = vld [vmem:[%s246 + $0x20] sm:$0xff]
      %v257 = vld [vmem:[%s246 + $0x28] sm:$0xff]
      %v258 = vld [vmem:[%s246 + $0x30] sm:$0xff]
      %v259 = vld [vmem:[%s246 + $0x38] sm:$0xff]
      %v260 = vld [vmem:[%s246 + $0x40] sm:$0xff]
      %v261 = vld [vmem:[%s246 + $0x48] sm:$0xff]
      %v262 = vld [vmem:[%s246 + $0x50] sm:$0xff]
      %v263 = vld [vmem:[%s246 + $0x58] sm:$0xff]
      %v264 = vld [vmem:[%s246 + $0x60] sm:$0xff]
      %v265 = vld [vmem:[%s246 + $0x68] sm:$0xff]
      %v266 = vld [vmem:[%s246 + $0x70] sm:$0xff]
      %v267 = vld [vmem:[%s246 + $0x78] sm:$0xff]
      %v268 = vld [vmem:[%s246 + $0x80] sm:$0xff]
      %v269 = vld [vmem:[%s246 + $0x88] sm:$0xff]
      %v270 = vld [vmem:[%s246 + $0x90] sm:$0xff]
      %v271 = vld [vmem:[%s246 + $0x98] sm:$0xff]
      %v272 = vld [vmem:[%s246 + $0xa0] sm:$0xff]
      %v273 = vld [vmem:[%s246 + $0xa8] sm:$0xff]
      %v274 = vld [vmem:[%s246 + $0xb0] sm:$0xff]
      %v275 = vld [vmem:[%s246 + $0xb8] sm:$0xff]
      %v276 = vld [vmem:[%s246 + $0xc0] sm:$0xff]
      %v277 = vld [vmem:[%s246 + $0xc8] sm:$0xff]
      %v278 = vld [vmem:[%s246 + $0xd0] sm:$0xff]
      %v279 = vld [vmem:[%s246 + $0xd8] sm:$0xff]
      %v280 = vld [vmem:[%s246 + $0xe0] sm:$0xff]
      %v281 = vld [vmem:[%s246 + $0xe8] sm:$0xff]
      %v282 = vld [vmem:[%s246 + $0xf0] sm:$0xff]
      %v283 = vld [vmem:[%s246 + $0xf8] sm:$0xff]
      %v284 = vld [vmem:[%s246 + $0x100] sm:$0xff]
      %v285 = vld [vmem:[%s246 + $0x108] sm:$0xff]
      %v286 = vld [vmem:[%s246 + $0x110] sm:$0xff]
      %v287 = vld [vmem:[%s246 + $0x118] sm:$0xff]
      %v288 = vld [vmem:[%s246 + $0x120] sm:$0xff]
      %v289 = vld [vmem:[%s246 + $0x128] sm:$0xff]
      %v290 = vld [vmem:[%s246 + $0x130] sm:$0xff]
      %v291 = vld [vmem:[%s246 + $0x138] sm:$0xff]
      %v292 = vld [vmem:[%s246 + $0x140] sm:$0xff]
      %v293 = vld [vmem:[%s246 + $0x148] sm:$0xff]
      %v294 = vld [vmem:[%s246 + $0x150] sm:$0xff]
      %v295 = vld [vmem:[%s246 + $0x158] sm:$0xff]
      %v296 = vld [vmem:[%s246 + $0x160] sm:$0xff]
      %v297 = vld [vmem:[%s1] sm:$0xf]
      %v298 = vld [vmem:[%s1 + $0x4] sm:$0xf]
      %v299 = vld [vmem:[%s1 + $0x8] sm:$0xf]
      %v300 = vld [vmem:[%s1 + $0xc] sm:$0xf]
      %v301 = vld [vmem:[%s1 + $0x10] sm:$0xf]
      %v302 = vld [vmem:[%s1 + $0x14] sm:$0xf]
      %v303 = vld [vmem:[%s1 + $0x18] sm:$0xf]
      %v304 = vld [vmem:[%s1 + $0x1c] sm:$0xf]
      %v305 = vld [vmem:[%s1 + $0x20] sm:$0xf]
      %v306 = vld [vmem:[%s1 + $0x24] sm:$0xf]
      %v307 = vld [vmem:[%s1 + $0x28] sm:$0xf]
      %v308 = vld [vmem:[%s1 + $0x2c] sm:$0xf]
      %v309 = vld [vmem:[%s1 + $0x30] sm:$0xf]
      %v310 = vld [vmem:[%s1 + $0x34] sm:$0xf]
      %v311 = vld [vmem:[%s1 + $0x38] sm:$0xf]
      %v312 = vld [vmem:[%s1 + $0x3c] sm:$0xf]
      %v313 = vld [vmem:[%s1 + $0x40] sm:$0xf]
      %v314 = vld [vmem:[%s1 + $0x44] sm:$0xf]
      %v315 = vld [vmem:[%s1 + $0x48] sm:$0xf]
      %v316 = vld [vmem:[%s1 + $0x4c] sm:$0xf]
      %v317 = vld [vmem:[%s1 + $0x50] sm:$0xf]
      %v318 = vld [vmem:[%s1 + $0x54] sm:$0xf]
      %v319 = vld [vmem:[%s1 + $0x58] sm:$0xf]
      %v320 = vld [vmem:[%s1 + $0x5c] sm:$0xf]
      %v321 = vld [vmem:[%s1 + $0x60] sm:$0xf]
      %v322 = vld [vmem:[%s1 + $0x64] sm:$0xf]
      %v323 = vld [vmem:[%s1 + $0x68] sm:$0xf]
      %v324 = vld [vmem:[%s1 + $0x6c] sm:$0xf]
      %v325 = vld [vmem:[%s1 + $0x70] sm:$0xf]
      %v326 = vld [vmem:[%s1 + $0x74] sm:$0xf]
      %v327 = vld [vmem:[%s1 + $0x78] sm:$0xf]
      %v328 = vld [vmem:[%s1 + $0x7c] sm:$0xf]
      %v329 = vld [vmem:[%s1 + $0x80] sm:$0xf]
      %v330 = vld [vmem:[%s1 + $0x84] sm:$0xf]
      %v331 = vld [vmem:[%s1 + $0x88] sm:$0xf]
      %v332 = vld [vmem:[%s1 + $0x8c] sm:$0xf]
      %v333 = vld [vmem:[%s1 + $0x90] sm:$0xf]
      %v334 = vld [vmem:[%s1 + $0x94] sm:$0xf]
      %v335 = vld [vmem:[%s1 + $0x98] sm:$0xf]
      %v336 = vld [vmem:[%s1 + $0x9c] sm:$0xf]
      %v337 = vld [vmem:[%s1 + $0xa0] sm:$0xf]
      %v338 = vld [vmem:[%s1 + $0xa4] sm:$0xf]
      %v339 = vld [vmem:[%s1 + $0xa8] sm:$0xf]
      %v340 = vld [vmem:[%s1 + $0xac] sm:$0xf]
      %v341 = vld [vmem:[%s1 + $0xb0] sm:$0xf]
      %v342 = vld [vmem:[%s1 + $0xb4] sm:$0xf]
      %v343 = vld [vmem:[%s1 + $0xb8] sm:$0xf]
      %v344 = vld [vmem:[%s1 + $0xbc] sm:$0xf]
      %v345 = vld [vmem:[%s1 + $0xc0] sm:$0xf]
      %v346 = vld [vmem:[%s1 + $0xc4] sm:$0xf]
      %v347 = vld [vmem:[%s1 + $0xc8] sm:$0xf]
      %v348 = vld [vmem:[%s1 + $0xcc] sm:$0xf]
      %v349 = vld [vmem:[%s1 + $0xd0] sm:$0xf]
      %v350 = vld [vmem:[%s1 + $0xd4] sm:$0xf]
      %v351 = vld [vmem:[%s1 + $0xd8] sm:$0xf]
      %v352 = vld [vmem:[%s1 + $0xdc] sm:$0xf]
      %v353 = vld [vmem:[%s1 + $0xe0] sm:$0xf]
      %v354 = vld [vmem:[%s1 + $0xe4] sm:$0xf]
      %v355 = vld [vmem:[%s1 + $0xe8] sm:$0xf]
      %v356 = vld [vmem:[%s1 + $0xec] sm:$0xf]
      %v357 = vld [vmem:[%s1 + $0xf0] sm:$0xf]
      %v358 = vld [vmem:[%s1 + $0xf4] sm:$0xf]
      %v359 = vld [vmem:[%s1 + $0xf8] sm:$0xf]
      %v360 = vld [vmem:[%s1 + $0xfc] sm:$0xf]
      %v361 = vld [vmem:[%s1 + $0x100] sm:$0xf]
      %v362 = vld [vmem:[%s1 + $0x104] sm:$0xf]
      %v363 = vld [vmem:[%s1 + $0x108] sm:$0xf]
      %v364 = vld [vmem:[%s1 + $0x10c] sm:$0xf]
      %v365 = vld [vmem:[%s1 + $0x110] sm:$0xf]
      %v366 = vld [vmem:[%s1 + $0x114] sm:$0xf]
      %v367 = vld [vmem:[%s1 + $0x118] sm:$0xf]
      %v368 = vld [vmem:[%s1 + $0x11c] sm:$0xf]
      %v369 = vld [vmem:[%s1 + $0x120] sm:$0xf]
      %v370 = vld [vmem:[%s1 + $0x124] sm:$0xf]
      %v371 = vld [vmem:[%s1 + $0x128] sm:$0xf]
      %v372 = vld [vmem:[%s1 + $0x12c] sm:$0xf]
      %v373 = vld [vmem:[%s1 + $0x130] sm:$0xf]
      %v374 = vld [vmem:[%s1 + $0x134] sm:$0xf]
      %v375 = vld [vmem:[%s1 + $0x138] sm:$0xf]
      %v376 = vld [vmem:[%s1 + $0x13c] sm:$0xf]
      %v377 = vld [vmem:[%s1 + $0x140] sm:$0xf]
      %v378 = vld [vmem:[%s1 + $0x144] sm:$0xf]
      %v379 = vld [vmem:[%s1 + $0x148] sm:$0xf]
      %v380 = vld [vmem:[%s1 + $0x14c] sm:$0xf]
      %v381 = vld [vmem:[%s1 + $0x150] sm:$0xf]
      %v382 = vld [vmem:[%s1 + $0x154] sm:$0xf]
      %v383 = vld [vmem:[%s1 + $0x158] sm:$0xf]
      %v384 = vld [vmem:[%s1 + $0x15c] sm:$0xf]
      %v385 = vld [vmem:[%s1 + $0x160] sm:$0xf]
      %v386 = vld [vmem:[%s1 + $0x164] sm:$0xf]
      %v387 = vld [vmem:[%s1 + $0x168] sm:$0xf]
      %v388 = vld [vmem:[%s1 + $0x16c] sm:$0xf]
      %v389 = vld [vmem:[%s1 + $0x170] sm:$0xf]
      %v390 = vld [vmem:[%s1 + $0x174] sm:$0xf]
      %v391 = vld [vmem:[%s1 + $0x178] sm:$0xf]
      %v392 = vld [vmem:[%s1 + $0x17c] sm:$0xf]
      %v393 = vld [vmem:[%s1 + $0x180] sm:$0xf]
      %v394 = vld [vmem:[%s1 + $0x184] sm:$0xf]
      %v395 = vld [vmem:[%s1 + $0x188] sm:$0xf]
      %v396 = vld [vmem:[%s1 + $0x18c] sm:$0xf]
      %v397 = vld [vmem:[%s1 + $0x190] sm:$0xf]
      %v398 = vld [vmem:[%s1 + $0x194] sm:$0xf]
      %v399 = vld [vmem:[%s1 + $0x198] sm:$0xf]
      %v400 = vld [vmem:[%s1 + $0x19c] sm:$0xf]
      %v401 = vld [vmem:[%s1 + $0x1a0] sm:$0xf]
      %v402 = vld [vmem:[%s1 + $0x1a4] sm:$0xf]
      %v403 = vld [vmem:[%s1 + $0x1a8] sm:$0xf]
      %v404 = vld [vmem:[%s1 + $0x1ac] sm:$0xf]
      %v405 = vld [vmem:[%s1 + $0x1b0] sm:$0xf]
      %v406 = vld [vmem:[%s1 + $0x1b4] sm:$0xf]
      %v407 = vld [vmem:[%s1 + $0x1b8] sm:$0xf]
      %v408 = vld [vmem:[%s1 + $0x1bc] sm:$0xf]
      %v409 = vld [vmem:[%s1 + $0x1c0] sm:$0xf]
      %v410 = vld [vmem:[%s1 + $0x1c4] sm:$0xf]
      %v411 = vld [vmem:[%s1 + $0x1c8] sm:$0xf]
      %v412 = vld [vmem:[%s1 + $0x1cc] sm:$0xf]
      %v413 = vld [vmem:[%s1 + $0x1d0] sm:$0xf]
      %v414 = vld [vmem:[%s1 + $0x1d4] sm:$0xf]
      %v415 = vld [vmem:[%s1 + $0x1d8] sm:$0xf]
      %v416 = vld [vmem:[%s1 + $0x1dc] sm:$0xf]
      %v417 = vld [vmem:[%s1 + $0x1e0] sm:$0xf]
      %v418 = vld [vmem:[%s1 + $0x1e4] sm:$0xf]
      %v419 = vld [vmem:[%s1 + $0x1e8] sm:$0xf]
      %v420 = vld [vmem:[%s1 + $0x1ec] sm:$0xf]
      %v421 = vld [vmem:[%s1 + $0x1f0] sm:$0xf]
      %v422 = vld [vmem:[%s1 + $0x1f4] sm:$0xf]
      %v423 = vld [vmem:[%s1 + $0x1f8] sm:$0xf]
      %v424 = vld [vmem:[%s1 + $0x1fc] sm:$0xf]
      %v425 = vld [vmem:[%s1 + $0x200] sm:$0xf]
      %v426 = vld [vmem:[%s1 + $0x204] sm:$0xf]
      %v427 = vld [vmem:[%s1 + $0x208] sm:$0xf]
      %v428 = vld [vmem:[%s1 + $0x20c] sm:$0xf]
      %v429 = vld [vmem:[%s1 + $0x210] sm:$0xf]
      %v430 = vld [vmem:[%s1 + $0x214] sm:$0xf]
      %v431 = vld [vmem:[%s1 + $0x218] sm:$0xf]
      %v432 = vld [vmem:[%s1 + $0x21c] sm:$0xf]
      %v433 = vld [vmem:[%s1 + $0x220] sm:$0xf]
      %v434 = vld [vmem:[%s1 + $0x224] sm:$0xf]
      %v435 = vld [vmem:[%s1 + $0x228] sm:$0xf]
      %v436 = vld [vmem:[%s1 + $0x22c] sm:$0xf]
      %v437 = vld [vmem:[%s1 + $0x230] sm:$0xf]
      %v438 = vld [vmem:[%s1 + $0x234] sm:$0xf]
      %v439 = vld [vmem:[%s1 + $0x238] sm:$0xf]
      %v440 = vld [vmem:[%s1 + $0x23c] sm:$0xf]
      %v441 = vld [vmem:[%s1 + $0x240] sm:$0xf]
      %v442 = vld [vmem:[%s1 + $0x244] sm:$0xf]
      %v443 = vld [vmem:[%s1 + $0x248] sm:$0xf]
      %v444 = vld [vmem:[%s1 + $0x24c] sm:$0xf]
      %v445 = vld [vmem:[%s1 + $0x250] sm:$0xf]
      %v446 = vld [vmem:[%s1 + $0x254] sm:$0xf]
      %v447 = vld [vmem:[%s1 + $0x258] sm:$0xf]
      %v448 = vld [vmem:[%s1 + $0x25c] sm:$0xf]
      %v449 = vld [vmem:[%s1 + $0x260] sm:$0xf]
      %v450 = vld [vmem:[%s1 + $0x264] sm:$0xf]
      %v451 = vld [vmem:[%s1 + $0x268] sm:$0xf]
      %v452 = vld [vmem:[%s1 + $0x26c] sm:$0xf]
      %v453 = vld [vmem:[%s1 + $0x270] sm:$0xf]
      %v454 = vld [vmem:[%s1 + $0x274] sm:$0xf]
      %v455 = vld [vmem:[%s1 + $0x278] sm:$0xf]
      %v456 = vld [vmem:[%s1 + $0x27c] sm:$0xf]
      %v457 = vld [vmem:[%s1 + $0x280] sm:$0xf]
      %v458 = vld [vmem:[%s1 + $0x284] sm:$0xf]
      %v459 = vld [vmem:[%s1 + $0x288] sm:$0xf]
      %v460 = vld [vmem:[%s1 + $0x28c] sm:$0xf]
      %v461 = vld [vmem:[%s1 + $0x290] sm:$0xf]
      %v462 = vld [vmem:[%s1 + $0x294] sm:$0xf]
      %v463 = vld [vmem:[%s1 + $0x298] sm:$0xf]
      %v464 = vld [vmem:[%s1 + $0x29c] sm:$0xf]
      %v465 = vld [vmem:[%s1 + $0x2a0] sm:$0xf]
      %v466 = vld [vmem:[%s1 + $0x2a4] sm:$0xf]
      %v467 = vld [vmem:[%s1 + $0x2a8] sm:$0xf]
      %v468 = vld [vmem:[%s1 + $0x2ac] sm:$0xf]
      %v469 = vld [vmem:[%s1 + $0x2b0] sm:$0xf]
      %v470 = vld [vmem:[%s1 + $0x2b4] sm:$0xf]
      %v471 = vld [vmem:[%s1 + $0x2b8] sm:$0xf]
      %v472 = vld [vmem:[%s1 + $0x2bc] sm:$0xf]
      %v473 = vld [vmem:[%s1 + $0x2c0] sm:$0xf]
      %v474 = vld [vmem:[%s1 + $0x2c4] sm:$0xf]
      %v475 = vld [vmem:[%s1 + $0x2c8] sm:$0xf]
      %v476 = vld [vmem:[%s1 + $0x2cc] sm:$0xf]
      %v477 = vld [vmem:[%s1 + $0x2d0] sm:$0xf]
      %v478 = vld [vmem:[%s1 + $0x2d4] sm:$0xf]
      %v479 = vld [vmem:[%s1 + $0x2d8] sm:$0xf]
      %v480 = vld [vmem:[%s1 + $0x2dc] sm:$0xf]
      %v481 = vld [vmem:[%s1 + $0x2e0] sm:$0xf]
      %v482 = vld [vmem:[%s1 + $0x2e4] sm:$0xf]
      %v483 = vld [vmem:[%s1 + $0x2e8] sm:$0xf]
      %v484 = vld [vmem:[%s1 + $0x2ec] sm:$0xf]
      %v485 = vld [vmem:[%s1 + $0x2f0] sm:$0xf]
      %v486 = vld [vmem:[%s1 + $0x2f4] sm:$0xf]
      %v487 = vld [vmem:[%s1 + $0x2f8] sm:$0xf]
      %v488 = vld [vmem:[%s1 + $0x2fc] sm:$0xf]
      %v489 = vld [vmem:[%s1 + $0x300] sm:$0xf]
      %v490 = vld [vmem:[%s1 + $0x304] sm:$0xf]
      %v491 = vld [vmem:[%s1 + $0x308] sm:$0xf]
      %v492 = vld [vmem:[%s1 + $0x30c] sm:$0xf]
      %v493 = vld [vmem:[%s1 + $0x310] sm:$0xf]
      %v494 = vld [vmem:[%s1 + $0x314] sm:$0xf]
      %v495 = vld [vmem:[%s1 + $0x318] sm:$0xf]
      %v496 = vld [vmem:[%s1 + $0x31c] sm:$0xf]
      %v497 = vld [vmem:[%s1 + $0x320] sm:$0xf]
      %v498 = vld [vmem:[%s1 + $0x324] sm:$0xf]
      %v499 = vld [vmem:[%s1 + $0x328] sm:$0xf]
      %v500 = vld [vmem:[%s1 + $0x32c] sm:$0xf]
      %v501 = vld [vmem:[%s1 + $0x330] sm:$0xf]
      %v502 = vld [vmem:[%s1 + $0x334] sm:$0xf]
      %v503 = vld [vmem:[%s1 + $0x338] sm:$0xf]
      %v504 = vld [vmem:[%s1 + $0x33c] sm:$0xf]
      %v505 = vld [vmem:[%s1 + $0x340] sm:$0xf]
      %v506 = vld [vmem:[%s1 + $0x344] sm:$0xf]
      %v507 = vld [vmem:[%s1 + $0x348] sm:$0xf]
      %v508 = vld [vmem:[%s1 + $0x34c] sm:$0xf]
      %v509 = vld [vmem:[%s1 + $0x350] sm:$0xf]
      %v510 = vld [vmem:[%s1 + $0x354] sm:$0xf]
      %v511 = vld [vmem:[%s1 + $0x358] sm:$0xf]
      %v512 = vld [vmem:[%s1 + $0x35c] sm:$0xf]
      %v513 = vld [vmem:[%s1 + $0x360] sm:$0xf]
      %v514 = vld [vmem:[%s1 + $0x364] sm:$0xf]
      %v515 = vld [vmem:[%s1 + $0x368] sm:$0xf]
      %v516 = vld [vmem:[%s1 + $0x36c] sm:$0xf]
      %v517 = vld [vmem:[%s1 + $0x370] sm:$0xf]
      %v518 = vld [vmem:[%s1 + $0x374] sm:$0xf]
      %v519 = vld [vmem:[%s1 + $0x378] sm:$0xf]
      %v520 = vld [vmem:[%s1 + $0x37c] sm:$0xf]
      %v521 = vld [vmem:[%s1 + $0x380] sm:$0xf]
      %v522 = vld [vmem:[%s1 + $0x384] sm:$0xf]
      %v523 = vld [vmem:[%s1 + $0x388] sm:$0xf]
      %v524 = vld [vmem:[%s1 + $0x38c] sm:$0xf]
      %v525 = vld [vmem:[%s1 + $0x390] sm:$0xf]
      %v526 = vld [vmem:[%s1 + $0x394] sm:$0xf]
      %v527 = vld [vmem:[%s1 + $0x398] sm:$0xf]
      %v528 = vld [vmem:[%s1 + $0x39c] sm:$0xf]
      %v529 = vld [vmem:[%s1 + $0x3a0] sm:$0xf]
      %v530 = vld [vmem:[%s1 + $0x3a4] sm:$0xf]
      %v531 = vld [vmem:[%s1 + $0x3a8] sm:$0xf]
      %v532 = vld [vmem:[%s1 + $0x3ac] sm:$0xf]
      %v533 = vld [vmem:[%s1 + $0x3b0] sm:$0xf]
      %v534 = vld [vmem:[%s1 + $0x3b4] sm:$0xf]
      %v535 = vld [vmem:[%s1 + $0x3b8] sm:$0xf]
      %v536 = vld [vmem:[%s1 + $0x3bc] sm:$0xf]
      %v537 = vld [vmem:[%s1 + $0x3c0] sm:$0xf]
      %v538 = vld [vmem:[%s1 + $0x3c4] sm:$0xf]
      %v539 = vld [vmem:[%s1 + $0x3c8] sm:$0xf]
      %v540 = vld [vmem:[%s1 + $0x3cc] sm:$0xf]
      %v541 = vld [vmem:[%s1 + $0x3d0] sm:$0xf]
      %v542 = vld [vmem:[%s1 + $0x3d4] sm:$0xf]
      %v543 = vld [vmem:[%s1 + $0x3d8] sm:$0xf]
      %v544 = vld [vmem:[%s1 + $0x3dc] sm:$0xf]
      %v545 = vld [vmem:[%s1 + $0x3e0] sm:$0xf]
      %v546 = vld [vmem:[%s1 + $0x3e4] sm:$0xf]
      %v547 = vld [vmem:[%s1 + $0x3e8] sm:$0xf]
      %v548 = vld [vmem:[%s1 + $0x3ec] sm:$0xf]
      %v549 = vld [vmem:[%s1 + $0x3f0] sm:$0xf]
      %v550 = vld [vmem:[%s1 + $0x3f4] sm:$0xf]
      %v551 = vld [vmem:[%s1 + $0x3f8] sm:$0xf]
      %v552 = vld [vmem:[%s1 + $0x3fc] sm:$0xf]
      %v553 = vld [vmem:[%s1 + $0x400] sm:$0xf]
      %v554 = vld [vmem:[%s1 + $0x404] sm:$0xf]
      %v555 = vld [vmem:[%s1 + $0x408] sm:$0xf]
      %v556 = vld [vmem:[%s1 + $0x40c] sm:$0xf]
      %v557 = vld [vmem:[%s1 + $0x410] sm:$0xf]
      %v558 = vld [vmem:[%s1 + $0x414] sm:$0xf]
      %v559 = vld [vmem:[%s1 + $0x418] sm:$0xf]
      %v560 = vld [vmem:[%s1 + $0x41c] sm:$0xf]
      %v561 = vld [vmem:[%s1 + $0x420] sm:$0xf]
      %v562 = vld [vmem:[%s1 + $0x424] sm:$0xf]
      %v563 = vld [vmem:[%s1 + $0x428] sm:$0xf]
      %v564 = vld [vmem:[%s1 + $0x42c] sm:$0xf]
      %v565 = vld [vmem:[%s1 + $0x430] sm:$0xf]
      %v566 = vld [vmem:[%s1 + $0x434] sm:$0xf]
      %v567 = vld [vmem:[%s1 + $0x438] sm:$0xf]
      %v568 = vld [vmem:[%s1 + $0x43c] sm:$0xf]
      %v569 = vld [vmem:[%s1 + $0x440] sm:$0xf]
      %v570 = vld [vmem:[%s1 + $0x444] sm:$0xf]
      %v571 = vld [vmem:[%s1 + $0x448] sm:$0xf]
      %v572 = vld [vmem:[%s1 + $0x44c] sm:$0xf]
      %v573 = vld [vmem:[%s1 + $0x450] sm:$0xf]
      %v574 = vld [vmem:[%s1 + $0x454] sm:$0xf]
      %v575 = vld [vmem:[%s1 + $0x458] sm:$0xf]
      %v576 = vld [vmem:[%s1 + $0x45c] sm:$0xf]
      %v577 = vld [vmem:[%s1 + $0x460] sm:$0xf]
      %v578 = vld [vmem:[%s1 + $0x464] sm:$0xf]
      %v579 = vld [vmem:[%s1 + $0x468] sm:$0xf]
      %v580 = vld [vmem:[%s1 + $0x46c] sm:$0xf]
      %v581 = vld [vmem:[%s1 + $0x470] sm:$0xf]
      %v582 = vld [vmem:[%s1 + $0x474] sm:$0xf]
      %v583 = vld [vmem:[%s1 + $0x478] sm:$0xf]
      %v584 = vld [vmem:[%s1 + $0x47c] sm:$0xf]
      %v585 = vld [vmem:[%s1 + $0x480] sm:$0xf]
      %v586 = vld [vmem:[%s1 + $0x484] sm:$0xf]
      %v587 = vld [vmem:[%s1 + $0x488] sm:$0xf]
      %v588 = vld [vmem:[%s1 + $0x48c] sm:$0xf]
      %v589 = vld [vmem:[%s1 + $0x490] sm:$0xf]
      %v590 = vld [vmem:[%s1 + $0x494] sm:$0xf]
      %v591 = vld [vmem:[%s1 + $0x498] sm:$0xf]
      %v592 = vld [vmem:[%s1 + $0x49c] sm:$0xf]
      %v593 = vld [vmem:[%s1 + $0x4a0] sm:$0xf]
      %v594 = vld [vmem:[%s1 + $0x4a4] sm:$0xf]
      %v595 = vld [vmem:[%s1 + $0x4a8] sm:$0xf]
      %v596 = vld [vmem:[%s1 + $0x4ac] sm:$0xf]
      %v597 = vld [vmem:[%s1 + $0x4b0] sm:$0xf]
      %v598 = vld [vmem:[%s1 + $0x4b4] sm:$0xf]
      %v599 = vld [vmem:[%s1 + $0x4b8] sm:$0xf]
      %v600 = vld [vmem:[%s1 + $0x4bc] sm:$0xf]
      %v601 = vld [vmem:[%s1 + $0x4c0] sm:$0xf]
      %v602 = vld [vmem:[%s1 + $0x4c4] sm:$0xf]
      %v603 = vld [vmem:[%s1 + $0x4c8] sm:$0xf]
      %v604 = vld [vmem:[%s1 + $0x4cc] sm:$0xf]
      %v605 = vld [vmem:[%s1 + $0x4d0] sm:$0xf]
      %v606 = vld [vmem:[%s1 + $0x4d4] sm:$0xf]
      %v607 = vld [vmem:[%s1 + $0x4d8] sm:$0xf]
      %v608 = vld [vmem:[%s1 + $0x4dc] sm:$0xf]
      %v609 = vld [vmem:[%s1 + $0x4e0] sm:$0xf]
      %v610 = vld [vmem:[%s1 + $0x4e4] sm:$0xf]
      %v611 = vld [vmem:[%s1 + $0x4e8] sm:$0xf]
      %v612 = vld [vmem:[%s1 + $0x4ec] sm:$0xf]
      %v613 = vld [vmem:[%s1 + $0x4f0] sm:$0xf]
      %v614 = vld [vmem:[%s1 + $0x4f4] sm:$0xf]
      %v615 = vld [vmem:[%s1 + $0x4f8] sm:$0xf]
      %v616 = vld [vmem:[%s1 + $0x4fc] sm:$0xf]
      %v617 = vld [vmem:[%s1 + $0x500] sm:$0xf]
      %v618 = vld [vmem:[%s1 + $0x504] sm:$0xf]
      %v619 = vld [vmem:[%s1 + $0x508] sm:$0xf]
      %v620 = vld [vmem:[%s1 + $0x50c] sm:$0xf]
      %v621 = vld [vmem:[%s1 + $0x510] sm:$0xf]
      %v622 = vld [vmem:[%s1 + $0x514] sm:$0xf]
      %v623 = vld [vmem:[%s1 + $0x518] sm:$0xf]
      %v624 = vld [vmem:[%s1 + $0x51c] sm:$0xf]
      %v625 = vld [vmem:[%s1 + $0x520] sm:$0xf]
      %v626 = vld [vmem:[%s1 + $0x524] sm:$0xf]
      %v627 = vld [vmem:[%s1 + $0x528] sm:$0xf]
      %v628 = vld [vmem:[%s1 + $0x52c] sm:$0xf]
      %v629 = vld [vmem:[%s1 + $0x530] sm:$0xf]
      %v630 = vld [vmem:[%s1 + $0x534] sm:$0xf]
      %v631 = vld [vmem:[%s1 + $0x538] sm:$0xf]
      %v632 = vld [vmem:[%s1 + $0x53c] sm:$0xf]
      %v633 = vld [vmem:[%s1 + $0x540] sm:$0xf]
      %v634 = vld [vmem:[%s1 + $0x544] sm:$0xf]
      %v635 = vld [vmem:[%s1 + $0x548] sm:$0xf]
      %v636 = vld [vmem:[%s1 + $0x54c] sm:$0xf]
      %v637 = vld [vmem:[%s1 + $0x550] sm:$0xf]
      %v638 = vld [vmem:[%s1 + $0x554] sm:$0xf]
      %v639 = vld [vmem:[%s1 + $0x558] sm:$0xf]
      %v640 = vld [vmem:[%s1 + $0x55c] sm:$0xf]
      %v641 = vld [vmem:[%s1 + $0x560] sm:$0xf]
      %v642 = vld [vmem:[%s1 + $0x564] sm:$0xf]
      %v643 = vld [vmem:[%s1 + $0x568] sm:$0xf]
      %v644 = vld [vmem:[%s1 + $0x56c] sm:$0xf]
      %v645 = vld [vmem:[%s1 + $0x570] sm:$0xf]
      %v646 = vld [vmem:[%s1 + $0x574] sm:$0xf]
      %v647 = vld [vmem:[%s1 + $0x578] sm:$0xf]
      %v648 = vld [vmem:[%s1 + $0x57c] sm:$0xf]
      %v649 = vld [vmem:[%s1 + $0x580] sm:$0xf]
      %v650 = vld [vmem:[%s1 + $0x584] sm:$0xf]
      %v651 = vld [vmem:[%s1 + $0x588] sm:$0xf]
      %v652 = vld [vmem:[%s1 + $0x58c] sm:$0xf]
      %v653 = vld [vmem:[%s1 + $0x590] sm:$0xf]
      %v654 = vld [vmem:[%s1 + $0x594] sm:$0xf]
      %v655 = vld [vmem:[%s1 + $0x598] sm:$0xf]
      %v656 = vld [vmem:[%s1 + $0x59c] sm:$0xf]
      %v657 = vld [vmem:[%s1 + $0x5a0] sm:$0xf]
      %v658 = vld [vmem:[%s1 + $0x5a4] sm:$0xf]
      %v659 = vld [vmem:[%s1 + $0x5a8] sm:$0xf]
      %v660 = vld [vmem:[%s1 + $0x5ac] sm:$0xf]
      %v661 = vld [vmem:[%s1 + $0x5b0] sm:$0xf]
      %v662 = vld [vmem:[%s1 + $0x5b4] sm:$0xf]
      %v663 = vld [vmem:[%s1 + $0x5b8] sm:$0xf]
      %v664 = vld [vmem:[%s1 + $0x5bc] sm:$0xf]
      %v665 = vld [vmem:[%s1 + $0x5c0] sm:$0xf]
      %v666 = vld [vmem:[%s1 + $0x5c4] sm:$0xf]
      %v667 = vld [vmem:[%s1 + $0x5c8] sm:$0xf]
      %v668 = vld [vmem:[%s1 + $0x5cc] sm:$0xf]
      %v669 = vld [vmem:[%s1 + $0x5d0] sm:$0xf]
      %v670 = vld [vmem:[%s1 + $0x5d4] sm:$0xf]
      %v671 = vld [vmem:[%s1 + $0x5d8] sm:$0xf]
      %v672 = vld [vmem:[%s1 + $0x5dc] sm:$0xf]
      %v673 = vld [vmem:[%s1 + $0x5e0] sm:$0xf]
      %v674 = vld [vmem:[%s1 + $0x5e4] sm:$0xf]
      %v675 = vld [vmem:[%s1 + $0x5e8] sm:$0xf]
      %v676 = vld [vmem:[%s1 + $0x5ec] sm:$0xf]
      %v677 = vld [vmem:[%s1 + $0x5f0] sm:$0xf]
      %v678 = vld [vmem:[%s1 + $0x5f4] sm:$0xf]
      %v679 = vld [vmem:[%s1 + $0x5f8] sm:$0xf]
      %v680 = vld [vmem:[%s1 + $0x5fc] sm:$0xf]
      %v681 = vld [vmem:[%s1 + $0x600] sm:$0xf]
      %v682 = vld [vmem:[%s1 + $0x604] sm:$0xf]
      %v683 = vld [vmem:[%s1 + $0x608] sm:$0xf]
      %v684 = vld [vmem:[%s1 + $0x60c] sm:$0xf]
      %v685 = vld [vmem:[%s1 + $0x610] sm:$0xf]
      %v686 = vld [vmem:[%s1 + $0x614] sm:$0xf]
      %v687 = vld [vmem:[%s1 + $0x618] sm:$0xf]
      %v688 = vld [vmem:[%s1 + $0x61c] sm:$0xf]
      %v689 = vld [vmem:[%s1 + $0x620] sm:$0xf]
      %v690 = vld [vmem:[%s1 + $0x624] sm:$0xf]
      %v691 = vld [vmem:[%s1 + $0x628] sm:$0xf]
      %v692 = vld [vmem:[%s1 + $0x62c] sm:$0xf]
      %v693 = vld [vmem:[%s1 + $0x630] sm:$0xf]
      %v694 = vld [vmem:[%s1 + $0x634] sm:$0xf]
      %v695 = vld [vmem:[%s1 + $0x638] sm:$0xf]
      %v696 = vld [vmem:[%s1 + $0x63c] sm:$0xf]
      %v697 = vld [vmem:[%s1 + $0x640] sm:$0xf]
      %v698 = vld [vmem:[%s1 + $0x644] sm:$0xf]
      %v699 = vld [vmem:[%s1 + $0x648] sm:$0xf]
      %v700 = vld [vmem:[%s1 + $0x64c] sm:$0xf]
      %v701 = vld [vmem:[%s1 + $0x650] sm:$0xf]
      %v702 = vld [vmem:[%s1 + $0x654] sm:$0xf]
      %v703 = vld [vmem:[%s1 + $0x658] sm:$0xf]
      %v704 = vld [vmem:[%s1 + $0x65c] sm:$0xf]
      %v705 = vld [vmem:[%s1 + $0x660] sm:$0xf]
      %v706 = vld [vmem:[%s1 + $0x664] sm:$0xf]
      %v707 = vld [vmem:[%s1 + $0x668] sm:$0xf]
      %v708 = vld [vmem:[%s1 + $0x66c] sm:$0xf]
      %v709 = vld [vmem:[%s1 + $0x670] sm:$0xf]
      %v710 = vld [vmem:[%s1 + $0x674] sm:$0xf]
      %v711 = vld [vmem:[%s1 + $0x678] sm:$0xf]
      %v712 = vld [vmem:[%s1 + $0x67c] sm:$0xf]
      %v713 = vld [vmem:[%s1 + $0x680] sm:$0xf]
      %v714 = vld [vmem:[%s1 + $0x684] sm:$0xf]
      %v715 = vld [vmem:[%s1 + $0x688] sm:$0xf]
      %v716 = vld [vmem:[%s1 + $0x68c] sm:$0xf]
      %v717 = vld [vmem:[%s1 + $0x690] sm:$0xf]
      %v718 = vld [vmem:[%s1 + $0x694] sm:$0xf]
      %v719 = vld [vmem:[%s1 + $0x698] sm:$0xf]
      %v720 = vld [vmem:[%s1 + $0x69c] sm:$0xf]
      %v721 = vld [vmem:[%s1 + $0x6a0] sm:$0xf]
      %v722 = vld [vmem:[%s1 + $0x6a4] sm:$0xf]
      %v723 = vld [vmem:[%s1 + $0x6a8] sm:$0xf]
      %v724 = vld [vmem:[%s1 + $0x6ac] sm:$0xf]
      %v725 = vld [vmem:[%s1 + $0x6b0] sm:$0xf]
      %v726 = vld [vmem:[%s1 + $0x6b4] sm:$0xf]
      %v727 = vld [vmem:[%s1 + $0x6b8] sm:$0xf]
      %v728 = vld [vmem:[%s1 + $0x6bc] sm:$0xf]
      %v729 = vld [vmem:[%s1 + $0x6c0] sm:$0xf]
      %v730 = vld [vmem:[%s1 + $0x6c4] sm:$0xf]
      %v731 = vld [vmem:[%s1 + $0x6c8] sm:$0xf]
      %v732 = vld [vmem:[%s1 + $0x6cc] sm:$0xf]
      %v733 = vld [vmem:[%s1 + $0x6d0] sm:$0xf]
      %v734 = vld [vmem:[%s1 + $0x6d4] sm:$0xf]
      %v735 = vld [vmem:[%s1 + $0x6d8] sm:$0xf]
      %v736 = vld [vmem:[%s1 + $0x6dc] sm:$0xf]
      %v737 = vld [vmem:[%s1 + $0x6e0] sm:$0xf]
      %v738 = vld [vmem:[%s1 + $0x6e4] sm:$0xf]
      %v739 = vld [vmem:[%s1 + $0x6e8] sm:$0xf]
      %v740 = vld [vmem:[%s1 + $0x6ec] sm:$0xf]
      %v741 = vld [vmem:[%s1 + $0x6f0] sm:$0xf]
      %v742 = vld [vmem:[%s1 + $0x6f4] sm:$0xf]
      %v743 = vld [vmem:[%s1 + $0x6f8] sm:$0xf]
      %v744 = vld [vmem:[%s1 + $0x6fc] sm:$0xf]
      %v745 = vld [vmem:[%s1 + $0x700] sm:$0xf]
      %v746 = vld [vmem:[%s1 + $0x704] sm:$0xf]
      %v747 = vld [vmem:[%s1 + $0x708] sm:$0xf]
      %v748 = vld [vmem:[%s1 + $0x70c] sm:$0xf]
      %v749 = vld [vmem:[%s1 + $0x710] sm:$0xf]
      %v750 = vld [vmem:[%s1 + $0x714] sm:$0xf]
      %v751 = vld [vmem:[%s1 + $0x718] sm:$0xf]
      %v752 = vld [vmem:[%s1 + $0x71c] sm:$0xf]
      %v753 = vld [vmem:[%s1 + $0x720] sm:$0xf]
      %v754 = vld [vmem:[%s1 + $0x724] sm:$0xf]
      %v755 = vld [vmem:[%s1 + $0x728] sm:$0xf]
      %v756 = vld [vmem:[%s1 + $0x72c] sm:$0xf]
      %v757 = vld [vmem:[%s1 + $0x730] sm:$0xf]
      %v758 = vld [vmem:[%s1 + $0x734] sm:$0xf]
      %v759 = vld [vmem:[%s1 + $0x738] sm:$0xf]
      %v760 = vld [vmem:[%s1 + $0x73c] sm:$0xf]
      %v761 = vld [vmem:[%s1 + $0x740] sm:$0xf]
      %v762 = vld [vmem:[%s1 + $0x744] sm:$0xf]
      %v763 = vld [vmem:[%s1 + $0x748] sm:$0xf]
      %v764 = vld [vmem:[%s1 + $0x74c] sm:$0xf]
      %v765 = vld [vmem:[%s1 + $0x750] sm:$0xf]
      %v766 = vld [vmem:[%s1 + $0x754] sm:$0xf]
      %v767 = vld [vmem:[%s1 + $0x758] sm:$0xf]
      %v768 = vld [vmem:[%s1 + $0x75c] sm:$0xf]
      %v769 = vld [vmem:[%s1 + $0x760] sm:$0xf]
      %v770 = vld [vmem:[%s1 + $0x764] sm:$0xf]
      %v771 = vld [vmem:[%s1 + $0x768] sm:$0xf]
      %v772 = vld [vmem:[%s1 + $0x76c] sm:$0xf]
      %v773 = vld [vmem:[%s1 + $0x770] sm:$0xf]
      %v774 = vld [vmem:[%s1 + $0x774] sm:$0xf]
      %v775 = vld [vmem:[%s1 + $0x778] sm:$0xf]
      %v776 = vld [vmem:[%s1 + $0x77c] sm:$0xf]
      %v777 = vld [vmem:[%s1 + $0x780] sm:$0xf]
      %v778 = vld [vmem:[%s1 + $0x784] sm:$0xf]
      %v779 = vld [vmem:[%s1 + $0x788] sm:$0xf]
      %v780 = vld [vmem:[%s1 + $0x78c] sm:$0xf]
      %v781 = vld [vmem:[%s1 + $0x790] sm:$0xf]
      %v782 = vld [vmem:[%s1 + $0x794] sm:$0xf]
      %v783 = vld [vmem:[%s1 + $0x798] sm:$0xf]
      %v784 = vld [vmem:[%s1 + $0x79c] sm:$0xf]
      %v785 = vld [vmem:[%s1 + $0x7a0] sm:$0xf]
      %v786 = vld [vmem:[%s1 + $0x7a4] sm:$0xf]
      %v787 = vld [vmem:[%s1 + $0x7a8] sm:$0xf]
      %v788 = vld [vmem:[%s1 + $0x7ac] sm:$0xf]
      %v789 = vld [vmem:[%s1 + $0x7b0] sm:$0xf]
      %v790 = vld [vmem:[%s1 + $0x7b4] sm:$0xf]
      %v791 = vld [vmem:[%s1 + $0x7b8] sm:$0xf]
      %v792 = vld [vmem:[%s1 + $0x7bc] sm:$0xf]
      %v793 = vld [vmem:[%s1 + $0x7c0] sm:$0xf]
      %v794 = vld [vmem:[%s1 + $0x7c4] sm:$0xf]
      %v795 = vld [vmem:[%s1 + $0x7c8] sm:$0xf]
      %v796 = vld [vmem:[%s1 + $0x7cc] sm:$0xf]
      %v797 = vld [vmem:[%s1 + $0x7d0] sm:$0xf]
      %v798 = vld [vmem:[%s1 + $0x7d4] sm:$0xf]
      %v799 = vld [vmem:[%s1 + $0x7d8] sm:$0xf]
      %v800 = vld [vmem:[%s1 + $0x7dc] sm:$0xf]
      %v801 = vld [vmem:[%s1 + $0x7e0] sm:$0xf]
      %v802 = vld [vmem:[%s1 + $0x7e4] sm:$0xf]
      %v803 = vld [vmem:[%s1 + $0x7e8] sm:$0xf]
      %v804 = vld [vmem:[%s1 + $0x7ec] sm:$0xf]
      %v805 = vld [vmem:[%s1 + $0x7f0] sm:$0xf]
      %v806 = vld [vmem:[%s1 + $0x7f4] sm:$0xf]
      %v807 = vld [vmem:[%s1 + $0x7f8] sm:$0xf]
      %v808 = vld [vmem:[%s1 + $0x7fc] sm:$0xf]
      %v809 = vld [vmem:[%s1 + $0x800] sm:$0xf]
      %v810 = vld [vmem:[%s1 + $0x804] sm:$0xf]
      %v811 = vld [vmem:[%s1 + $0x808] sm:$0xf]
      %v812 = vld [vmem:[%s1 + $0x80c] sm:$0xf]
      %v813 = vld [vmem:[%s1 + $0x810] sm:$0xf]
      %v814 = vld [vmem:[%s1 + $0x814] sm:$0xf]
      %v815 = vld [vmem:[%s1 + $0x818] sm:$0xf]
      %v816 = vld [vmem:[%s1 + $0x81c] sm:$0xf]
      %v817 = vld [vmem:[%s1 + $0x820] sm:$0xf]
      %v818 = vld [vmem:[%s1 + $0x824] sm:$0xf]
      %v819 = vld [vmem:[%s1 + $0x828] sm:$0xf]
      %v820 = vld [vmem:[%s1 + $0x82c] sm:$0xf]
      %v821 = vld [vmem:[%s1 + $0x830] sm:$0xf]
      %v822 = vld [vmem:[%s1 + $0x834] sm:$0xf]
      %v823 = vld [vmem:[%s1 + $0x838] sm:$0xf]
      %v824 = vld [vmem:[%s1 + $0x83c] sm:$0xf]
      %v825 = vld [vmem:[%s1 + $0x840] sm:$0xf]
      %v826 = vld [vmem:[%s1 + $0x844] sm:$0xf]
      %v827 = vld [vmem:[%s1 + $0x848] sm:$0xf]
      %v828 = vld [vmem:[%s1 + $0x84c] sm:$0xf]
      %v829 = vld [vmem:[%s1 + $0x850] sm:$0xf]
      %v830 = vld [vmem:[%s1 + $0x854] sm:$0xf]
      %v831 = vld [vmem:[%s1 + $0x858] sm:$0xf]
      %v832 = vld [vmem:[%s1 + $0x85c] sm:$0xf]
      %v833 = vld [vmem:[%s1 + $0x860] sm:$0xf]
      %v834 = vld [vmem:[%s1 + $0x864] sm:$0xf]
      %v835 = vld [vmem:[%s1 + $0x868] sm:$0xf]
      %v836 = vld [vmem:[%s1 + $0x86c] sm:$0xf]
      %v837 = vld [vmem:[%s1 + $0x870] sm:$0xf]
      %v838 = vld [vmem:[%s1 + $0x874] sm:$0xf]
      %v839 = vld [vmem:[%s1 + $0x878] sm:$0xf]
      %v840 = vld [vmem:[%s1 + $0x87c] sm:$0xf]
      %v841 = vld [vmem:[%s1 + $0x880] sm:$0xf]
      %v842 = vld [vmem:[%s1 + $0x884] sm:$0xf]
      %v843 = vld [vmem:[%s1 + $0x888] sm:$0xf]
      %v844 = vld [vmem:[%s1 + $0x88c] sm:$0xf]
      %v845 = vld [vmem:[%s1 + $0x890] sm:$0xf]
      %v846 = vld [vmem:[%s1 + $0x894] sm:$0xf]
      %v847 = vld [vmem:[%s1 + $0x898] sm:$0xf]
      %v848 = vld [vmem:[%s1 + $0x89c] sm:$0xf]
      %v849 = vld [vmem:[%s1 + $0x8a0] sm:$0xf]
      %v850 = vld [vmem:[%s1 + $0x8a4] sm:$0xf]
      %v851 = vld [vmem:[%s1 + $0x8a8] sm:$0xf]
      %v852 = vld [vmem:[%s1 + $0x8ac] sm:$0xf]
      %v853 = vld [vmem:[%s1 + $0x8b0] sm:$0xf]
      %v854 = vld [vmem:[%s1 + $0x8b4] sm:$0xf]
      %v855 = vld [vmem:[%s1 + $0x8b8] sm:$0xf]
      %v856 = vld [vmem:[%s1 + $0x8bc] sm:$0xf]
      %v857 = vld [vmem:[%s1 + $0x8c0] sm:$0xf]
      %v858 = vld [vmem:[%s1 + $0x8c4] sm:$0xf]
      %v859 = vld [vmem:[%s1 + $0x8c8] sm:$0xf]
      %v860 = vld [vmem:[%s1 + $0x8cc] sm:$0xf]
      %v861 = vld [vmem:[%s1 + $0x8d0] sm:$0xf]
      %v862 = vld [vmem:[%s1 + $0x8d4] sm:$0xf]
      %v863 = vld [vmem:[%s1 + $0x8d8] sm:$0xf]
      %v864 = vld [vmem:[%s1 + $0x8dc] sm:$0xf]
      %v865 = vld [vmem:[%s1 + $0x8e0] sm:$0xf]
      %v866 = vld [vmem:[%s1 + $0x8e4] sm:$0xf]
      %v867 = vld [vmem:[%s1 + $0x8e8] sm:$0xf]
      %v868 = vld [vmem:[%s1 + $0x8ec] sm:$0xf]
      %v869 = vld [vmem:[%s1 + $0x8f0] sm:$0xf]
      %v870 = vld [vmem:[%s1 + $0x8f4] sm:$0xf]
      %v871 = vld [vmem:[%s1 + $0x8f8] sm:$0xf]
      %v872 = vld [vmem:[%s1 + $0x8fc] sm:$0xf]
      %v873 = vld [vmem:[%s1 + $0x900] sm:$0xf]
      %v874 = vld [vmem:[%s1 + $0x904] sm:$0xf]
      %v875 = vld [vmem:[%s1 + $0x908] sm:$0xf]
      %v876 = vld [vmem:[%s1 + $0x90c] sm:$0xf]
      %v877 = vld [vmem:[%s1 + $0x910] sm:$0xf]
      %v878 = vld [vmem:[%s1 + $0x914] sm:$0xf]
      %v879 = vld [vmem:[%s1 + $0x918] sm:$0xf]
      %v880 = vld [vmem:[%s1 + $0x91c] sm:$0xf]
      %v881 = vld [vmem:[%s1 + $0x920] sm:$0xf]
      %v882 = vld [vmem:[%s1 + $0x924] sm:$0xf]
      %v883 = vld [vmem:[%s1 + $0x928] sm:$0xf]
      %v884 = vld [vmem:[%s1 + $0x92c] sm:$0xf]
      %v885 = vld [vmem:[%s1 + $0x930] sm:$0xf]
      %v886 = vld [vmem:[%s1 + $0x934] sm:$0xf]
      %v887 = vld [vmem:[%s1 + $0x938] sm:$0xf]
      %v888 = vld [vmem:[%s1 + $0x93c] sm:$0xf]
      %v889 = vld [vmem:[%s1 + $0x940] sm:$0xf]
      %v890 = vld [vmem:[%s1 + $0x944] sm:$0xf]
      %v891 = vld [vmem:[%s1 + $0x948] sm:$0xf]
      %v892 = vld [vmem:[%s1 + $0x94c] sm:$0xf]
      %v893 = vld [vmem:[%s1 + $0x950] sm:$0xf]
      %v894 = vld [vmem:[%s1 + $0x954] sm:$0xf]
      %v895 = vld [vmem:[%s1 + $0x958] sm:$0xf]
      %v896 = vld [vmem:[%s1 + $0x95c] sm:$0xf]
      %v897 = vld [vmem:[%s1 + $0x960] sm:$0xf]
      %v898 = vld [vmem:[%s1 + $0x964] sm:$0xf]
      %v899 = vld [vmem:[%s1 + $0x968] sm:$0xf]
      %v900 = vld [vmem:[%s1 + $0x96c] sm:$0xf]
      %v901 = vld [vmem:[%s1 + $0x970] sm:$0xf]
      %v902 = vld [vmem:[%s1 + $0x974] sm:$0xf]
      %v903 = vld [vmem:[%s1 + $0x978] sm:$0xf]
      %v904 = vld [vmem:[%s1 + $0x97c] sm:$0xf]
      %v905 = vld [vmem:[%s1 + $0x980] sm:$0xf]
      %v906 = vld [vmem:[%s1 + $0x984] sm:$0xf]
      %v907 = vld [vmem:[%s1 + $0x988] sm:$0xf]
      %v908 = vld [vmem:[%s1 + $0x98c] sm:$0xf]
      %v909 = vld [vmem:[%s1 + $0x990] sm:$0xf]
      %v910 = vld [vmem:[%s1 + $0x994] sm:$0xf]
      %v911 = vld [vmem:[%s1 + $0x998] sm:$0xf]
      %v912 = vld [vmem:[%s1 + $0x99c] sm:$0xf]
      %v913 = vld [vmem:[%s1 + $0x9a0] sm:$0xf]
      %v914 = vld [vmem:[%s1 + $0x9a4] sm:$0xf]
      %v915 = vld [vmem:[%s1 + $0x9a8] sm:$0xf]
      %v916 = vld [vmem:[%s1 + $0x9ac] sm:$0xf]
      %v917 = vld [vmem:[%s1 + $0x9b0] sm:$0xf]
      %v918 = vld [vmem:[%s1 + $0x9b4] sm:$0xf]
      %v919 = vld [vmem:[%s1 + $0x9b8] sm:$0xf]
      %v920 = vld [vmem:[%s1 + $0x9bc] sm:$0xf]
      %v921 = vld [vmem:[%s1 + $0x9c0] sm:$0xf]
      %v922 = vld [vmem:[%s1 + $0x9c4] sm:$0xf]
      %v923 = vld [vmem:[%s1 + $0x9c8] sm:$0xf]
      %v924 = vld [vmem:[%s1 + $0x9cc] sm:$0xf]
      %v925 = vld [vmem:[%s1 + $0x9d0] sm:$0xf]
      %v926 = vld [vmem:[%s1 + $0x9d4] sm:$0xf]
      %v927 = vld [vmem:[%s1 + $0x9d8] sm:$0xf]
      %v928 = vld [vmem:[%s1 + $0x9dc] sm:$0xf]
      %v929 = vld [vmem:[%s1 + $0x9e0] sm:$0xf]
      %v930 = vld [vmem:[%s1 + $0x9e4] sm:$0xf]
      %v931 = vld [vmem:[%s1 + $0x9e8] sm:$0xf]
      %v932 = vld [vmem:[%s1 + $0x9ec] sm:$0xf]
      %v933 = vld [vmem:[%s1 + $0x9f0] sm:$0xf]
      %v934 = vld [vmem:[%s1 + $0x9f4] sm:$0xf]
      %v935 = vld [vmem:[%s1 + $0x9f8] sm:$0xf]
      %v936 = vld [vmem:[%s1 + $0x9fc] sm:$0xf]
      %v937 = vld [vmem:[%s1 + $0xa00] sm:$0xf]
      %v938 = vld [vmem:[%s1 + $0xa04] sm:$0xf]
      %v939 = vld [vmem:[%s1 + $0xa08] sm:$0xf]
      %v940 = vld [vmem:[%s1 + $0xa0c] sm:$0xf]
      %v941 = vld [vmem:[%s1 + $0xa10] sm:$0xf]
      %v942 = vld [vmem:[%s1 + $0xa14] sm:$0xf]
      %v943 = vld [vmem:[%s1 + $0xa18] sm:$0xf]
      %v944 = vld [vmem:[%s1 + $0xa1c] sm:$0xf]
      %v945 = vld [vmem:[%s1 + $0xa20] sm:$0xf]
      %v946 = vld [vmem:[%s1 + $0xa24] sm:$0xf]
      %v947 = vld [vmem:[%s1 + $0xa28] sm:$0xf]
      %v948 = vld [vmem:[%s1 + $0xa2c] sm:$0xf]
      %v949 = vld [vmem:[%s1 + $0xa30] sm:$0xf]
      %v950 = vld [vmem:[%s1 + $0xa34] sm:$0xf]
      %v951 = vld [vmem:[%s1 + $0xa38] sm:$0xf]
      %v952 = vld [vmem:[%s1 + $0xa3c] sm:$0xf]
      %v953 = vld [vmem:[%s1 + $0xa40] sm:$0xf]
      %v954 = vld [vmem:[%s1 + $0xa44] sm:$0xf]
      %v955 = vld [vmem:[%s1 + $0xa48] sm:$0xf]
      %v956 = vld [vmem:[%s1 + $0xa4c] sm:$0xf]
      %v957 = vld [vmem:[%s1 + $0xa50] sm:$0xf]
      %v958 = vld [vmem:[%s1 + $0xa54] sm:$0xf]
      %v959 = vld [vmem:[%s1 + $0xa58] sm:$0xf]
      %v960 = vld [vmem:[%s1 + $0xa5c] sm:$0xf]
      %v961 = vld [vmem:[%s1 + $0xa60] sm:$0xf]
      %v962 = vld [vmem:[%s1 + $0xa64] sm:$0xf]
      %v963 = vld [vmem:[%s1 + $0xa68] sm:$0xf]
      %v964 = vld [vmem:[%s1 + $0xa6c] sm:$0xf]
      %v965 = vld [vmem:[%s1 + $0xa70] sm:$0xf]
      %v966 = vld [vmem:[%s1 + $0xa74] sm:$0xf]
      %v967 = vld [vmem:[%s1 + $0xa78] sm:$0xf]
      %v968 = vld [vmem:[%s1 + $0xa7c] sm:$0xf]
      %v969 = vld [vmem:[%s1 + $0xa80] sm:$0xf]
      %v970 = vld [vmem:[%s1 + $0xa84] sm:$0xf]
      %v971 = vld [vmem:[%s1 + $0xa88] sm:$0xf]
      %v972 = vld [vmem:[%s1 + $0xa8c] sm:$0xf]
      %v973 = vld [vmem:[%s1 + $0xa90] sm:$0xf]
      %v974 = vld [vmem:[%s1 + $0xa94] sm:$0xf]
      %v975 = vld [vmem:[%s1 + $0xa98] sm:$0xf]
      %v976 = vld [vmem:[%s1 + $0xa9c] sm:$0xf]
      %v977 = vld [vmem:[%s1 + $0xaa0] sm:$0xf]
      %v978 = vld [vmem:[%s1 + $0xaa4] sm:$0xf]
      %v979 = vld [vmem:[%s1 + $0xaa8] sm:$0xf]
      %v980 = vld [vmem:[%s1 + $0xaac] sm:$0xf]
      %v981 = vld [vmem:[%s1 + $0xab0] sm:$0xf]
      %v982 = vld [vmem:[%s1 + $0xab4] sm:$0xf]
      %v983 = vld [vmem:[%s1 + $0xab8] sm:$0xf]
      %v984 = vld [vmem:[%s1 + $0xabc] sm:$0xf]
      %v985 = vld [vmem:[%s1 + $0xac0] sm:$0xf]
      %v986 = vld [vmem:[%s1 + $0xac4] sm:$0xf]
      %v987 = vld [vmem:[%s1 + $0xac8] sm:$0xf]
      %v988 = vld [vmem:[%s1 + $0xacc] sm:$0xf]
      %v989 = vld [vmem:[%s1 + $0xad0] sm:$0xf]
      %v990 = vld [vmem:[%s1 + $0xad4] sm:$0xf]
      %v991 = vld [vmem:[%s1 + $0xad8] sm:$0xf]
      %v992 = vld [vmem:[%s1 + $0xadc] sm:$0xf]
      %v993 = vld [vmem:[%s1 + $0xae0] sm:$0xf]
      %v994 = vld [vmem:[%s1 + $0xae4] sm:$0xf]
      %v995 = vld [vmem:[%s1 + $0xae8] sm:$0xf]
      %v996 = vld [vmem:[%s1 + $0xaec] sm:$0xf]
      %v997 = vld [vmem:[%s1 + $0xaf0] sm:$0xf]
      %v998 = vld [vmem:[%s1 + $0xaf4] sm:$0xf]
      %v999 = vld [vmem:[%s1 + $0xaf8] sm:$0xf]
      %v1000 = vld [vmem:[%s1 + $0xafc] sm:$0xf]
      %v1001 = vld [vmem:[%s1 + $0xb00] sm:$0xf]
      %v1002 = vld [vmem:[%s1 + $0xb04] sm:$0xf]
      %v1003 = vld [vmem:[%s1 + $0xb08] sm:$0xf]
      %v1004 = vld [vmem:[%s1 + $0xb0c] sm:$0xf]
      %v1005 = vld [vmem:[%s1 + $0xb10] sm:$0xf]
      %v1006 = vld [vmem:[%s1 + $0xb14] sm:$0xf]
      %v1007 = vld [vmem:[%s1 + $0xb18] sm:$0xf]
      %v1008 = vld [vmem:[%s1 + $0xb1c] sm:$0xf]
      %v1009 = vld [vmem:[%s1 + $0xb20] sm:$0xf]
      %v1010 = vld [vmem:[%s1 + $0xb24] sm:$0xf]
      %v1011 = vld [vmem:[%s1 + $0xb28] sm:$0xf]
      %v1012 = vld [vmem:[%s1 + $0xb2c] sm:$0xf]
      %v1013 = vld [vmem:[%s1 + $0xb30] sm:$0xf]
      %v1014 = vld [vmem:[%s1 + $0xb34] sm:$0xf]
      %v1015 = vld [vmem:[%s1 + $0xb38] sm:$0xf]
      %v1016 = vld [vmem:[%s1 + $0xb3c] sm:$0xf]
      %v1017 = vld [vmem:[%s1 + $0xb40] sm:$0xf]
      %v1018 = vld [vmem:[%s1 + $0xb44] sm:$0xf]
      %v1019 = vld [vmem:[%s1 + $0xb48] sm:$0xf]
      %v1020 = vld [vmem:[%s1 + $0xb4c] sm:$0xf]
      %v1021 = vld [vmem:[%s1 + $0xb50] sm:$0xf]
      %v1022 = vld [vmem:[%s1 + $0xb54] sm:$0xf]
      %v1023 = vld [vmem:[%s1 + $0xb58] sm:$0xf]
      %v1024 = vld [vmem:[%s1 + $0xb5c] sm:$0xf]
      %v1025 = vld [vmem:[%s1 + $0xb60] sm:$0xf]
      %v1026 = vld [vmem:[%s1 + $0xb64] sm:$0xf]
      %v1027 = vld [vmem:[%s1 + $0xb68] sm:$0xf]
      %v1028 = vld [vmem:[%s1 + $0xb6c] sm:$0xf]
      %v1029 = vld [vmem:[%s1 + $0xb70] sm:$0xf]
      %v1030 = vld [vmem:[%s1 + $0xb74] sm:$0xf]
      %v1031 = vld [vmem:[%s1 + $0xb78] sm:$0xf]
      %v1032 = vld [vmem:[%s1 + $0xb7c] sm:$0xf]
      %v1033 = vld [vmem:[%s1 + $0xb80] sm:$0xf]
      %v1034 = vld [vmem:[%s1 + $0xb84] sm:$0xf]
      %v1035 = vld [vmem:[%s1 + $0xb88] sm:$0xf]
      %v1036 = vld [vmem:[%s1 + $0xb8c] sm:$0xf]
      %v1037 = vld [vmem:[%s1 + $0xb90] sm:$0xf]
      %v1038 = vld [vmem:[%s1 + $0xb94] sm:$0xf]
      %v1039 = vld [vmem:[%s1 + $0xb98] sm:$0xf]
      %v1040 = vld [vmem:[%s1 + $0xb9c] sm:$0xf]
      %v1041 = vld [vmem:[%s1 + $0xba0] sm:$0xf]
      %v1042 = vld [vmem:[%s1 + $0xba4] sm:$0xf]
      %v1043 = vld [vmem:[%s1 + $0xba8] sm:$0xf]
      %v1044 = vld [vmem:[%s1 + $0xbac] sm:$0xf]
      %v1045 = vld [vmem:[%s1 + $0xbb0] sm:$0xf]
      %v1046 = vld [vmem:[%s1 + $0xbb4] sm:$0xf]
      %v1047 = vld [vmem:[%s1 + $0xbb8] sm:$0xf]
      %v1048 = vld [vmem:[%s1 + $0xbbc] sm:$0xf]
      %v1049 = vld [vmem:[%s1 + $0xbc0] sm:$0xf]
      %v1050 = vld [vmem:[%s1 + $0xbc4] sm:$0xf]
      %v1051 = vld [vmem:[%s1 + $0xbc8] sm:$0xf]
      %v1052 = vld [vmem:[%s1 + $0xbcc] sm:$0xf]
      %v1053 = vld [vmem:[%s1 + $0xbd0] sm:$0xf]
      %v1054 = vld [vmem:[%s1 + $0xbd4] sm:$0xf]
      %v1055 = vld [vmem:[%s1 + $0xbd8] sm:$0xf]
      %v1056 = vld [vmem:[%s1 + $0xbdc] sm:$0xf]
      %v1057 = vld [vmem:[%s1 + $0xbe0] sm:$0xf]
      %v1058 = vld [vmem:[%s1 + $0xbe4] sm:$0xf]
      %v1059 = vld [vmem:[%s1 + $0xbe8] sm:$0xf]
      %v1060 = vld [vmem:[%s1 + $0xbec] sm:$0xf]
      %v1061 = vld [vmem:[%s1 + $0xbf0] sm:$0xf]
      %v1062 = vld [vmem:[%s1 + $0xbf4] sm:$0xf]
      %v1063 = vld [vmem:[%s1 + $0xbf8] sm:$0xf]
      %v1064 = vld [vmem:[%s1 + $0xbfc] sm:$0xf]
      %v1065 = vld [vmem:[%s1 + $0xc00] sm:$0xf]
      %v1066 = vld [vmem:[%s1 + $0xc04] sm:$0xf]
      %v1067 = vld [vmem:[%s1 + $0xc08] sm:$0xf]
      %v1068 = vld [vmem:[%s1 + $0xc0c] sm:$0xf]
      %v1069 = vld [vmem:[%s1 + $0xc10] sm:$0xf]
      %v1070 = vld [vmem:[%s1 + $0xc14] sm:$0xf]
      %v1071 = vld [vmem:[%s1 + $0xc18] sm:$0xf]
      %v1072 = vld [vmem:[%s1 + $0xc1c] sm:$0xf]
      %v1073 = vld [vmem:[%s1 + $0xc20] sm:$0xf]
      %v1074 = vld [vmem:[%s1 + $0xc24] sm:$0xf]
      %v1075 = vld [vmem:[%s1 + $0xc28] sm:$0xf]
      %v1076 = vld [vmem:[%s1 + $0xc2c] sm:$0xf]
      %v1077 = vld [vmem:[%s1 + $0xc30] sm:$0xf]
      %v1078 = vld [vmem:[%s1 + $0xc34] sm:$0xf]
      %v1079 = vld [vmem:[%s1 + $0xc38] sm:$0xf]
      %v1080 = vld [vmem:[%s1 + $0xc3c] sm:$0xf]
      %v1081 = vld [vmem:[%s1 + $0xc40] sm:$0xf]
      %v1082 = vld [vmem:[%s1 + $0xc44] sm:$0xf]
      %v1083 = vld [vmem:[%s1 + $0xc48] sm:$0xf]
      %v1084 = vld [vmem:[%s1 + $0xc4c] sm:$0xf]
      %v1085 = vld [vmem:[%s1 + $0xc50] sm:$0xf]
      %v1086 = vld [vmem:[%s1 + $0xc54] sm:$0xf]
      %v1087 = vld [vmem:[%s1 + $0xc58] sm:$0xf]
      %v1088 = vld [vmem:[%s1 + $0xc5c] sm:$0xf]
      %v1089 = vld [vmem:[%s1 + $0xc60] sm:$0xf]
      %v1090 = vld [vmem:[%s1 + $0xc64] sm:$0xf]
      %v1091 = vld [vmem:[%s1 + $0xc68] sm:$0xf]
      %v1092 = vld [vmem:[%s1 + $0xc6c] sm:$0xf]
      %v1093 = vld [vmem:[%s1 + $0xc70] sm:$0xf]
      %v1094 = vld [vmem:[%s1 + $0xc74] sm:$0xf]
      %v1095 = vld [vmem:[%s1 + $0xc78] sm:$0xf]
      %v1096 = vld [vmem:[%s1 + $0xc7c] sm:$0xf]
      %v1097 = vld [vmem:[%s1 + $0xc80] sm:$0xf]
      %v1098 = vld [vmem:[%s1 + $0xc84] sm:$0xf]
      %v1099 = vld [vmem:[%s1 + $0xc88] sm:$0xf]
      %v1100 = vld [vmem:[%s1 + $0xc8c] sm:$0xf]
      %v1101 = vld [vmem:[%s1 + $0xc90] sm:$0xf]
      %v1102 = vld [vmem:[%s1 + $0xc94] sm:$0xf]
      %v1103 = vld [vmem:[%s1 + $0xc98] sm:$0xf]
      %v1104 = vld [vmem:[%s1 + $0xc9c] sm:$0xf]
      %v1105 = vld [vmem:[%s1 + $0xca0] sm:$0xf]
      %v1106 = vld [vmem:[%s1 + $0xca4] sm:$0xf]
      %v1107 = vld [vmem:[%s1 + $0xca8] sm:$0xf]
      %v1108 = vld [vmem:[%s1 + $0xcac] sm:$0xf]
      %v1109 = vld [vmem:[%s1 + $0xcb0] sm:$0xf]
      %v1110 = vld [vmem:[%s1 + $0xcb4] sm:$0xf]
      %v1111 = vld [vmem:[%s1 + $0xcb8] sm:$0xf]
      %v1112 = vld [vmem:[%s1 + $0xcbc] sm:$0xf]
      %v1113 = vld [vmem:[%s1 + $0xcc0] sm:$0xf]
      %v1114 = vld [vmem:[%s1 + $0xcc4] sm:$0xf]
      %v1115 = vld [vmem:[%s1 + $0xcc8] sm:$0xf]
      %v1116 = vld [vmem:[%s1 + $0xccc] sm:$0xf]
      %v1117 = vld [vmem:[%s1 + $0xcd0] sm:$0xf]
      %v1118 = vld [vmem:[%s1 + $0xcd4] sm:$0xf]
      %v1119 = vld [vmem:[%s1 + $0xcd8] sm:$0xf]
      %v1120 = vld [vmem:[%s1 + $0xcdc] sm:$0xf]
      %v1121 = vld [vmem:[%s1 + $0xce0] sm:$0xf]
      %v1122 = vld [vmem:[%s1 + $0xce4] sm:$0xf]
      %v1123 = vld [vmem:[%s1 + $0xce8] sm:$0xf]
      %v1124 = vld [vmem:[%s1 + $0xcec] sm:$0xf]
      %v1125 = vld [vmem:[%s1 + $0xcf0] sm:$0xf]
      %v1126 = vld [vmem:[%s1 + $0xcf4] sm:$0xf]
      %v1127 = vld [vmem:[%s1 + $0xcf8] sm:$0xf]
      %v1128 = vld [vmem:[%s1 + $0xcfc] sm:$0xf]
      %v1129 = vld [vmem:[%s1 + $0xd00] sm:$0xf]
      %v1130 = vld [vmem:[%s1 + $0xd04] sm:$0xf]
      %v1131 = vld [vmem:[%s1 + $0xd08] sm:$0xf]
      %v1132 = vld [vmem:[%s1 + $0xd0c] sm:$0xf]
      %v1133 = vld [vmem:[%s1 + $0xd10] sm:$0xf]
      %v1134 = vld [vmem:[%s1 + $0xd14] sm:$0xf]
      %v1135 = vld [vmem:[%s1 + $0xd18] sm:$0xf]
      %v1136 = vld [vmem:[%s1 + $0xd1c] sm:$0xf]
      %v1137 = vld [vmem:[%s1 + $0xd20] sm:$0xf]
      %v1138 = vld [vmem:[%s1 + $0xd24] sm:$0xf]
      %v1139 = vld [vmem:[%s1 + $0xd28] sm:$0xf]
      %v1140 = vld [vmem:[%s1 + $0xd2c] sm:$0xf]
      %v1141 = vld [vmem:[%s1 + $0xd30] sm:$0xf]
      %v1142 = vld [vmem:[%s1 + $0xd34] sm:$0xf]
      %v1143 = vld [vmem:[%s1 + $0xd38] sm:$0xf]
      %v1144 = vld [vmem:[%s1 + $0xd3c] sm:$0xf]
      %v1145 = vld [vmem:[%s1 + $0xd40] sm:$0xf]
      %v1146 = vld [vmem:[%s1 + $0xd44] sm:$0xf]
      %v1147 = vld [vmem:[%s1 + $0xd48] sm:$0xf]
      %v1148 = vld [vmem:[%s1 + $0xd4c] sm:$0xf]
      %v1149 = vld [vmem:[%s1 + $0xd50] sm:$0xf]
      %v1150 = vld [vmem:[%s1 + $0xd54] sm:$0xf]
      %v1151 = vld [vmem:[%s1 + $0xd58] sm:$0xf]
      %v1152 = vld [vmem:[%s1 + $0xd5c] sm:$0xf]
      %v1153 = vld [vmem:[%s1 + $0xd60] sm:$0xf]
      %v1154 = vld [vmem:[%s1 + $0xd64] sm:$0xf]
      %v1155 = vld [vmem:[%s1 + $0xd68] sm:$0xf]
      %v1156 = vld [vmem:[%s1 + $0xd6c] sm:$0xf]
      %v1157 = vld [vmem:[%s1 + $0xd70] sm:$0xf]
      %v1158 = vld [vmem:[%s1 + $0xd74] sm:$0xf]
      %v1159 = vld [vmem:[%s1 + $0xd78] sm:$0xf]
      %v1160 = vld [vmem:[%s1 + $0xd7c] sm:$0xf]
      %v1161 = vld [vmem:[%s1 + $0xd80] sm:$0xf]
      %v1162 = vld [vmem:[%s1 + $0xd84] sm:$0xf]
      %v1163 = vld [vmem:[%s1 + $0xd88] sm:$0xf]
      %v1164 = vld [vmem:[%s1 + $0xd8c] sm:$0xf]
      %v1165 = vld [vmem:[%s1 + $0xd90] sm:$0xf]
      %v1166 = vld [vmem:[%s1 + $0xd94] sm:$0xf]
      %v1167 = vld [vmem:[%s1 + $0xd98] sm:$0xf]
      %v1168 = vld [vmem:[%s1 + $0xd9c] sm:$0xf]
      %v1169 = vld [vmem:[%s1 + $0xda0] sm:$0xf]
      %v1170 = vld [vmem:[%s1 + $0xda4] sm:$0xf]
      %v1171 = vld [vmem:[%s1 + $0xda8] sm:$0xf]
      %v1172 = vld [vmem:[%s1 + $0xdac] sm:$0xf]
      %v1173 = vld [vmem:[%s1 + $0xdb0] sm:$0xf]
      %v1174 = vld [vmem:[%s1 + $0xdb4] sm:$0xf]
      %v1175 = vld [vmem:[%s1 + $0xdb8] sm:$0xf]
      %v1176 = vld [vmem:[%s1 + $0xdbc] sm:$0xf]
      %v1177 = vld [vmem:[%s1 + $0xdc0] sm:$0xf]
      %v1178 = vld [vmem:[%s1 + $0xdc4] sm:$0xf]
      %v1179 = vld [vmem:[%s1 + $0xdc8] sm:$0xf]
      %v1180 = vld [vmem:[%s1 + $0xdcc] sm:$0xf]
      %v1181 = vld [vmem:[%s1 + $0xdd0] sm:$0xf]
      %v1182 = vld [vmem:[%s1 + $0xdd4] sm:$0xf]
      %v1183 = vld [vmem:[%s1 + $0xdd8] sm:$0xf]
      %v1184 = vld [vmem:[%s1 + $0xddc] sm:$0xf]
      %v1185 = vld [vmem:[%s1 + $0xde0] sm:$0xf]
      %v1186 = vld [vmem:[%s1 + $0xde4] sm:$0xf]
      %v1187 = vld [vmem:[%s1 + $0xde8] sm:$0xf]
      %v1188 = vld [vmem:[%s1 + $0xdec] sm:$0xf]
      %v1189 = vld [vmem:[%s1 + $0xdf0] sm:$0xf]
      %v1190 = vld [vmem:[%s1 + $0xdf4] sm:$0xf]
      %v1191 = vld [vmem:[%s1 + $0xdf8] sm:$0xf]
      %v1192 = vld [vmem:[%s1 + $0xdfc] sm:$0xf]
      %v1193 = vld [vmem:[%s1 + $0xe00] sm:$0xf]
      %v1194 = vld [vmem:[%s1 + $0xe04] sm:$0xf]
      %v1195 = vld [vmem:[%s1 + $0xe08] sm:$0xf]
      %v1196 = vld [vmem:[%s1 + $0xe0c] sm:$0xf]
      %v1197 = vld [vmem:[%s1 + $0xe10] sm:$0xf]
      %v1198 = vld [vmem:[%s1 + $0xe14] sm:$0xf]
      %v1199 = vld [vmem:[%s1 + $0xe18] sm:$0xf]
      %v1200 = vld [vmem:[%s1 + $0xe1c] sm:$0xf]
      %v1201 = vld [vmem:[%s1 + $0xe20] sm:$0xf]
      %v1202 = vld [vmem:[%s1 + $0xe24] sm:$0xf]
      %v1203 = vld [vmem:[%s1 + $0xe28] sm:$0xf]
      %v1204 = vld [vmem:[%s1 + $0xe2c] sm:$0xf]
      %v1205 = vld [vmem:[%s1 + $0xe30] sm:$0xf]
      %v1206 = vld [vmem:[%s1 + $0xe34] sm:$0xf]
      %v1207 = vld [vmem:[%s1 + $0xe38] sm:$0xf]
      %v1208 = vld [vmem:[%s1 + $0xe3c] sm:$0xf]
      %v1209 = vld [vmem:[%s1 + $0xe40] sm:$0xf]
      %v1210 = vld [vmem:[%s1 + $0xe44] sm:$0xf]
      %v1211 = vld [vmem:[%s1 + $0xe48] sm:$0xf]
      %v1212 = vld [vmem:[%s1 + $0xe4c] sm:$0xf]
      %v1213 = vld [vmem:[%s1 + $0xe50] sm:$0xf]
      %v1214 = vld [vmem:[%s1 + $0xe54] sm:$0xf]
      %v1215 = vld [vmem:[%s1 + $0xe58] sm:$0xf]
      %v1216 = vld [vmem:[%s1 + $0xe5c] sm:$0xf]
      %v1217 = vld [vmem:[%s1 + $0xe60] sm:$0xf]
      %v1218 = vld [vmem:[%s1 + $0xe64] sm:$0xf]
      %v1219 = vld [vmem:[%s1 + $0xe68] sm:$0xf]
      %v1220 = vld [vmem:[%s1 + $0xe6c] sm:$0xf]
      %v1221 = vld [vmem:[%s1 + $0xe70] sm:$0xf]
      %v1222 = vld [vmem:[%s1 + $0xe74] sm:$0xf]
      %v1223 = vld [vmem:[%s1 + $0xe78] sm:$0xf]
      %v1224 = vld [vmem:[%s1 + $0xe7c] sm:$0xf]
      %v1225 = vld [vmem:[%s1 + $0xe80] sm:$0xf]
      %v1226 = vld [vmem:[%s1 + $0xe84] sm:$0xf]
      %v1227 = vld [vmem:[%s1 + $0xe88] sm:$0xf]
      %v1228 = vld [vmem:[%s1 + $0xe8c] sm:$0xf]
      %v1229 = vld [vmem:[%s1 + $0xe90] sm:$0xf]
      %v1230 = vld [vmem:[%s1 + $0xe94] sm:$0xf]
      %v1231 = vld [vmem:[%s1 + $0xe98] sm:$0xf]
      %v1232 = vld [vmem:[%s1 + $0xe9c] sm:$0xf]
      %v1233 = vld [vmem:[%s1 + $0xea0] sm:$0xf]
      %v1234 = vld [vmem:[%s1 + $0xea4] sm:$0xf]
      %v1235 = vld [vmem:[%s1 + $0xea8] sm:$0xf]
      %v1236 = vld [vmem:[%s1 + $0xeac] sm:$0xf]
      %v1237 = vld [vmem:[%s1 + $0xeb0] sm:$0xf]
      %v1238 = vld [vmem:[%s1 + $0xeb4] sm:$0xf]
      %v1239 = vld [vmem:[%s1 + $0xeb8] sm:$0xf]
      %v1240 = vld [vmem:[%s1 + $0xebc] sm:$0xf]
      %v1241 = vld [vmem:[%s1 + $0xec0] sm:$0xf]
      %v1242 = vld [vmem:[%s1 + $0xec4] sm:$0xf]
      %v1243 = vld [vmem:[%s1 + $0xec8] sm:$0xf]
      %v1244 = vld [vmem:[%s1 + $0xecc] sm:$0xf]
      %v1245 = vld [vmem:[%s1 + $0xed0] sm:$0xf]
      %v1246 = vld [vmem:[%s1 + $0xed4] sm:$0xf]
      %v1247 = vld [vmem:[%s1 + $0xed8] sm:$0xf]
      %v1248 = vld [vmem:[%s1 + $0xedc] sm:$0xf]
      %v1249 = vld [vmem:[%s1 + $0xee0] sm:$0xf]
      %v1250 = vld [vmem:[%s1 + $0xee4] sm:$0xf]
      %v1251 = vld [vmem:[%s1 + $0xee8] sm:$0xf]
      %v1252 = vld [vmem:[%s1 + $0xeec] sm:$0xf]
      %v1253 = vld [vmem:[%s1 + $0xef0] sm:$0xf]
      %v1254 = vld [vmem:[%s1 + $0xef4] sm:$0xf]
      %v1255 = vld [vmem:[%s1 + $0xef8] sm:$0xf]
      %v1256 = vld [vmem:[%s1 + $0xefc] sm:$0xf]
      %v1257 = vld [vmem:[%s1 + $0xf00] sm:$0xf]
      %v1258 = vld [vmem:[%s1 + $0xf04] sm:$0xf]
      %v1259 = vld [vmem:[%s1 + $0xf08] sm:$0xf]
      %v1260 = vld [vmem:[%s1 + $0xf0c] sm:$0xf]
      %v1261 = vld [vmem:[%s1 + $0xf10] sm:$0xf]
      %v1262 = vld [vmem:[%s1 + $0xf14] sm:$0xf]
      %v1263 = vld [vmem:[%s1 + $0xf18] sm:$0xf]
      %v1264 = vld [vmem:[%s1 + $0xf1c] sm:$0xf]
      %v1265 = vld [vmem:[%s1 + $0xf20] sm:$0xf]
      %v1266 = vld [vmem:[%s1 + $0xf24] sm:$0xf]
      %v1267 = vld [vmem:[%s1 + $0xf28] sm:$0xf]
      %v1268 = vld [vmem:[%s1 + $0xf2c] sm:$0xf]
      %v1269 = vld [vmem:[%s1 + $0xf30] sm:$0xf]
      %v1270 = vld [vmem:[%s1 + $0xf34] sm:$0xf]
      %v1271 = vld [vmem:[%s1 + $0xf38] sm:$0xf]
      %v1272 = vld [vmem:[%s1 + $0xf3c] sm:$0xf]
      %v1273 = vld [vmem:[%s1 + $0xf40] sm:$0xf]
      %v1274 = vld [vmem:[%s1 + $0xf44] sm:$0xf]
      %v1275 = vld [vmem:[%s1 + $0xf48] sm:$0xf]
      %v1276 = vld [vmem:[%s1 + $0xf4c] sm:$0xf]
      %v1277 = vld [vmem:[%s1 + $0xf50] sm:$0xf]
      %v1278 = vld [vmem:[%s1 + $0xf54] sm:$0xf]
      %v1279 = vld [vmem:[%s1 + $0xf58] sm:$0xf]
      %v1280 = vld [vmem:[%s1 + $0xf5c] sm:$0xf]
      %v1281 = vld [vmem:[%s1 + $0xf60] sm:$0xf]
      %v1282 = vld [vmem:[%s1 + $0xf64] sm:$0xf]
      %v1283 = vld [vmem:[%s1 + $0xf68] sm:$0xf]
      %v1284 = vld [vmem:[%s1 + $0xf6c] sm:$0xf]
      %v1285 = vld [vmem:[%s1 + $0xf70] sm:$0xf]
      %v1286 = vld [vmem:[%s1 + $0xf74] sm:$0xf]
      %v1287 = vld [vmem:[%s1 + $0xf78] sm:$0xf]
      %v1288 = vld [vmem:[%s1 + $0xf7c] sm:$0xf]
      %v1289 = vld [vmem:[%s1 + $0xf80] sm:$0xf]
      %v1290 = vld [vmem:[%s1 + $0xf84] sm:$0xf]
      %v1291 = vld [vmem:[%s1 + $0xf88] sm:$0xf]
      %v1292 = vld [vmem:[%s1 + $0xf8c] sm:$0xf]
      %v1293 = vld [vmem:[%s1 + $0xf90] sm:$0xf]
      %v1294 = vld [vmem:[%s1 + $0xf94] sm:$0xf]
      %v1295 = vld [vmem:[%s1 + $0xf98] sm:$0xf]
      %v1296 = vld [vmem:[%s1 + $0xf9c] sm:$0xf]
      %v1297 = vld [vmem:[%s1 + $0xfa0] sm:$0xf]
      %v1298 = vld [vmem:[%s1 + $0xfa4] sm:$0xf]
      %v1299 = vld [vmem:[%s1 + $0xfa8] sm:$0xf]
      %v1300 = vld [vmem:[%s1 + $0xfac] sm:$0xf]
      %v1301 = vld [vmem:[%s1 + $0xfb0] sm:$0xf]
      %v1302 = vld [vmem:[%s1 + $0xfb4] sm:$0xf]
      %v1303 = vld [vmem:[%s1 + $0xfb8] sm:$0xf]
      %v1304 = vld [vmem:[%s1 + $0xfbc] sm:$0xf]
      %v1305 = vld [vmem:[%s1 + $0xfc0] sm:$0xf]
      %v1306 = vld [vmem:[%s1 + $0xfc4] sm:$0xf]
      %v1307 = vld [vmem:[%s1 + $0xfc8] sm:$0xf]
      %v1308 = vld [vmem:[%s1 + $0xfcc] sm:$0xf]
      %v1309 = vld [vmem:[%s1 + $0xfd0] sm:$0xf]
      %v1310 = vld [vmem:[%s1 + $0xfd4] sm:$0xf]
      %v1311 = vld [vmem:[%s1 + $0xfd8] sm:$0xf]
      %v1312 = vld [vmem:[%s1 + $0xfdc] sm:$0xf]
      %v1313 = vld [vmem:[%s1 + $0xfe0] sm:$0xf]
      %v1314 = vld [vmem:[%s1 + $0xfe4] sm:$0xf]
      %v1315 = vld [vmem:[%s1 + $0xfe8] sm:$0xf]
      %v1316 = vld [vmem:[%s1 + $0xfec] sm:$0xf]
      %v1317 = vld [vmem:[%s1 + $0xff0] sm:$0xf]
      %v1318 = vld [vmem:[%s1 + $0xff4] sm:$0xf]
      %v1319 = vld [vmem:[%s1 + $0xff8] sm:$0xf]
      %v1320 = vld [vmem:[%s1 + $0xffc] sm:$0xf]
      %v1321 = vld [vmem:[%s1 + $0x1000] sm:$0xf]
      %v1322 = vld [vmem:[%s1 + $0x1004] sm:$0xf]
      %v1323 = vld [vmem:[%s1 + $0x1008] sm:$0xf]
      %v1324 = vld [vmem:[%s1 + $0x100c] sm:$0xf]
      %v1325 = vld [vmem:[%s1 + $0x1010] sm:$0xf]
      %v1326 = vld [vmem:[%s1 + $0x1014] sm:$0xf]
      %v1327 = vld [vmem:[%s1 + $0x1018] sm:$0xf]
      %v1328 = vld [vmem:[%s1 + $0x101c] sm:$0xf]
      %v1329 = vld [vmem:[%s1 + $0x1020] sm:$0xf]
      %v1330 = vld [vmem:[%s1 + $0x1024] sm:$0xf]
      %v1331 = vld [vmem:[%s1 + $0x1028] sm:$0xf]
      %v1332 = vld [vmem:[%s1 + $0x102c] sm:$0xf]
      %v1333 = vld [vmem:[%s1 + $0x1030] sm:$0xf]
      %v1334 = vld [vmem:[%s1 + $0x1034] sm:$0xf]
      %v1335 = vld [vmem:[%s1 + $0x1038] sm:$0xf]
      %v1336 = vld [vmem:[%s1 + $0x103c] sm:$0xf]
      %v1337 = vld [vmem:[%s1 + $0x1040] sm:$0xf]
      %v1338 = vld [vmem:[%s1 + $0x1044] sm:$0xf]
      %v1339 = vld [vmem:[%s1 + $0x1048] sm:$0xf]
      %v1340 = vld [vmem:[%s1 + $0x104c] sm:$0xf]
      %v1341 = vld [vmem:[%s1 + $0x1050] sm:$0xf]
      %v1342 = vld [vmem:[%s1 + $0x1054] sm:$0xf]
      %v1343 = vld [vmem:[%s1 + $0x1058] sm:$0xf]
      %v1344 = vld [vmem:[%s1 + $0x105c] sm:$0xf]
      %v1345 = vld [vmem:[%s1 + $0x1060] sm:$0xf]
      %v1346 = vld [vmem:[%s1 + $0x1064] sm:$0xf]
      %v1347 = vld [vmem:[%s1 + $0x1068] sm:$0xf]
      %v1348 = vld [vmem:[%s1 + $0x106c] sm:$0xf]
      %v1349 = vld [vmem:[%s1 + $0x1070] sm:$0xf]
      %v1350 = vld [vmem:[%s1 + $0x1074] sm:$0xf]
      %v1351 = vld [vmem:[%s1 + $0x1078] sm:$0xf]
      %v1352 = vld [vmem:[%s1 + $0x107c] sm:$0xf]
      %v1353 = vld [vmem:[%s1 + $0x1080] sm:$0xf]
      %v1354 = vld [vmem:[%s1 + $0x1084] sm:$0xf]
      %v1355 = vld [vmem:[%s1 + $0x1088] sm:$0xf]
      %v1356 = vld [vmem:[%s1 + $0x108c] sm:$0xf]
      %v1357 = vld [vmem:[%s1 + $0x1090] sm:$0xf]
      %v1358 = vld [vmem:[%s1 + $0x1094] sm:$0xf]
      %v1359 = vld [vmem:[%s1 + $0x1098] sm:$0xf]
      %v1360 = vld [vmem:[%s1 + $0x109c] sm:$0xf]
      %v1361 = vld [vmem:[%s1 + $0x10a0] sm:$0xf]
      %v1362 = vld [vmem:[%s1 + $0x10a4] sm:$0xf]
      %v1363 = vld [vmem:[%s1 + $0x10a8] sm:$0xf]
      %v1364 = vld [vmem:[%s1 + $0x10ac] sm:$0xf]
      %v1365 = vld [vmem:[%s1 + $0x10b0] sm:$0xf]
      %v1366 = vld [vmem:[%s1 + $0x10b4] sm:$0xf]
      %v1367 = vld [vmem:[%s1 + $0x10b8] sm:$0xf]
      %v1368 = vld [vmem:[%s1 + $0x10bc] sm:$0xf]
      %v1369 = vld [vmem:[%s1 + $0x10c0] sm:$0xf]
      %v1370 = vld [vmem:[%s1 + $0x10c4] sm:$0xf]
      %v1371 = vld [vmem:[%s1 + $0x10c8] sm:$0xf]
      %v1372 = vld [vmem:[%s1 + $0x10cc] sm:$0xf]
      %v1373 = vld [vmem:[%s1 + $0x10d0] sm:$0xf]
      %v1374 = vld [vmem:[%s1 + $0x10d4] sm:$0xf]
      %v1375 = vld [vmem:[%s1 + $0x10d8] sm:$0xf]
      %v1376 = vld [vmem:[%s1 + $0x10dc] sm:$0xf]
      %v1377 = vld [vmem:[%s1 + $0x10e0] sm:$0xf]
      %v1378 = vld [vmem:[%s1 + $0x10e4] sm:$0xf]
      %v1379 = vld [vmem:[%s1 + $0x10e8] sm:$0xf]
      %v1380 = vld [vmem:[%s1 + $0x10ec] sm:$0xf]
      %v1381 = vld [vmem:[%s1 + $0x10f0] sm:$0xf]
      %v1382 = vld [vmem:[%s1 + $0x10f4] sm:$0xf]
      %v1383 = vld [vmem:[%s1 + $0x10f8] sm:$0xf]
      %v1384 = vld [vmem:[%s1 + $0x10fc] sm:$0xf]
      %v1385 = vld [vmem:[%s1 + $0x1100] sm:$0xf]
      %v1386 = vld [vmem:[%s1 + $0x1104] sm:$0xf]
      %v1387 = vld [vmem:[%s1 + $0x1108] sm:$0xf]
      %v1388 = vld [vmem:[%s1 + $0x110c] sm:$0xf]
      %v1389 = vld [vmem:[%s1 + $0x1110] sm:$0xf]
      %v1390 = vld [vmem:[%s1 + $0x1114] sm:$0xf]
      %v1391 = vld [vmem:[%s1 + $0x1118] sm:$0xf]
      %v1392 = vld [vmem:[%s1 + $0x111c] sm:$0xf]
      %v1393 = vld [vmem:[%s1 + $0x1120] sm:$0xf]
      %v1394 = vld [vmem:[%s1 + $0x1124] sm:$0xf]
      %v1395 = vld [vmem:[%s1 + $0x1128] sm:$0xf]
      %v1396 = vld [vmem:[%s1 + $0x112c] sm:$0xf]
      %v1397 = vld [vmem:[%s1 + $0x1130] sm:$0xf]
      %v1398 = vld [vmem:[%s1 + $0x1134] sm:$0xf]
      %v1399 = vld [vmem:[%s1 + $0x1138] sm:$0xf]
      %v1400 = vld [vmem:[%s1 + $0x113c] sm:$0xf]
      %v1401 = vld [vmem:[%s1 + $0x1140] sm:$0xf]
      %v1402 = vld [vmem:[%s1 + $0x1144] sm:$0xf]
      %v1403 = vld [vmem:[%s1 + $0x1148] sm:$0xf]
      %v1404 = vld [vmem:[%s1 + $0x114c] sm:$0xf]
      %v1405 = vld [vmem:[%s1 + $0x1150] sm:$0xf]
      %v1406 = vld [vmem:[%s1 + $0x1154] sm:$0xf]
      %v1407 = vld [vmem:[%s1 + $0x1158] sm:$0xf]
      %v1408 = vld [vmem:[%s1 + $0x115c] sm:$0xf]
      %v1409 = vld [vmem:[%s1 + $0x1160] sm:$0xf]
      %v1410 = vld [vmem:[%s1 + $0x1164] sm:$0xf]
      %v1411 = vld [vmem:[%s1 + $0x1168] sm:$0xf]
      %v1412 = vld [vmem:[%s1 + $0x116c] sm:$0xf]
      %v1413 = vld [vmem:[%s1 + $0x1170] sm:$0xf]
      %v1414 = vld [vmem:[%s1 + $0x1174] sm:$0xf]
      %v1415 = vld [vmem:[%s1 + $0x1178] sm:$0xf]
      %v1416 = vld [vmem:[%s1 + $0x117c] sm:$0xf]
      %v1417 = vld [vmem:[%s1 + $0x1180] sm:$0xf]
      %v1418 = vld [vmem:[%s1 + $0x1184] sm:$0xf]
      %v1419 = vld [vmem:[%s1 + $0x1188] sm:$0xf]
      %v1420 = vld [vmem:[%s1 + $0x118c] sm:$0xf]
      %v1421 = vld [vmem:[%s1 + $0x1190] sm:$0xf]
      %v1422 = vld [vmem:[%s1 + $0x1194] sm:$0xf]
      %v1423 = vld [vmem:[%s1 + $0x1198] sm:$0xf]
      %v1424 = vld [vmem:[%s1 + $0x119c] sm:$0xf]
      %v1425 = vld [vmem:[%s1 + $0x11a0] sm:$0xf]
      %v1426 = vld [vmem:[%s1 + $0x11a4] sm:$0xf]
      %v1427 = vld [vmem:[%s1 + $0x11a8] sm:$0xf]
      %v1428 = vld [vmem:[%s1 + $0x11ac] sm:$0xf]
      %v1429 = vld [vmem:[%s1 + $0x11b0] sm:$0xf]
      %v1430 = vld [vmem:[%s1 + $0x11b4] sm:$0xf]
      %v1431 = vld [vmem:[%s1 + $0x11b8] sm:$0xf]
      %v1432 = vld [vmem:[%s1 + $0x11bc] sm:$0xf]
      %v1433 = vld [vmem:[%s1 + $0x11c0] sm:$0xf]
      %v1434 = vld [vmem:[%s1 + $0x11c4] sm:$0xf]
      %v1435 = vld [vmem:[%s1 + $0x11c8] sm:$0xf]
      %v1436 = vld [vmem:[%s1 + $0x11cc] sm:$0xf]
      %v1437 = vld [vmem:[%s1 + $0x11d0] sm:$0xf]
      %v1438 = vld [vmem:[%s1 + $0x11d4] sm:$0xf]
      %v1439 = vld [vmem:[%s1 + $0x11d8] sm:$0xf]
      %v1440 = vld [vmem:[%s1 + $0x11dc] sm:$0xf]
      %v1441 = vld [vmem:[%s1 + $0x11e0] sm:$0xf]
      %v1442 = vld [vmem:[%s1 + $0x11e4] sm:$0xf]
      %v1443 = vld [vmem:[%s1 + $0x11e8] sm:$0xf]
      %v1444 = vld [vmem:[%s1 + $0x11ec] sm:$0xf]
      %v1445 = vld [vmem:[%s1 + $0x11f0] sm:$0xf]
      %v1446 = vld [vmem:[%s1 + $0x11f4] sm:$0xf]
      %v1447 = vld [vmem:[%s1 + $0x11f8] sm:$0xf]
      %v1448 = vld [vmem:[%s1 + $0x11fc] sm:$0xf]
      %v1449 = vld [vmem:[%s1 + $0x1200] sm:$0xf]
      %v1450 = vld [vmem:[%s1 + $0x1204] sm:$0xf]
      %v1451 = vld [vmem:[%s1 + $0x1208] sm:$0xf]
      %v1452 = vld [vmem:[%s1 + $0x120c] sm:$0xf]
      %v1453 = vld [vmem:[%s1 + $0x1210] sm:$0xf]
      %v1454 = vld [vmem:[%s1 + $0x1214] sm:$0xf]
      %v1455 = vld [vmem:[%s1 + $0x1218] sm:$0xf]
      %v1456 = vld [vmem:[%s1 + $0x121c] sm:$0xf]
      %v1457 = vld [vmem:[%s1 + $0x1220] sm:$0xf]
      %v1458 = vld [vmem:[%s1 + $0x1224] sm:$0xf]
      %v1459 = vld [vmem:[%s1 + $0x1228] sm:$0xf]
      %v1460 = vld [vmem:[%s1 + $0x122c] sm:$0xf]
      %v1461 = vld [vmem:[%s1 + $0x1230] sm:$0xf]
      %v1462 = vld [vmem:[%s1 + $0x1234] sm:$0xf]
      %v1463 = vld [vmem:[%s1 + $0x1238] sm:$0xf]
      %v1464 = vld [vmem:[%s1 + $0x123c] sm:$0xf]
      %v1465 = vld [vmem:[%s1 + $0x1240] sm:$0xf]
      %v1466 = vld [vmem:[%s1 + $0x1244] sm:$0xf]
      %v1467 = vld [vmem:[%s1 + $0x1248] sm:$0xf]
      %v1468 = vld [vmem:[%s1 + $0x124c] sm:$0xf]
      %v1469 = vld [vmem:[%s1 + $0x1250] sm:$0xf]
      %v1470 = vld [vmem:[%s1 + $0x1254] sm:$0xf]
      %v1471 = vld [vmem:[%s1 + $0x1258] sm:$0xf]
      %v1472 = vld [vmem:[%s1 + $0x125c] sm:$0xf]
      %v1473 = vld [vmem:[%s1 + $0x1260] sm:$0xf]
      %v1474 = vld [vmem:[%s1 + $0x1264] sm:$0xf]
      %v1475 = vld [vmem:[%s1 + $0x1268] sm:$0xf]
      %v1476 = vld [vmem:[%s1 + $0x126c] sm:$0xf]
      %v1477 = vld [vmem:[%s1 + $0x1270] sm:$0xf]
      %v1478 = vld [vmem:[%s1 + $0x1274] sm:$0xf]
      %v1479 = vld [vmem:[%s1 + $0x1278] sm:$0xf]
      %v1480 = vld [vmem:[%s1 + $0x127c] sm:$0xf]
      %v1481 = vld [vmem:[%s1 + $0x1280] sm:$0xf]
      %v1482 = vld [vmem:[%s1 + $0x1284] sm:$0xf]
      %v1483 = vld [vmem:[%s1 + $0x1288] sm:$0xf]
      %v1484 = vld [vmem:[%s1 + $0x128c] sm:$0xf]
      %v1485 = vld [vmem:[%s1 + $0x1290] sm:$0xf]
      %v1486 = vld [vmem:[%s1 + $0x1294] sm:$0xf]
      %v1487 = vld [vmem:[%s1 + $0x1298] sm:$0xf]
      %v1488 = vld [vmem:[%s1 + $0x129c] sm:$0xf]
      %v1489 = vld [vmem:[%s1 + $0x12a0] sm:$0xf]
      %v1490 = vld [vmem:[%s1 + $0x12a4] sm:$0xf]
      %v1491 = vld [vmem:[%s1 + $0x12a8] sm:$0xf]
      %v1492 = vld [vmem:[%s1 + $0x12ac] sm:$0xf]
      %v1493 = vld [vmem:[%s1 + $0x12b0] sm:$0xf]
      %v1494 = vld [vmem:[%s1 + $0x12b4] sm:$0xf]
      %v1495 = vld [vmem:[%s1 + $0x12b8] sm:$0xf]
      %v1496 = vld [vmem:[%s1 + $0x12bc] sm:$0xf]
      %v1497 = vld [vmem:[%s1 + $0x12c0] sm:$0xf]
      %v1498 = vld [vmem:[%s1 + $0x12c4] sm:$0xf]
      %v1499 = vld [vmem:[%s1 + $0x12c8] sm:$0xf]
      %v1500 = vld [vmem:[%s1 + $0x12cc] sm:$0xf]
      %v1501 = vld [vmem:[%s1 + $0x12d0] sm:$0xf]
      %v1502 = vld [vmem:[%s1 + $0x12d4] sm:$0xf]
      %v1503 = vld [vmem:[%s1 + $0x12d8] sm:$0xf]
      %v1504 = vld [vmem:[%s1 + $0x12dc] sm:$0xf]
      %v1505 = vld [vmem:[%s1 + $0x12e0] sm:$0xf]
      %v1506 = vld [vmem:[%s1 + $0x12e4] sm:$0xf]
      %v1507 = vld [vmem:[%s1 + $0x12e8] sm:$0xf]
      %v1508 = vld [vmem:[%s1 + $0x12ec] sm:$0xf]
      %v1509 = vld [vmem:[%s1 + $0x12f0] sm:$0xf]
      %v1510 = vld [vmem:[%s1 + $0x12f4] sm:$0xf]
      %v1511 = vld [vmem:[%s1 + $0x12f8] sm:$0xf]
      %v1512 = vld [vmem:[%s1 + $0x12fc] sm:$0xf]
      %v1513 = vld [vmem:[%s1 + $0x1300] sm:$0xf]
      %v1514 = vld [vmem:[%s1 + $0x1304] sm:$0xf]
      %v1515 = vld [vmem:[%s1 + $0x1308] sm:$0xf]
      %v1516 = vld [vmem:[%s1 + $0x130c] sm:$0xf]
      %v1517 = vld [vmem:[%s1 + $0x1310] sm:$0xf]
      %v1518 = vld [vmem:[%s1 + $0x1314] sm:$0xf]
      %v1519 = vld [vmem:[%s1 + $0x1318] sm:$0xf]
      %v1520 = vld [vmem:[%s1 + $0x131c] sm:$0xf]
      %v1521 = vld [vmem:[%s1 + $0x1320] sm:$0xf]
      %v1522 = vld [vmem:[%s1 + $0x1324] sm:$0xf]
      %v1523 = vld [vmem:[%s1 + $0x1328] sm:$0xf]
      %v1524 = vld [vmem:[%s1 + $0x132c] sm:$0xf]
      %v1525 = vld [vmem:[%s1 + $0x1330] sm:$0xf]
      %v1526 = vld [vmem:[%s1 + $0x1334] sm:$0xf]
      %v1527 = vld [vmem:[%s1 + $0x1338] sm:$0xf]
      %v1528 = vld [vmem:[%s1 + $0x133c] sm:$0xf]
      %v1529 = vld [vmem:[%s1 + $0x1340] sm:$0xf]
      %v1530 = vld [vmem:[%s1 + $0x1344] sm:$0xf]
      %v1531 = vld [vmem:[%s1 + $0x1348] sm:$0xf]
      %v1532 = vld [vmem:[%s1 + $0x134c] sm:$0xf]
      %v1533 = vld [vmem:[%s1 + $0x1350] sm:$0xf]
      %v1534 = vld [vmem:[%s1 + $0x1354] sm:$0xf]
      %v1535 = vld [vmem:[%s1 + $0x1358] sm:$0xf]
      %v1536 = vld [vmem:[%s1 + $0x135c] sm:$0xf]
      %v1537 = vld [vmem:[%s1 + $0x1360] sm:$0xf]
      %v1538 = vld [vmem:[%s1 + $0x1364] sm:$0xf]
      %v1539 = vld [vmem:[%s1 + $0x1368] sm:$0xf]
      %v1540 = vld [vmem:[%s1 + $0x136c] sm:$0xf]
      %v1541 = vld [vmem:[%s1 + $0x1370] sm:$0xf]
      %v1542 = vld [vmem:[%s1 + $0x1374] sm:$0xf]
      %v1543 = vld [vmem:[%s1 + $0x1378] sm:$0xf]
      %v1544 = vld [vmem:[%s1 + $0x137c] sm:$0xf]
      %v1545 = vld [vmem:[%s1 + $0x1380] sm:$0xf]
      %v1546 = vld [vmem:[%s1 + $0x1384] sm:$0xf]
      %v1547 = vld [vmem:[%s1 + $0x1388] sm:$0xf]
      %v1548 = vld [vmem:[%s1 + $0x138c] sm:$0xf]
      %v1549 = vld [vmem:[%s1 + $0x1390] sm:$0xf]
      %v1550 = vld [vmem:[%s1 + $0x1394] sm:$0xf]
      %v1551 = vld [vmem:[%s1 + $0x1398] sm:$0xf]
      %v1552 = vld [vmem:[%s1 + $0x139c] sm:$0xf]
      %v1553 = vld [vmem:[%s1 + $0x13a0] sm:$0xf]
      %v1554 = vld [vmem:[%s1 + $0x13a4] sm:$0xf]
      %v1555 = vld [vmem:[%s1 + $0x13a8] sm:$0xf]
      %v1556 = vld [vmem:[%s1 + $0x13ac] sm:$0xf]
      %v1557 = vld [vmem:[%s1 + $0x13b0] sm:$0xf]
      %v1558 = vld [vmem:[%s1 + $0x13b4] sm:$0xf]
      %v1559 = vld [vmem:[%s1 + $0x13b8] sm:$0xf]
      %v1560 = vld [vmem:[%s1 + $0x13bc] sm:$0xf]
      %v1561 = vld [vmem:[%s1 + $0x13c0] sm:$0xf]
      %v1562 = vld [vmem:[%s1 + $0x13c4] sm:$0xf]
      %v1563 = vld [vmem:[%s1 + $0x13c8] sm:$0xf]
      %v1564 = vld [vmem:[%s1 + $0x13cc] sm:$0xf]
      %v1565 = vld [vmem:[%s1 + $0x13d0] sm:$0xf]
      %v1566 = vld [vmem:[%s1 + $0x13d4] sm:$0xf]
      %v1567 = vld [vmem:[%s1 + $0x13d8] sm:$0xf]
      %v1568 = vld [vmem:[%s1 + $0x13dc] sm:$0xf]
      %v1569 = vld [vmem:[%s1 + $0x13e0] sm:$0xf]
      %v1570 = vld [vmem:[%s1 + $0x13e4] sm:$0xf]
      %v1571 = vld [vmem:[%s1 + $0x13e8] sm:$0xf]
      %v1572 = vld [vmem:[%s1 + $0x13ec] sm:$0xf]
      %v1573 = vld [vmem:[%s1 + $0x13f0] sm:$0xf]
      %v1574 = vld [vmem:[%s1 + $0x13f4] sm:$0xf]
      %v1575 = vld [vmem:[%s1 + $0x13f8] sm:$0xf]
      %v1576 = vld [vmem:[%s1 + $0x13fc] sm:$0xf]
      %v1577 = vld [vmem:[%s1 + $0x1400] sm:$0xf]
      %v1578 = vld [vmem:[%s1 + $0x1404] sm:$0xf]
      %v1579 = vld [vmem:[%s1 + $0x1408] sm:$0xf]
      %v1580 = vld [vmem:[%s1 + $0x140c] sm:$0xf]
      %v1581 = vld [vmem:[%s1 + $0x1410] sm:$0xf]
      %v1582 = vld [vmem:[%s1 + $0x1414] sm:$0xf]
      %v1583 = vld [vmem:[%s1 + $0x1418] sm:$0xf]
      %v1584 = vld [vmem:[%s1 + $0x141c] sm:$0xf]
      %v1585 = vld [vmem:[%s1 + $0x1420] sm:$0xf]
      %v1586 = vld [vmem:[%s1 + $0x1424] sm:$0xf]
      %v1587 = vld [vmem:[%s1 + $0x1428] sm:$0xf]
      %v1588 = vld [vmem:[%s1 + $0x142c] sm:$0xf]
      %v1589 = vld [vmem:[%s1 + $0x1430] sm:$0xf]
      %v1590 = vld [vmem:[%s1 + $0x1434] sm:$0xf]
      %v1591 = vld [vmem:[%s1 + $0x1438] sm:$0xf]
      %v1592 = vld [vmem:[%s1 + $0x143c] sm:$0xf]
      %v1593 = vld [vmem:[%s1 + $0x1440] sm:$0xf]
      %v1594 = vld [vmem:[%s1 + $0x1444] sm:$0xf]
      %v1595 = vld [vmem:[%s1 + $0x1448] sm:$0xf]
      %v1596 = vld [vmem:[%s1 + $0x144c] sm:$0xf]
      %v1597 = vld [vmem:[%s1 + $0x1450] sm:$0xf]
      %v1598 = vld [vmem:[%s1 + $0x1454] sm:$0xf]
      %v1599 = vld [vmem:[%s1 + $0x1458] sm:$0xf]
      %v1600 = vld [vmem:[%s1 + $0x145c] sm:$0xf]
      %v1601 = vld [vmem:[%s1 + $0x1460] sm:$0xf]
      %v1602 = vld [vmem:[%s1 + $0x1464] sm:$0xf]
      %v1603 = vld [vmem:[%s1 + $0x1468] sm:$0xf]
      %v1604 = vld [vmem:[%s1 + $0x146c] sm:$0xf]
      %v1605 = vld [vmem:[%s1 + $0x1470] sm:$0xf]
      %v1606 = vld [vmem:[%s1 + $0x1474] sm:$0xf]
      %v1607 = vld [vmem:[%s1 + $0x1478] sm:$0xf]
      %v1608 = vld [vmem:[%s1 + $0x147c] sm:$0xf]
      %v1609 = vld [vmem:[%s1 + $0x1480] sm:$0xf]
      %v1610 = vld [vmem:[%s1 + $0x1484] sm:$0xf]
      %v1611 = vld [vmem:[%s1 + $0x1488] sm:$0xf]
      %v1612 = vld [vmem:[%s1 + $0x148c] sm:$0xf]
      %v1613 = vld [vmem:[%s1 + $0x1490] sm:$0xf]
      %v1614 = vld [vmem:[%s1 + $0x1494] sm:$0xf]
      %v1615 = vld [vmem:[%s1 + $0x1498] sm:$0xf]
      %v1616 = vld [vmem:[%s1 + $0x149c] sm:$0xf]
      %v1617 = vld [vmem:[%s1 + $0x14a0] sm:$0xf]
      %v1618 = vld [vmem:[%s1 + $0x14a4] sm:$0xf]
      %v1619 = vld [vmem:[%s1 + $0x14a8] sm:$0xf]
      %v1620 = vld [vmem:[%s1 + $0x14ac] sm:$0xf]
      %v1621 = vld [vmem:[%s1 + $0x14b0] sm:$0xf]
      %v1622 = vld [vmem:[%s1 + $0x14b4] sm:$0xf]
      %v1623 = vld [vmem:[%s1 + $0x14b8] sm:$0xf]
      %v1624 = vld [vmem:[%s1 + $0x14bc] sm:$0xf]
      %v1625 = vld [vmem:[%s1 + $0x14c0] sm:$0xf]
      %v1626 = vld [vmem:[%s1 + $0x14c4] sm:$0xf]
      %v1627 = vld [vmem:[%s1 + $0x14c8] sm:$0xf]
      %v1628 = vld [vmem:[%s1 + $0x14cc] sm:$0xf]
      %v1629 = vld [vmem:[%s1 + $0x14d0] sm:$0xf]
      %v1630 = vld [vmem:[%s1 + $0x14d4] sm:$0xf]
      %v1631 = vld [vmem:[%s1 + $0x14d8] sm:$0xf]
      %v1632 = vld [vmem:[%s1 + $0x14dc] sm:$0xf]
      %v1633 = vld [vmem:[%s1 + $0x14e0] sm:$0xf]
      %v1634 = vld [vmem:[%s1 + $0x14e4] sm:$0xf]
      %v1635 = vld [vmem:[%s1 + $0x14e8] sm:$0xf]
      %v1636 = vld [vmem:[%s1 + $0x14ec] sm:$0xf]
      %v1637 = vld [vmem:[%s1 + $0x14f0] sm:$0xf]
      %v1638 = vld [vmem:[%s1 + $0x14f4] sm:$0xf]
      %v1639 = vld [vmem:[%s1 + $0x14f8] sm:$0xf]
      %v1640 = vld [vmem:[%s1 + $0x14fc] sm:$0xf]
      %v1641 = vld [vmem:[%s1 + $0x1500] sm:$0xf]
      %v1642 = vld [vmem:[%s1 + $0x1504] sm:$0xf]
      %v1643 = vld [vmem:[%s1 + $0x1508] sm:$0xf]
      %v1644 = vld [vmem:[%s1 + $0x150c] sm:$0xf]
      %v1645 = vld [vmem:[%s1 + $0x1510] sm:$0xf]
      %v1646 = vld [vmem:[%s1 + $0x1514] sm:$0xf]
      %v1647 = vld [vmem:[%s1 + $0x1518] sm:$0xf]
      %v1648 = vld [vmem:[%s1 + $0x151c] sm:$0xf]
      %v1649 = vld [vmem:[%s1 + $0x1520] sm:$0xf]
      %v1650 = vld [vmem:[%s1 + $0x1524] sm:$0xf]
      %v1651 = vld [vmem:[%s1 + $0x1528] sm:$0xf]
      %v1652 = vld [vmem:[%s1 + $0x152c] sm:$0xf]
      %v1653 = vld [vmem:[%s1 + $0x1530] sm:$0xf]
      %v1654 = vld [vmem:[%s1 + $0x1534] sm:$0xf]
      %v1655 = vld [vmem:[%s1 + $0x1538] sm:$0xf]
      %v1656 = vld [vmem:[%s1 + $0x153c] sm:$0xf]
      %v1657 = vld [vmem:[%s1 + $0x1540] sm:$0xf]
      %v1658 = vld [vmem:[%s1 + $0x1544] sm:$0xf]
      %v1659 = vld [vmem:[%s1 + $0x1548] sm:$0xf]
      %v1660 = vld [vmem:[%s1 + $0x154c] sm:$0xf]
      %v1661 = vld [vmem:[%s1 + $0x1550] sm:$0xf]
      %v1662 = vld [vmem:[%s1 + $0x1554] sm:$0xf]
      %v1663 = vld [vmem:[%s1 + $0x1558] sm:$0xf]
      %v1664 = vld [vmem:[%s1 + $0x155c] sm:$0xf]
      %v1665 = vld [vmem:[%s1 + $0x1560] sm:$0xf]
      %v1666 = vld [vmem:[%s1 + $0x1564] sm:$0xf]
      %v1667 = vld [vmem:[%s1 + $0x1568] sm:$0xf]
      %v1668 = vld [vmem:[%s1 + $0x156c] sm:$0xf]
      %v1669 = vld [vmem:[%s1 + $0x1570] sm:$0xf]
      %v1670 = vld [vmem:[%s1 + $0x1574] sm:$0xf]
      %v1671 = vld [vmem:[%s1 + $0x1578] sm:$0xf]
      %v1672 = vld [vmem:[%s1 + $0x157c] sm:$0xf]
      %v1673 = vld [vmem:[%s1 + $0x1580] sm:$0xf]
      %v1674 = vld [vmem:[%s1 + $0x1584] sm:$0xf]
      %v1675 = vld [vmem:[%s1 + $0x1588] sm:$0xf]
      %v1676 = vld [vmem:[%s1 + $0x158c] sm:$0xf]
      %v1677 = vld [vmem:[%s1 + $0x1590] sm:$0xf]
      %v1678 = vld [vmem:[%s1 + $0x1594] sm:$0xf]
      %v1679 = vld [vmem:[%s1 + $0x1598] sm:$0xf]
      %v1680 = vld [vmem:[%s1 + $0x159c] sm:$0xf]
      %v1681 = vld [vmem:[%s1 + $0x15a0] sm:$0xf]
      %v1682 = vld [vmem:[%s1 + $0x15a4] sm:$0xf]
      %v1683 = vld [vmem:[%s1 + $0x15a8] sm:$0xf]
      %v1684 = vld [vmem:[%s1 + $0x15ac] sm:$0xf]
      %v1685 = vld [vmem:[%s1 + $0x15b0] sm:$0xf]
      %v1686 = vld [vmem:[%s1 + $0x15b4] sm:$0xf]
      %v1687 = vld [vmem:[%s1 + $0x15b8] sm:$0xf]
      %v1688 = vld [vmem:[%s1 + $0x15bc] sm:$0xf]
      %v1689 = vld [vmem:[%s1 + $0x15c0] sm:$0xf]
      %v1690 = vld [vmem:[%s1 + $0x15c4] sm:$0xf]
      %v1691 = vld [vmem:[%s1 + $0x15c8] sm:$0xf]
      %v1692 = vld [vmem:[%s1 + $0x15cc] sm:$0xf]
      %v1693 = vld [vmem:[%s1 + $0x15d0] sm:$0xf]
      %v1694 = vld [vmem:[%s1 + $0x15d4] sm:$0xf]
      %v1695 = vld [vmem:[%s1 + $0x15d8] sm:$0xf]
      %v1696 = vld [vmem:[%s1 + $0x15dc] sm:$0xf]
      %v1697 = vld [vmem:[%s1 + $0x15e0] sm:$0xf]
      %v1698 = vld [vmem:[%s1 + $0x15e4] sm:$0xf]
      %v1699 = vld [vmem:[%s1 + $0x15e8] sm:$0xf]
      %v1700 = vld [vmem:[%s1 + $0x15ec] sm:$0xf]
      %v1701 = vld [vmem:[%s1 + $0x15f0] sm:$0xf]
      %v1702 = vld [vmem:[%s1 + $0x15f4] sm:$0xf]
      %v1703 = vld [vmem:[%s1 + $0x15f8] sm:$0xf]
      %v1704 = vld [vmem:[%s1 + $0x15fc] sm:$0xf]
      %v1705 = vld [vmem:[%s1 + $0x1600] sm:$0xf]
      %v1706 = vld [vmem:[%s1 + $0x1604] sm:$0xf]
      %v1707 = vld [vmem:[%s1 + $0x1608] sm:$0xf]
      %v1708 = vld [vmem:[%s1 + $0x160c] sm:$0xf]
      %v1709 = vld [vmem:[%s1 + $0x1610] sm:$0xf]
      %v1710 = vld [vmem:[%s1 + $0x1614] sm:$0xf]
      %v1711 = vld [vmem:[%s1 + $0x1618] sm:$0xf]
      %v1712 = vld [vmem:[%s1 + $0x161c] sm:$0xf]
      %v1713 = vld [vmem:[%s1 + $0x1620] sm:$0xf]
      %v1714 = vld [vmem:[%s1 + $0x1624] sm:$0xf]
      %v1715 = vld [vmem:[%s1 + $0x1628] sm:$0xf]
      %v1716 = vld [vmem:[%s1 + $0x162c] sm:$0xf]
      %v1717 = vld [vmem:[%s1 + $0x1630] sm:$0xf]
      %v1718 = vld [vmem:[%s1 + $0x1634] sm:$0xf]
      %v1719 = vld [vmem:[%s1 + $0x1638] sm:$0xf]
      %v1720 = vld [vmem:[%s1 + $0x163c] sm:$0xf]
      %v1721 = vld [vmem:[%s1 + $0x1640] sm:$0xf]
      %v1722 = vld [vmem:[%s1 + $0x1644] sm:$0xf]
      %v1723 = vld [vmem:[%s1 + $0x1648] sm:$0xf]
      %v1724 = vld [vmem:[%s1 + $0x164c] sm:$0xf]
      %v1725 = vld [vmem:[%s1 + $0x1650] sm:$0xf]
      %v1726 = vld [vmem:[%s1 + $0x1654] sm:$0xf]
      %v1727 = vld [vmem:[%s1 + $0x1658] sm:$0xf]
      %v1728 = vld [vmem:[%s1 + $0x165c] sm:$0xf]
      %v1729 = vld [vmem:[%s1 + $0x1660] sm:$0xf]
      %v1730 = vld [vmem:[%s1 + $0x1664] sm:$0xf]
      %v1731 = vld [vmem:[%s1 + $0x1668] sm:$0xf]
      %v1732 = vld [vmem:[%s1 + $0x166c] sm:$0xf]
      %v1733 = vld [vmem:[%s1 + $0x1670] sm:$0xf]
      %v1734 = vld [vmem:[%s1 + $0x1674] sm:$0xf]
      %v1735 = vld [vmem:[%s1 + $0x1678] sm:$0xf]
      %v1736 = vld [vmem:[%s1 + $0x167c] sm:$0xf]
      %v1737 = vld [vmem:[%s4] sm:$0x1]
      %v1738 = vperm.slane %v1737, 0
      %v1784 = vunpack.c.l.b16 %v252
      %v1785 = vunpack.c.h.b16 %v252
      %v1786 = vunpack.c.l.b16 %v253
      %v1787 = vunpack.c.h.b16 %v253
      %v1788 = vunpack.c.l.b16 %v254
      %v1789 = vunpack.c.h.b16 %v254
      %v1790 = vunpack.c.l.b16 %v255
      %v1791 = vunpack.c.h.b16 %v255
      %v1792 = vunpack.c.l.b16 %v256
      %v1793 = vunpack.c.h.b16 %v256
      %v1794 = vunpack.c.l.b16 %v257
      %v1795 = vunpack.c.h.b16 %v257
      %v1796 = vunpack.c.l.b16 %v258
      %v1797 = vunpack.c.h.b16 %v258
      %v1798 = vunpack.c.l.b16 %v259
      %v1799 = vunpack.c.h.b16 %v259
      %v1800 = vunpack.c.l.b16 %v260
      %v1801 = vunpack.c.h.b16 %v260
      %v1802 = vunpack.c.l.b16 %v261
      %v1803 = vunpack.c.h.b16 %v261
      %v1804 = vunpack.c.l.b16 %v262
      %v1805 = vunpack.c.h.b16 %v262
      %v1806 = vunpack.c.l.b16 %v263
      %v1807 = vunpack.c.h.b16 %v263
      %v1808 = vunpack.c.l.b16 %v264
      %v1809 = vunpack.c.h.b16 %v264
      %v1810 = vunpack.c.l.b16 %v265
      %v1811 = vunpack.c.h.b16 %v265
      %v1812 = vunpack.c.l.b16 %v266
      %v1813 = vunpack.c.h.b16 %v266
      %v1814 = vunpack.c.l.b16 %v267
      %v1815 = vunpack.c.h.b16 %v267
      %v1816 = vunpack.c.l.b16 %v268
      %v1817 = vunpack.c.h.b16 %v268
      %v1818 = vunpack.c.l.b16 %v269
      %v1819 = vunpack.c.h.b16 %v269
      %v1820 = vunpack.c.l.b16 %v270
      %v1821 = vunpack.c.h.b16 %v270
      %v1822 = vunpack.c.l.b16 %v271
      %v1823 = vunpack.c.h.b16 %v271
      %v1824 = vunpack.c.l.b16 %v272
      %v1825 = vunpack.c.h.b16 %v272
      %v1826 = vunpack.c.l.b16 %v273
      %v1827 = vunpack.c.h.b16 %v273
      %v1828 = vunpack.c.l.b16 %v274
      %v1829 = vunpack.c.h.b16 %v274
      %v1830 = vunpack.c.l.b16 %v275
      %v1831 = vunpack.c.h.b16 %v275
      %v1832 = vunpack.c.l.b16 %v276
      %v1833 = vunpack.c.h.b16 %v276
      %v1834 = vunpack.c.l.b16 %v277
      %v1835 = vunpack.c.h.b16 %v277
      %v1836 = vunpack.c.l.b16 %v278
      %v1837 = vunpack.c.h.b16 %v278
      %v1838 = vunpack.c.l.b16 %v279
      %v1839 = vunpack.c.h.b16 %v279
      %v1840 = vunpack.c.l.b16 %v280
      %v1841 = vunpack.c.h.b16 %v280
      %v1842 = vunpack.c.l.b16 %v281
      %v1843 = vunpack.c.h.b16 %v281
      %v1844 = vunpack.c.l.b16 %v282
      %v1845 = vunpack.c.h.b16 %v282
      %v1846 = vunpack.c.l.b16 %v283
      %v1847 = vunpack.c.h.b16 %v283
      %v1848 = vunpack.c.l.b16 %v284
      %v1849 = vunpack.c.h.b16 %v284
      %v1850 = vunpack.c.l.b16 %v285
      %v1851 = vunpack.c.h.b16 %v285
      %v1852 = vunpack.c.l.b16 %v286
      %v1853 = vunpack.c.h.b16 %v286
      %v1854 = vunpack.c.l.b16 %v287
      %v1855 = vunpack.c.h.b16 %v287
      %v1856 = vunpack.c.l.b16 %v288
      %v1857 = vunpack.c.h.b16 %v288
      %v1858 = vunpack.c.l.b16 %v289
      %v1859 = vunpack.c.h.b16 %v289
      %v1860 = vunpack.c.l.b16 %v290
      %v1861 = vunpack.c.h.b16 %v290
      %v1862 = vunpack.c.l.b16 %v291
      %v1863 = vunpack.c.h.b16 %v291
      %v1864 = vunpack.c.l.b16 %v292
      %v1865 = vunpack.c.h.b16 %v292
      %v1866 = vunpack.c.l.b16 %v293
      %v1867 = vunpack.c.h.b16 %v293
      %v1868 = vunpack.c.l.b16 %v294
      %v1869 = vunpack.c.h.b16 %v294
      %v1870 = vunpack.c.l.b16 %v295
      %v1871 = vunpack.c.h.b16 %v295
      %v1872 = vunpack.c.l.b16 %v296
      %v1873 = vunpack.c.h.b16 %v296
      %v1874 = vpack.c.b16 %v1784, %v1784
      %v1875 = vpack.c.b16 %v1785, %v1785
      %v1876 = vpack.c.b16 %v1786, %v1786
      %v1877 = vpack.c.b16 %v1787, %v1787
      %v1878 = vpack.c.b16 %v1788, %v1788
      %v1879 = vpack.c.b16 %v1789, %v1789
      %v1880 = vpack.c.b16 %v1790, %v1790
      %v1881 = vpack.c.b16 %v1791, %v1791
      %v1882 = vpack.c.b16 %v1792, %v1792
      %v1883 = vpack.c.b16 %v1793, %v1793
      %v1884 = vpack.c.b16 %v1794, %v1794
      %v1885 = vpack.c.b16 %v1795, %v1795
      %v1886 = vpack.c.b16 %v1796, %v1796
      %v1887 = vpack.c.b16 %v1797, %v1797
      %v1888 = vpack.c.b16 %v1798, %v1798
      %v1889 = vpack.c.b16 %v1799, %v1799
      %v1890 = vpack.c.b16 %v1800, %v1800
      %v1891 = vpack.c.b16 %v1801, %v1801
      %v1892 = vpack.c.b16 %v1802, %v1802
      %v1893 = vpack.c.b16 %v1803, %v1803
      %v1894 = vpack.c.b16 %v1804, %v1804
      %v1895 = vpack.c.b16 %v1805, %v1805
      %v1896 = vpack.c.b16 %v1806, %v1806
      %v1897 = vpack.c.b16 %v1807, %v1807
      %v1898 = vpack.c.b16 %v1808, %v1808
      %v1899 = vpack.c.b16 %v1809, %v1809
      %v1900 = vpack.c.b16 %v1810, %v1810
      %v1901 = vpack.c.b16 %v1811, %v1811
      %v1902 = vpack.c.b16 %v1812, %v1812
      %v1903 = vpack.c.b16 %v1813, %v1813
      %v1904 = vpack.c.b16 %v1814, %v1814
      %v1905 = vpack.c.b16 %v1815, %v1815
      %v1906 = vpack.c.b16 %v1816, %v1816
      %v1907 = vpack.c.b16 %v1817, %v1817
      %v1908 = vpack.c.b16 %v1818, %v1818
      %v1909 = vpack.c.b16 %v1819, %v1819
      %v1910 = vpack.c.b16 %v1820, %v1820
      %v1911 = vpack.c.b16 %v1821, %v1821
      %v1912 = vpack.c.b16 %v1822, %v1822
      %v1913 = vpack.c.b16 %v1823, %v1823
      %v1914 = vpack.c.b16 %v1824, %v1824
      %v1915 = vpack.c.b16 %v1825, %v1825
      %v1916 = vpack.c.b16 %v1826, %v1826
      %v1917 = vpack.c.b16 %v1827, %v1827
      %v1918 = vpack.c.b16 %v1828, %v1828
      %v1919 = vpack.c.b16 %v1829, %v1829
      %v1920 = vpack.c.b16 %v1830, %v1830
      %v1921 = vpack.c.b16 %v1831, %v1831
      %v1922 = vpack.c.b16 %v1832, %v1832
      %v1923 = vpack.c.b16 %v1833, %v1833
      %v1924 = vpack.c.b16 %v1834, %v1834
      %v1925 = vpack.c.b16 %v1835, %v1835
      %v1926 = vpack.c.b16 %v1836, %v1836
      %v1927 = vpack.c.b16 %v1837, %v1837
      %v1928 = vpack.c.b16 %v1838, %v1838
      %v1929 = vpack.c.b16 %v1839, %v1839
      %v1930 = vpack.c.b16 %v1840, %v1840
      %v1931 = vpack.c.b16 %v1841, %v1841
      %v1932 = vpack.c.b16 %v1842, %v1842
      %v1933 = vpack.c.b16 %v1843, %v1843
      %v1934 = vpack.c.b16 %v1844, %v1844
      %v1935 = vpack.c.b16 %v1845, %v1845
      %v1936 = vpack.c.b16 %v1846, %v1846
      %v1937 = vpack.c.b16 %v1847, %v1847
      %v1938 = vpack.c.b16 %v1848, %v1848
      %v1939 = vpack.c.b16 %v1849, %v1849
      %v1940 = vpack.c.b16 %v1850, %v1850
      %v1941 = vpack.c.b16 %v1851, %v1851
      %v1942 = vpack.c.b16 %v1852, %v1852
      %v1943 = vpack.c.b16 %v1853, %v1853
      %v1944 = vpack.c.b16 %v1854, %v1854
      %v1945 = vpack.c.b16 %v1855, %v1855
      %v1946 = vpack.c.b16 %v1856, %v1856
      %v1947 = vpack.c.b16 %v1857, %v1857
      %v1948 = vpack.c.b16 %v1858, %v1858
      %v1949 = vpack.c.b16 %v1859, %v1859
      %v1950 = vpack.c.b16 %v1860, %v1860
      %v1951 = vpack.c.b16 %v1861, %v1861
      %v1952 = vpack.c.b16 %v1862, %v1862
      %v1953 = vpack.c.b16 %v1863, %v1863
      %v1954 = vpack.c.b16 %v1864, %v1864
      %v1955 = vpack.c.b16 %v1865, %v1865
      %v1956 = vpack.c.b16 %v1866, %v1866
      %v1957 = vpack.c.b16 %v1867, %v1867
      %v1958 = vpack.c.b16 %v1868, %v1868
      %v1959 = vpack.c.b16 %v1869, %v1869
      %v1960 = vpack.c.b16 %v1870, %v1870
      %v1961 = vpack.c.b16 %v1871, %v1871
      %v1962 = vpack.c.b16 %v1872, %v1872
      %v1963 = vpack.c.b16 %v1873, %v1873
      %v3494 = vunpack.c.l.b16 %v297
      %v3495 = vunpack.c.l.b16 %v298
      %v3496 = vunpack.c.l.b16 %v299
      %v3497 = vunpack.c.l.b16 %v300
      %v3498 = vunpack.c.l.b16 %v301
      %v3499 = vunpack.c.l.b16 %v302
      %v3500 = vunpack.c.l.b16 %v303
      %v3501 = vunpack.c.l.b16 %v304
      %v3502 = vunpack.c.l.b16 %v305
      %v3503 = vunpack.c.l.b16 %v306
      %v3504 = vunpack.c.l.b16 %v307
      %v3505 = vunpack.c.l.b16 %v308
      %v3506 = vunpack.c.l.b16 %v309
      %v3507 = vunpack.c.l.b16 %v310
      %v3508 = vunpack.c.l.b16 %v311
      %v3509 = vunpack.c.l.b16 %v312
      %v3510 = vunpack.c.l.b16 %v313
      %v3511 = vunpack.c.l.b16 %v314
      %v3512 = vunpack.c.l.b16 %v315
      %v3513 = vunpack.c.l.b16 %v316
      %v3514 = vunpack.c.l.b16 %v317
      %v3515 = vunpack.c.l.b16 %v318
      %v3516 = vunpack.c.l.b16 %v319
      %v3517 = vunpack.c.l.b16 %v320
      %v3518 = vunpack.c.l.b16 %v321
      %v3519 = vunpack.c.l.b16 %v322
      %v3520 = vunpack.c.l.b16 %v323
      %v3521 = vunpack.c.l.b16 %v324
      %v3522 = vunpack.c.l.b16 %v325
      %v3523 = vunpack.c.l.b16 %v326
      %v3524 = vunpack.c.l.b16 %v327
      %v3525 = vunpack.c.l.b16 %v328
      %v3526 = vunpack.c.l.b16 %v329
      %v3527 = vunpack.c.l.b16 %v330
      %v3528 = vunpack.c.l.b16 %v331
      %v3529 = vunpack.c.l.b16 %v332
      %v3530 = vunpack.c.l.b16 %v333
      %v3531 = vunpack.c.l.b16 %v334
      %v3532 = vunpack.c.l.b16 %v335
      %v3533 = vunpack.c.l.b16 %v336
      %v3534 = vunpack.c.l.b16 %v337
      %v3535 = vunpack.c.l.b16 %v338
      %v3536 = vunpack.c.l.b16 %v339
      %v3537 = vunpack.c.l.b16 %v340
      %v3538 = vunpack.c.l.b16 %v341
      %v3539 = vunpack.c.l.b16 %v342
      %v3540 = vunpack.c.l.b16 %v343
      %v3541 = vunpack.c.l.b16 %v344
      %v3542 = vunpack.c.l.b16 %v345
      %v3543 = vunpack.c.l.b16 %v346
      %v3544 = vunpack.c.l.b16 %v347
      %v3545 = vunpack.c.l.b16 %v348
      %v3546 = vunpack.c.l.b16 %v349
      %v3547 = vunpack.c.l.b16 %v350
      %v3548 = vunpack.c.l.b16 %v351
      %v3549 = vunpack.c.l.b16 %v352
      %v3550 = vunpack.c.l.b16 %v353
      %v3551 = vunpack.c.l.b16 %v354
      %v3552 = vunpack.c.l.b16 %v355
      %v3553 = vunpack.c.l.b16 %v356
      %v3554 = vunpack.c.l.b16 %v357
      %v3555 = vunpack.c.l.b16 %v358
      %v3556 = vunpack.c.l.b16 %v359
      %v3557 = vunpack.c.l.b16 %v360
      %v3558 = vunpack.c.l.b16 %v361
      %v3559 = vunpack.c.l.b16 %v362
      %v3560 = vunpack.c.l.b16 %v363
      %v3561 = vunpack.c.l.b16 %v364
      %v3562 = vunpack.c.l.b16 %v365
      %v3563 = vunpack.c.l.b16 %v366
      %v3564 = vunpack.c.l.b16 %v367
      %v3565 = vunpack.c.l.b16 %v368
      %v3566 = vunpack.c.l.b16 %v369
      %v3567 = vunpack.c.l.b16 %v370
      %v3568 = vunpack.c.l.b16 %v371
      %v3569 = vunpack.c.l.b16 %v372
      %v3570 = vunpack.c.l.b16 %v373
      %v3571 = vunpack.c.l.b16 %v374
      %v3572 = vunpack.c.l.b16 %v375
      %v3573 = vunpack.c.l.b16 %v376
      %v3574 = vunpack.c.l.b16 %v377
      %v3575 = vunpack.c.l.b16 %v378
      %v3576 = vunpack.c.l.b16 %v379
      %v3577 = vunpack.c.l.b16 %v380
      %v3578 = vunpack.c.l.b16 %v381
      %v3579 = vunpack.c.l.b16 %v382
      %v3580 = vunpack.c.l.b16 %v383
      %v3581 = vunpack.c.l.b16 %v384
      %v3582 = vunpack.c.l.b16 %v385
      %v3583 = vunpack.c.l.b16 %v386
      %v3584 = vunpack.c.l.b16 %v387
      %v3585 = vunpack.c.l.b16 %v388
      %v3586 = vunpack.c.l.b16 %v389
      %v3587 = vunpack.c.l.b16 %v390
      %v3588 = vunpack.c.l.b16 %v391
      %v3589 = vunpack.c.l.b16 %v392
      %v3590 = vunpack.c.l.b16 %v393
      %v3591 = vunpack.c.l.b16 %v394
      %v3592 = vunpack.c.l.b16 %v395
      %v3593 = vunpack.c.l.b16 %v396
      %v3594 = vunpack.c.l.b16 %v397
      %v3595 = vunpack.c.l.b16 %v398
      %v3596 = vunpack.c.l.b16 %v399
      %v3597 = vunpack.c.l.b16 %v400
      %v3598 = vunpack.c.l.b16 %v401
      %v3599 = vunpack.c.l.b16 %v402
      %v3600 = vunpack.c.l.b16 %v403
      %v3601 = vunpack.c.l.b16 %v404
      %v3602 = vunpack.c.l.b16 %v405
      %v3603 = vunpack.c.l.b16 %v406
      %v3604 = vunpack.c.l.b16 %v407
      %v3605 = vunpack.c.l.b16 %v408
      %v3606 = vunpack.c.l.b16 %v409
      %v3607 = vunpack.c.l.b16 %v410
      %v3608 = vunpack.c.l.b16 %v411
      %v3609 = vunpack.c.l.b16 %v412
      %v3610 = vunpack.c.l.b16 %v413
      %v3611 = vunpack.c.l.b16 %v414
      %v3612 = vunpack.c.l.b16 %v415
      %v3613 = vunpack.c.l.b16 %v416
      %v3614 = vunpack.c.l.b16 %v417
      %v3615 = vunpack.c.l.b16 %v418
      %v3616 = vunpack.c.l.b16 %v419
      %v3617 = vunpack.c.l.b16 %v420
      %v3618 = vunpack.c.l.b16 %v421
      %v3619 = vunpack.c.l.b16 %v422
      %v3620 = vunpack.c.l.b16 %v423
      %v3621 = vunpack.c.l.b16 %v424
      %v3622 = vunpack.c.l.b16 %v425
      %v3623 = vunpack.c.l.b16 %v426
      %v3624 = vunpack.c.l.b16 %v427
      %v3625 = vunpack.c.l.b16 %v428
      %v3626 = vunpack.c.l.b16 %v429
      %v3627 = vunpack.c.l.b16 %v430
      %v3628 = vunpack.c.l.b16 %v431
      %v3629 = vunpack.c.l.b16 %v432
      %v3630 = vunpack.c.l.b16 %v433
      %v3631 = vunpack.c.l.b16 %v434
      %v3632 = vunpack.c.l.b16 %v435
      %v3633 = vunpack.c.l.b16 %v436
      %v3634 = vunpack.c.l.b16 %v437
      %v3635 = vunpack.c.l.b16 %v438
      %v3636 = vunpack.c.l.b16 %v439
      %v3637 = vunpack.c.l.b16 %v440
      %v3638 = vunpack.c.l.b16 %v441
      %v3639 = vunpack.c.l.b16 %v442
      %v3640 = vunpack.c.l.b16 %v443
      %v3641 = vunpack.c.l.b16 %v444
      %v3642 = vunpack.c.l.b16 %v445
      %v3643 = vunpack.c.l.b16 %v446
      %v3644 = vunpack.c.l.b16 %v447
      %v3645 = vunpack.c.l.b16 %v448
      %v3646 = vunpack.c.l.b16 %v449
      %v3647 = vunpack.c.l.b16 %v450
      %v3648 = vunpack.c.l.b16 %v451
      %v3649 = vunpack.c.l.b16 %v452
      %v3650 = vunpack.c.l.b16 %v453
      %v3651 = vunpack.c.l.b16 %v454
      %v3652 = vunpack.c.l.b16 %v455
      %v3653 = vunpack.c.l.b16 %v456
      %v3654 = vunpack.c.l.b16 %v457
      %v3655 = vunpack.c.l.b16 %v458
      %v3656 = vunpack.c.l.b16 %v459
      %v3657 = vunpack.c.l.b16 %v460
      %v3658 = vunpack.c.l.b16 %v461
      %v3659 = vunpack.c.l.b16 %v462
      %v3660 = vunpack.c.l.b16 %v463
      %v3661 = vunpack.c.l.b16 %v464
      %v3662 = vunpack.c.l.b16 %v465
      %v3663 = vunpack.c.l.b16 %v466
      %v3664 = vunpack.c.l.b16 %v467
      %v3665 = vunpack.c.l.b16 %v468
      %v3666 = vunpack.c.l.b16 %v469
      %v3667 = vunpack.c.l.b16 %v470
      %v3668 = vunpack.c.l.b16 %v471
      %v3669 = vunpack.c.l.b16 %v472
      %v3670 = vunpack.c.l.b16 %v473
      %v3671 = vunpack.c.l.b16 %v474
      %v3672 = vunpack.c.l.b16 %v475
      %v3673 = vunpack.c.l.b16 %v476
      %v3674 = vunpack.c.l.b16 %v477
      %v3675 = vunpack.c.l.b16 %v478
      %v3676 = vunpack.c.l.b16 %v479
      %v3677 = vunpack.c.l.b16 %v480
      %v3678 = vunpack.c.l.b16 %v481
      %v3679 = vunpack.c.l.b16 %v482
      %v3680 = vunpack.c.l.b16 %v483
      %v3681 = vunpack.c.l.b16 %v484
      %v3682 = vunpack.c.l.b16 %v485
      %v3683 = vunpack.c.l.b16 %v486
      %v3684 = vunpack.c.l.b16 %v487
      %v3685 = vunpack.c.l.b16 %v488
      %v3686 = vunpack.c.l.b16 %v489
      %v3687 = vunpack.c.l.b16 %v490
      %v3688 = vunpack.c.l.b16 %v491
      %v3689 = vunpack.c.l.b16 %v492
      %v3690 = vunpack.c.l.b16 %v493
      %v3691 = vunpack.c.l.b16 %v494
      %v3692 = vunpack.c.l.b16 %v495
      %v3693 = vunpack.c.l.b16 %v496
      %v3694 = vunpack.c.l.b16 %v497
      %v3695 = vunpack.c.l.b16 %v498
      %v3696 = vunpack.c.l.b16 %v499
      %v3697 = vunpack.c.l.b16 %v500
      %v3698 = vunpack.c.l.b16 %v501
      %v3699 = vunpack.c.l.b16 %v502
      %v3700 = vunpack.c.l.b16 %v503
      %v3701 = vunpack.c.l.b16 %v504
      %v3702 = vunpack.c.l.b16 %v505
      %v3703 = vunpack.c.l.b16 %v506
      %v3704 = vunpack.c.l.b16 %v507
      %v3705 = vunpack.c.l.b16 %v508
      %v3706 = vunpack.c.l.b16 %v509
      %v3707 = vunpack.c.l.b16 %v510
      %v3708 = vunpack.c.l.b16 %v511
      %v3709 = vunpack.c.l.b16 %v512
      %v3710 = vunpack.c.l.b16 %v513
      %v3711 = vunpack.c.l.b16 %v514
      %v3712 = vunpack.c.l.b16 %v515
      %v3713 = vunpack.c.l.b16 %v516
      %v3714 = vunpack.c.l.b16 %v517
      %v3715 = vunpack.c.l.b16 %v518
      %v3716 = vunpack.c.l.b16 %v519
      %v3717 = vunpack.c.l.b16 %v520
      %v3718 = vunpack.c.l.b16 %v521
      %v3719 = vunpack.c.l.b16 %v522
      %v3720 = vunpack.c.l.b16 %v523
      %v3721 = vunpack.c.l.b16 %v524
      %v3722 = vunpack.c.l.b16 %v525
      %v3723 = vunpack.c.l.b16 %v526
      %v3724 = vunpack.c.l.b16 %v527
      %v3725 = vunpack.c.l.b16 %v528
      %v3726 = vunpack.c.l.b16 %v529
      %v3727 = vunpack.c.l.b16 %v530
      %v3728 = vunpack.c.l.b16 %v531
      %v3729 = vunpack.c.l.b16 %v532
      %v3730 = vunpack.c.l.b16 %v533
      %v3731 = vunpack.c.l.b16 %v534
      %v3732 = vunpack.c.l.b16 %v535
      %v3733 = vunpack.c.l.b16 %v536
      %v3734 = vunpack.c.l.b16 %v537
      %v3735 = vunpack.c.l.b16 %v538
      %v3736 = vunpack.c.l.b16 %v539
      %v3737 = vunpack.c.l.b16 %v540
      %v3738 = vunpack.c.l.b16 %v541
      %v3739 = vunpack.c.l.b16 %v542
      %v3740 = vunpack.c.l.b16 %v543
      %v3741 = vunpack.c.l.b16 %v544
      %v3742 = vunpack.c.l.b16 %v545
      %v3743 = vunpack.c.l.b16 %v546
      %v3744 = vunpack.c.l.b16 %v547
      %v3745 = vunpack.c.l.b16 %v548
      %v3746 = vunpack.c.l.b16 %v549
      %v3747 = vunpack.c.l.b16 %v550
      %v3748 = vunpack.c.l.b16 %v551
      %v3749 = vunpack.c.l.b16 %v552
      %v3750 = vunpack.c.l.b16 %v553
      %v3751 = vunpack.c.l.b16 %v554
      %v3752 = vunpack.c.l.b16 %v555
      %v3753 = vunpack.c.l.b16 %v556
      %v3754 = vunpack.c.l.b16 %v557
      %v3755 = vunpack.c.l.b16 %v558
      %v3756 = vunpack.c.l.b16 %v559
      %v3757 = vunpack.c.l.b16 %v560
      %v3758 = vunpack.c.l.b16 %v561
      %v3759 = vunpack.c.l.b16 %v562
      %v3760 = vunpack.c.l.b16 %v563
      %v3761 = vunpack.c.l.b16 %v564
      %v3762 = vunpack.c.l.b16 %v565
      %v3763 = vunpack.c.l.b16 %v566
      %v3764 = vunpack.c.l.b16 %v567
      %v3765 = vunpack.c.l.b16 %v568
      %v3766 = vunpack.c.l.b16 %v569
      %v3767 = vunpack.c.l.b16 %v570
      %v3768 = vunpack.c.l.b16 %v571
      %v3769 = vunpack.c.l.b16 %v572
      %v3770 = vunpack.c.l.b16 %v573
      %v3771 = vunpack.c.l.b16 %v574
      %v3772 = vunpack.c.l.b16 %v575
      %v3773 = vunpack.c.l.b16 %v576
      %v3774 = vunpack.c.l.b16 %v577
      %v3775 = vunpack.c.l.b16 %v578
      %v3776 = vunpack.c.l.b16 %v579
      %v3777 = vunpack.c.l.b16 %v580
      %v3778 = vunpack.c.l.b16 %v581
      %v3779 = vunpack.c.l.b16 %v582
      %v3780 = vunpack.c.l.b16 %v583
      %v3781 = vunpack.c.l.b16 %v584
      %v3782 = vunpack.c.l.b16 %v585
      %v3783 = vunpack.c.l.b16 %v586
      %v3784 = vunpack.c.l.b16 %v587
      %v3785 = vunpack.c.l.b16 %v588
      %v3786 = vunpack.c.l.b16 %v589
      %v3787 = vunpack.c.l.b16 %v590
      %v3788 = vunpack.c.l.b16 %v591
      %v3789 = vunpack.c.l.b16 %v592
      %v3790 = vunpack.c.l.b16 %v593
      %v3791 = vunpack.c.l.b16 %v594
      %v3792 = vunpack.c.l.b16 %v595
      %v3793 = vunpack.c.l.b16 %v596
      %v3794 = vunpack.c.l.b16 %v597
      %v3795 = vunpack.c.l.b16 %v598
      %v3796 = vunpack.c.l.b16 %v599
      %v3797 = vunpack.c.l.b16 %v600
      %v3798 = vunpack.c.l.b16 %v601
      %v3799 = vunpack.c.l.b16 %v602
      %v3800 = vunpack.c.l.b16 %v603
      %v3801 = vunpack.c.l.b16 %v604
      %v3802 = vunpack.c.l.b16 %v605
      %v3803 = vunpack.c.l.b16 %v606
      %v3804 = vunpack.c.l.b16 %v607
      %v3805 = vunpack.c.l.b16 %v608
      %v3806 = vunpack.c.l.b16 %v609
      %v3807 = vunpack.c.l.b16 %v610
      %v3808 = vunpack.c.l.b16 %v611
      %v3809 = vunpack.c.l.b16 %v612
      %v3810 = vunpack.c.l.b16 %v613
      %v3811 = vunpack.c.l.b16 %v614
      %v3812 = vunpack.c.l.b16 %v615
      %v3813 = vunpack.c.l.b16 %v616
      %v3814 = vunpack.c.l.b16 %v617
      %v3815 = vunpack.c.l.b16 %v618
      %v3816 = vunpack.c.l.b16 %v619
      %v3817 = vunpack.c.l.b16 %v620
      %v3818 = vunpack.c.l.b16 %v621
      %v3819 = vunpack.c.l.b16 %v622
      %v3820 = vunpack.c.l.b16 %v623
      %v3821 = vunpack.c.l.b16 %v624
      %v3822 = vunpack.c.l.b16 %v625
      %v3823 = vunpack.c.l.b16 %v626
      %v3824 = vunpack.c.l.b16 %v627
      %v3825 = vunpack.c.l.b16 %v628
      %v3826 = vunpack.c.l.b16 %v629
      %v3827 = vunpack.c.l.b16 %v630
      %v3828 = vunpack.c.l.b16 %v631
      %v3829 = vunpack.c.l.b16 %v632
      %v3830 = vunpack.c.l.b16 %v633
      %v3831 = vunpack.c.l.b16 %v634
      %v3832 = vunpack.c.l.b16 %v635
      %v3833 = vunpack.c.l.b16 %v636
      %v3834 = vunpack.c.l.b16 %v637
      %v3835 = vunpack.c.l.b16 %v638
      %v3836 = vunpack.c.l.b16 %v639
      %v3837 = vunpack.c.l.b16 %v640
      %v3838 = vunpack.c.l.b16 %v641
      %v3839 = vunpack.c.l.b16 %v642
      %v3840 = vunpack.c.l.b16 %v643
      %v3841 = vunpack.c.l.b16 %v644
      %v3842 = vunpack.c.l.b16 %v645
      %v3843 = vunpack.c.l.b16 %v646
      %v3844 = vunpack.c.l.b16 %v647
      %v3845 = vunpack.c.l.b16 %v648
      %v3846 = vunpack.c.l.b16 %v649
      %v3847 = vunpack.c.l.b16 %v650
      %v3848 = vunpack.c.l.b16 %v651
      %v3849 = vunpack.c.l.b16 %v652
      %v3850 = vunpack.c.l.b16 %v653
      %v3851 = vunpack.c.l.b16 %v654
      %v3852 = vunpack.c.l.b16 %v655
      %v3853 = vunpack.c.l.b16 %v656
      %v3854 = vunpack.c.l.b16 %v657
      %v3855 = vunpack.c.l.b16 %v658
      %v3856 = vunpack.c.l.b16 %v659
      %v3857 = vunpack.c.l.b16 %v660
      %v3858 = vunpack.c.l.b16 %v661
      %v3859 = vunpack.c.l.b16 %v662
      %v3860 = vunpack.c.l.b16 %v663
      %v3861 = vunpack.c.l.b16 %v664
      %v3862 = vunpack.c.l.b16 %v665
      %v3863 = vunpack.c.l.b16 %v666
      %v3864 = vunpack.c.l.b16 %v667
      %v3865 = vunpack.c.l.b16 %v668
      %v3866 = vunpack.c.l.b16 %v669
      %v3867 = vunpack.c.l.b16 %v670
      %v3868 = vunpack.c.l.b16 %v671
      %v3869 = vunpack.c.l.b16 %v672
      %v3870 = vunpack.c.l.b16 %v673
      %v3871 = vunpack.c.l.b16 %v674
      %v3872 = vunpack.c.l.b16 %v675
      %v3873 = vunpack.c.l.b16 %v676
      %v3874 = vunpack.c.l.b16 %v677
      %v3875 = vunpack.c.l.b16 %v678
      %v3876 = vunpack.c.l.b16 %v679
      %v3877 = vunpack.c.l.b16 %v680
      %v3878 = vunpack.c.l.b16 %v681
      %v3879 = vunpack.c.l.b16 %v682
      %v3880 = vunpack.c.l.b16 %v683
      %v3881 = vunpack.c.l.b16 %v684
      %v3882 = vunpack.c.l.b16 %v685
      %v3883 = vunpack.c.l.b16 %v686
      %v3884 = vunpack.c.l.b16 %v687
      %v3885 = vunpack.c.l.b16 %v688
      %v3886 = vunpack.c.l.b16 %v689
      %v3887 = vunpack.c.l.b16 %v690
      %v3888 = vunpack.c.l.b16 %v691
      %v3889 = vunpack.c.l.b16 %v692
      %v3890 = vunpack.c.l.b16 %v693
      %v3891 = vunpack.c.l.b16 %v694
      %v3892 = vunpack.c.l.b16 %v695
      %v3893 = vunpack.c.l.b16 %v696
      %v3894 = vunpack.c.l.b16 %v697
      %v3895 = vunpack.c.l.b16 %v698
      %v3896 = vunpack.c.l.b16 %v699
      %v3897 = vunpack.c.l.b16 %v700
      %v3898 = vunpack.c.l.b16 %v701
      %v3899 = vunpack.c.l.b16 %v702
      %v3900 = vunpack.c.l.b16 %v703
      %v3901 = vunpack.c.l.b16 %v704
      %v3902 = vunpack.c.l.b16 %v705
      %v3903 = vunpack.c.l.b16 %v706
      %v3904 = vunpack.c.l.b16 %v707
      %v3905 = vunpack.c.l.b16 %v708
      %v3906 = vunpack.c.l.b16 %v709
      %v3907 = vunpack.c.l.b16 %v710
      %v3908 = vunpack.c.l.b16 %v711
      %v3909 = vunpack.c.l.b16 %v712
      %v3910 = vunpack.c.l.b16 %v713
      %v3911 = vunpack.c.l.b16 %v714
      %v3912 = vunpack.c.l.b16 %v715
      %v3913 = vunpack.c.l.b16 %v716
      %v3914 = vunpack.c.l.b16 %v717
      %v3915 = vunpack.c.l.b16 %v718
      %v3916 = vunpack.c.l.b16 %v719
      %v3917 = vunpack.c.l.b16 %v720
      %v3918 = vunpack.c.l.b16 %v721
      %v3919 = vunpack.c.l.b16 %v722
      %v3920 = vunpack.c.l.b16 %v723
      %v3921 = vunpack.c.l.b16 %v724
      %v3922 = vunpack.c.l.b16 %v725
      %v3923 = vunpack.c.l.b16 %v726
      %v3924 = vunpack.c.l.b16 %v727
      %v3925 = vunpack.c.l.b16 %v728
      %v3926 = vunpack.c.l.b16 %v729
      %v3927 = vunpack.c.l.b16 %v730
      %v3928 = vunpack.c.l.b16 %v731
      %v3929 = vunpack.c.l.b16 %v732
      %v3930 = vunpack.c.l.b16 %v733
      %v3931 = vunpack.c.l.b16 %v734
      %v3932 = vunpack.c.l.b16 %v735
      %v3933 = vunpack.c.l.b16 %v736
      %v3934 = vunpack.c.l.b16 %v737
      %v3935 = vunpack.c.l.b16 %v738
      %v3936 = vunpack.c.l.b16 %v739
      %v3937 = vunpack.c.l.b16 %v740
      %v3938 = vunpack.c.l.b16 %v741
      %v3939 = vunpack.c.l.b16 %v742
      %v3940 = vunpack.c.l.b16 %v743
      %v3941 = vunpack.c.l.b16 %v744
      %v3942 = vunpack.c.l.b16 %v745
      %v3943 = vunpack.c.l.b16 %v746
      %v3944 = vunpack.c.l.b16 %v747
      %v3945 = vunpack.c.l.b16 %v748
      %v3946 = vunpack.c.l.b16 %v749
      %v3947 = vunpack.c.l.b16 %v750
      %v3948 = vunpack.c.l.b16 %v751
      %v3949 = vunpack.c.l.b16 %v752
      %v3950 = vunpack.c.l.b16 %v753
      %v3951 = vunpack.c.l.b16 %v754
      %v3952 = vunpack.c.l.b16 %v755
      %v3953 = vunpack.c.l.b16 %v756
      %v3954 = vunpack.c.l.b16 %v757
      %v3955 = vunpack.c.l.b16 %v758
      %v3956 = vunpack.c.l.b16 %v759
      %v3957 = vunpack.c.l.b16 %v760
      %v3958 = vunpack.c.l.b16 %v761
      %v3959 = vunpack.c.l.b16 %v762
      %v3960 = vunpack.c.l.b16 %v763
      %v3961 = vunpack.c.l.b16 %v764
      %v3962 = vunpack.c.l.b16 %v765
      %v3963 = vunpack.c.l.b16 %v766
      %v3964 = vunpack.c.l.b16 %v767
      %v3965 = vunpack.c.l.b16 %v768
      %v3966 = vunpack.c.l.b16 %v769
      %v3967 = vunpack.c.l.b16 %v770
      %v3968 = vunpack.c.l.b16 %v771
      %v3969 = vunpack.c.l.b16 %v772
      %v3970 = vunpack.c.l.b16 %v773
      %v3971 = vunpack.c.l.b16 %v774
      %v3972 = vunpack.c.l.b16 %v775
      %v3973 = vunpack.c.l.b16 %v776
      %v3974 = vunpack.c.l.b16 %v777
      %v3975 = vunpack.c.l.b16 %v778
      %v3976 = vunpack.c.l.b16 %v779
      %v3977 = vunpack.c.l.b16 %v780
      %v3978 = vunpack.c.l.b16 %v781
      %v3979 = vunpack.c.l.b16 %v782
      %v3980 = vunpack.c.l.b16 %v783
      %v3981 = vunpack.c.l.b16 %v784
      %v3982 = vunpack.c.l.b16 %v785
      %v3983 = vunpack.c.l.b16 %v786
      %v3984 = vunpack.c.l.b16 %v787
      %v3985 = vunpack.c.l.b16 %v788
      %v3986 = vunpack.c.l.b16 %v789
      %v3987 = vunpack.c.l.b16 %v790
      %v3988 = vunpack.c.l.b16 %v791
      %v3989 = vunpack.c.l.b16 %v792
      %v3990 = vunpack.c.l.b16 %v793
      %v3991 = vunpack.c.l.b16 %v794
      %v3992 = vunpack.c.l.b16 %v795
      %v3993 = vunpack.c.l.b16 %v796
      %v3994 = vunpack.c.l.b16 %v797
      %v3995 = vunpack.c.l.b16 %v798
      %v3996 = vunpack.c.l.b16 %v799
      %v3997 = vunpack.c.l.b16 %v800
      %v3998 = vunpack.c.l.b16 %v801
      %v3999 = vunpack.c.l.b16 %v802
      %v4000 = vunpack.c.l.b16 %v803
      %v4001 = vunpack.c.l.b16 %v804
      %v4002 = vunpack.c.l.b16 %v805
      %v4003 = vunpack.c.l.b16 %v806
      %v4004 = vunpack.c.l.b16 %v807
      %v4005 = vunpack.c.l.b16 %v808
      %v4006 = vunpack.c.l.b16 %v809
      %v4007 = vunpack.c.l.b16 %v810
      %v4008 = vunpack.c.l.b16 %v811
      %v4009 = vunpack.c.l.b16 %v812
      %v4010 = vunpack.c.l.b16 %v813
      %v4011 = vunpack.c.l.b16 %v814
      %v4012 = vunpack.c.l.b16 %v815
      %v4013 = vunpack.c.l.b16 %v816
      %v4014 = vunpack.c.l.b16 %v817
      %v4015 = vunpack.c.l.b16 %v818
      %v4016 = vunpack.c.l.b16 %v819
      %v4017 = vunpack.c.l.b16 %v820
      %v4018 = vunpack.c.l.b16 %v821
      %v4019 = vunpack.c.l.b16 %v822
      %v4020 = vunpack.c.l.b16 %v823
      %v4021 = vunpack.c.l.b16 %v824
      %v4022 = vunpack.c.l.b16 %v825
      %v4023 = vunpack.c.l.b16 %v826
      %v4024 = vunpack.c.l.b16 %v827
      %v4025 = vunpack.c.l.b16 %v828
      %v4026 = vunpack.c.l.b16 %v829
      %v4027 = vunpack.c.l.b16 %v830
      %v4028 = vunpack.c.l.b16 %v831
      %v4029 = vunpack.c.l.b16 %v832
      %v4030 = vunpack.c.l.b16 %v833
      %v4031 = vunpack.c.l.b16 %v834
      %v4032 = vunpack.c.l.b16 %v835
      %v4033 = vunpack.c.l.b16 %v836
      %v4034 = vunpack.c.l.b16 %v837
      %v4035 = vunpack.c.l.b16 %v838
      %v4036 = vunpack.c.l.b16 %v839
      %v4037 = vunpack.c.l.b16 %v840
      %v4038 = vunpack.c.l.b16 %v841
      %v4039 = vunpack.c.l.b16 %v842
      %v4040 = vunpack.c.l.b16 %v843
      %v4041 = vunpack.c.l.b16 %v844
      %v4042 = vunpack.c.l.b16 %v845
      %v4043 = vunpack.c.l.b16 %v846
      %v4044 = vunpack.c.l.b16 %v847
      %v4045 = vunpack.c.l.b16 %v848
      %v4046 = vunpack.c.l.b16 %v849
      %v4047 = vunpack.c.l.b16 %v850
      %v4048 = vunpack.c.l.b16 %v851
      %v4049 = vunpack.c.l.b16 %v852
      %v4050 = vunpack.c.l.b16 %v853
      %v4051 = vunpack.c.l.b16 %v854
      %v4052 = vunpack.c.l.b16 %v855
      %v4053 = vunpack.c.l.b16 %v856
      %v4054 = vunpack.c.l.b16 %v857
      %v4055 = vunpack.c.l.b16 %v858
      %v4056 = vunpack.c.l.b16 %v859
      %v4057 = vunpack.c.l.b16 %v860
      %v4058 = vunpack.c.l.b16 %v861
      %v4059 = vunpack.c.l.b16 %v862
      %v4060 = vunpack.c.l.b16 %v863
      %v4061 = vunpack.c.l.b16 %v864
      %v4062 = vunpack.c.l.b16 %v865
      %v4063 = vunpack.c.l.b16 %v866
      %v4064 = vunpack.c.l.b16 %v867
      %v4065 = vunpack.c.l.b16 %v868
      %v4066 = vunpack.c.l.b16 %v869
      %v4067 = vunpack.c.l.b16 %v870
      %v4068 = vunpack.c.l.b16 %v871
      %v4069 = vunpack.c.l.b16 %v872
      %v4070 = vunpack.c.l.b16 %v873
      %v4071 = vunpack.c.l.b16 %v874
      %v4072 = vunpack.c.l.b16 %v875
      %v4073 = vunpack.c.l.b16 %v876
      %v4074 = vunpack.c.l.b16 %v877
      %v4075 = vunpack.c.l.b16 %v878
      %v4076 = vunpack.c.l.b16 %v879
      %v4077 = vunpack.c.l.b16 %v880
      %v4078 = vunpack.c.l.b16 %v881
      %v4079 = vunpack.c.l.b16 %v882
      %v4080 = vunpack.c.l.b16 %v883
      %v4081 = vunpack.c.l.b16 %v884
      %v4082 = vunpack.c.l.b16 %v885
      %v4083 = vunpack.c.l.b16 %v886
      %v4084 = vunpack.c.l.b16 %v887
      %v4085 = vunpack.c.l.b16 %v888
      %v4086 = vunpack.c.l.b16 %v889
      %v4087 = vunpack.c.l.b16 %v890
      %v4088 = vunpack.c.l.b16 %v891
      %v4089 = vunpack.c.l.b16 %v892
      %v4090 = vunpack.c.l.b16 %v893
      %v4091 = vunpack.c.l.b16 %v894
      %v4092 = vunpack.c.l.b16 %v895
      %v4093 = vunpack.c.l.b16 %v896
      %v4094 = vunpack.c.l.b16 %v897
      %v4095 = vunpack.c.l.b16 %v898
      %v4096 = vunpack.c.l.b16 %v899
      %v4097 = vunpack.c.l.b16 %v900
      %v4098 = vunpack.c.l.b16 %v901
      %v4099 = vunpack.c.l.b16 %v902
      %v4100 = vunpack.c.l.b16 %v903
      %v4101 = vunpack.c.l.b16 %v904
      %v4102 = vunpack.c.l.b16 %v905
      %v4103 = vunpack.c.l.b16 %v906
      %v4104 = vunpack.c.l.b16 %v907
      %v4105 = vunpack.c.l.b16 %v908
      %v4106 = vunpack.c.l.b16 %v909
      %v4107 = vunpack.c.l.b16 %v910
      %v4108 = vunpack.c.l.b16 %v911
      %v4109 = vunpack.c.l.b16 %v912
      %v4110 = vunpack.c.l.b16 %v913
      %v4111 = vunpack.c.l.b16 %v914
      %v4112 = vunpack.c.l.b16 %v915
      %v4113 = vunpack.c.l.b16 %v916
      %v4114 = vunpack.c.l.b16 %v917
      %v4115 = vunpack.c.l.b16 %v918
      %v4116 = vunpack.c.l.b16 %v919
      %v4117 = vunpack.c.l.b16 %v920
      %v4118 = vunpack.c.l.b16 %v921
      %v4119 = vunpack.c.l.b16 %v922
      %v4120 = vunpack.c.l.b16 %v923
      %v4121 = vunpack.c.l.b16 %v924
      %v4122 = vunpack.c.l.b16 %v925
      %v4123 = vunpack.c.l.b16 %v926
      %v4124 = vunpack.c.l.b16 %v927
      %v4125 = vunpack.c.l.b16 %v928
      %v4126 = vunpack.c.l.b16 %v929
      %v4127 = vunpack.c.l.b16 %v930
      %v4128 = vunpack.c.l.b16 %v931
      %v4129 = vunpack.c.l.b16 %v932
      %v4130 = vunpack.c.l.b16 %v933
      %v4131 = vunpack.c.l.b16 %v934
      %v4132 = vunpack.c.l.b16 %v935
      %v4133 = vunpack.c.l.b16 %v936
      %v4134 = vunpack.c.l.b16 %v937
      %v4135 = vunpack.c.l.b16 %v938
      %v4136 = vunpack.c.l.b16 %v939
      %v4137 = vunpack.c.l.b16 %v940
      %v4138 = vunpack.c.l.b16 %v941
      %v4139 = vunpack.c.l.b16 %v942
      %v4140 = vunpack.c.l.b16 %v943
      %v4141 = vunpack.c.l.b16 %v944
      %v4142 = vunpack.c.l.b16 %v945
      %v4143 = vunpack.c.l.b16 %v946
      %v4144 = vunpack.c.l.b16 %v947
      %v4145 = vunpack.c.l.b16 %v948
      %v4146 = vunpack.c.l.b16 %v949
      %v4147 = vunpack.c.l.b16 %v950
      %v4148 = vunpack.c.l.b16 %v951
      %v4149 = vunpack.c.l.b16 %v952
      %v4150 = vunpack.c.l.b16 %v953
      %v4151 = vunpack.c.l.b16 %v954
      %v4152 = vunpack.c.l.b16 %v955
      %v4153 = vunpack.c.l.b16 %v956
      %v4154 = vunpack.c.l.b16 %v957
      %v4155 = vunpack.c.l.b16 %v958
      %v4156 = vunpack.c.l.b16 %v959
      %v4157 = vunpack.c.l.b16 %v960
      %v4158 = vunpack.c.l.b16 %v961
      %v4159 = vunpack.c.l.b16 %v962
      %v4160 = vunpack.c.l.b16 %v963
      %v4161 = vunpack.c.l.b16 %v964
      %v4162 = vunpack.c.l.b16 %v965
      %v4163 = vunpack.c.l.b16 %v966
      %v4164 = vunpack.c.l.b16 %v967
      %v4165 = vunpack.c.l.b16 %v968
      %v4166 = vunpack.c.l.b16 %v969
      %v4167 = vunpack.c.l.b16 %v970
      %v4168 = vunpack.c.l.b16 %v971
      %v4169 = vunpack.c.l.b16 %v972
      %v4170 = vunpack.c.l.b16 %v973
      %v4171 = vunpack.c.l.b16 %v974
      %v4172 = vunpack.c.l.b16 %v975
      %v4173 = vunpack.c.l.b16 %v976
      %v4174 = vunpack.c.l.b16 %v977
      %v4175 = vunpack.c.l.b16 %v978
      %v4176 = vunpack.c.l.b16 %v979
      %v4177 = vunpack.c.l.b16 %v980
      %v4178 = vunpack.c.l.b16 %v981
      %v4179 = vunpack.c.l.b16 %v982
      %v4180 = vunpack.c.l.b16 %v983
      %v4181 = vunpack.c.l.b16 %v984
      %v4182 = vunpack.c.l.b16 %v985
      %v4183 = vunpack.c.l.b16 %v986
      %v4184 = vunpack.c.l.b16 %v987
      %v4185 = vunpack.c.l.b16 %v988
      %v4186 = vunpack.c.l.b16 %v989
      %v4187 = vunpack.c.l.b16 %v990
      %v4188 = vunpack.c.l.b16 %v991
      %v4189 = vunpack.c.l.b16 %v992
      %v4190 = vunpack.c.l.b16 %v993
      %v4191 = vunpack.c.l.b16 %v994
      %v4192 = vunpack.c.l.b16 %v995
      %v4193 = vunpack.c.l.b16 %v996
      %v4194 = vunpack.c.l.b16 %v997
      %v4195 = vunpack.c.l.b16 %v998
      %v4196 = vunpack.c.l.b16 %v999
      %v4197 = vunpack.c.l.b16 %v1000
      %v4198 = vunpack.c.l.b16 %v1001
      %v4199 = vunpack.c.l.b16 %v1002
      %v4200 = vunpack.c.l.b16 %v1003
      %v4201 = vunpack.c.l.b16 %v1004
      %v4202 = vunpack.c.l.b16 %v1005
      %v4203 = vunpack.c.l.b16 %v1006
      %v4204 = vunpack.c.l.b16 %v1007
      %v4205 = vunpack.c.l.b16 %v1008
      %v4206 = vunpack.c.l.b16 %v1009
      %v4207 = vunpack.c.l.b16 %v1010
      %v4208 = vunpack.c.l.b16 %v1011
      %v4209 = vunpack.c.l.b16 %v1012
      %v4210 = vunpack.c.l.b16 %v1013
      %v4211 = vunpack.c.l.b16 %v1014
      %v4212 = vunpack.c.l.b16 %v1015
      %v4213 = vunpack.c.l.b16 %v1016
      %v4214 = vunpack.c.l.b16 %v1017
      %v4215 = vunpack.c.l.b16 %v1018
      %v4216 = vunpack.c.l.b16 %v1019
      %v4217 = vunpack.c.l.b16 %v1020
      %v4218 = vunpack.c.l.b16 %v1021
      %v4219 = vunpack.c.l.b16 %v1022
      %v4220 = vunpack.c.l.b16 %v1023
      %v4221 = vunpack.c.l.b16 %v1024
      %v4222 = vunpack.c.l.b16 %v1025
      %v4223 = vunpack.c.l.b16 %v1026
      %v4224 = vunpack.c.l.b16 %v1027
      %v4225 = vunpack.c.l.b16 %v1028
      %v4226 = vunpack.c.l.b16 %v1029
      %v4227 = vunpack.c.l.b16 %v1030
      %v4228 = vunpack.c.l.b16 %v1031
      %v4229 = vunpack.c.l.b16 %v1032
      %v4230 = vunpack.c.l.b16 %v1033
      %v4231 = vunpack.c.l.b16 %v1034
      %v4232 = vunpack.c.l.b16 %v1035
      %v4233 = vunpack.c.l.b16 %v1036
      %v4234 = vunpack.c.l.b16 %v1037
      %v4235 = vunpack.c.l.b16 %v1038
      %v4236 = vunpack.c.l.b16 %v1039
      %v4237 = vunpack.c.l.b16 %v1040
      %v4238 = vunpack.c.l.b16 %v1041
      %v4239 = vunpack.c.l.b16 %v1042
      %v4240 = vunpack.c.l.b16 %v1043
      %v4241 = vunpack.c.l.b16 %v1044
      %v4242 = vunpack.c.l.b16 %v1045
      %v4243 = vunpack.c.l.b16 %v1046
      %v4244 = vunpack.c.l.b16 %v1047
      %v4245 = vunpack.c.l.b16 %v1048
      %v4246 = vunpack.c.l.b16 %v1049
      %v4247 = vunpack.c.l.b16 %v1050
      %v4248 = vunpack.c.l.b16 %v1051
      %v4249 = vunpack.c.l.b16 %v1052
      %v4250 = vunpack.c.l.b16 %v1053
      %v4251 = vunpack.c.l.b16 %v1054
      %v4252 = vunpack.c.l.b16 %v1055
      %v4253 = vunpack.c.l.b16 %v1056
      %v4254 = vunpack.c.l.b16 %v1057
      %v4255 = vunpack.c.l.b16 %v1058
      %v4256 = vunpack.c.l.b16 %v1059
      %v4257 = vunpack.c.l.b16 %v1060
      %v4258 = vunpack.c.l.b16 %v1061
      %v4259 = vunpack.c.l.b16 %v1062
      %v4260 = vunpack.c.l.b16 %v1063
      %v4261 = vunpack.c.l.b16 %v1064
      %v4262 = vunpack.c.l.b16 %v1065
      %v4263 = vunpack.c.l.b16 %v1066
      %v4264 = vunpack.c.l.b16 %v1067
      %v4265 = vunpack.c.l.b16 %v1068
      %v4266 = vunpack.c.l.b16 %v1069
      %v4267 = vunpack.c.l.b16 %v1070
      %v4268 = vunpack.c.l.b16 %v1071
      %v4269 = vunpack.c.l.b16 %v1072
      %v4270 = vunpack.c.l.b16 %v1073
      %v4271 = vunpack.c.l.b16 %v1074
      %v4272 = vunpack.c.l.b16 %v1075
      %v4273 = vunpack.c.l.b16 %v1076
      %v4274 = vunpack.c.l.b16 %v1077
      %v4275 = vunpack.c.l.b16 %v1078
      %v4276 = vunpack.c.l.b16 %v1079
      %v4277 = vunpack.c.l.b16 %v1080
      %v4278 = vunpack.c.l.b16 %v1081
      %v4279 = vunpack.c.l.b16 %v1082
      %v4280 = vunpack.c.l.b16 %v1083
      %v4281 = vunpack.c.l.b16 %v1084
      %v4282 = vunpack.c.l.b16 %v1085
      %v4283 = vunpack.c.l.b16 %v1086
      %v4284 = vunpack.c.l.b16 %v1087
      %v4285 = vunpack.c.l.b16 %v1088
      %v4286 = vunpack.c.l.b16 %v1089
      %v4287 = vunpack.c.l.b16 %v1090
      %v4288 = vunpack.c.l.b16 %v1091
      %v4289 = vunpack.c.l.b16 %v1092
      %v4290 = vunpack.c.l.b16 %v1093
      %v4291 = vunpack.c.l.b16 %v1094
      %v4292 = vunpack.c.l.b16 %v1095
      %v4293 = vunpack.c.l.b16 %v1096
      %v4294 = vunpack.c.l.b16 %v1097
      %v4295 = vunpack.c.l.b16 %v1098
      %v4296 = vunpack.c.l.b16 %v1099
      %v4297 = vunpack.c.l.b16 %v1100
      %v4298 = vunpack.c.l.b16 %v1101
      %v4299 = vunpack.c.l.b16 %v1102
      %v4300 = vunpack.c.l.b16 %v1103
      %v4301 = vunpack.c.l.b16 %v1104
      %v4302 = vunpack.c.l.b16 %v1105
      %v4303 = vunpack.c.l.b16 %v1106
      %v4304 = vunpack.c.l.b16 %v1107
      %v4305 = vunpack.c.l.b16 %v1108
      %v4306 = vunpack.c.l.b16 %v1109
      %v4307 = vunpack.c.l.b16 %v1110
      %v4308 = vunpack.c.l.b16 %v1111
      %v4309 = vunpack.c.l.b16 %v1112
      %v4310 = vunpack.c.l.b16 %v1113
      %v4311 = vunpack.c.l.b16 %v1114
      %v4312 = vunpack.c.l.b16 %v1115
      %v4313 = vunpack.c.l.b16 %v1116
      %v4314 = vunpack.c.l.b16 %v1117
      %v4315 = vunpack.c.l.b16 %v1118
      %v4316 = vunpack.c.l.b16 %v1119
      %v4317 = vunpack.c.l.b16 %v1120
      %v4318 = vunpack.c.l.b16 %v1121
      %v4319 = vunpack.c.l.b16 %v1122
      %v4320 = vunpack.c.l.b16 %v1123
      %v4321 = vunpack.c.l.b16 %v1124
      %v4322 = vunpack.c.l.b16 %v1125
      %v4323 = vunpack.c.l.b16 %v1126
      %v4324 = vunpack.c.l.b16 %v1127
      %v4325 = vunpack.c.l.b16 %v1128
      %v4326 = vunpack.c.l.b16 %v1129
      %v4327 = vunpack.c.l.b16 %v1130
      %v4328 = vunpack.c.l.b16 %v1131
      %v4329 = vunpack.c.l.b16 %v1132
      %v4330 = vunpack.c.l.b16 %v1133
      %v4331 = vunpack.c.l.b16 %v1134
      %v4332 = vunpack.c.l.b16 %v1135
      %v4333 = vunpack.c.l.b16 %v1136
      %v4334 = vunpack.c.l.b16 %v1137
      %v4335 = vunpack.c.l.b16 %v1138
      %v4336 = vunpack.c.l.b16 %v1139
      %v4337 = vunpack.c.l.b16 %v1140
      %v4338 = vunpack.c.l.b16 %v1141
      %v4339 = vunpack.c.l.b16 %v1142
      %v4340 = vunpack.c.l.b16 %v1143
      %v4341 = vunpack.c.l.b16 %v1144
      %v4342 = vunpack.c.l.b16 %v1145
      %v4343 = vunpack.c.l.b16 %v1146
      %v4344 = vunpack.c.l.b16 %v1147
      %v4345 = vunpack.c.l.b16 %v1148
      %v4346 = vunpack.c.l.b16 %v1149
      %v4347 = vunpack.c.l.b16 %v1150
      %v4348 = vunpack.c.l.b16 %v1151
      %v4349 = vunpack.c.l.b16 %v1152
      %v4350 = vunpack.c.l.b16 %v1153
      %v4351 = vunpack.c.l.b16 %v1154
      %v4352 = vunpack.c.l.b16 %v1155
      %v4353 = vunpack.c.l.b16 %v1156
      %v4354 = vunpack.c.l.b16 %v1157
      %v4355 = vunpack.c.l.b16 %v1158
      %v4356 = vunpack.c.l.b16 %v1159
      %v4357 = vunpack.c.l.b16 %v1160
      %v4358 = vunpack.c.l.b16 %v1161
      %v4359 = vunpack.c.l.b16 %v1162
      %v4360 = vunpack.c.l.b16 %v1163
      %v4361 = vunpack.c.l.b16 %v1164
      %v4362 = vunpack.c.l.b16 %v1165
      %v4363 = vunpack.c.l.b16 %v1166
      %v4364 = vunpack.c.l.b16 %v1167
      %v4365 = vunpack.c.l.b16 %v1168
      %v4366 = vunpack.c.l.b16 %v1169
      %v4367 = vunpack.c.l.b16 %v1170
      %v4368 = vunpack.c.l.b16 %v1171
      %v4369 = vunpack.c.l.b16 %v1172
      %v4370 = vunpack.c.l.b16 %v1173
      %v4371 = vunpack.c.l.b16 %v1174
      %v4372 = vunpack.c.l.b16 %v1175
      %v4373 = vunpack.c.l.b16 %v1176
      %v4374 = vunpack.c.l.b16 %v1177
      %v4375 = vunpack.c.l.b16 %v1178
      %v4376 = vunpack.c.l.b16 %v1179
      %v4377 = vunpack.c.l.b16 %v1180
      %v4378 = vunpack.c.l.b16 %v1181
      %v4379 = vunpack.c.l.b16 %v1182
      %v4380 = vunpack.c.l.b16 %v1183
      %v4381 = vunpack.c.l.b16 %v1184
      %v4382 = vunpack.c.l.b16 %v1185
      %v4383 = vunpack.c.l.b16 %v1186
      %v4384 = vunpack.c.l.b16 %v1187
      %v4385 = vunpack.c.l.b16 %v1188
      %v4386 = vunpack.c.l.b16 %v1189
      %v4387 = vunpack.c.l.b16 %v1190
      %v4388 = vunpack.c.l.b16 %v1191
      %v4389 = vunpack.c.l.b16 %v1192
      %v4390 = vunpack.c.l.b16 %v1193
      %v4391 = vunpack.c.l.b16 %v1194
      %v4392 = vunpack.c.l.b16 %v1195
      %v4393 = vunpack.c.l.b16 %v1196
      %v4394 = vunpack.c.l.b16 %v1197
      %v4395 = vunpack.c.l.b16 %v1198
      %v4396 = vunpack.c.l.b16 %v1199
      %v4397 = vunpack.c.l.b16 %v1200
      %v4398 = vunpack.c.l.b16 %v1201
      %v4399 = vunpack.c.l.b16 %v1202
      %v4400 = vunpack.c.l.b16 %v1203
      %v4401 = vunpack.c.l.b16 %v1204
      %v4402 = vunpack.c.l.b16 %v1205
      %v4403 = vunpack.c.l.b16 %v1206
      %v4404 = vunpack.c.l.b16 %v1207
      %v4405 = vunpack.c.l.b16 %v1208
      %v4406 = vunpack.c.l.b16 %v1209
      %v4407 = vunpack.c.l.b16 %v1210
      %v4408 = vunpack.c.l.b16 %v1211
      %v4409 = vunpack.c.l.b16 %v1212
      %v4410 = vunpack.c.l.b16 %v1213
      %v4411 = vunpack.c.l.b16 %v1214
      %v4412 = vunpack.c.l.b16 %v1215
      %v4413 = vunpack.c.l.b16 %v1216
      %v4414 = vunpack.c.l.b16 %v1217
      %v4415 = vunpack.c.l.b16 %v1218
      %v4416 = vunpack.c.l.b16 %v1219
      %v4417 = vunpack.c.l.b16 %v1220
      %v4418 = vunpack.c.l.b16 %v1221
      %v4419 = vunpack.c.l.b16 %v1222
      %v4420 = vunpack.c.l.b16 %v1223
      %v4421 = vunpack.c.l.b16 %v1224
      %v4422 = vunpack.c.l.b16 %v1225
      %v4423 = vunpack.c.l.b16 %v1226
      %v4424 = vunpack.c.l.b16 %v1227
      %v4425 = vunpack.c.l.b16 %v1228
      %v4426 = vunpack.c.l.b16 %v1229
      %v4427 = vunpack.c.l.b16 %v1230
      %v4428 = vunpack.c.l.b16 %v1231
      %v4429 = vunpack.c.l.b16 %v1232
      %v4430 = vunpack.c.l.b16 %v1233
      %v4431 = vunpack.c.l.b16 %v1234
      %v4432 = vunpack.c.l.b16 %v1235
      %v4433 = vunpack.c.l.b16 %v1236
      %v4434 = vunpack.c.l.b16 %v1237
      %v4435 = vunpack.c.l.b16 %v1238
      %v4436 = vunpack.c.l.b16 %v1239
      %v4437 = vunpack.c.l.b16 %v1240
      %v4438 = vunpack.c.l.b16 %v1241
      %v4439 = vunpack.c.l.b16 %v1242
      %v4440 = vunpack.c.l.b16 %v1243
      %v4441 = vunpack.c.l.b16 %v1244
      %v4442 = vunpack.c.l.b16 %v1245
      %v4443 = vunpack.c.l.b16 %v1246
      %v4444 = vunpack.c.l.b16 %v1247
      %v4445 = vunpack.c.l.b16 %v1248
      %v4446 = vunpack.c.l.b16 %v1249
      %v4447 = vunpack.c.l.b16 %v1250
      %v4448 = vunpack.c.l.b16 %v1251
      %v4449 = vunpack.c.l.b16 %v1252
      %v4450 = vunpack.c.l.b16 %v1253
      %v4451 = vunpack.c.l.b16 %v1254
      %v4452 = vunpack.c.l.b16 %v1255
      %v4453 = vunpack.c.l.b16 %v1256
      %v4454 = vunpack.c.l.b16 %v1257
      %v4455 = vunpack.c.l.b16 %v1258
      %v4456 = vunpack.c.l.b16 %v1259
      %v4457 = vunpack.c.l.b16 %v1260
      %v4458 = vunpack.c.l.b16 %v1261
      %v4459 = vunpack.c.l.b16 %v1262
      %v4460 = vunpack.c.l.b16 %v1263
      %v4461 = vunpack.c.l.b16 %v1264
      %v4462 = vunpack.c.l.b16 %v1265
      %v4463 = vunpack.c.l.b16 %v1266
      %v4464 = vunpack.c.l.b16 %v1267
      %v4465 = vunpack.c.l.b16 %v1268
      %v4466 = vunpack.c.l.b16 %v1269
      %v4467 = vunpack.c.l.b16 %v1270
      %v4468 = vunpack.c.l.b16 %v1271
      %v4469 = vunpack.c.l.b16 %v1272
      %v4470 = vunpack.c.l.b16 %v1273
      %v4471 = vunpack.c.l.b16 %v1274
      %v4472 = vunpack.c.l.b16 %v1275
      %v4473 = vunpack.c.l.b16 %v1276
      %v4474 = vunpack.c.l.b16 %v1277
      %v4475 = vunpack.c.l.b16 %v1278
      %v4476 = vunpack.c.l.b16 %v1279
      %v4477 = vunpack.c.l.b16 %v1280
      %v4478 = vunpack.c.l.b16 %v1281
      %v4479 = vunpack.c.l.b16 %v1282
      %v4480 = vunpack.c.l.b16 %v1283
      %v4481 = vunpack.c.l.b16 %v1284
      %v4482 = vunpack.c.l.b16 %v1285
      %v4483 = vunpack.c.l.b16 %v1286
      %v4484 = vunpack.c.l.b16 %v1287
      %v4485 = vunpack.c.l.b16 %v1288
      %v4486 = vunpack.c.l.b16 %v1289
      %v4487 = vunpack.c.l.b16 %v1290
      %v4488 = vunpack.c.l.b16 %v1291
      %v4489 = vunpack.c.l.b16 %v1292
      %v4490 = vunpack.c.l.b16 %v1293
      %v4491 = vunpack.c.l.b16 %v1294
      %v4492 = vunpack.c.l.b16 %v1295
      %v4493 = vunpack.c.l.b16 %v1296
      %v4494 = vunpack.c.l.b16 %v1297
      %v4495 = vunpack.c.l.b16 %v1298
      %v4496 = vunpack.c.l.b16 %v1299
      %v4497 = vunpack.c.l.b16 %v1300
      %v4498 = vunpack.c.l.b16 %v1301
      %v4499 = vunpack.c.l.b16 %v1302
      %v4500 = vunpack.c.l.b16 %v1303
      %v4501 = vunpack.c.l.b16 %v1304
      %v4502 = vunpack.c.l.b16 %v1305
      %v4503 = vunpack.c.l.b16 %v1306
      %v4504 = vunpack.c.l.b16 %v1307
      %v4505 = vunpack.c.l.b16 %v1308
      %v4506 = vunpack.c.l.b16 %v1309
      %v4507 = vunpack.c.l.b16 %v1310
      %v4508 = vunpack.c.l.b16 %v1311
      %v4509 = vunpack.c.l.b16 %v1312
      %v4510 = vunpack.c.l.b16 %v1313
      %v4511 = vunpack.c.l.b16 %v1314
      %v4512 = vunpack.c.l.b16 %v1315
      %v4513 = vunpack.c.l.b16 %v1316
      %v4514 = vunpack.c.l.b16 %v1317
      %v4515 = vunpack.c.l.b16 %v1318
      %v4516 = vunpack.c.l.b16 %v1319
      %v4517 = vunpack.c.l.b16 %v1320
      %v4518 = vunpack.c.l.b16 %v1321
      %v4519 = vunpack.c.l.b16 %v1322
      %v4520 = vunpack.c.l.b16 %v1323
      %v4521 = vunpack.c.l.b16 %v1324
      %v4522 = vunpack.c.l.b16 %v1325
      %v4523 = vunpack.c.l.b16 %v1326
      %v4524 = vunpack.c.l.b16 %v1327
      %v4525 = vunpack.c.l.b16 %v1328
      %v4526 = vunpack.c.l.b16 %v1329
      %v4527 = vunpack.c.l.b16 %v1330
      %v4528 = vunpack.c.l.b16 %v1331
      %v4529 = vunpack.c.l.b16 %v1332
      %v4530 = vunpack.c.l.b16 %v1333
      %v4531 = vunpack.c.l.b16 %v1334
      %v4532 = vunpack.c.l.b16 %v1335
      %v4533 = vunpack.c.l.b16 %v1336
      %v4534 = vunpack.c.l.b16 %v1337
      %v4535 = vunpack.c.l.b16 %v1338
      %v4536 = vunpack.c.l.b16 %v1339
      %v4537 = vunpack.c.l.b16 %v1340
      %v4538 = vunpack.c.l.b16 %v1341
      %v4539 = vunpack.c.l.b16 %v1342
      %v4540 = vunpack.c.l.b16 %v1343
      %v4541 = vunpack.c.l.b16 %v1344
      %v4542 = vunpack.c.l.b16 %v1345
      %v4543 = vunpack.c.l.b16 %v1346
      %v4544 = vunpack.c.l.b16 %v1347
      %v4545 = vunpack.c.l.b16 %v1348
      %v4546 = vunpack.c.l.b16 %v1349
      %v4547 = vunpack.c.l.b16 %v1350
      %v4548 = vunpack.c.l.b16 %v1351
      %v4549 = vunpack.c.l.b16 %v1352
      %v4550 = vunpack.c.l.b16 %v1353
      %v4551 = vunpack.c.l.b16 %v1354
      %v4552 = vunpack.c.l.b16 %v1355
      %v4553 = vunpack.c.l.b16 %v1356
      %v4554 = vunpack.c.l.b16 %v1357
      %v4555 = vunpack.c.l.b16 %v1358
      %v4556 = vunpack.c.l.b16 %v1359
      %v4557 = vunpack.c.l.b16 %v1360
      %v4558 = vunpack.c.l.b16 %v1361
      %v4559 = vunpack.c.l.b16 %v1362
      %v4560 = vunpack.c.l.b16 %v1363
      %v4561 = vunpack.c.l.b16 %v1364
      %v4562 = vunpack.c.l.b16 %v1365
      %v4563 = vunpack.c.l.b16 %v1366
      %v4564 = vunpack.c.l.b16 %v1367
      %v4565 = vunpack.c.l.b16 %v1368
      %v4566 = vunpack.c.l.b16 %v1369
      %v4567 = vunpack.c.l.b16 %v1370
      %v4568 = vunpack.c.l.b16 %v1371
      %v4569 = vunpack.c.l.b16 %v1372
      %v4570 = vunpack.c.l.b16 %v1373
      %v4571 = vunpack.c.l.b16 %v1374
      %v4572 = vunpack.c.l.b16 %v1375
      %v4573 = vunpack.c.l.b16 %v1376
      %v4574 = vunpack.c.l.b16 %v1377
      %v4575 = vunpack.c.l.b16 %v1378
      %v4576 = vunpack.c.l.b16 %v1379
      %v4577 = vunpack.c.l.b16 %v1380
      %v4578 = vunpack.c.l.b16 %v1381
      %v4579 = vunpack.c.l.b16 %v1382
      %v4580 = vunpack.c.l.b16 %v1383
      %v4581 = vunpack.c.l.b16 %v1384
      %v4582 = vunpack.c.l.b16 %v1385
      %v4583 = vunpack.c.l.b16 %v1386
      %v4584 = vunpack.c.l.b16 %v1387
      %v4585 = vunpack.c.l.b16 %v1388
      %v4586 = vunpack.c.l.b16 %v1389
      %v4587 = vunpack.c.l.b16 %v1390
      %v4588 = vunpack.c.l.b16 %v1391
      %v4589 = vunpack.c.l.b16 %v1392
      %v4590 = vunpack.c.l.b16 %v1393
      %v4591 = vunpack.c.l.b16 %v1394
      %v4592 = vunpack.c.l.b16 %v1395
      %v4593 = vunpack.c.l.b16 %v1396
      %v4594 = vunpack.c.l.b16 %v1397
      %v4595 = vunpack.c.l.b16 %v1398
      %v4596 = vunpack.c.l.b16 %v1399
      %v4597 = vunpack.c.l.b16 %v1400
      %v4598 = vunpack.c.l.b16 %v1401
      %v4599 = vunpack.c.l.b16 %v1402
      %v4600 = vunpack.c.l.b16 %v1403
      %v4601 = vunpack.c.l.b16 %v1404
      %v4602 = vunpack.c.l.b16 %v1405
      %v4603 = vunpack.c.l.b16 %v1406
      %v4604 = vunpack.c.l.b16 %v1407
      %v4605 = vunpack.c.l.b16 %v1408
      %v4606 = vunpack.c.l.b16 %v1409
      %v4607 = vunpack.c.l.b16 %v1410
      %v4608 = vunpack.c.l.b16 %v1411
      %v4609 = vunpack.c.l.b16 %v1412
      %v4610 = vunpack.c.l.b16 %v1413
      %v4611 = vunpack.c.l.b16 %v1414
      %v4612 = vunpack.c.l.b16 %v1415
      %v4613 = vunpack.c.l.b16 %v1416
      %v4614 = vunpack.c.l.b16 %v1417
      %v4615 = vunpack.c.l.b16 %v1418
      %v4616 = vunpack.c.l.b16 %v1419
      %v4617 = vunpack.c.l.b16 %v1420
      %v4618 = vunpack.c.l.b16 %v1421
      %v4619 = vunpack.c.l.b16 %v1422
      %v4620 = vunpack.c.l.b16 %v1423
      %v4621 = vunpack.c.l.b16 %v1424
      %v4622 = vunpack.c.l.b16 %v1425
      %v4623 = vunpack.c.l.b16 %v1426
      %v4624 = vunpack.c.l.b16 %v1427
      %v4625 = vunpack.c.l.b16 %v1428
      %v4626 = vunpack.c.l.b16 %v1429
      %v4627 = vunpack.c.l.b16 %v1430
      %v4628 = vunpack.c.l.b16 %v1431
      %v4629 = vunpack.c.l.b16 %v1432
      %v4630 = vunpack.c.l.b16 %v1433
      %v4631 = vunpack.c.l.b16 %v1434
      %v4632 = vunpack.c.l.b16 %v1435
      %v4633 = vunpack.c.l.b16 %v1436
      %v4634 = vunpack.c.l.b16 %v1437
      %v4635 = vunpack.c.l.b16 %v1438
      %v4636 = vunpack.c.l.b16 %v1439
      %v4637 = vunpack.c.l.b16 %v1440
      %v4638 = vunpack.c.l.b16 %v1441
      %v4639 = vunpack.c.l.b16 %v1442
      %v4640 = vunpack.c.l.b16 %v1443
      %v4641 = vunpack.c.l.b16 %v1444
      %v4642 = vunpack.c.l.b16 %v1445
      %v4643 = vunpack.c.l.b16 %v1446
      %v4644 = vunpack.c.l.b16 %v1447
      %v4645 = vunpack.c.l.b16 %v1448
      %v4646 = vunpack.c.l.b16 %v1449
      %v4647 = vunpack.c.l.b16 %v1450
      %v4648 = vunpack.c.l.b16 %v1451
      %v4649 = vunpack.c.l.b16 %v1452
      %v4650 = vunpack.c.l.b16 %v1453
      %v4651 = vunpack.c.l.b16 %v1454
      %v4652 = vunpack.c.l.b16 %v1455
      %v4653 = vunpack.c.l.b16 %v1456
      %v4654 = vunpack.c.l.b16 %v1457
      %v4655 = vunpack.c.l.b16 %v1458
      %v4656 = vunpack.c.l.b16 %v1459
      %v4657 = vunpack.c.l.b16 %v1460
      %v4658 = vunpack.c.l.b16 %v1461
      %v4659 = vunpack.c.l.b16 %v1462
      %v4660 = vunpack.c.l.b16 %v1463
      %v4661 = vunpack.c.l.b16 %v1464
      %v4662 = vunpack.c.l.b16 %v1465
      %v4663 = vunpack.c.l.b16 %v1466
      %v4664 = vunpack.c.l.b16 %v1467
      %v4665 = vunpack.c.l.b16 %v1468
      %v4666 = vunpack.c.l.b16 %v1469
      %v4667 = vunpack.c.l.b16 %v1470
      %v4668 = vunpack.c.l.b16 %v1471
      %v4669 = vunpack.c.l.b16 %v1472
      %v4670 = vunpack.c.l.b16 %v1473
      %v4671 = vunpack.c.l.b16 %v1474
      %v4672 = vunpack.c.l.b16 %v1475
      %v4673 = vunpack.c.l.b16 %v1476
      %v4674 = vunpack.c.l.b16 %v1477
      %v4675 = vunpack.c.l.b16 %v1478
      %v4676 = vunpack.c.l.b16 %v1479
      %v4677 = vunpack.c.l.b16 %v1480
      %v4678 = vunpack.c.l.b16 %v1481
      %v4679 = vunpack.c.l.b16 %v1482
      %v4680 = vunpack.c.l.b16 %v1483
      %v4681 = vunpack.c.l.b16 %v1484
      %v4682 = vunpack.c.l.b16 %v1485
      %v4683 = vunpack.c.l.b16 %v1486
      %v4684 = vunpack.c.l.b16 %v1487
      %v4685 = vunpack.c.l.b16 %v1488
      %v4686 = vunpack.c.l.b16 %v1489
      %v4687 = vunpack.c.l.b16 %v1490
      %v4688 = vunpack.c.l.b16 %v1491
      %v4689 = vunpack.c.l.b16 %v1492
      %v4690 = vunpack.c.l.b16 %v1493
      %v4691 = vunpack.c.l.b16 %v1494
      %v4692 = vunpack.c.l.b16 %v1495
      %v4693 = vunpack.c.l.b16 %v1496
      %v4694 = vunpack.c.l.b16 %v1497
      %v4695 = vunpack.c.l.b16 %v1498
      %v4696 = vunpack.c.l.b16 %v1499
      %v4697 = vunpack.c.l.b16 %v1500
      %v4698 = vunpack.c.l.b16 %v1501
      %v4699 = vunpack.c.l.b16 %v1502
      %v4700 = vunpack.c.l.b16 %v1503
      %v4701 = vunpack.c.l.b16 %v1504
      %v4702 = vunpack.c.l.b16 %v1505
      %v4703 = vunpack.c.l.b16 %v1506
      %v4704 = vunpack.c.l.b16 %v1507
      %v4705 = vunpack.c.l.b16 %v1508
      %v4706 = vunpack.c.l.b16 %v1509
      %v4707 = vunpack.c.l.b16 %v1510
      %v4708 = vunpack.c.l.b16 %v1511
      %v4709 = vunpack.c.l.b16 %v1512
      %v4710 = vunpack.c.l.b16 %v1513
      %v4711 = vunpack.c.l.b16 %v1514
      %v4712 = vunpack.c.l.b16 %v1515
      %v4713 = vunpack.c.l.b16 %v1516
      %v4714 = vunpack.c.l.b16 %v1517
      %v4715 = vunpack.c.l.b16 %v1518
      %v4716 = vunpack.c.l.b16 %v1519
      %v4717 = vunpack.c.l.b16 %v1520
      %v4718 = vunpack.c.l.b16 %v1521
      %v4719 = vunpack.c.l.b16 %v1522
      %v4720 = vunpack.c.l.b16 %v1523
      %v4721 = vunpack.c.l.b16 %v1524
      %v4722 = vunpack.c.l.b16 %v1525
      %v4723 = vunpack.c.l.b16 %v1526
      %v4724 = vunpack.c.l.b16 %v1527
      %v4725 = vunpack.c.l.b16 %v1528
      %v4726 = vunpack.c.l.b16 %v1529
      %v4727 = vunpack.c.l.b16 %v1530
      %v4728 = vunpack.c.l.b16 %v1531
      %v4729 = vunpack.c.l.b16 %v1532
      %v4730 = vunpack.c.l.b16 %v1533
      %v4731 = vunpack.c.l.b16 %v1534
      %v4732 = vunpack.c.l.b16 %v1535
      %v4733 = vunpack.c.l.b16 %v1536
      %v4734 = vunpack.c.l.b16 %v1537
      %v4735 = vunpack.c.l.b16 %v1538
      %v4736 = vunpack.c.l.b16 %v1539
      %v4737 = vunpack.c.l.b16 %v1540
      %v4738 = vunpack.c.l.b16 %v1541
      %v4739 = vunpack.c.l.b16 %v1542
      %v4740 = vunpack.c.l.b16 %v1543
      %v4741 = vunpack.c.l.b16 %v1544
      %v4742 = vunpack.c.l.b16 %v1545
      %v4743 = vunpack.c.l.b16 %v1546
      %v4744 = vunpack.c.l.b16 %v1547
      %v4745 = vunpack.c.l.b16 %v1548
      %v4746 = vunpack.c.l.b16 %v1549
      %v4747 = vunpack.c.l.b16 %v1550
      %v4748 = vunpack.c.l.b16 %v1551
      %v4749 = vunpack.c.l.b16 %v1552
      %v4750 = vunpack.c.l.b16 %v1553
      %v4751 = vunpack.c.l.b16 %v1554
      %v4752 = vunpack.c.l.b16 %v1555
      %v4753 = vunpack.c.l.b16 %v1556
      %v4754 = vunpack.c.l.b16 %v1557
      %v4755 = vunpack.c.l.b16 %v1558
      %v4756 = vunpack.c.l.b16 %v1559
      %v4757 = vunpack.c.l.b16 %v1560
      %v4758 = vunpack.c.l.b16 %v1561
      %v4759 = vunpack.c.l.b16 %v1562
      %v4760 = vunpack.c.l.b16 %v1563
      %v4761 = vunpack.c.l.b16 %v1564
      %v4762 = vunpack.c.l.b16 %v1565
      %v4763 = vunpack.c.l.b16 %v1566
      %v4764 = vunpack.c.l.b16 %v1567
      %v4765 = vunpack.c.l.b16 %v1568
      %v4766 = vunpack.c.l.b16 %v1569
      %v4767 = vunpack.c.l.b16 %v1570
      %v4768 = vunpack.c.l.b16 %v1571
      %v4769 = vunpack.c.l.b16 %v1572
      %v4770 = vunpack.c.l.b16 %v1573
      %v4771 = vunpack.c.l.b16 %v1574
      %v4772 = vunpack.c.l.b16 %v1575
      %v4773 = vunpack.c.l.b16 %v1576
      %v4774 = vunpack.c.l.b16 %v1577
      %v4775 = vunpack.c.l.b16 %v1578
      %v4776 = vunpack.c.l.b16 %v1579
      %v4777 = vunpack.c.l.b16 %v1580
      %v4778 = vunpack.c.l.b16 %v1581
      %v4779 = vunpack.c.l.b16 %v1582
      %v4780 = vunpack.c.l.b16 %v1583
      %v4781 = vunpack.c.l.b16 %v1584
      %v4782 = vunpack.c.l.b16 %v1585
      %v4783 = vunpack.c.l.b16 %v1586
      %v4784 = vunpack.c.l.b16 %v1587
      %v4785 = vunpack.c.l.b16 %v1588
      %v4786 = vunpack.c.l.b16 %v1589
      %v4787 = vunpack.c.l.b16 %v1590
      %v4788 = vunpack.c.l.b16 %v1591
      %v4789 = vunpack.c.l.b16 %v1592
      %v4790 = vunpack.c.l.b16 %v1593
      %v4791 = vunpack.c.l.b16 %v1594
      %v4792 = vunpack.c.l.b16 %v1595
      %v4793 = vunpack.c.l.b16 %v1596
      %v4794 = vunpack.c.l.b16 %v1597
      %v4795 = vunpack.c.l.b16 %v1598
      %v4796 = vunpack.c.l.b16 %v1599
      %v4797 = vunpack.c.l.b16 %v1600
      %v4798 = vunpack.c.l.b16 %v1601
      %v4799 = vunpack.c.l.b16 %v1602
      %v4800 = vunpack.c.l.b16 %v1603
      %v4801 = vunpack.c.l.b16 %v1604
      %v4802 = vunpack.c.l.b16 %v1605
      %v4803 = vunpack.c.l.b16 %v1606
      %v4804 = vunpack.c.l.b16 %v1607
      %v4805 = vunpack.c.l.b16 %v1608
      %v4806 = vunpack.c.l.b16 %v1609
      %v4807 = vunpack.c.l.b16 %v1610
      %v4808 = vunpack.c.l.b16 %v1611
      %v4809 = vunpack.c.l.b16 %v1612
      %v4810 = vunpack.c.l.b16 %v1613
      %v4811 = vunpack.c.l.b16 %v1614
      %v4812 = vunpack.c.l.b16 %v1615
      %v4813 = vunpack.c.l.b16 %v1616
      %v4814 = vunpack.c.l.b16 %v1617
      %v4815 = vunpack.c.l.b16 %v1618
      %v4816 = vunpack.c.l.b16 %v1619
      %v4817 = vunpack.c.l.b16 %v1620
      %v4818 = vunpack.c.l.b16 %v1621
      %v4819 = vunpack.c.l.b16 %v1622
      %v4820 = vunpack.c.l.b16 %v1623
      %v4821 = vunpack.c.l.b16 %v1624
      %v4822 = vunpack.c.l.b16 %v1625
      %v4823 = vunpack.c.l.b16 %v1626
      %v4824 = vunpack.c.l.b16 %v1627
      %v4825 = vunpack.c.l.b16 %v1628
      %v4826 = vunpack.c.l.b16 %v1629
      %v4827 = vunpack.c.l.b16 %v1630
      %v4828 = vunpack.c.l.b16 %v1631
      %v4829 = vunpack.c.l.b16 %v1632
      %v4830 = vunpack.c.l.b16 %v1633
      %v4831 = vunpack.c.l.b16 %v1634
      %v4832 = vunpack.c.l.b16 %v1635
      %v4833 = vunpack.c.l.b16 %v1636
      %v4834 = vunpack.c.l.b16 %v1637
      %v4835 = vunpack.c.l.b16 %v1638
      %v4836 = vunpack.c.l.b16 %v1639
      %v4837 = vunpack.c.l.b16 %v1640
      %v4838 = vunpack.c.l.b16 %v1641
      %v4839 = vunpack.c.l.b16 %v1642
      %v4840 = vunpack.c.l.b16 %v1643
      %v4841 = vunpack.c.l.b16 %v1644
      %v4842 = vunpack.c.l.b16 %v1645
      %v4843 = vunpack.c.l.b16 %v1646
      %v4844 = vunpack.c.l.b16 %v1647
      %v4845 = vunpack.c.l.b16 %v1648
      %v4846 = vunpack.c.l.b16 %v1649
      %v4847 = vunpack.c.l.b16 %v1650
      %v4848 = vunpack.c.l.b16 %v1651
      %v4849 = vunpack.c.l.b16 %v1652
      %v4850 = vunpack.c.l.b16 %v1653
      %v4851 = vunpack.c.l.b16 %v1654
      %v4852 = vunpack.c.l.b16 %v1655
      %v4853 = vunpack.c.l.b16 %v1656
      %v4854 = vunpack.c.l.b16 %v1657
      %v4855 = vunpack.c.l.b16 %v1658
      %v4856 = vunpack.c.l.b16 %v1659
      %v4857 = vunpack.c.l.b16 %v1660
      %v4858 = vunpack.c.l.b16 %v1661
      %v4859 = vunpack.c.l.b16 %v1662
      %v4860 = vunpack.c.l.b16 %v1663
      %v4861 = vunpack.c.l.b16 %v1664
      %v4862 = vunpack.c.l.b16 %v1665
      %v4863 = vunpack.c.l.b16 %v1666
      %v4864 = vunpack.c.l.b16 %v1667
      %v4865 = vunpack.c.l.b16 %v1668
      %v4866 = vunpack.c.l.b16 %v1669
      %v4867 = vunpack.c.l.b16 %v1670
      %v4868 = vunpack.c.l.b16 %v1671
      %v4869 = vunpack.c.l.b16 %v1672
      %v4870 = vunpack.c.l.b16 %v1673
      %v4871 = vunpack.c.l.b16 %v1674
      %v4872 = vunpack.c.l.b16 %v1675
      %v4873 = vunpack.c.l.b16 %v1676
      %v4874 = vunpack.c.l.b16 %v1677
      %v4875 = vunpack.c.l.b16 %v1678
      %v4876 = vunpack.c.l.b16 %v1679
      %v4877 = vunpack.c.l.b16 %v1680
      %v4878 = vunpack.c.l.b16 %v1681
      %v4879 = vunpack.c.l.b16 %v1682
      %v4880 = vunpack.c.l.b16 %v1683
      %v4881 = vunpack.c.l.b16 %v1684
      %v4882 = vunpack.c.l.b16 %v1685
      %v4883 = vunpack.c.l.b16 %v1686
      %v4884 = vunpack.c.l.b16 %v1687
      %v4885 = vunpack.c.l.b16 %v1688
      %v4886 = vunpack.c.l.b16 %v1689
      %v4887 = vunpack.c.l.b16 %v1690
      %v4888 = vunpack.c.l.b16 %v1691
      %v4889 = vunpack.c.l.b16 %v1692
      %v4890 = vunpack.c.l.b16 %v1693
      %v4891 = vunpack.c.l.b16 %v1694
      %v4892 = vunpack.c.l.b16 %v1695
      %v4893 = vunpack.c.l.b16 %v1696
      %v4894 = vunpack.c.l.b16 %v1697
      %v4895 = vunpack.c.l.b16 %v1698
      %v4896 = vunpack.c.l.b16 %v1699
      %v4897 = vunpack.c.l.b16 %v1700
      %v4898 = vunpack.c.l.b16 %v1701
      %v4899 = vunpack.c.l.b16 %v1702
      %v4900 = vunpack.c.l.b16 %v1703
      %v4901 = vunpack.c.l.b16 %v1704
      %v4902 = vunpack.c.l.b16 %v1705
      %v4903 = vunpack.c.l.b16 %v1706
      %v4904 = vunpack.c.l.b16 %v1707
      %v4905 = vunpack.c.l.b16 %v1708
      %v4906 = vunpack.c.l.b16 %v1709
      %v4907 = vunpack.c.l.b16 %v1710
      %v4908 = vunpack.c.l.b16 %v1711
      %v4909 = vunpack.c.l.b16 %v1712
      %v4910 = vunpack.c.l.b16 %v1713
      %v4911 = vunpack.c.l.b16 %v1714
      %v4912 = vunpack.c.l.b16 %v1715
      %v4913 = vunpack.c.l.b16 %v1716
      %v4914 = vunpack.c.l.b16 %v1717
      %v4915 = vunpack.c.l.b16 %v1718
      %v4916 = vunpack.c.l.b16 %v1719
      %v4917 = vunpack.c.l.b16 %v1720
      %v4918 = vunpack.c.l.b16 %v1721
      %v4919 = vunpack.c.l.b16 %v1722
      %v4920 = vunpack.c.l.b16 %v1723
      %v4921 = vunpack.c.l.b16 %v1724
      %v4922 = vunpack.c.l.b16 %v1725
      %v4923 = vunpack.c.l.b16 %v1726
      %v4924 = vunpack.c.l.b16 %v1727
      %v4925 = vunpack.c.l.b16 %v1728
      %v4926 = vunpack.c.l.b16 %v1729
      %v4927 = vunpack.c.l.b16 %v1730
      %v4928 = vunpack.c.l.b16 %v1731
      %v4929 = vunpack.c.l.b16 %v1732
      %v4930 = vunpack.c.l.b16 %v1733
      %v4931 = vunpack.c.l.b16 %v1734
      %v4932 = vunpack.c.l.b16 %v1735
      %v4933 = vunpack.c.l.b16 %v1736
      %v4934 = vpack.c.b16 %v3495, %v3494
      %v4935 = vpack.c.b16 %v3497, %v3496
      %v4936 = vpack.c.b16 %v3499, %v3498
      %v4937 = vpack.c.b16 %v3501, %v3500
      %v4938 = vpack.c.b16 %v3503, %v3502
      %v4939 = vpack.c.b16 %v3505, %v3504
      %v4940 = vpack.c.b16 %v3507, %v3506
      %v4941 = vpack.c.b16 %v3509, %v3508
      %v4942 = vpack.c.b16 %v3511, %v3510
      %v4943 = vpack.c.b16 %v3513, %v3512
      %v4944 = vpack.c.b16 %v3515, %v3514
      %v4945 = vpack.c.b16 %v3517, %v3516
      %v4946 = vpack.c.b16 %v3519, %v3518
      %v4947 = vpack.c.b16 %v3521, %v3520
      %v4948 = vpack.c.b16 %v3523, %v3522
      %v4949 = vpack.c.b16 %v3525, %v3524
      %v4950 = vpack.c.b16 %v3527, %v3526
      %v4951 = vpack.c.b16 %v3529, %v3528
      %v4952 = vpack.c.b16 %v3531, %v3530
      %v4953 = vpack.c.b16 %v3533, %v3532
      %v4954 = vpack.c.b16 %v3535, %v3534
      %v4955 = vpack.c.b16 %v3537, %v3536
      %v4956 = vpack.c.b16 %v3539, %v3538
      %v4957 = vpack.c.b16 %v3541, %v3540
      %v4958 = vpack.c.b16 %v3543, %v3542
      %v4959 = vpack.c.b16 %v3545, %v3544
      %v4960 = vpack.c.b16 %v3547, %v3546
      %v4961 = vpack.c.b16 %v3549, %v3548
      %v4962 = vpack.c.b16 %v3551, %v3550
      %v4963 = vpack.c.b16 %v3553, %v3552
      %v4964 = vpack.c.b16 %v3555, %v3554
      %v4965 = vpack.c.b16 %v3557, %v3556
      %v4966 = vpack.c.b16 %v3559, %v3558
      %v4967 = vpack.c.b16 %v3561, %v3560
      %v4968 = vpack.c.b16 %v3563, %v3562
      %v4969 = vpack.c.b16 %v3565, %v3564
      %v4970 = vpack.c.b16 %v3567, %v3566
      %v4971 = vpack.c.b16 %v3569, %v3568
      %v4972 = vpack.c.b16 %v3571, %v3570
      %v4973 = vpack.c.b16 %v3573, %v3572
      %v4974 = vpack.c.b16 %v3575, %v3574
      %v4975 = vpack.c.b16 %v3577, %v3576
      %v4976 = vpack.c.b16 %v3579, %v3578
      %v4977 = vpack.c.b16 %v3581, %v3580
      %v4978 = vpack.c.b16 %v3583, %v3582
      %v4979 = vpack.c.b16 %v3585, %v3584
      %v4980 = vpack.c.b16 %v3587, %v3586
      %v4981 = vpack.c.b16 %v3589, %v3588
      %v4982 = vpack.c.b16 %v3591, %v3590
      %v4983 = vpack.c.b16 %v3593, %v3592
      %v4984 = vpack.c.b16 %v3595, %v3594
      %v4985 = vpack.c.b16 %v3597, %v3596
      %v4986 = vpack.c.b16 %v3599, %v3598
      %v4987 = vpack.c.b16 %v3601, %v3600
      %v4988 = vpack.c.b16 %v3603, %v3602
      %v4989 = vpack.c.b16 %v3605, %v3604
      %v4990 = vpack.c.b16 %v3607, %v3606
      %v4991 = vpack.c.b16 %v3609, %v3608
      %v4992 = vpack.c.b16 %v3611, %v3610
      %v4993 = vpack.c.b16 %v3613, %v3612
      %v4994 = vpack.c.b16 %v3615, %v3614
      %v4995 = vpack.c.b16 %v3617, %v3616
      %v4996 = vpack.c.b16 %v3619, %v3618
      %v4997 = vpack.c.b16 %v3621, %v3620
      %v4998 = vpack.c.b16 %v3623, %v3622
      %v4999 = vpack.c.b16 %v3625, %v3624
      %v5000 = vpack.c.b16 %v3627, %v3626
      %v5001 = vpack.c.b16 %v3629, %v3628
      %v5002 = vpack.c.b16 %v3631, %v3630
      %v5003 = vpack.c.b16 %v3633, %v3632
      %v5004 = vpack.c.b16 %v3635, %v3634
      %v5005 = vpack.c.b16 %v3637, %v3636
      %v5006 = vpack.c.b16 %v3639, %v3638
      %v5007 = vpack.c.b16 %v3641, %v3640
      %v5008 = vpack.c.b16 %v3643, %v3642
      %v5009 = vpack.c.b16 %v3645, %v3644
      %v5010 = vpack.c.b16 %v3647, %v3646
      %v5011 = vpack.c.b16 %v3649, %v3648
      %v5012 = vpack.c.b16 %v3651, %v3650
      %v5013 = vpack.c.b16 %v3653, %v3652
      %v5014 = vpack.c.b16 %v3655, %v3654
      %v5015 = vpack.c.b16 %v3657, %v3656
      %v5016 = vpack.c.b16 %v3659, %v3658
      %v5017 = vpack.c.b16 %v3661, %v3660
      %v5018 = vpack.c.b16 %v3663, %v3662
      %v5019 = vpack.c.b16 %v3665, %v3664
      %v5020 = vpack.c.b16 %v3667, %v3666
      %v5021 = vpack.c.b16 %v3669, %v3668
      %v5022 = vpack.c.b16 %v3671, %v3670
      %v5023 = vpack.c.b16 %v3673, %v3672
      %v5024 = vpack.c.b16 %v3675, %v3674
      %v5025 = vpack.c.b16 %v3677, %v3676
      %v5026 = vpack.c.b16 %v3679, %v3678
      %v5027 = vpack.c.b16 %v3681, %v3680
      %v5028 = vpack.c.b16 %v3683, %v3682
      %v5029 = vpack.c.b16 %v3685, %v3684
      %v5030 = vpack.c.b16 %v3687, %v3686
      %v5031 = vpack.c.b16 %v3689, %v3688
      %v5032 = vpack.c.b16 %v3691, %v3690
      %v5033 = vpack.c.b16 %v3693, %v3692
      %v5034 = vpack.c.b16 %v3695, %v3694
      %v5035 = vpack.c.b16 %v3697, %v3696
      %v5036 = vpack.c.b16 %v3699, %v3698
      %v5037 = vpack.c.b16 %v3701, %v3700
      %v5038 = vpack.c.b16 %v3703, %v3702
      %v5039 = vpack.c.b16 %v3705, %v3704
      %v5040 = vpack.c.b16 %v3707, %v3706
      %v5041 = vpack.c.b16 %v3709, %v3708
      %v5042 = vpack.c.b16 %v3711, %v3710
      %v5043 = vpack.c.b16 %v3713, %v3712
      %v5044 = vpack.c.b16 %v3715, %v3714
      %v5045 = vpack.c.b16 %v3717, %v3716
      %v5046 = vpack.c.b16 %v3719, %v3718
      %v5047 = vpack.c.b16 %v3721, %v3720
      %v5048 = vpack.c.b16 %v3723, %v3722
      %v5049 = vpack.c.b16 %v3725, %v3724
      %v5050 = vpack.c.b16 %v3727, %v3726
      %v5051 = vpack.c.b16 %v3729, %v3728
      %v5052 = vpack.c.b16 %v3731, %v3730
      %v5053 = vpack.c.b16 %v3733, %v3732
      %v5054 = vpack.c.b16 %v3735, %v3734
      %v5055 = vpack.c.b16 %v3737, %v3736
      %v5056 = vpack.c.b16 %v3739, %v3738
      %v5057 = vpack.c.b16 %v3741, %v3740
      %v5058 = vpack.c.b16 %v3743, %v3742
      %v5059 = vpack.c.b16 %v3745, %v3744
      %v5060 = vpack.c.b16 %v3747, %v3746
      %v5061 = vpack.c.b16 %v3749, %v3748
      %v5062 = vpack.c.b16 %v3751, %v3750
      %v5063 = vpack.c.b16 %v3753, %v3752
      %v5064 = vpack.c.b16 %v3755, %v3754
      %v5065 = vpack.c.b16 %v3757, %v3756
      %v5066 = vpack.c.b16 %v3759, %v3758
      %v5067 = vpack.c.b16 %v3761, %v3760
      %v5068 = vpack.c.b16 %v3763, %v3762
      %v5069 = vpack.c.b16 %v3765, %v3764
      %v5070 = vpack.c.b16 %v3767, %v3766
      %v5071 = vpack.c.b16 %v3769, %v3768
      %v5072 = vpack.c.b16 %v3771, %v3770
      %v5073 = vpack.c.b16 %v3773, %v3772
      %v5074 = vpack.c.b16 %v3775, %v3774
      %v5075 = vpack.c.b16 %v3777, %v3776
      %v5076 = vpack.c.b16 %v3779, %v3778
      %v5077 = vpack.c.b16 %v3781, %v3780
      %v5078 = vpack.c.b16 %v3783, %v3782
      %v5079 = vpack.c.b16 %v3785, %v3784
      %v5080 = vpack.c.b16 %v3787, %v3786
      %v5081 = vpack.c.b16 %v3789, %v3788
      %v5082 = vpack.c.b16 %v3791, %v3790
      %v5083 = vpack.c.b16 %v3793, %v3792
      %v5084 = vpack.c.b16 %v3795, %v3794
      %v5085 = vpack.c.b16 %v3797, %v3796
      %v5086 = vpack.c.b16 %v3799, %v3798
      %v5087 = vpack.c.b16 %v3801, %v3800
      %v5088 = vpack.c.b16 %v3803, %v3802
      %v5089 = vpack.c.b16 %v3805, %v3804
      %v5090 = vpack.c.b16 %v3807, %v3806
      %v5091 = vpack.c.b16 %v3809, %v3808
      %v5092 = vpack.c.b16 %v3811, %v3810
      %v5093 = vpack.c.b16 %v3813, %v3812
      %v5094 = vpack.c.b16 %v3815, %v3814
      %v5095 = vpack.c.b16 %v3817, %v3816
      %v5096 = vpack.c.b16 %v3819, %v3818
      %v5097 = vpack.c.b16 %v3821, %v3820
      %v5098 = vpack.c.b16 %v3823, %v3822
      %v5099 = vpack.c.b16 %v3825, %v3824
      %v5100 = vpack.c.b16 %v3827, %v3826
      %v5101 = vpack.c.b16 %v3829, %v3828
      %v5102 = vpack.c.b16 %v3831, %v3830
      %v5103 = vpack.c.b16 %v3833, %v3832
      %v5104 = vpack.c.b16 %v3835, %v3834
      %v5105 = vpack.c.b16 %v3837, %v3836
      %v5106 = vpack.c.b16 %v3839, %v3838
      %v5107 = vpack.c.b16 %v3841, %v3840
      %v5108 = vpack.c.b16 %v3843, %v3842
      %v5109 = vpack.c.b16 %v3845, %v3844
      %v5110 = vpack.c.b16 %v3847, %v3846
      %v5111 = vpack.c.b16 %v3849, %v3848
      %v5112 = vpack.c.b16 %v3851, %v3850
      %v5113 = vpack.c.b16 %v3853, %v3852
      %v5114 = vpack.c.b16 %v3855, %v3854
      %v5115 = vpack.c.b16 %v3857, %v3856
      %v5116 = vpack.c.b16 %v3859, %v3858
      %v5117 = vpack.c.b16 %v3861, %v3860
      %v5118 = vpack.c.b16 %v3863, %v3862
      %v5119 = vpack.c.b16 %v3865, %v3864
      %v5120 = vpack.c.b16 %v3867, %v3866
      %v5121 = vpack.c.b16 %v3869, %v3868
      %v5122 = vpack.c.b16 %v3871, %v3870
      %v5123 = vpack.c.b16 %v3873, %v3872
      %v5124 = vpack.c.b16 %v3875, %v3874
      %v5125 = vpack.c.b16 %v3877, %v3876
      %v5126 = vpack.c.b16 %v3879, %v3878
      %v5127 = vpack.c.b16 %v3881, %v3880
      %v5128 = vpack.c.b16 %v3883, %v3882
      %v5129 = vpack.c.b16 %v3885, %v3884
      %v5130 = vpack.c.b16 %v3887, %v3886
      %v5131 = vpack.c.b16 %v3889, %v3888
      %v5132 = vpack.c.b16 %v3891, %v3890
      %v5133 = vpack.c.b16 %v3893, %v3892
      %v5134 = vpack.c.b16 %v3895, %v3894
      %v5135 = vpack.c.b16 %v3897, %v3896
      %v5136 = vpack.c.b16 %v3899, %v3898
      %v5137 = vpack.c.b16 %v3901, %v3900
      %v5138 = vpack.c.b16 %v3903, %v3902
      %v5139 = vpack.c.b16 %v3905, %v3904
      %v5140 = vpack.c.b16 %v3907, %v3906
      %v5141 = vpack.c.b16 %v3909, %v3908
      %v5142 = vpack.c.b16 %v3911, %v3910
      %v5143 = vpack.c.b16 %v3913, %v3912
      %v5144 = vpack.c.b16 %v3915, %v3914
      %v5145 = vpack.c.b16 %v3917, %v3916
      %v5146 = vpack.c.b16 %v3919, %v3918
      %v5147 = vpack.c.b16 %v3921, %v3920
      %v5148 = vpack.c.b16 %v3923, %v3922
      %v5149 = vpack.c.b16 %v3925, %v3924
      %v5150 = vpack.c.b16 %v3927, %v3926
      %v5151 = vpack.c.b16 %v3929, %v3928
      %v5152 = vpack.c.b16 %v3931, %v3930
      %v5153 = vpack.c.b16 %v3933, %v3932
      %v5154 = vpack.c.b16 %v3935, %v3934
      %v5155 = vpack.c.b16 %v3937, %v3936
      %v5156 = vpack.c.b16 %v3939, %v3938
      %v5157 = vpack.c.b16 %v3941, %v3940
      %v5158 = vpack.c.b16 %v3943, %v3942
      %v5159 = vpack.c.b16 %v3945, %v3944
      %v5160 = vpack.c.b16 %v3947, %v3946
      %v5161 = vpack.c.b16 %v3949, %v3948
      %v5162 = vpack.c.b16 %v3951, %v3950
      %v5163 = vpack.c.b16 %v3953, %v3952
      %v5164 = vpack.c.b16 %v3955, %v3954
      %v5165 = vpack.c.b16 %v3957, %v3956
      %v5166 = vpack.c.b16 %v3959, %v3958
      %v5167 = vpack.c.b16 %v3961, %v3960
      %v5168 = vpack.c.b16 %v3963, %v3962
      %v5169 = vpack.c.b16 %v3965, %v3964
      %v5170 = vpack.c.b16 %v3967, %v3966
      %v5171 = vpack.c.b16 %v3969, %v3968
      %v5172 = vpack.c.b16 %v3971, %v3970
      %v5173 = vpack.c.b16 %v3973, %v3972
      %v5174 = vpack.c.b16 %v3975, %v3974
      %v5175 = vpack.c.b16 %v3977, %v3976
      %v5176 = vpack.c.b16 %v3979, %v3978
      %v5177 = vpack.c.b16 %v3981, %v3980
      %v5178 = vpack.c.b16 %v3983, %v3982
      %v5179 = vpack.c.b16 %v3985, %v3984
      %v5180 = vpack.c.b16 %v3987, %v3986
      %v5181 = vpack.c.b16 %v3989, %v3988
      %v5182 = vpack.c.b16 %v3991, %v3990
      %v5183 = vpack.c.b16 %v3993, %v3992
      %v5184 = vpack.c.b16 %v3995, %v3994
      %v5185 = vpack.c.b16 %v3997, %v3996
      %v5186 = vpack.c.b16 %v3999, %v3998
      %v5187 = vpack.c.b16 %v4001, %v4000
      %v5188 = vpack.c.b16 %v4003, %v4002
      %v5189 = vpack.c.b16 %v4005, %v4004
      %v5190 = vpack.c.b16 %v4007, %v4006
      %v5191 = vpack.c.b16 %v4009, %v4008
      %v5192 = vpack.c.b16 %v4011, %v4010
      %v5193 = vpack.c.b16 %v4013, %v4012
      %v5194 = vpack.c.b16 %v4015, %v4014
      %v5195 = vpack.c.b16 %v4017, %v4016
      %v5196 = vpack.c.b16 %v4019, %v4018
      %v5197 = vpack.c.b16 %v4021, %v4020
      %v5198 = vpack.c.b16 %v4023, %v4022
      %v5199 = vpack.c.b16 %v4025, %v4024
      %v5200 = vpack.c.b16 %v4027, %v4026
      %v5201 = vpack.c.b16 %v4029, %v4028
      %v5202 = vpack.c.b16 %v4031, %v4030
      %v5203 = vpack.c.b16 %v4033, %v4032
      %v5204 = vpack.c.b16 %v4035, %v4034
      %v5205 = vpack.c.b16 %v4037, %v4036
      %v5206 = vpack.c.b16 %v4039, %v4038
      %v5207 = vpack.c.b16 %v4041, %v4040
      %v5208 = vpack.c.b16 %v4043, %v4042
      %v5209 = vpack.c.b16 %v4045, %v4044
      %v5210 = vpack.c.b16 %v4047, %v4046
      %v5211 = vpack.c.b16 %v4049, %v4048
      %v5212 = vpack.c.b16 %v4051, %v4050
      %v5213 = vpack.c.b16 %v4053, %v4052
      %v5214 = vpack.c.b16 %v4055, %v4054
      %v5215 = vpack.c.b16 %v4057, %v4056
      %v5216 = vpack.c.b16 %v4059, %v4058
      %v5217 = vpack.c.b16 %v4061, %v4060
      %v5218 = vpack.c.b16 %v4063, %v4062
      %v5219 = vpack.c.b16 %v4065, %v4064
      %v5220 = vpack.c.b16 %v4067, %v4066
      %v5221 = vpack.c.b16 %v4069, %v4068
      %v5222 = vpack.c.b16 %v4071, %v4070
      %v5223 = vpack.c.b16 %v4073, %v4072
      %v5224 = vpack.c.b16 %v4075, %v4074
      %v5225 = vpack.c.b16 %v4077, %v4076
      %v5226 = vpack.c.b16 %v4079, %v4078
      %v5227 = vpack.c.b16 %v4081, %v4080
      %v5228 = vpack.c.b16 %v4083, %v4082
      %v5229 = vpack.c.b16 %v4085, %v4084
      %v5230 = vpack.c.b16 %v4087, %v4086
      %v5231 = vpack.c.b16 %v4089, %v4088
      %v5232 = vpack.c.b16 %v4091, %v4090
      %v5233 = vpack.c.b16 %v4093, %v4092
      %v5234 = vpack.c.b16 %v4095, %v4094
      %v5235 = vpack.c.b16 %v4097, %v4096
      %v5236 = vpack.c.b16 %v4099, %v4098
      %v5237 = vpack.c.b16 %v4101, %v4100
      %v5238 = vpack.c.b16 %v4103, %v4102
      %v5239 = vpack.c.b16 %v4105, %v4104
      %v5240 = vpack.c.b16 %v4107, %v4106
      %v5241 = vpack.c.b16 %v4109, %v4108
      %v5242 = vpack.c.b16 %v4111, %v4110
      %v5243 = vpack.c.b16 %v4113, %v4112
      %v5244 = vpack.c.b16 %v4115, %v4114
      %v5245 = vpack.c.b16 %v4117, %v4116
      %v5246 = vpack.c.b16 %v4119, %v4118
      %v5247 = vpack.c.b16 %v4121, %v4120
      %v5248 = vpack.c.b16 %v4123, %v4122
      %v5249 = vpack.c.b16 %v4125, %v4124
      %v5250 = vpack.c.b16 %v4127, %v4126
      %v5251 = vpack.c.b16 %v4129, %v4128
      %v5252 = vpack.c.b16 %v4131, %v4130
      %v5253 = vpack.c.b16 %v4133, %v4132
      %v5254 = vpack.c.b16 %v4135, %v4134
      %v5255 = vpack.c.b16 %v4137, %v4136
      %v5256 = vpack.c.b16 %v4139, %v4138
      %v5257 = vpack.c.b16 %v4141, %v4140
      %v5258 = vpack.c.b16 %v4143, %v4142
      %v5259 = vpack.c.b16 %v4145, %v4144
      %v5260 = vpack.c.b16 %v4147, %v4146
      %v5261 = vpack.c.b16 %v4149, %v4148
      %v5262 = vpack.c.b16 %v4151, %v4150
      %v5263 = vpack.c.b16 %v4153, %v4152
      %v5264 = vpack.c.b16 %v4155, %v4154
      %v5265 = vpack.c.b16 %v4157, %v4156
      %v5266 = vpack.c.b16 %v4159, %v4158
      %v5267 = vpack.c.b16 %v4161, %v4160
      %v5268 = vpack.c.b16 %v4163, %v4162
      %v5269 = vpack.c.b16 %v4165, %v4164
      %v5270 = vpack.c.b16 %v4167, %v4166
      %v5271 = vpack.c.b16 %v4169, %v4168
      %v5272 = vpack.c.b16 %v4171, %v4170
      %v5273 = vpack.c.b16 %v4173, %v4172
      %v5274 = vpack.c.b16 %v4175, %v4174
      %v5275 = vpack.c.b16 %v4177, %v4176
      %v5276 = vpack.c.b16 %v4179, %v4178
      %v5277 = vpack.c.b16 %v4181, %v4180
      %v5278 = vpack.c.b16 %v4183, %v4182
      %v5279 = vpack.c.b16 %v4185, %v4184
      %v5280 = vpack.c.b16 %v4187, %v4186
      %v5281 = vpack.c.b16 %v4189, %v4188
      %v5282 = vpack.c.b16 %v4191, %v4190
      %v5283 = vpack.c.b16 %v4193, %v4192
      %v5284 = vpack.c.b16 %v4195, %v4194
      %v5285 = vpack.c.b16 %v4197, %v4196
      %v5286 = vpack.c.b16 %v4199, %v4198
      %v5287 = vpack.c.b16 %v4201, %v4200
      %v5288 = vpack.c.b16 %v4203, %v4202
      %v5289 = vpack.c.b16 %v4205, %v4204
      %v5290 = vpack.c.b16 %v4207, %v4206
      %v5291 = vpack.c.b16 %v4209, %v4208
      %v5292 = vpack.c.b16 %v4211, %v4210
      %v5293 = vpack.c.b16 %v4213, %v4212
      %v5294 = vpack.c.b16 %v4215, %v4214
      %v5295 = vpack.c.b16 %v4217, %v4216
      %v5296 = vpack.c.b16 %v4219, %v4218
      %v5297 = vpack.c.b16 %v4221, %v4220
      %v5298 = vpack.c.b16 %v4223, %v4222
      %v5299 = vpack.c.b16 %v4225, %v4224
      %v5300 = vpack.c.b16 %v4227, %v4226
      %v5301 = vpack.c.b16 %v4229, %v4228
      %v5302 = vpack.c.b16 %v4231, %v4230
      %v5303 = vpack.c.b16 %v4233, %v4232
      %v5304 = vpack.c.b16 %v4235, %v4234
      %v5305 = vpack.c.b16 %v4237, %v4236
      %v5306 = vpack.c.b16 %v4239, %v4238
      %v5307 = vpack.c.b16 %v4241, %v4240
      %v5308 = vpack.c.b16 %v4243, %v4242
      %v5309 = vpack.c.b16 %v4245, %v4244
      %v5310 = vpack.c.b16 %v4247, %v4246
      %v5311 = vpack.c.b16 %v4249, %v4248
      %v5312 = vpack.c.b16 %v4251, %v4250
      %v5313 = vpack.c.b16 %v4253, %v4252
      %v5314 = vpack.c.b16 %v4255, %v4254
      %v5315 = vpack.c.b16 %v4257, %v4256
      %v5316 = vpack.c.b16 %v4259, %v4258
      %v5317 = vpack.c.b16 %v4261, %v4260
      %v5318 = vpack.c.b16 %v4263, %v4262
      %v5319 = vpack.c.b16 %v4265, %v4264
      %v5320 = vpack.c.b16 %v4267, %v4266
      %v5321 = vpack.c.b16 %v4269, %v4268
      %v5322 = vpack.c.b16 %v4271, %v4270
      %v5323 = vpack.c.b16 %v4273, %v4272
      %v5324 = vpack.c.b16 %v4275, %v4274
      %v5325 = vpack.c.b16 %v4277, %v4276
      %v5326 = vpack.c.b16 %v4279, %v4278
      %v5327 = vpack.c.b16 %v4281, %v4280
      %v5328 = vpack.c.b16 %v4283, %v4282
      %v5329 = vpack.c.b16 %v4285, %v4284
      %v5330 = vpack.c.b16 %v4287, %v4286
      %v5331 = vpack.c.b16 %v4289, %v4288
      %v5332 = vpack.c.b16 %v4291, %v4290
      %v5333 = vpack.c.b16 %v4293, %v4292
      %v5334 = vpack.c.b16 %v4295, %v4294
      %v5335 = vpack.c.b16 %v4297, %v4296
      %v5336 = vpack.c.b16 %v4299, %v4298
      %v5337 = vpack.c.b16 %v4301, %v4300
      %v5338 = vpack.c.b16 %v4303, %v4302
      %v5339 = vpack.c.b16 %v4305, %v4304
      %v5340 = vpack.c.b16 %v4307, %v4306
      %v5341 = vpack.c.b16 %v4309, %v4308
      %v5342 = vpack.c.b16 %v4311, %v4310
      %v5343 = vpack.c.b16 %v4313, %v4312
      %v5344 = vpack.c.b16 %v4315, %v4314
      %v5345 = vpack.c.b16 %v4317, %v4316
      %v5346 = vpack.c.b16 %v4319, %v4318
      %v5347 = vpack.c.b16 %v4321, %v4320
      %v5348 = vpack.c.b16 %v4323, %v4322
      %v5349 = vpack.c.b16 %v4325, %v4324
      %v5350 = vpack.c.b16 %v4327, %v4326
      %v5351 = vpack.c.b16 %v4329, %v4328
      %v5352 = vpack.c.b16 %v4331, %v4330
      %v5353 = vpack.c.b16 %v4333, %v4332
      %v5354 = vpack.c.b16 %v4335, %v4334
      %v5355 = vpack.c.b16 %v4337, %v4336
      %v5356 = vpack.c.b16 %v4339, %v4338
      %v5357 = vpack.c.b16 %v4341, %v4340
      %v5358 = vpack.c.b16 %v4343, %v4342
      %v5359 = vpack.c.b16 %v4345, %v4344
      %v5360 = vpack.c.b16 %v4347, %v4346
      %v5361 = vpack.c.b16 %v4349, %v4348
      %v5362 = vpack.c.b16 %v4351, %v4350
      %v5363 = vpack.c.b16 %v4353, %v4352
      %v5364 = vpack.c.b16 %v4355, %v4354
      %v5365 = vpack.c.b16 %v4357, %v4356
      %v5366 = vpack.c.b16 %v4359, %v4358
      %v5367 = vpack.c.b16 %v4361, %v4360
      %v5368 = vpack.c.b16 %v4363, %v4362
      %v5369 = vpack.c.b16 %v4365, %v4364
      %v5370 = vpack.c.b16 %v4367, %v4366
      %v5371 = vpack.c.b16 %v4369, %v4368
      %v5372 = vpack.c.b16 %v4371, %v4370
      %v5373 = vpack.c.b16 %v4373, %v4372
      %v5374 = vpack.c.b16 %v4375, %v4374
      %v5375 = vpack.c.b16 %v4377, %v4376
      %v5376 = vpack.c.b16 %v4379, %v4378
      %v5377 = vpack.c.b16 %v4381, %v4380
      %v5378 = vpack.c.b16 %v4383, %v4382
      %v5379 = vpack.c.b16 %v4385, %v4384
      %v5380 = vpack.c.b16 %v4387, %v4386
      %v5381 = vpack.c.b16 %v4389, %v4388
      %v5382 = vpack.c.b16 %v4391, %v4390
      %v5383 = vpack.c.b16 %v4393, %v4392
      %v5384 = vpack.c.b16 %v4395, %v4394
      %v5385 = vpack.c.b16 %v4397, %v4396
      %v5386 = vpack.c.b16 %v4399, %v4398
      %v5387 = vpack.c.b16 %v4401, %v4400
      %v5388 = vpack.c.b16 %v4403, %v4402
      %v5389 = vpack.c.b16 %v4405, %v4404
      %v5390 = vpack.c.b16 %v4407, %v4406
      %v5391 = vpack.c.b16 %v4409, %v4408
      %v5392 = vpack.c.b16 %v4411, %v4410
      %v5393 = vpack.c.b16 %v4413, %v4412
      %v5394 = vpack.c.b16 %v4415, %v4414
      %v5395 = vpack.c.b16 %v4417, %v4416
      %v5396 = vpack.c.b16 %v4419, %v4418
      %v5397 = vpack.c.b16 %v4421, %v4420
      %v5398 = vpack.c.b16 %v4423, %v4422
      %v5399 = vpack.c.b16 %v4425, %v4424
      %v5400 = vpack.c.b16 %v4427, %v4426
      %v5401 = vpack.c.b16 %v4429, %v4428
      %v5402 = vpack.c.b16 %v4431, %v4430
      %v5403 = vpack.c.b16 %v4433, %v4432
      %v5404 = vpack.c.b16 %v4435, %v4434
      %v5405 = vpack.c.b16 %v4437, %v4436
      %v5406 = vpack.c.b16 %v4439, %v4438
      %v5407 = vpack.c.b16 %v4441, %v4440
      %v5408 = vpack.c.b16 %v4443, %v4442
      %v5409 = vpack.c.b16 %v4445, %v4444
      %v5410 = vpack.c.b16 %v4447, %v4446
      %v5411 = vpack.c.b16 %v4449, %v4448
      %v5412 = vpack.c.b16 %v4451, %v4450
      %v5413 = vpack.c.b16 %v4453, %v4452
      %v5414 = vpack.c.b16 %v4455, %v4454
      %v5415 = vpack.c.b16 %v4457, %v4456
      %v5416 = vpack.c.b16 %v4459, %v4458
      %v5417 = vpack.c.b16 %v4461, %v4460
      %v5418 = vpack.c.b16 %v4463, %v4462
      %v5419 = vpack.c.b16 %v4465, %v4464
      %v5420 = vpack.c.b16 %v4467, %v4466
      %v5421 = vpack.c.b16 %v4469, %v4468
      %v5422 = vpack.c.b16 %v4471, %v4470
      %v5423 = vpack.c.b16 %v4473, %v4472
      %v5424 = vpack.c.b16 %v4475, %v4474
      %v5425 = vpack.c.b16 %v4477, %v4476
      %v5426 = vpack.c.b16 %v4479, %v4478
      %v5427 = vpack.c.b16 %v4481, %v4480
      %v5428 = vpack.c.b16 %v4483, %v4482
      %v5429 = vpack.c.b16 %v4485, %v4484
      %v5430 = vpack.c.b16 %v4487, %v4486
      %v5431 = vpack.c.b16 %v4489, %v4488
      %v5432 = vpack.c.b16 %v4491, %v4490
      %v5433 = vpack.c.b16 %v4493, %v4492
      %v5434 = vpack.c.b16 %v4495, %v4494
      %v5435 = vpack.c.b16 %v4497, %v4496
      %v5436 = vpack.c.b16 %v4499, %v4498
      %v5437 = vpack.c.b16 %v4501, %v4500
      %v5438 = vpack.c.b16 %v4503, %v4502
      %v5439 = vpack.c.b16 %v4505, %v4504
      %v5440 = vpack.c.b16 %v4507, %v4506
      %v5441 = vpack.c.b16 %v4509, %v4508
      %v5442 = vpack.c.b16 %v4511, %v4510
      %v5443 = vpack.c.b16 %v4513, %v4512
      %v5444 = vpack.c.b16 %v4515, %v4514
      %v5445 = vpack.c.b16 %v4517, %v4516
      %v5446 = vpack.c.b16 %v4519, %v4518
      %v5447 = vpack.c.b16 %v4521, %v4520
      %v5448 = vpack.c.b16 %v4523, %v4522
      %v5449 = vpack.c.b16 %v4525, %v4524
      %v5450 = vpack.c.b16 %v4527, %v4526
      %v5451 = vpack.c.b16 %v4529, %v4528
      %v5452 = vpack.c.b16 %v4531, %v4530
      %v5453 = vpack.c.b16 %v4533, %v4532
      %v5454 = vpack.c.b16 %v4535, %v4534
      %v5455 = vpack.c.b16 %v4537, %v4536
      %v5456 = vpack.c.b16 %v4539, %v4538
      %v5457 = vpack.c.b16 %v4541, %v4540
      %v5458 = vpack.c.b16 %v4543, %v4542
      %v5459 = vpack.c.b16 %v4545, %v4544
      %v5460 = vpack.c.b16 %v4547, %v4546
      %v5461 = vpack.c.b16 %v4549, %v4548
      %v5462 = vpack.c.b16 %v4551, %v4550
      %v5463 = vpack.c.b16 %v4553, %v4552
      %v5464 = vpack.c.b16 %v4555, %v4554
      %v5465 = vpack.c.b16 %v4557, %v4556
      %v5466 = vpack.c.b16 %v4559, %v4558
      %v5467 = vpack.c.b16 %v4561, %v4560
      %v5468 = vpack.c.b16 %v4563, %v4562
      %v5469 = vpack.c.b16 %v4565, %v4564
      %v5470 = vpack.c.b16 %v4567, %v4566
      %v5471 = vpack.c.b16 %v4569, %v4568
      %v5472 = vpack.c.b16 %v4571, %v4570
      %v5473 = vpack.c.b16 %v4573, %v4572
      %v5474 = vpack.c.b16 %v4575, %v4574
      %v5475 = vpack.c.b16 %v4577, %v4576
      %v5476 = vpack.c.b16 %v4579, %v4578
      %v5477 = vpack.c.b16 %v4581, %v4580
      %v5478 = vpack.c.b16 %v4583, %v4582
      %v5479 = vpack.c.b16 %v4585, %v4584
      %v5480 = vpack.c.b16 %v4587, %v4586
      %v5481 = vpack.c.b16 %v4589, %v4588
      %v5482 = vpack.c.b16 %v4591, %v4590
      %v5483 = vpack.c.b16 %v4593, %v4592
      %v5484 = vpack.c.b16 %v4595, %v4594
      %v5485 = vpack.c.b16 %v4597, %v4596
      %v5486 = vpack.c.b16 %v4599, %v4598
      %v5487 = vpack.c.b16 %v4601, %v4600
      %v5488 = vpack.c.b16 %v4603, %v4602
      %v5489 = vpack.c.b16 %v4605, %v4604
      %v5490 = vpack.c.b16 %v4607, %v4606
      %v5491 = vpack.c.b16 %v4609, %v4608
      %v5492 = vpack.c.b16 %v4611, %v4610
      %v5493 = vpack.c.b16 %v4613, %v4612
      %v5494 = vpack.c.b16 %v4615, %v4614
      %v5495 = vpack.c.b16 %v4617, %v4616
      %v5496 = vpack.c.b16 %v4619, %v4618
      %v5497 = vpack.c.b16 %v4621, %v4620
      %v5498 = vpack.c.b16 %v4623, %v4622
      %v5499 = vpack.c.b16 %v4625, %v4624
      %v5500 = vpack.c.b16 %v4627, %v4626
      %v5501 = vpack.c.b16 %v4629, %v4628
      %v5502 = vpack.c.b16 %v4631, %v4630
      %v5503 = vpack.c.b16 %v4633, %v4632
      %v5504 = vpack.c.b16 %v4635, %v4634
      %v5505 = vpack.c.b16 %v4637, %v4636
      %v5506 = vpack.c.b16 %v4639, %v4638
      %v5507 = vpack.c.b16 %v4641, %v4640
      %v5508 = vpack.c.b16 %v4643, %v4642
      %v5509 = vpack.c.b16 %v4645, %v4644
      %v5510 = vpack.c.b16 %v4647, %v4646
      %v5511 = vpack.c.b16 %v4649, %v4648
      %v5512 = vpack.c.b16 %v4651, %v4650
      %v5513 = vpack.c.b16 %v4653, %v4652
      %v5514 = vpack.c.b16 %v4655, %v4654
      %v5515 = vpack.c.b16 %v4657, %v4656
      %v5516 = vpack.c.b16 %v4659, %v4658
      %v5517 = vpack.c.b16 %v4661, %v4660
      %v5518 = vpack.c.b16 %v4663, %v4662
      %v5519 = vpack.c.b16 %v4665, %v4664
      %v5520 = vpack.c.b16 %v4667, %v4666
      %v5521 = vpack.c.b16 %v4669, %v4668
      %v5522 = vpack.c.b16 %v4671, %v4670
      %v5523 = vpack.c.b16 %v4673, %v4672
      %v5524 = vpack.c.b16 %v4675, %v4674
      %v5525 = vpack.c.b16 %v4677, %v4676
      %v5526 = vpack.c.b16 %v4679, %v4678
      %v5527 = vpack.c.b16 %v4681, %v4680
      %v5528 = vpack.c.b16 %v4683, %v4682
      %v5529 = vpack.c.b16 %v4685, %v4684
      %v5530 = vpack.c.b16 %v4687, %v4686
      %v5531 = vpack.c.b16 %v4689, %v4688
      %v5532 = vpack.c.b16 %v4691, %v4690
      %v5533 = vpack.c.b16 %v4693, %v4692
      %v5534 = vpack.c.b16 %v4695, %v4694
      %v5535 = vpack.c.b16 %v4697, %v4696
      %v5536 = vpack.c.b16 %v4699, %v4698
      %v5537 = vpack.c.b16 %v4701, %v4700
      %v5538 = vpack.c.b16 %v4703, %v4702
      %v5539 = vpack.c.b16 %v4705, %v4704
      %v5540 = vpack.c.b16 %v4707, %v4706
      %v5541 = vpack.c.b16 %v4709, %v4708
      %v5542 = vpack.c.b16 %v4711, %v4710
      %v5543 = vpack.c.b16 %v4713, %v4712
      %v5544 = vpack.c.b16 %v4715, %v4714
      %v5545 = vpack.c.b16 %v4717, %v4716
      %v5546 = vpack.c.b16 %v4719, %v4718
      %v5547 = vpack.c.b16 %v4721, %v4720
      %v5548 = vpack.c.b16 %v4723, %v4722
      %v5549 = vpack.c.b16 %v4725, %v4724
      %v5550 = vpack.c.b16 %v4727, %v4726
      %v5551 = vpack.c.b16 %v4729, %v4728
      %v5552 = vpack.c.b16 %v4731, %v4730
      %v5553 = vpack.c.b16 %v4733, %v4732
      %v5554 = vpack.c.b16 %v4735, %v4734
      %v5555 = vpack.c.b16 %v4737, %v4736
      %v5556 = vpack.c.b16 %v4739, %v4738
      %v5557 = vpack.c.b16 %v4741, %v4740
      %v5558 = vpack.c.b16 %v4743, %v4742
      %v5559 = vpack.c.b16 %v4745, %v4744
      %v5560 = vpack.c.b16 %v4747, %v4746
      %v5561 = vpack.c.b16 %v4749, %v4748
      %v5562 = vpack.c.b16 %v4751, %v4750
      %v5563 = vpack.c.b16 %v4753, %v4752
      %v5564 = vpack.c.b16 %v4755, %v4754
      %v5565 = vpack.c.b16 %v4757, %v4756
      %v5566 = vpack.c.b16 %v4759, %v4758
      %v5567 = vpack.c.b16 %v4761, %v4760
      %v5568 = vpack.c.b16 %v4763, %v4762
      %v5569 = vpack.c.b16 %v4765, %v4764
      %v5570 = vpack.c.b16 %v4767, %v4766
      %v5571 = vpack.c.b16 %v4769, %v4768
      %v5572 = vpack.c.b16 %v4771, %v4770
      %v5573 = vpack.c.b16 %v4773, %v4772
      %v5574 = vpack.c.b16 %v4775, %v4774
      %v5575 = vpack.c.b16 %v4777, %v4776
      %v5576 = vpack.c.b16 %v4779, %v4778
      %v5577 = vpack.c.b16 %v4781, %v4780
      %v5578 = vpack.c.b16 %v4783, %v4782
      %v5579 = vpack.c.b16 %v4785, %v4784
      %v5580 = vpack.c.b16 %v4787, %v4786
      %v5581 = vpack.c.b16 %v4789, %v4788
      %v5582 = vpack.c.b16 %v4791, %v4790
      %v5583 = vpack.c.b16 %v4793, %v4792
      %v5584 = vpack.c.b16 %v4795, %v4794
      %v5585 = vpack.c.b16 %v4797, %v4796
      %v5586 = vpack.c.b16 %v4799, %v4798
      %v5587 = vpack.c.b16 %v4801, %v4800
      %v5588 = vpack.c.b16 %v4803, %v4802
      %v5589 = vpack.c.b16 %v4805, %v4804
      %v5590 = vpack.c.b16 %v4807, %v4806
      %v5591 = vpack.c.b16 %v4809, %v4808
      %v5592 = vpack.c.b16 %v4811, %v4810
      %v5593 = vpack.c.b16 %v4813, %v4812
      %v5594 = vpack.c.b16 %v4815, %v4814
      %v5595 = vpack.c.b16 %v4817, %v4816
      %v5596 = vpack.c.b16 %v4819, %v4818
      %v5597 = vpack.c.b16 %v4821, %v4820
      %v5598 = vpack.c.b16 %v4823, %v4822
      %v5599 = vpack.c.b16 %v4825, %v4824
      %v5600 = vpack.c.b16 %v4827, %v4826
      %v5601 = vpack.c.b16 %v4829, %v4828
      %v5602 = vpack.c.b16 %v4831, %v4830
      %v5603 = vpack.c.b16 %v4833, %v4832
      %v5604 = vpack.c.b16 %v4835, %v4834
      %v5605 = vpack.c.b16 %v4837, %v4836
      %v5606 = vpack.c.b16 %v4839, %v4838
      %v5607 = vpack.c.b16 %v4841, %v4840
      %v5608 = vpack.c.b16 %v4843, %v4842
      %v5609 = vpack.c.b16 %v4845, %v4844
      %v5610 = vpack.c.b16 %v4847, %v4846
      %v5611 = vpack.c.b16 %v4849, %v4848
      %v5612 = vpack.c.b16 %v4851, %v4850
      %v5613 = vpack.c.b16 %v4853, %v4852
      %v5614 = vpack.c.b16 %v4855, %v4854
      %v5615 = vpack.c.b16 %v4857, %v4856
      %v5616 = vpack.c.b16 %v4859, %v4858
      %v5617 = vpack.c.b16 %v4861, %v4860
      %v5618 = vpack.c.b16 %v4863, %v4862
      %v5619 = vpack.c.b16 %v4865, %v4864
      %v5620 = vpack.c.b16 %v4867, %v4866
      %v5621 = vpack.c.b16 %v4869, %v4868
      %v5622 = vpack.c.b16 %v4871, %v4870
      %v5623 = vpack.c.b16 %v4873, %v4872
      %v5624 = vpack.c.b16 %v4875, %v4874
      %v5625 = vpack.c.b16 %v4877, %v4876
      %v5626 = vpack.c.b16 %v4879, %v4878
      %v5627 = vpack.c.b16 %v4881, %v4880
      %v5628 = vpack.c.b16 %v4883, %v4882
      %v5629 = vpack.c.b16 %v4885, %v4884
      %v5630 = vpack.c.b16 %v4887, %v4886
      %v5631 = vpack.c.b16 %v4889, %v4888
      %v5632 = vpack.c.b16 %v4891, %v4890
      %v5633 = vpack.c.b16 %v4893, %v4892
      %v5634 = vpack.c.b16 %v4895, %v4894
      %v5635 = vpack.c.b16 %v4897, %v4896
      %v5636 = vpack.c.b16 %v4899, %v4898
      %v5637 = vpack.c.b16 %v4901, %v4900
      %v5638 = vpack.c.b16 %v4903, %v4902
      %v5639 = vpack.c.b16 %v4905, %v4904
      %v5640 = vpack.c.b16 %v4907, %v4906
      %v5641 = vpack.c.b16 %v4909, %v4908
      %v5642 = vpack.c.b16 %v4911, %v4910
      %v5643 = vpack.c.b16 %v4913, %v4912
      %v5644 = vpack.c.b16 %v4915, %v4914
      %v5645 = vpack.c.b16 %v4917, %v4916
      %v5646 = vpack.c.b16 %v4919, %v4918
      %v5647 = vpack.c.b16 %v4921, %v4920
      %v5648 = vpack.c.b16 %v4923, %v4922
      %v5649 = vpack.c.b16 %v4925, %v4924
      %v5650 = vpack.c.b16 %v4927, %v4926
      %v5651 = vpack.c.b16 %v4929, %v4928
      %v5652 = vpack.c.b16 %v4931, %v4930
      %v5653 = vpack.c.b16 %v4933, %v4932
      %6374 = vmatpush.bf16.msra.mxu0 %v4941
      %6375 = vmatpush.bf16.msra.mxu0 %v4940
      %6376 = vmatpush.bf16.msra.mxu0 %v4939
      %6377 = vmatpush.bf16.msra.mxu0 %v4938
      %6378 = vmatpush.bf16.msra.mxu0 %v4937
      %6379 = vmatpush.bf16.msra.mxu0 %v4936
      %6380 = vmatpush.bf16.msra.mxu0 %v4935
      %6381 = vmatpush.bf16.msra.mxu0 %v4934
      %6382 = vmatmul.bf16.gmra.mxu0 %v1874
      %v6383 = vpop.f32.mrf.mxu0
      %v6384 = vadd.f32 %v1738, %v6383
      %v6385 = vpop.f32.mrf.mxu0
      %6386 = vdwg.mxu0
      %6387 = vmatpush.bf16.msra.mxu0 %v4949
      %6388 = vmatpush.bf16.msra.mxu0 %v4948
      %6389 = vmatpush.bf16.msra.mxu0 %v4947
      %6390 = vmatpush.bf16.msra.mxu0 %v4946
      %6391 = vmatpush.bf16.msra.mxu0 %v4945
      %6392 = vmatpush.bf16.msra.mxu0 %v4944
      %6393 = vmatpush.bf16.msra.mxu0 %v4943
      %6394 = vmatpush.bf16.msra.mxu0 %v4942
      %6395 = vmatmul.bf16.gmra.mxu0 %v1875
      %v6396 = vpop.f32.mrf.mxu0
      %v6397 = vadd.f32 %v6384, %v6396
      %v6398 = vpop.f32.mrf.mxu0
      %6399 = vdwg.mxu0
      %6400 = vmatpush.bf16.msra.mxu0 %v4957
      %6401 = vmatpush.bf16.msra.mxu0 %v4956
      %6402 = vmatpush.bf16.msra.mxu0 %v4955
      %6403 = vmatpush.bf16.msra.mxu0 %v4954
      %6404 = vmatpush.bf16.msra.mxu0 %v4953
      %6405 = vmatpush.bf16.msra.mxu0 %v4952
      %6406 = vmatpush.bf16.msra.mxu0 %v4951
      %6407 = vmatpush.bf16.msra.mxu0 %v4950
      %6408 = vmatmul.bf16.gmra.mxu0 %v1876
      %v6409 = vpop.f32.mrf.mxu0
      %v6410 = vadd.f32 %v6397, %v6409
      %v6411 = vpop.f32.mrf.mxu0
      %6412 = vdwg.mxu0
      %6413 = vmatpush.bf16.msra.mxu0 %v4965
      %6414 = vmatpush.bf16.msra.mxu0 %v4964
      %6415 = vmatpush.bf16.msra.mxu0 %v4963
      %6416 = vmatpush.bf16.msra.mxu0 %v4962
      %6417 = vmatpush.bf16.msra.mxu0 %v4961
      %6418 = vmatpush.bf16.msra.mxu0 %v4960
      %6419 = vmatpush.bf16.msra.mxu0 %v4959
      %6420 = vmatpush.bf16.msra.mxu0 %v4958
      %6421 = vmatmul.bf16.gmra.mxu0 %v1877
      %v6422 = vpop.f32.mrf.mxu0
      %v6423 = vadd.f32 %v6410, %v6422
      %v6424 = vpop.f32.mrf.mxu0
      %6425 = vdwg.mxu0
      %6426 = vmatpush.bf16.msra.mxu0 %v4973
      %6427 = vmatpush.bf16.msra.mxu0 %v4972
      %6428 = vmatpush.bf16.msra.mxu0 %v4971
      %6429 = vmatpush.bf16.msra.mxu0 %v4970
      %6430 = vmatpush.bf16.msra.mxu0 %v4969
      %6431 = vmatpush.bf16.msra.mxu0 %v4968
      %6432 = vmatpush.bf16.msra.mxu0 %v4967
      %6433 = vmatpush.bf16.msra.mxu0 %v4966
      %6434 = vmatmul.bf16.gmra.mxu0 %v1878
      %v6435 = vpop.f32.mrf.mxu0
      %v6436 = vadd.f32 %v6423, %v6435
      %v6437 = vpop.f32.mrf.mxu0
      %6438 = vdwg.mxu0
      %6439 = vmatpush.bf16.msra.mxu0 %v4981
      %6440 = vmatpush.bf16.msra.mxu0 %v4980
      %6441 = vmatpush.bf16.msra.mxu0 %v4979
      %6442 = vmatpush.bf16.msra.mxu0 %v4978
      %6443 = vmatpush.bf16.msra.mxu0 %v4977
      %6444 = vmatpush.bf16.msra.mxu0 %v4976
      %6445 = vmatpush.bf16.msra.mxu0 %v4975
      %6446 = vmatpush.bf16.msra.mxu0 %v4974
      %6447 = vmatmul.bf16.gmra.mxu0 %v1879
      %v6448 = vpop.f32.mrf.mxu0
      %v6449 = vadd.f32 %v6436, %v6448
      %v6450 = vpop.f32.mrf.mxu0
      %6451 = vdwg.mxu0
      %6452 = vmatpush.bf16.msra.mxu0 %v4989
      %6453 = vmatpush.bf16.msra.mxu0 %v4988
      %6454 = vmatpush.bf16.msra.mxu0 %v4987
      %6455 = vmatpush.bf16.msra.mxu0 %v4986
      %6456 = vmatpush.bf16.msra.mxu0 %v4985
      %6457 = vmatpush.bf16.msra.mxu0 %v4984
      %6458 = vmatpush.bf16.msra.mxu0 %v4983
      %6459 = vmatpush.bf16.msra.mxu0 %v4982
      %6460 = vmatmul.bf16.gmra.mxu0 %v1880
      %v6461 = vpop.f32.mrf.mxu0
      %v6462 = vadd.f32 %v6449, %v6461
      %v6463 = vpop.f32.mrf.mxu0
      %6464 = vdwg.mxu0
      %6465 = vmatpush.bf16.msra.mxu0 %v4997
      %6466 = vmatpush.bf16.msra.mxu0 %v4996
      %6467 = vmatpush.bf16.msra.mxu0 %v4995
      %6468 = vmatpush.bf16.msra.mxu0 %v4994
      %6469 = vmatpush.bf16.msra.mxu0 %v4993
      %6470 = vmatpush.bf16.msra.mxu0 %v4992
      %6471 = vmatpush.bf16.msra.mxu0 %v4991
      %6472 = vmatpush.bf16.msra.mxu0 %v4990
      %6473 = vmatmul.bf16.gmra.mxu0 %v1881
      %v6474 = vpop.f32.mrf.mxu0
      %v6475 = vadd.f32 %v6462, %v6474
      %v6476 = vpop.f32.mrf.mxu0
      %6477 = vdwg.mxu0
      %6478 = vmatpush.bf16.msra.mxu0 %v5005
      %6479 = vmatpush.bf16.msra.mxu0 %v5004
      %6480 = vmatpush.bf16.msra.mxu0 %v5003
      %6481 = vmatpush.bf16.msra.mxu0 %v5002
      %6482 = vmatpush.bf16.msra.mxu0 %v5001
      %6483 = vmatpush.bf16.msra.mxu0 %v5000
      %6484 = vmatpush.bf16.msra.mxu0 %v4999
      %6485 = vmatpush.bf16.msra.mxu0 %v4998
      %6486 = vmatmul.bf16.gmra.mxu0 %v1882
      %v6487 = vpop.f32.mrf.mxu0
      %v6488 = vadd.f32 %v6475, %v6487
      %v6489 = vpop.f32.mrf.mxu0
      %6490 = vdwg.mxu0
      %6491 = vmatpush.bf16.msra.mxu0 %v5013
      %6492 = vmatpush.bf16.msra.mxu0 %v5012
      %6493 = vmatpush.bf16.msra.mxu0 %v5011
      %6494 = vmatpush.bf16.msra.mxu0 %v5010
      %6495 = vmatpush.bf16.msra.mxu0 %v5009
      %6496 = vmatpush.bf16.msra.mxu0 %v5008
      %6497 = vmatpush.bf16.msra.mxu0 %v5007
      %6498 = vmatpush.bf16.msra.mxu0 %v5006
      %6499 = vmatmul.bf16.gmra.mxu0 %v1883
      %v6500 = vpop.f32.mrf.mxu0
      %v6501 = vadd.f32 %v6488, %v6500
      %v6502 = vpop.f32.mrf.mxu0
      %6503 = vdwg.mxu0
      %6504 = vmatpush.bf16.msra.mxu0 %v5021
      %6505 = vmatpush.bf16.msra.mxu0 %v5020
      %6506 = vmatpush.bf16.msra.mxu0 %v5019
      %6507 = vmatpush.bf16.msra.mxu0 %v5018
      %6508 = vmatpush.bf16.msra.mxu0 %v5017
      %6509 = vmatpush.bf16.msra.mxu0 %v5016
      %6510 = vmatpush.bf16.msra.mxu0 %v5015
      %6511 = vmatpush.bf16.msra.mxu0 %v5014
      %6512 = vmatmul.bf16.gmra.mxu0 %v1884
      %v6513 = vpop.f32.mrf.mxu0
      %v6514 = vadd.f32 %v6501, %v6513
      %v6515 = vpop.f32.mrf.mxu0
      %6516 = vdwg.mxu0
      %6517 = vmatpush.bf16.msra.mxu0 %v5029
      %6518 = vmatpush.bf16.msra.mxu0 %v5028
      %6519 = vmatpush.bf16.msra.mxu0 %v5027
      %6520 = vmatpush.bf16.msra.mxu0 %v5026
      %6521 = vmatpush.bf16.msra.mxu0 %v5025
      %6522 = vmatpush.bf16.msra.mxu0 %v5024
      %6523 = vmatpush.bf16.msra.mxu0 %v5023
      %6524 = vmatpush.bf16.msra.mxu0 %v5022
      %6525 = vmatmul.bf16.gmra.mxu0 %v1885
      %v6526 = vpop.f32.mrf.mxu0
      %v6527 = vadd.f32 %v6514, %v6526
      %v6528 = vpop.f32.mrf.mxu0
      %6529 = vdwg.mxu0
      %6530 = vmatpush.bf16.msra.mxu0 %v5037
      %6531 = vmatpush.bf16.msra.mxu0 %v5036
      %6532 = vmatpush.bf16.msra.mxu0 %v5035
      %6533 = vmatpush.bf16.msra.mxu0 %v5034
      %6534 = vmatpush.bf16.msra.mxu0 %v5033
      %6535 = vmatpush.bf16.msra.mxu0 %v5032
      %6536 = vmatpush.bf16.msra.mxu0 %v5031
      %6537 = vmatpush.bf16.msra.mxu0 %v5030
      %6538 = vmatmul.bf16.gmra.mxu0 %v1886
      %v6539 = vpop.f32.mrf.mxu0
      %v6540 = vadd.f32 %v6527, %v6539
      %v6541 = vpop.f32.mrf.mxu0
      %6542 = vdwg.mxu0
      %6543 = vmatpush.bf16.msra.mxu0 %v5045
      %6544 = vmatpush.bf16.msra.mxu0 %v5044
      %6545 = vmatpush.bf16.msra.mxu0 %v5043
      %6546 = vmatpush.bf16.msra.mxu0 %v5042
      %6547 = vmatpush.bf16.msra.mxu0 %v5041
      %6548 = vmatpush.bf16.msra.mxu0 %v5040
      %6549 = vmatpush.bf16.msra.mxu0 %v5039
      %6550 = vmatpush.bf16.msra.mxu0 %v5038
      %6551 = vmatmul.bf16.gmra.mxu0 %v1887
      %v6552 = vpop.f32.mrf.mxu0
      %v6553 = vadd.f32 %v6540, %v6552
      %v6554 = vpop.f32.mrf.mxu0
      %6555 = vdwg.mxu0
      %6556 = vmatpush.bf16.msra.mxu0 %v5053
      %6557 = vmatpush.bf16.msra.mxu0 %v5052
      %6558 = vmatpush.bf16.msra.mxu0 %v5051
      %6559 = vmatpush.bf16.msra.mxu0 %v5050
      %6560 = vmatpush.bf16.msra.mxu0 %v5049
      %6561 = vmatpush.bf16.msra.mxu0 %v5048
      %6562 = vmatpush.bf16.msra.mxu0 %v5047
      %6563 = vmatpush.bf16.msra.mxu0 %v5046
      %6564 = vmatmul.bf16.gmra.mxu0 %v1888
      %v6565 = vpop.f32.mrf.mxu0
      %v6566 = vadd.f32 %v6553, %v6565
      %v6567 = vpop.f32.mrf.mxu0
      %6568 = vdwg.mxu0
      %6569 = vmatpush.bf16.msra.mxu0 %v5061
      %6570 = vmatpush.bf16.msra.mxu0 %v5060
      %6571 = vmatpush.bf16.msra.mxu0 %v5059
      %6572 = vmatpush.bf16.msra.mxu0 %v5058
      %6573 = vmatpush.bf16.msra.mxu0 %v5057
      %6574 = vmatpush.bf16.msra.mxu0 %v5056
      %6575 = vmatpush.bf16.msra.mxu0 %v5055
      %6576 = vmatpush.bf16.msra.mxu0 %v5054
      %6577 = vmatmul.bf16.gmra.mxu0 %v1889
      %v6578 = vpop.f32.mrf.mxu0
      %v6579 = vadd.f32 %v6566, %v6578
      %v6580 = vpop.f32.mrf.mxu0
      %6581 = vdwg.mxu0
      %6582 = vmatpush.bf16.msra.mxu0 %v5069
      %6583 = vmatpush.bf16.msra.mxu0 %v5068
      %6584 = vmatpush.bf16.msra.mxu0 %v5067
      %6585 = vmatpush.bf16.msra.mxu0 %v5066
      %6586 = vmatpush.bf16.msra.mxu0 %v5065
      %6587 = vmatpush.bf16.msra.mxu0 %v5064
      %6588 = vmatpush.bf16.msra.mxu0 %v5063
      %6589 = vmatpush.bf16.msra.mxu0 %v5062
      %6590 = vmatmul.bf16.gmra.mxu0 %v1890
      %v6591 = vpop.f32.mrf.mxu0
      %v6592 = vadd.f32 %v6579, %v6591
      %v6593 = vpop.f32.mrf.mxu0
      %6594 = vdwg.mxu0
      %6595 = vmatpush.bf16.msra.mxu0 %v5077
      %6596 = vmatpush.bf16.msra.mxu0 %v5076
      %6597 = vmatpush.bf16.msra.mxu0 %v5075
      %6598 = vmatpush.bf16.msra.mxu0 %v5074
      %6599 = vmatpush.bf16.msra.mxu0 %v5073
      %6600 = vmatpush.bf16.msra.mxu0 %v5072
      %6601 = vmatpush.bf16.msra.mxu0 %v5071
      %6602 = vmatpush.bf16.msra.mxu0 %v5070
      %6603 = vmatmul.bf16.gmra.mxu0 %v1891
      %v6604 = vpop.f32.mrf.mxu0
      %v6605 = vadd.f32 %v6592, %v6604
      %v6606 = vpop.f32.mrf.mxu0
      %6607 = vdwg.mxu0
      %6608 = vmatpush.bf16.msra.mxu0 %v5085
      %6609 = vmatpush.bf16.msra.mxu0 %v5084
      %6610 = vmatpush.bf16.msra.mxu0 %v5083
      %6611 = vmatpush.bf16.msra.mxu0 %v5082
      %6612 = vmatpush.bf16.msra.mxu0 %v5081
      %6613 = vmatpush.bf16.msra.mxu0 %v5080
      %6614 = vmatpush.bf16.msra.mxu0 %v5079
      %6615 = vmatpush.bf16.msra.mxu0 %v5078
      %6616 = vmatmul.bf16.gmra.mxu0 %v1892
      %v6617 = vpop.f32.mrf.mxu0
      %v6618 = vadd.f32 %v6605, %v6617
      %v6619 = vpop.f32.mrf.mxu0
      %6620 = vdwg.mxu0
      %6621 = vmatpush.bf16.msra.mxu0 %v5093
      %6622 = vmatpush.bf16.msra.mxu0 %v5092
      %6623 = vmatpush.bf16.msra.mxu0 %v5091
      %6624 = vmatpush.bf16.msra.mxu0 %v5090
      %6625 = vmatpush.bf16.msra.mxu0 %v5089
      %6626 = vmatpush.bf16.msra.mxu0 %v5088
      %6627 = vmatpush.bf16.msra.mxu0 %v5087
      %6628 = vmatpush.bf16.msra.mxu0 %v5086
      %6629 = vmatmul.bf16.gmra.mxu0 %v1893
      %v6630 = vpop.f32.mrf.mxu0
      %v6631 = vadd.f32 %v6618, %v6630
      %v6632 = vpop.f32.mrf.mxu0
      %6633 = vdwg.mxu0
      %6634 = vmatpush.bf16.msra.mxu0 %v5101
      %6635 = vmatpush.bf16.msra.mxu0 %v5100
      %6636 = vmatpush.bf16.msra.mxu0 %v5099
      %6637 = vmatpush.bf16.msra.mxu0 %v5098
      %6638 = vmatpush.bf16.msra.mxu0 %v5097
      %6639 = vmatpush.bf16.msra.mxu0 %v5096
      %6640 = vmatpush.bf16.msra.mxu0 %v5095
      %6641 = vmatpush.bf16.msra.mxu0 %v5094
      %6642 = vmatmul.bf16.gmra.mxu0 %v1894
      %v6643 = vpop.f32.mrf.mxu0
      %v6644 = vadd.f32 %v6631, %v6643
      %v6645 = vpop.f32.mrf.mxu0
      %6646 = vdwg.mxu0
      %6647 = vmatpush.bf16.msra.mxu0 %v5109
      %6648 = vmatpush.bf16.msra.mxu0 %v5108
      %6649 = vmatpush.bf16.msra.mxu0 %v5107
      %6650 = vmatpush.bf16.msra.mxu0 %v5106
      %6651 = vmatpush.bf16.msra.mxu0 %v5105
      %6652 = vmatpush.bf16.msra.mxu0 %v5104
      %6653 = vmatpush.bf16.msra.mxu0 %v5103
      %6654 = vmatpush.bf16.msra.mxu0 %v5102
      %6655 = vmatmul.bf16.gmra.mxu0 %v1895
      %v6656 = vpop.f32.mrf.mxu0
      %v6657 = vadd.f32 %v6644, %v6656
      %v6658 = vpop.f32.mrf.mxu0
      %6659 = vdwg.mxu0
      %6660 = vmatpush.bf16.msra.mxu0 %v5117
      %6661 = vmatpush.bf16.msra.mxu0 %v5116
      %6662 = vmatpush.bf16.msra.mxu0 %v5115
      %6663 = vmatpush.bf16.msra.mxu0 %v5114
      %6664 = vmatpush.bf16.msra.mxu0 %v5113
      %6665 = vmatpush.bf16.msra.mxu0 %v5112
      %6666 = vmatpush.bf16.msra.mxu0 %v5111
      %6667 = vmatpush.bf16.msra.mxu0 %v5110
      %6668 = vmatmul.bf16.gmra.mxu0 %v1896
      %v6669 = vpop.f32.mrf.mxu0
      %v6670 = vadd.f32 %v6657, %v6669
      %v6671 = vpop.f32.mrf.mxu0
      %6672 = vdwg.mxu0
      %6673 = vmatpush.bf16.msra.mxu0 %v5125
      %6674 = vmatpush.bf16.msra.mxu0 %v5124
      %6675 = vmatpush.bf16.msra.mxu0 %v5123
      %6676 = vmatpush.bf16.msra.mxu0 %v5122
      %6677 = vmatpush.bf16.msra.mxu0 %v5121
      %6678 = vmatpush.bf16.msra.mxu0 %v5120
      %6679 = vmatpush.bf16.msra.mxu0 %v5119
      %6680 = vmatpush.bf16.msra.mxu0 %v5118
      %6681 = vmatmul.bf16.gmra.mxu0 %v1897
      %v6682 = vpop.f32.mrf.mxu0
      %v6683 = vadd.f32 %v6670, %v6682
      %v6684 = vpop.f32.mrf.mxu0
      %6685 = vdwg.mxu0
      %6686 = vmatpush.bf16.msra.mxu0 %v5133
      %6687 = vmatpush.bf16.msra.mxu0 %v5132
      %6688 = vmatpush.bf16.msra.mxu0 %v5131
      %6689 = vmatpush.bf16.msra.mxu0 %v5130
      %6690 = vmatpush.bf16.msra.mxu0 %v5129
      %6691 = vmatpush.bf16.msra.mxu0 %v5128
      %6692 = vmatpush.bf16.msra.mxu0 %v5127
      %6693 = vmatpush.bf16.msra.mxu0 %v5126
      %6694 = vmatmul.bf16.gmra.mxu0 %v1898
      %v6695 = vpop.f32.mrf.mxu0
      %v6696 = vadd.f32 %v6683, %v6695
      %v6697 = vpop.f32.mrf.mxu0
      %6698 = vdwg.mxu0
      %6699 = vmatpush.bf16.msra.mxu0 %v5141
      %6700 = vmatpush.bf16.msra.mxu0 %v5140
      %6701 = vmatpush.bf16.msra.mxu0 %v5139
      %6702 = vmatpush.bf16.msra.mxu0 %v5138
      %6703 = vmatpush.bf16.msra.mxu0 %v5137
      %6704 = vmatpush.bf16.msra.mxu0 %v5136
      %6705 = vmatpush.bf16.msra.mxu0 %v5135
      %6706 = vmatpush.bf16.msra.mxu0 %v5134
      %6707 = vmatmul.bf16.gmra.mxu0 %v1899
      %v6708 = vpop.f32.mrf.mxu0
      %v6709 = vadd.f32 %v6696, %v6708
      %v6710 = vpop.f32.mrf.mxu0
      %6711 = vdwg.mxu0
      %6712 = vmatpush.bf16.msra.mxu0 %v5149
      %6713 = vmatpush.bf16.msra.mxu0 %v5148
      %6714 = vmatpush.bf16.msra.mxu0 %v5147
      %6715 = vmatpush.bf16.msra.mxu0 %v5146
      %6716 = vmatpush.bf16.msra.mxu0 %v5145
      %6717 = vmatpush.bf16.msra.mxu0 %v5144
      %6718 = vmatpush.bf16.msra.mxu0 %v5143
      %6719 = vmatpush.bf16.msra.mxu0 %v5142
      %6720 = vmatmul.bf16.gmra.mxu0 %v1900
      %v6721 = vpop.f32.mrf.mxu0
      %v6722 = vadd.f32 %v6709, %v6721
      %v6723 = vpop.f32.mrf.mxu0
      %6724 = vdwg.mxu0
      %6725 = vmatpush.bf16.msra.mxu0 %v5157
      %6726 = vmatpush.bf16.msra.mxu0 %v5156
      %6727 = vmatpush.bf16.msra.mxu0 %v5155
      %6728 = vmatpush.bf16.msra.mxu0 %v5154
      %6729 = vmatpush.bf16.msra.mxu0 %v5153
      %6730 = vmatpush.bf16.msra.mxu0 %v5152
      %6731 = vmatpush.bf16.msra.mxu0 %v5151
      %6732 = vmatpush.bf16.msra.mxu0 %v5150
      %6733 = vmatmul.bf16.gmra.mxu0 %v1901
      %v6734 = vpop.f32.mrf.mxu0
      %v6735 = vadd.f32 %v6722, %v6734
      %v6736 = vpop.f32.mrf.mxu0
      %6737 = vdwg.mxu0
      %6738 = vmatpush.bf16.msra.mxu0 %v5165
      %6739 = vmatpush.bf16.msra.mxu0 %v5164
      %6740 = vmatpush.bf16.msra.mxu0 %v5163
      %6741 = vmatpush.bf16.msra.mxu0 %v5162
      %6742 = vmatpush.bf16.msra.mxu0 %v5161
      %6743 = vmatpush.bf16.msra.mxu0 %v5160
      %6744 = vmatpush.bf16.msra.mxu0 %v5159
      %6745 = vmatpush.bf16.msra.mxu0 %v5158
      %6746 = vmatmul.bf16.gmra.mxu0 %v1902
      %v6747 = vpop.f32.mrf.mxu0
      %v6748 = vadd.f32 %v6735, %v6747
      %v6749 = vpop.f32.mrf.mxu0
      %6750 = vdwg.mxu0
      %6751 = vmatpush.bf16.msra.mxu0 %v5173
      %6752 = vmatpush.bf16.msra.mxu0 %v5172
      %6753 = vmatpush.bf16.msra.mxu0 %v5171
      %6754 = vmatpush.bf16.msra.mxu0 %v5170
      %6755 = vmatpush.bf16.msra.mxu0 %v5169
      %6756 = vmatpush.bf16.msra.mxu0 %v5168
      %6757 = vmatpush.bf16.msra.mxu0 %v5167
      %6758 = vmatpush.bf16.msra.mxu0 %v5166
      %6759 = vmatmul.bf16.gmra.mxu0 %v1903
      %v6760 = vpop.f32.mrf.mxu0
      %v6761 = vadd.f32 %v6748, %v6760
      %v6762 = vpop.f32.mrf.mxu0
      %6763 = vdwg.mxu0
      %6764 = vmatpush.bf16.msra.mxu0 %v5181
      %6765 = vmatpush.bf16.msra.mxu0 %v5180
      %6766 = vmatpush.bf16.msra.mxu0 %v5179
      %6767 = vmatpush.bf16.msra.mxu0 %v5178
      %6768 = vmatpush.bf16.msra.mxu0 %v5177
      %6769 = vmatpush.bf16.msra.mxu0 %v5176
      %6770 = vmatpush.bf16.msra.mxu0 %v5175
      %6771 = vmatpush.bf16.msra.mxu0 %v5174
      %6772 = vmatmul.bf16.gmra.mxu0 %v1904
      %v6773 = vpop.f32.mrf.mxu0
      %v6774 = vadd.f32 %v6761, %v6773
      %v6775 = vpop.f32.mrf.mxu0
      %6776 = vdwg.mxu0
      %6777 = vmatpush.bf16.msra.mxu0 %v5189
      %6778 = vmatpush.bf16.msra.mxu0 %v5188
      %6779 = vmatpush.bf16.msra.mxu0 %v5187
      %6780 = vmatpush.bf16.msra.mxu0 %v5186
      %6781 = vmatpush.bf16.msra.mxu0 %v5185
      %6782 = vmatpush.bf16.msra.mxu0 %v5184
      %6783 = vmatpush.bf16.msra.mxu0 %v5183
      %6784 = vmatpush.bf16.msra.mxu0 %v5182
      %6785 = vmatmul.bf16.gmra.mxu0 %v1905
      %v6786 = vpop.f32.mrf.mxu0
      %v6787 = vadd.f32 %v6774, %v6786
      %v6788 = vpop.f32.mrf.mxu0
      %6789 = vdwg.mxu0
      %6790 = vmatpush.bf16.msra.mxu0 %v5197
      %6791 = vmatpush.bf16.msra.mxu0 %v5196
      %6792 = vmatpush.bf16.msra.mxu0 %v5195
      %6793 = vmatpush.bf16.msra.mxu0 %v5194
      %6794 = vmatpush.bf16.msra.mxu0 %v5193
      %6795 = vmatpush.bf16.msra.mxu0 %v5192
      %6796 = vmatpush.bf16.msra.mxu0 %v5191
      %6797 = vmatpush.bf16.msra.mxu0 %v5190
      %6798 = vmatmul.bf16.gmra.mxu0 %v1906
      %v6799 = vpop.f32.mrf.mxu0
      %v6800 = vadd.f32 %v6787, %v6799
      %v6801 = vpop.f32.mrf.mxu0
      %6802 = vdwg.mxu0
      %6803 = vmatpush.bf16.msra.mxu0 %v5205
      %6804 = vmatpush.bf16.msra.mxu0 %v5204
      %6805 = vmatpush.bf16.msra.mxu0 %v5203
      %6806 = vmatpush.bf16.msra.mxu0 %v5202
      %6807 = vmatpush.bf16.msra.mxu0 %v5201
      %6808 = vmatpush.bf16.msra.mxu0 %v5200
      %6809 = vmatpush.bf16.msra.mxu0 %v5199
      %6810 = vmatpush.bf16.msra.mxu0 %v5198
      %6811 = vmatmul.bf16.gmra.mxu0 %v1907
      %v6812 = vpop.f32.mrf.mxu0
      %v6813 = vadd.f32 %v6800, %v6812
      %v6814 = vpop.f32.mrf.mxu0
      %6815 = vdwg.mxu0
      %6816 = vmatpush.bf16.msra.mxu0 %v5213
      %6817 = vmatpush.bf16.msra.mxu0 %v5212
      %6818 = vmatpush.bf16.msra.mxu0 %v5211
      %6819 = vmatpush.bf16.msra.mxu0 %v5210
      %6820 = vmatpush.bf16.msra.mxu0 %v5209
      %6821 = vmatpush.bf16.msra.mxu0 %v5208
      %6822 = vmatpush.bf16.msra.mxu0 %v5207
      %6823 = vmatpush.bf16.msra.mxu0 %v5206
      %6824 = vmatmul.bf16.gmra.mxu0 %v1908
      %v6825 = vpop.f32.mrf.mxu0
      %v6826 = vadd.f32 %v6813, %v6825
      %v6827 = vpop.f32.mrf.mxu0
      %6828 = vdwg.mxu0
      %6829 = vmatpush.bf16.msra.mxu0 %v5221
      %6830 = vmatpush.bf16.msra.mxu0 %v5220
      %6831 = vmatpush.bf16.msra.mxu0 %v5219
      %6832 = vmatpush.bf16.msra.mxu0 %v5218
      %6833 = vmatpush.bf16.msra.mxu0 %v5217
      %6834 = vmatpush.bf16.msra.mxu0 %v5216
      %6835 = vmatpush.bf16.msra.mxu0 %v5215
      %6836 = vmatpush.bf16.msra.mxu0 %v5214
      %6837 = vmatmul.bf16.gmra.mxu0 %v1909
      %v6838 = vpop.f32.mrf.mxu0
      %v6839 = vadd.f32 %v6826, %v6838
      %v6840 = vpop.f32.mrf.mxu0
      %6841 = vdwg.mxu0
      %6842 = vmatpush.bf16.msra.mxu0 %v5229
      %6843 = vmatpush.bf16.msra.mxu0 %v5228
      %6844 = vmatpush.bf16.msra.mxu0 %v5227
      %6845 = vmatpush.bf16.msra.mxu0 %v5226
      %6846 = vmatpush.bf16.msra.mxu0 %v5225
      %6847 = vmatpush.bf16.msra.mxu0 %v5224
      %6848 = vmatpush.bf16.msra.mxu0 %v5223
      %6849 = vmatpush.bf16.msra.mxu0 %v5222
      %6850 = vmatmul.bf16.gmra.mxu0 %v1910
      %v6851 = vpop.f32.mrf.mxu0
      %v6852 = vadd.f32 %v6839, %v6851
      %v6853 = vpop.f32.mrf.mxu0
      %6854 = vdwg.mxu0
      %6855 = vmatpush.bf16.msra.mxu0 %v5237
      %6856 = vmatpush.bf16.msra.mxu0 %v5236
      %6857 = vmatpush.bf16.msra.mxu0 %v5235
      %6858 = vmatpush.bf16.msra.mxu0 %v5234
      %6859 = vmatpush.bf16.msra.mxu0 %v5233
      %6860 = vmatpush.bf16.msra.mxu0 %v5232
      %6861 = vmatpush.bf16.msra.mxu0 %v5231
      %6862 = vmatpush.bf16.msra.mxu0 %v5230
      %6863 = vmatmul.bf16.gmra.mxu0 %v1911
      %v6864 = vpop.f32.mrf.mxu0
      %v6865 = vadd.f32 %v6852, %v6864
      %v6866 = vpop.f32.mrf.mxu0
      %6867 = vdwg.mxu0
      %6868 = vmatpush.bf16.msra.mxu0 %v5245
      %6869 = vmatpush.bf16.msra.mxu0 %v5244
      %6870 = vmatpush.bf16.msra.mxu0 %v5243
      %6871 = vmatpush.bf16.msra.mxu0 %v5242
      %6872 = vmatpush.bf16.msra.mxu0 %v5241
      %6873 = vmatpush.bf16.msra.mxu0 %v5240
      %6874 = vmatpush.bf16.msra.mxu0 %v5239
      %6875 = vmatpush.bf16.msra.mxu0 %v5238
      %6876 = vmatmul.bf16.gmra.mxu0 %v1912
      %v6877 = vpop.f32.mrf.mxu0
      %v6878 = vadd.f32 %v6865, %v6877
      %v6879 = vpop.f32.mrf.mxu0
      %6880 = vdwg.mxu0
      %6881 = vmatpush.bf16.msra.mxu0 %v5253
      %6882 = vmatpush.bf16.msra.mxu0 %v5252
      %6883 = vmatpush.bf16.msra.mxu0 %v5251
      %6884 = vmatpush.bf16.msra.mxu0 %v5250
      %6885 = vmatpush.bf16.msra.mxu0 %v5249
      %6886 = vmatpush.bf16.msra.mxu0 %v5248
      %6887 = vmatpush.bf16.msra.mxu0 %v5247
      %6888 = vmatpush.bf16.msra.mxu0 %v5246
      %6889 = vmatmul.bf16.gmra.mxu0 %v1913
      %v6890 = vpop.f32.mrf.mxu0
      %v6891 = vadd.f32 %v6878, %v6890
      %v6892 = vpop.f32.mrf.mxu0
      %6893 = vdwg.mxu0
      %6894 = vmatpush.bf16.msra.mxu0 %v5261
      %6895 = vmatpush.bf16.msra.mxu0 %v5260
      %6896 = vmatpush.bf16.msra.mxu0 %v5259
      %6897 = vmatpush.bf16.msra.mxu0 %v5258
      %6898 = vmatpush.bf16.msra.mxu0 %v5257
      %6899 = vmatpush.bf16.msra.mxu0 %v5256
      %6900 = vmatpush.bf16.msra.mxu0 %v5255
      %6901 = vmatpush.bf16.msra.mxu0 %v5254
      %6902 = vmatmul.bf16.gmra.mxu0 %v1914
      %v6903 = vpop.f32.mrf.mxu0
      %v6904 = vadd.f32 %v6891, %v6903
      %v6905 = vpop.f32.mrf.mxu0
      %6906 = vdwg.mxu0
      %6907 = vmatpush.bf16.msra.mxu0 %v5269
      %6908 = vmatpush.bf16.msra.mxu0 %v5268
      %6909 = vmatpush.bf16.msra.mxu0 %v5267
      %6910 = vmatpush.bf16.msra.mxu0 %v5266
      %6911 = vmatpush.bf16.msra.mxu0 %v5265
      %6912 = vmatpush.bf16.msra.mxu0 %v5264
      %6913 = vmatpush.bf16.msra.mxu0 %v5263
      %6914 = vmatpush.bf16.msra.mxu0 %v5262
      %6915 = vmatmul.bf16.gmra.mxu0 %v1915
      %v6916 = vpop.f32.mrf.mxu0
      %v6917 = vadd.f32 %v6904, %v6916
      %v6918 = vpop.f32.mrf.mxu0
      %6919 = vdwg.mxu0
      %6920 = vmatpush.bf16.msra.mxu0 %v5277
      %6921 = vmatpush.bf16.msra.mxu0 %v5276
      %6922 = vmatpush.bf16.msra.mxu0 %v5275
      %6923 = vmatpush.bf16.msra.mxu0 %v5274
      %6924 = vmatpush.bf16.msra.mxu0 %v5273
      %6925 = vmatpush.bf16.msra.mxu0 %v5272
      %6926 = vmatpush.bf16.msra.mxu0 %v5271
      %6927 = vmatpush.bf16.msra.mxu0 %v5270
      %6928 = vmatmul.bf16.gmra.mxu0 %v1916
      %v6929 = vpop.f32.mrf.mxu0
      %v6930 = vadd.f32 %v6917, %v6929
      %v6931 = vpop.f32.mrf.mxu0
      %6932 = vdwg.mxu0
      %6933 = vmatpush.bf16.msra.mxu0 %v5285
      %6934 = vmatpush.bf16.msra.mxu0 %v5284
      %6935 = vmatpush.bf16.msra.mxu0 %v5283
      %6936 = vmatpush.bf16.msra.mxu0 %v5282
      %6937 = vmatpush.bf16.msra.mxu0 %v5281
      %6938 = vmatpush.bf16.msra.mxu0 %v5280
      %6939 = vmatpush.bf16.msra.mxu0 %v5279
      %6940 = vmatpush.bf16.msra.mxu0 %v5278
      %6941 = vmatmul.bf16.gmra.mxu0 %v1917
      %v6942 = vpop.f32.mrf.mxu0
      %v6943 = vadd.f32 %v6930, %v6942
      %v6944 = vpop.f32.mrf.mxu0
      %6945 = vdwg.mxu0
      %6946 = vmatpush.bf16.msra.mxu0 %v5293
      %6947 = vmatpush.bf16.msra.mxu0 %v5292
      %6948 = vmatpush.bf16.msra.mxu0 %v5291
      %6949 = vmatpush.bf16.msra.mxu0 %v5290
      %6950 = vmatpush.bf16.msra.mxu0 %v5289
      %6951 = vmatpush.bf16.msra.mxu0 %v5288
      %6952 = vmatpush.bf16.msra.mxu0 %v5287
      %6953 = vmatpush.bf16.msra.mxu0 %v5286
      %6954 = vmatmul.bf16.gmra.mxu0 %v1918
      %v6955 = vpop.f32.mrf.mxu0
      %v6956 = vadd.f32 %v6943, %v6955
      %v6957 = vpop.f32.mrf.mxu0
      %6958 = vdwg.mxu0
      %6959 = vmatpush.bf16.msra.mxu0 %v5301
      %6960 = vmatpush.bf16.msra.mxu0 %v5300
      %6961 = vmatpush.bf16.msra.mxu0 %v5299
      %6962 = vmatpush.bf16.msra.mxu0 %v5298
      %6963 = vmatpush.bf16.msra.mxu0 %v5297
      %6964 = vmatpush.bf16.msra.mxu0 %v5296
      %6965 = vmatpush.bf16.msra.mxu0 %v5295
      %6966 = vmatpush.bf16.msra.mxu0 %v5294
      %6967 = vmatmul.bf16.gmra.mxu0 %v1919
      %v6968 = vpop.f32.mrf.mxu0
      %v6969 = vadd.f32 %v6956, %v6968
      %v6970 = vpop.f32.mrf.mxu0
      %6971 = vdwg.mxu0
      %6972 = vmatpush.bf16.msra.mxu0 %v5309
      %6973 = vmatpush.bf16.msra.mxu0 %v5308
      %6974 = vmatpush.bf16.msra.mxu0 %v5307
      %6975 = vmatpush.bf16.msra.mxu0 %v5306
      %6976 = vmatpush.bf16.msra.mxu0 %v5305
      %6977 = vmatpush.bf16.msra.mxu0 %v5304
      %6978 = vmatpush.bf16.msra.mxu0 %v5303
      %6979 = vmatpush.bf16.msra.mxu0 %v5302
      %6980 = vmatmul.bf16.gmra.mxu0 %v1920
      %v6981 = vpop.f32.mrf.mxu0
      %v6982 = vadd.f32 %v6969, %v6981
      %v6983 = vpop.f32.mrf.mxu0
      %6984 = vdwg.mxu0
      %6985 = vmatpush.bf16.msra.mxu0 %v5317
      %6986 = vmatpush.bf16.msra.mxu0 %v5316
      %6987 = vmatpush.bf16.msra.mxu0 %v5315
      %6988 = vmatpush.bf16.msra.mxu0 %v5314
      %6989 = vmatpush.bf16.msra.mxu0 %v5313
      %6990 = vmatpush.bf16.msra.mxu0 %v5312
      %6991 = vmatpush.bf16.msra.mxu0 %v5311
      %6992 = vmatpush.bf16.msra.mxu0 %v5310
      %6993 = vmatmul.bf16.gmra.mxu0 %v1921
      %v6994 = vpop.f32.mrf.mxu0
      %v6995 = vadd.f32 %v6982, %v6994
      %v6996 = vpop.f32.mrf.mxu0
      %6997 = vdwg.mxu0
      %6998 = vmatpush.bf16.msra.mxu0 %v5325
      %6999 = vmatpush.bf16.msra.mxu0 %v5324
      %7000 = vmatpush.bf16.msra.mxu0 %v5323
      %7001 = vmatpush.bf16.msra.mxu0 %v5322
      %7002 = vmatpush.bf16.msra.mxu0 %v5321
      %7003 = vmatpush.bf16.msra.mxu0 %v5320
      %7004 = vmatpush.bf16.msra.mxu0 %v5319
      %7005 = vmatpush.bf16.msra.mxu0 %v5318
      %7006 = vmatmul.bf16.gmra.mxu0 %v1922
      %v7007 = vpop.f32.mrf.mxu0
      %v7008 = vadd.f32 %v6995, %v7007
      %v7009 = vpop.f32.mrf.mxu0
      %7010 = vdwg.mxu0
      %7011 = vmatpush.bf16.msra.mxu0 %v5333
      %7012 = vmatpush.bf16.msra.mxu0 %v5332
      %7013 = vmatpush.bf16.msra.mxu0 %v5331
      %7014 = vmatpush.bf16.msra.mxu0 %v5330
      %7015 = vmatpush.bf16.msra.mxu0 %v5329
      %7016 = vmatpush.bf16.msra.mxu0 %v5328
      %7017 = vmatpush.bf16.msra.mxu0 %v5327
      %7018 = vmatpush.bf16.msra.mxu0 %v5326
      %7019 = vmatmul.bf16.gmra.mxu0 %v1923
      %v7020 = vpop.f32.mrf.mxu0
      %v7021 = vadd.f32 %v7008, %v7020
      %v7022 = vpop.f32.mrf.mxu0
      %7023 = vdwg.mxu0
      %7024 = vmatpush.bf16.msra.mxu0 %v5341
      %7025 = vmatpush.bf16.msra.mxu0 %v5340
      %7026 = vmatpush.bf16.msra.mxu0 %v5339
      %7027 = vmatpush.bf16.msra.mxu0 %v5338
      %7028 = vmatpush.bf16.msra.mxu0 %v5337
      %7029 = vmatpush.bf16.msra.mxu0 %v5336
      %7030 = vmatpush.bf16.msra.mxu0 %v5335
      %7031 = vmatpush.bf16.msra.mxu0 %v5334
      %7032 = vmatmul.bf16.gmra.mxu0 %v1924
      %v7033 = vpop.f32.mrf.mxu0
      %v7034 = vadd.f32 %v7021, %v7033
      %v7035 = vpop.f32.mrf.mxu0
      %7036 = vdwg.mxu0
      %7037 = vmatpush.bf16.msra.mxu0 %v5349
      %7038 = vmatpush.bf16.msra.mxu0 %v5348
      %7039 = vmatpush.bf16.msra.mxu0 %v5347
      %7040 = vmatpush.bf16.msra.mxu0 %v5346
      %7041 = vmatpush.bf16.msra.mxu0 %v5345
      %7042 = vmatpush.bf16.msra.mxu0 %v5344
      %7043 = vmatpush.bf16.msra.mxu0 %v5343
      %7044 = vmatpush.bf16.msra.mxu0 %v5342
      %7045 = vmatmul.bf16.gmra.mxu0 %v1925
      %v7046 = vpop.f32.mrf.mxu0
      %v7047 = vadd.f32 %v7034, %v7046
      %v7048 = vpop.f32.mrf.mxu0
      %7049 = vdwg.mxu0
      %7050 = vmatpush.bf16.msra.mxu0 %v5357
      %7051 = vmatpush.bf16.msra.mxu0 %v5356
      %7052 = vmatpush.bf16.msra.mxu0 %v5355
      %7053 = vmatpush.bf16.msra.mxu0 %v5354
      %7054 = vmatpush.bf16.msra.mxu0 %v5353
      %7055 = vmatpush.bf16.msra.mxu0 %v5352
      %7056 = vmatpush.bf16.msra.mxu0 %v5351
      %7057 = vmatpush.bf16.msra.mxu0 %v5350
      %7058 = vmatmul.bf16.gmra.mxu0 %v1926
      %v7059 = vpop.f32.mrf.mxu0
      %v7060 = vadd.f32 %v7047, %v7059
      %v7061 = vpop.f32.mrf.mxu0
      %7062 = vdwg.mxu0
      %7063 = vmatpush.bf16.msra.mxu0 %v5365
      %7064 = vmatpush.bf16.msra.mxu0 %v5364
      %7065 = vmatpush.bf16.msra.mxu0 %v5363
      %7066 = vmatpush.bf16.msra.mxu0 %v5362
      %7067 = vmatpush.bf16.msra.mxu0 %v5361
      %7068 = vmatpush.bf16.msra.mxu0 %v5360
      %7069 = vmatpush.bf16.msra.mxu0 %v5359
      %7070 = vmatpush.bf16.msra.mxu0 %v5358
      %7071 = vmatmul.bf16.gmra.mxu0 %v1927
      %v7072 = vpop.f32.mrf.mxu0
      %v7073 = vadd.f32 %v7060, %v7072
      %v7074 = vpop.f32.mrf.mxu0
      %7075 = vdwg.mxu0
      %7076 = vmatpush.bf16.msra.mxu0 %v5373
      %7077 = vmatpush.bf16.msra.mxu0 %v5372
      %7078 = vmatpush.bf16.msra.mxu0 %v5371
      %7079 = vmatpush.bf16.msra.mxu0 %v5370
      %7080 = vmatpush.bf16.msra.mxu0 %v5369
      %7081 = vmatpush.bf16.msra.mxu0 %v5368
      %7082 = vmatpush.bf16.msra.mxu0 %v5367
      %7083 = vmatpush.bf16.msra.mxu0 %v5366
      %7084 = vmatmul.bf16.gmra.mxu0 %v1928
      %v7085 = vpop.f32.mrf.mxu0
      %v7086 = vadd.f32 %v7073, %v7085
      %v7087 = vpop.f32.mrf.mxu0
      %7088 = vdwg.mxu0
      %7089 = vmatpush.bf16.msra.mxu0 %v5381
      %7090 = vmatpush.bf16.msra.mxu0 %v5380
      %7091 = vmatpush.bf16.msra.mxu0 %v5379
      %7092 = vmatpush.bf16.msra.mxu0 %v5378
      %7093 = vmatpush.bf16.msra.mxu0 %v5377
      %7094 = vmatpush.bf16.msra.mxu0 %v5376
      %7095 = vmatpush.bf16.msra.mxu0 %v5375
      %7096 = vmatpush.bf16.msra.mxu0 %v5374
      %7097 = vmatmul.bf16.gmra.mxu0 %v1929
      %v7098 = vpop.f32.mrf.mxu0
      %v7099 = vadd.f32 %v7086, %v7098
      %v7100 = vpop.f32.mrf.mxu0
      %7101 = vdwg.mxu0
      %7102 = vmatpush.bf16.msra.mxu0 %v5389
      %7103 = vmatpush.bf16.msra.mxu0 %v5388
      %7104 = vmatpush.bf16.msra.mxu0 %v5387
      %7105 = vmatpush.bf16.msra.mxu0 %v5386
      %7106 = vmatpush.bf16.msra.mxu0 %v5385
      %7107 = vmatpush.bf16.msra.mxu0 %v5384
      %7108 = vmatpush.bf16.msra.mxu0 %v5383
      %7109 = vmatpush.bf16.msra.mxu0 %v5382
      %7110 = vmatmul.bf16.gmra.mxu0 %v1930
      %v7111 = vpop.f32.mrf.mxu0
      %v7112 = vadd.f32 %v7099, %v7111
      %v7113 = vpop.f32.mrf.mxu0
      %7114 = vdwg.mxu0
      %7115 = vmatpush.bf16.msra.mxu0 %v5397
      %7116 = vmatpush.bf16.msra.mxu0 %v5396
      %7117 = vmatpush.bf16.msra.mxu0 %v5395
      %7118 = vmatpush.bf16.msra.mxu0 %v5394
      %7119 = vmatpush.bf16.msra.mxu0 %v5393
      %7120 = vmatpush.bf16.msra.mxu0 %v5392
      %7121 = vmatpush.bf16.msra.mxu0 %v5391
      %7122 = vmatpush.bf16.msra.mxu0 %v5390
      %7123 = vmatmul.bf16.gmra.mxu0 %v1931
      %v7124 = vpop.f32.mrf.mxu0
      %v7125 = vadd.f32 %v7112, %v7124
      %v7126 = vpop.f32.mrf.mxu0
      %7127 = vdwg.mxu0
      %7128 = vmatpush.bf16.msra.mxu0 %v5405
      %7129 = vmatpush.bf16.msra.mxu0 %v5404
      %7130 = vmatpush.bf16.msra.mxu0 %v5403
      %7131 = vmatpush.bf16.msra.mxu0 %v5402
      %7132 = vmatpush.bf16.msra.mxu0 %v5401
      %7133 = vmatpush.bf16.msra.mxu0 %v5400
      %7134 = vmatpush.bf16.msra.mxu0 %v5399
      %7135 = vmatpush.bf16.msra.mxu0 %v5398
      %7136 = vmatmul.bf16.gmra.mxu0 %v1932
      %v7137 = vpop.f32.mrf.mxu0
      %v7138 = vadd.f32 %v7125, %v7137
      %v7139 = vpop.f32.mrf.mxu0
      %7140 = vdwg.mxu0
      %7141 = vmatpush.bf16.msra.mxu0 %v5413
      %7142 = vmatpush.bf16.msra.mxu0 %v5412
      %7143 = vmatpush.bf16.msra.mxu0 %v5411
      %7144 = vmatpush.bf16.msra.mxu0 %v5410
      %7145 = vmatpush.bf16.msra.mxu0 %v5409
      %7146 = vmatpush.bf16.msra.mxu0 %v5408
      %7147 = vmatpush.bf16.msra.mxu0 %v5407
      %7148 = vmatpush.bf16.msra.mxu0 %v5406
      %7149 = vmatmul.bf16.gmra.mxu0 %v1933
      %v7150 = vpop.f32.mrf.mxu0
      %v7151 = vadd.f32 %v7138, %v7150
      %v7152 = vpop.f32.mrf.mxu0
      %7153 = vdwg.mxu0
      %7154 = vmatpush.bf16.msra.mxu0 %v5421
      %7155 = vmatpush.bf16.msra.mxu0 %v5420
      %7156 = vmatpush.bf16.msra.mxu0 %v5419
      %7157 = vmatpush.bf16.msra.mxu0 %v5418
      %7158 = vmatpush.bf16.msra.mxu0 %v5417
      %7159 = vmatpush.bf16.msra.mxu0 %v5416
      %7160 = vmatpush.bf16.msra.mxu0 %v5415
      %7161 = vmatpush.bf16.msra.mxu0 %v5414
      %7162 = vmatmul.bf16.gmra.mxu0 %v1934
      %v7163 = vpop.f32.mrf.mxu0
      %v7164 = vadd.f32 %v7151, %v7163
      %v7165 = vpop.f32.mrf.mxu0
      %7166 = vdwg.mxu0
      %7167 = vmatpush.bf16.msra.mxu0 %v5429
      %7168 = vmatpush.bf16.msra.mxu0 %v5428
      %7169 = vmatpush.bf16.msra.mxu0 %v5427
      %7170 = vmatpush.bf16.msra.mxu0 %v5426
      %7171 = vmatpush.bf16.msra.mxu0 %v5425
      %7172 = vmatpush.bf16.msra.mxu0 %v5424
      %7173 = vmatpush.bf16.msra.mxu0 %v5423
      %7174 = vmatpush.bf16.msra.mxu0 %v5422
      %7175 = vmatmul.bf16.gmra.mxu0 %v1935
      %v7176 = vpop.f32.mrf.mxu0
      %v7177 = vadd.f32 %v7164, %v7176
      %v7178 = vpop.f32.mrf.mxu0
      %7179 = vdwg.mxu0
      %7180 = vmatpush.bf16.msra.mxu0 %v5437
      %7181 = vmatpush.bf16.msra.mxu0 %v5436
      %7182 = vmatpush.bf16.msra.mxu0 %v5435
      %7183 = vmatpush.bf16.msra.mxu0 %v5434
      %7184 = vmatpush.bf16.msra.mxu0 %v5433
      %7185 = vmatpush.bf16.msra.mxu0 %v5432
      %7186 = vmatpush.bf16.msra.mxu0 %v5431
      %7187 = vmatpush.bf16.msra.mxu0 %v5430
      %7188 = vmatmul.bf16.gmra.mxu0 %v1936
      %v7189 = vpop.f32.mrf.mxu0
      %v7190 = vadd.f32 %v7177, %v7189
      %v7191 = vpop.f32.mrf.mxu0
      %7192 = vdwg.mxu0
      %7193 = vmatpush.bf16.msra.mxu0 %v5445
      %7194 = vmatpush.bf16.msra.mxu0 %v5444
      %7195 = vmatpush.bf16.msra.mxu0 %v5443
      %7196 = vmatpush.bf16.msra.mxu0 %v5442
      %7197 = vmatpush.bf16.msra.mxu0 %v5441
      %7198 = vmatpush.bf16.msra.mxu0 %v5440
      %7199 = vmatpush.bf16.msra.mxu0 %v5439
      %7200 = vmatpush.bf16.msra.mxu0 %v5438
      %7201 = vmatmul.bf16.gmra.mxu0 %v1937
      %v7202 = vpop.f32.mrf.mxu0
      %v7203 = vadd.f32 %v7190, %v7202
      %v7204 = vpop.f32.mrf.mxu0
      %7205 = vdwg.mxu0
      %7206 = vmatpush.bf16.msra.mxu0 %v5453
      %7207 = vmatpush.bf16.msra.mxu0 %v5452
      %7208 = vmatpush.bf16.msra.mxu0 %v5451
      %7209 = vmatpush.bf16.msra.mxu0 %v5450
      %7210 = vmatpush.bf16.msra.mxu0 %v5449
      %7211 = vmatpush.bf16.msra.mxu0 %v5448
      %7212 = vmatpush.bf16.msra.mxu0 %v5447
      %7213 = vmatpush.bf16.msra.mxu0 %v5446
      %7214 = vmatmul.bf16.gmra.mxu0 %v1938
      %v7215 = vpop.f32.mrf.mxu0
      %v7216 = vadd.f32 %v7203, %v7215
      %v7217 = vpop.f32.mrf.mxu0
      %7218 = vdwg.mxu0
      %7219 = vmatpush.bf16.msra.mxu0 %v5461
      %7220 = vmatpush.bf16.msra.mxu0 %v5460
      %7221 = vmatpush.bf16.msra.mxu0 %v5459
      %7222 = vmatpush.bf16.msra.mxu0 %v5458
      %7223 = vmatpush.bf16.msra.mxu0 %v5457
      %7224 = vmatpush.bf16.msra.mxu0 %v5456
      %7225 = vmatpush.bf16.msra.mxu0 %v5455
      %7226 = vmatpush.bf16.msra.mxu0 %v5454
      %7227 = vmatmul.bf16.gmra.mxu0 %v1939
      %v7228 = vpop.f32.mrf.mxu0
      %v7229 = vadd.f32 %v7216, %v7228
      %v7230 = vpop.f32.mrf.mxu0
      %7231 = vdwg.mxu0
      %7232 = vmatpush.bf16.msra.mxu0 %v5469
      %7233 = vmatpush.bf16.msra.mxu0 %v5468
      %7234 = vmatpush.bf16.msra.mxu0 %v5467
      %7235 = vmatpush.bf16.msra.mxu0 %v5466
      %7236 = vmatpush.bf16.msra.mxu0 %v5465
      %7237 = vmatpush.bf16.msra.mxu0 %v5464
      %7238 = vmatpush.bf16.msra.mxu0 %v5463
      %7239 = vmatpush.bf16.msra.mxu0 %v5462
      %7240 = vmatmul.bf16.gmra.mxu0 %v1940
      %v7241 = vpop.f32.mrf.mxu0
      %v7242 = vadd.f32 %v7229, %v7241
      %v7243 = vpop.f32.mrf.mxu0
      %7244 = vdwg.mxu0
      %7245 = vmatpush.bf16.msra.mxu0 %v5477
      %7246 = vmatpush.bf16.msra.mxu0 %v5476
      %7247 = vmatpush.bf16.msra.mxu0 %v5475
      %7248 = vmatpush.bf16.msra.mxu0 %v5474
      %7249 = vmatpush.bf16.msra.mxu0 %v5473
      %7250 = vmatpush.bf16.msra.mxu0 %v5472
      %7251 = vmatpush.bf16.msra.mxu0 %v5471
      %7252 = vmatpush.bf16.msra.mxu0 %v5470
      %7253 = vmatmul.bf16.gmra.mxu0 %v1941
      %v7254 = vpop.f32.mrf.mxu0
      %v7255 = vadd.f32 %v7242, %v7254
      %v7256 = vpop.f32.mrf.mxu0
      %7257 = vdwg.mxu0
      %7258 = vmatpush.bf16.msra.mxu0 %v5485
      %7259 = vmatpush.bf16.msra.mxu0 %v5484
      %7260 = vmatpush.bf16.msra.mxu0 %v5483
      %7261 = vmatpush.bf16.msra.mxu0 %v5482
      %7262 = vmatpush.bf16.msra.mxu0 %v5481
      %7263 = vmatpush.bf16.msra.mxu0 %v5480
      %7264 = vmatpush.bf16.msra.mxu0 %v5479
      %7265 = vmatpush.bf16.msra.mxu0 %v5478
      %7266 = vmatmul.bf16.gmra.mxu0 %v1942
      %v7267 = vpop.f32.mrf.mxu0
      %v7268 = vadd.f32 %v7255, %v7267
      %v7269 = vpop.f32.mrf.mxu0
      %7270 = vdwg.mxu0
      %7271 = vmatpush.bf16.msra.mxu0 %v5493
      %7272 = vmatpush.bf16.msra.mxu0 %v5492
      %7273 = vmatpush.bf16.msra.mxu0 %v5491
      %7274 = vmatpush.bf16.msra.mxu0 %v5490
      %7275 = vmatpush.bf16.msra.mxu0 %v5489
      %7276 = vmatpush.bf16.msra.mxu0 %v5488
      %7277 = vmatpush.bf16.msra.mxu0 %v5487
      %7278 = vmatpush.bf16.msra.mxu0 %v5486
      %7279 = vmatmul.bf16.gmra.mxu0 %v1943
      %v7280 = vpop.f32.mrf.mxu0
      %v7281 = vadd.f32 %v7268, %v7280
      %v7282 = vpop.f32.mrf.mxu0
      %7283 = vdwg.mxu0
      %7284 = vmatpush.bf16.msra.mxu0 %v5501
      %7285 = vmatpush.bf16.msra.mxu0 %v5500
      %7286 = vmatpush.bf16.msra.mxu0 %v5499
      %7287 = vmatpush.bf16.msra.mxu0 %v5498
      %7288 = vmatpush.bf16.msra.mxu0 %v5497
      %7289 = vmatpush.bf16.msra.mxu0 %v5496
      %7290 = vmatpush.bf16.msra.mxu0 %v5495
      %7291 = vmatpush.bf16.msra.mxu0 %v5494
      %7292 = vmatmul.bf16.gmra.mxu0 %v1944
      %v7293 = vpop.f32.mrf.mxu0
      %v7294 = vadd.f32 %v7281, %v7293
      %v7295 = vpop.f32.mrf.mxu0
      %7296 = vdwg.mxu0
      %7297 = vmatpush.bf16.msra.mxu0 %v5509
      %7298 = vmatpush.bf16.msra.mxu0 %v5508
      %7299 = vmatpush.bf16.msra.mxu0 %v5507
      %7300 = vmatpush.bf16.msra.mxu0 %v5506
      %7301 = vmatpush.bf16.msra.mxu0 %v5505
      %7302 = vmatpush.bf16.msra.mxu0 %v5504
      %7303 = vmatpush.bf16.msra.mxu0 %v5503
      %7304 = vmatpush.bf16.msra.mxu0 %v5502
      %7305 = vmatmul.bf16.gmra.mxu0 %v1945
      %v7306 = vpop.f32.mrf.mxu0
      %v7307 = vadd.f32 %v7294, %v7306
      %v7308 = vpop.f32.mrf.mxu0
      %7309 = vdwg.mxu0
      %7310 = vmatpush.bf16.msra.mxu0 %v5517
      %7311 = vmatpush.bf16.msra.mxu0 %v5516
      %7312 = vmatpush.bf16.msra.mxu0 %v5515
      %7313 = vmatpush.bf16.msra.mxu0 %v5514
      %7314 = vmatpush.bf16.msra.mxu0 %v5513
      %7315 = vmatpush.bf16.msra.mxu0 %v5512
      %7316 = vmatpush.bf16.msra.mxu0 %v5511
      %7317 = vmatpush.bf16.msra.mxu0 %v5510
      %7318 = vmatmul.bf16.gmra.mxu0 %v1946
      %v7319 = vpop.f32.mrf.mxu0
      %v7320 = vadd.f32 %v7307, %v7319
      %v7321 = vpop.f32.mrf.mxu0
      %7322 = vdwg.mxu0
      %7323 = vmatpush.bf16.msra.mxu0 %v5525
      %7324 = vmatpush.bf16.msra.mxu0 %v5524
      %7325 = vmatpush.bf16.msra.mxu0 %v5523
      %7326 = vmatpush.bf16.msra.mxu0 %v5522
      %7327 = vmatpush.bf16.msra.mxu0 %v5521
      %7328 = vmatpush.bf16.msra.mxu0 %v5520
      %7329 = vmatpush.bf16.msra.mxu0 %v5519
      %7330 = vmatpush.bf16.msra.mxu0 %v5518
      %7331 = vmatmul.bf16.gmra.mxu0 %v1947
      %v7332 = vpop.f32.mrf.mxu0
      %v7333 = vadd.f32 %v7320, %v7332
      %v7334 = vpop.f32.mrf.mxu0
      %7335 = vdwg.mxu0
      %7336 = vmatpush.bf16.msra.mxu0 %v5533
      %7337 = vmatpush.bf16.msra.mxu0 %v5532
      %7338 = vmatpush.bf16.msra.mxu0 %v5531
      %7339 = vmatpush.bf16.msra.mxu0 %v5530
      %7340 = vmatpush.bf16.msra.mxu0 %v5529
      %7341 = vmatpush.bf16.msra.mxu0 %v5528
      %7342 = vmatpush.bf16.msra.mxu0 %v5527
      %7343 = vmatpush.bf16.msra.mxu0 %v5526
      %7344 = vmatmul.bf16.gmra.mxu0 %v1948
      %v7345 = vpop.f32.mrf.mxu0
      %v7346 = vadd.f32 %v7333, %v7345
      %v7347 = vpop.f32.mrf.mxu0
      %7348 = vdwg.mxu0
      %7349 = vmatpush.bf16.msra.mxu0 %v5541
      %7350 = vmatpush.bf16.msra.mxu0 %v5540
      %7351 = vmatpush.bf16.msra.mxu0 %v5539
      %7352 = vmatpush.bf16.msra.mxu0 %v5538
      %7353 = vmatpush.bf16.msra.mxu0 %v5537
      %7354 = vmatpush.bf16.msra.mxu0 %v5536
      %7355 = vmatpush.bf16.msra.mxu0 %v5535
      %7356 = vmatpush.bf16.msra.mxu0 %v5534
      %7357 = vmatmul.bf16.gmra.mxu0 %v1949
      %v7358 = vpop.f32.mrf.mxu0
      %v7359 = vadd.f32 %v7346, %v7358
      %v7360 = vpop.f32.mrf.mxu0
      %7361 = vdwg.mxu0
      %7362 = vmatpush.bf16.msra.mxu0 %v5549
      %7363 = vmatpush.bf16.msra.mxu0 %v5548
      %7364 = vmatpush.bf16.msra.mxu0 %v5547
      %7365 = vmatpush.bf16.msra.mxu0 %v5546
      %7366 = vmatpush.bf16.msra.mxu0 %v5545
      %7367 = vmatpush.bf16.msra.mxu0 %v5544
      %7368 = vmatpush.bf16.msra.mxu0 %v5543
      %7369 = vmatpush.bf16.msra.mxu0 %v5542
      %7370 = vmatmul.bf16.gmra.mxu0 %v1950
      %v7371 = vpop.f32.mrf.mxu0
      %v7372 = vadd.f32 %v7359, %v7371
      %v7373 = vpop.f32.mrf.mxu0
      %7374 = vdwg.mxu0
      %7375 = vmatpush.bf16.msra.mxu0 %v5557
      %7376 = vmatpush.bf16.msra.mxu0 %v5556
      %7377 = vmatpush.bf16.msra.mxu0 %v5555
      %7378 = vmatpush.bf16.msra.mxu0 %v5554
      %7379 = vmatpush.bf16.msra.mxu0 %v5553
      %7380 = vmatpush.bf16.msra.mxu0 %v5552
      %7381 = vmatpush.bf16.msra.mxu0 %v5551
      %7382 = vmatpush.bf16.msra.mxu0 %v5550
      %7383 = vmatmul.bf16.gmra.mxu0 %v1951
      %v7384 = vpop.f32.mrf.mxu0
      %v7385 = vadd.f32 %v7372, %v7384
      %v7386 = vpop.f32.mrf.mxu0
      %7387 = vdwg.mxu0
      %7388 = vmatpush.bf16.msra.mxu0 %v5565
      %7389 = vmatpush.bf16.msra.mxu0 %v5564
      %7390 = vmatpush.bf16.msra.mxu0 %v5563
      %7391 = vmatpush.bf16.msra.mxu0 %v5562
      %7392 = vmatpush.bf16.msra.mxu0 %v5561
      %7393 = vmatpush.bf16.msra.mxu0 %v5560
      %7394 = vmatpush.bf16.msra.mxu0 %v5559
      %7395 = vmatpush.bf16.msra.mxu0 %v5558
      %7396 = vmatmul.bf16.gmra.mxu0 %v1952
      %v7397 = vpop.f32.mrf.mxu0
      %v7398 = vadd.f32 %v7385, %v7397
      %v7399 = vpop.f32.mrf.mxu0
      %7400 = vdwg.mxu0
      %7401 = vmatpush.bf16.msra.mxu0 %v5573
      %7402 = vmatpush.bf16.msra.mxu0 %v5572
      %7403 = vmatpush.bf16.msra.mxu0 %v5571
      %7404 = vmatpush.bf16.msra.mxu0 %v5570
      %7405 = vmatpush.bf16.msra.mxu0 %v5569
      %7406 = vmatpush.bf16.msra.mxu0 %v5568
      %7407 = vmatpush.bf16.msra.mxu0 %v5567
      %7408 = vmatpush.bf16.msra.mxu0 %v5566
      %7409 = vmatmul.bf16.gmra.mxu0 %v1953
      %v7410 = vpop.f32.mrf.mxu0
      %v7411 = vadd.f32 %v7398, %v7410
      %v7412 = vpop.f32.mrf.mxu0
      %7413 = vdwg.mxu0
      %7414 = vmatpush.bf16.msra.mxu0 %v5581
      %7415 = vmatpush.bf16.msra.mxu0 %v5580
      %7416 = vmatpush.bf16.msra.mxu0 %v5579
      %7417 = vmatpush.bf16.msra.mxu0 %v5578
      %7418 = vmatpush.bf16.msra.mxu0 %v5577
      %7419 = vmatpush.bf16.msra.mxu0 %v5576
      %7420 = vmatpush.bf16.msra.mxu0 %v5575
      %7421 = vmatpush.bf16.msra.mxu0 %v5574
      %7422 = vmatmul.bf16.gmra.mxu0 %v1954
      %v7423 = vpop.f32.mrf.mxu0
      %v7424 = vadd.f32 %v7411, %v7423
      %v7425 = vpop.f32.mrf.mxu0
      %7426 = vdwg.mxu0
      %7427 = vmatpush.bf16.msra.mxu0 %v5589
      %7428 = vmatpush.bf16.msra.mxu0 %v5588
      %7429 = vmatpush.bf16.msra.mxu0 %v5587
      %7430 = vmatpush.bf16.msra.mxu0 %v5586
      %7431 = vmatpush.bf16.msra.mxu0 %v5585
      %7432 = vmatpush.bf16.msra.mxu0 %v5584
      %7433 = vmatpush.bf16.msra.mxu0 %v5583
      %7434 = vmatpush.bf16.msra.mxu0 %v5582
      %7435 = vmatmul.bf16.gmra.mxu0 %v1955
      %v7436 = vpop.f32.mrf.mxu0
      %v7437 = vadd.f32 %v7424, %v7436
      %v7438 = vpop.f32.mrf.mxu0
      %7439 = vdwg.mxu0
      %7440 = vmatpush.bf16.msra.mxu0 %v5597
      %7441 = vmatpush.bf16.msra.mxu0 %v5596
      %7442 = vmatpush.bf16.msra.mxu0 %v5595
      %7443 = vmatpush.bf16.msra.mxu0 %v5594
      %7444 = vmatpush.bf16.msra.mxu0 %v5593
      %7445 = vmatpush.bf16.msra.mxu0 %v5592
      %7446 = vmatpush.bf16.msra.mxu0 %v5591
      %7447 = vmatpush.bf16.msra.mxu0 %v5590
      %7448 = vmatmul.bf16.gmra.mxu0 %v1956
      %v7449 = vpop.f32.mrf.mxu0
      %v7450 = vadd.f32 %v7437, %v7449
      %v7451 = vpop.f32.mrf.mxu0
      %7452 = vdwg.mxu0
      %7453 = vmatpush.bf16.msra.mxu0 %v5605
      %7454 = vmatpush.bf16.msra.mxu0 %v5604
      %7455 = vmatpush.bf16.msra.mxu0 %v5603
      %7456 = vmatpush.bf16.msra.mxu0 %v5602
      %7457 = vmatpush.bf16.msra.mxu0 %v5601
      %7458 = vmatpush.bf16.msra.mxu0 %v5600
      %7459 = vmatpush.bf16.msra.mxu0 %v5599
      %7460 = vmatpush.bf16.msra.mxu0 %v5598
      %7461 = vmatmul.bf16.gmra.mxu0 %v1957
      %v7462 = vpop.f32.mrf.mxu0
      %v7463 = vadd.f32 %v7450, %v7462
      %v7464 = vpop.f32.mrf.mxu0
      %7465 = vdwg.mxu0
      %7466 = vmatpush.bf16.msra.mxu0 %v5613
      %7467 = vmatpush.bf16.msra.mxu0 %v5612
      %7468 = vmatpush.bf16.msra.mxu0 %v5611
      %7469 = vmatpush.bf16.msra.mxu0 %v5610
      %7470 = vmatpush.bf16.msra.mxu0 %v5609
      %7471 = vmatpush.bf16.msra.mxu0 %v5608
      %7472 = vmatpush.bf16.msra.mxu0 %v5607
      %7473 = vmatpush.bf16.msra.mxu0 %v5606
      %7474 = vmatmul.bf16.gmra.mxu0 %v1958
      %v7475 = vpop.f32.mrf.mxu0
      %v7476 = vadd.f32 %v7463, %v7475
      %v7477 = vpop.f32.mrf.mxu0
      %7478 = vdwg.mxu0
      %7479 = vmatpush.bf16.msra.mxu0 %v5621
      %7480 = vmatpush.bf16.msra.mxu0 %v5620
      %7481 = vmatpush.bf16.msra.mxu0 %v5619
      %7482 = vmatpush.bf16.msra.mxu0 %v5618
      %7483 = vmatpush.bf16.msra.mxu0 %v5617
      %7484 = vmatpush.bf16.msra.mxu0 %v5616
      %7485 = vmatpush.bf16.msra.mxu0 %v5615
      %7486 = vmatpush.bf16.msra.mxu0 %v5614
      %7487 = vmatmul.bf16.gmra.mxu0 %v1959
      %v7488 = vpop.f32.mrf.mxu0
      %v7489 = vadd.f32 %v7476, %v7488
      %v7490 = vpop.f32.mrf.mxu0
      %7491 = vdwg.mxu0
      %7492 = vmatpush.bf16.msra.mxu0 %v5629
      %7493 = vmatpush.bf16.msra.mxu0 %v5628
      %7494 = vmatpush.bf16.msra.mxu0 %v5627
      %7495 = vmatpush.bf16.msra.mxu0 %v5626
      %7496 = vmatpush.bf16.msra.mxu0 %v5625
      %7497 = vmatpush.bf16.msra.mxu0 %v5624
      %7498 = vmatpush.bf16.msra.mxu0 %v5623
      %7499 = vmatpush.bf16.msra.mxu0 %v5622
      %7500 = vmatmul.bf16.gmra.mxu0 %v1960
      %v7501 = vpop.f32.mrf.mxu0
      %v7502 = vadd.f32 %v7489, %v7501
      %v7503 = vpop.f32.mrf.mxu0
      %7504 = vdwg.mxu0
      %7505 = vmatpush.bf16.msra.mxu0 %v5637
      %7506 = vmatpush.bf16.msra.mxu0 %v5636
      %7507 = vmatpush.bf16.msra.mxu0 %v5635
      %7508 = vmatpush.bf16.msra.mxu0 %v5634
      %7509 = vmatpush.bf16.msra.mxu0 %v5633
      %7510 = vmatpush.bf16.msra.mxu0 %v5632
      %7511 = vmatpush.bf16.msra.mxu0 %v5631
      %7512 = vmatpush.bf16.msra.mxu0 %v5630
      %7513 = vmatmul.bf16.gmra.mxu0 %v1961
      %v7514 = vpop.f32.mrf.mxu0
      %v7515 = vadd.f32 %v7502, %v7514
      %v7516 = vpop.f32.mrf.mxu0
      %7517 = vdwg.mxu0
      %7518 = vmatpush.bf16.msra.mxu0 %v5645
      %7519 = vmatpush.bf16.msra.mxu0 %v5644
      %7520 = vmatpush.bf16.msra.mxu0 %v5643
      %7521 = vmatpush.bf16.msra.mxu0 %v5642
      %7522 = vmatpush.bf16.msra.mxu0 %v5641
      %7523 = vmatpush.bf16.msra.mxu0 %v5640
      %7524 = vmatpush.bf16.msra.mxu0 %v5639
      %7525 = vmatpush.bf16.msra.mxu0 %v5638
      %7526 = vmatmul.bf16.gmra.mxu0 %v1962
      %v7527 = vpop.f32.mrf.mxu0
      %v7528 = vadd.f32 %v7515, %v7527
      %v7529 = vpop.f32.mrf.mxu0
      %7530 = vdwg.mxu0
      %7531 = vmatpush.bf16.msra.mxu0 %v5653
      %7532 = vmatpush.bf16.msra.mxu0 %v5652
      %7533 = vmatpush.bf16.msra.mxu0 %v5651
      %7534 = vmatpush.bf16.msra.mxu0 %v5650
      %7535 = vmatpush.bf16.msra.mxu0 %v5649
      %7536 = vmatpush.bf16.msra.mxu0 %v5648
      %7537 = vmatpush.bf16.msra.mxu0 %v5647
      %7538 = vmatpush.bf16.msra.mxu0 %v5646
      %7539 = vmatmul.bf16.gmra.mxu0 %v1963
      %v7540 = vpop.f32.mrf.mxu0
      %v7541 = vadd.f32 %v7528, %v7540
      %v7542 = vpop.f32.mrf.mxu0
      %7543 = vdwg.mxu0
      %v7544 = vmax.f32 %v7541, 0.0
      %v7545 = vld [vmem:[%s2] sm:$0xf]
      %v7546 = vld [vmem:[%s2 + $0x4] sm:$0xf]
      %v7547 = vld [vmem:[%s2 + $0x8] sm:$0xf]
      %v7548 = vld [vmem:[%s2 + $0xc] sm:$0xf]
      %v7549 = vld [vmem:[%s2 + $0x10] sm:$0xf]
      %v7550 = vld [vmem:[%s2 + $0x14] sm:$0xf]
      %v7551 = vld [vmem:[%s2 + $0x18] sm:$0xf]
      %v7552 = vld [vmem:[%s2 + $0x1c] sm:$0xf]
      %v7553 = vld [vmem:[%s2 + $0x20] sm:$0xf]
      %v7554 = vld [vmem:[%s2 + $0x24] sm:$0xf]
      %v7555 = vld [vmem:[%s2 + $0x28] sm:$0xf]
      %v7556 = vld [vmem:[%s2 + $0x2c] sm:$0xf]
      %v7557 = vld [vmem:[%s2 + $0x30] sm:$0xf]
      %v7558 = vld [vmem:[%s2 + $0x34] sm:$0xf]
      %v7559 = vld [vmem:[%s2 + $0x38] sm:$0xf]
      %v7560 = vld [vmem:[%s2 + $0x3c] sm:$0xf]
      %v7561 = vpack.c.bf16 %v7544, %v7544
      %v7562 = vld [vmem:[%s4 + $0x1] sm:$0x1]
      %v7563 = vperm.slane %v7562, 0
      %v7580 = vunpack.c.l.b16 %v7545
      %v7581 = vunpack.c.l.b16 %v7546
      %v7582 = vunpack.c.l.b16 %v7547
      %v7583 = vunpack.c.l.b16 %v7548
      %v7584 = vunpack.c.l.b16 %v7549
      %v7585 = vunpack.c.l.b16 %v7550
      %v7586 = vunpack.c.l.b16 %v7551
      %v7587 = vunpack.c.l.b16 %v7552
      %v7588 = vunpack.c.l.b16 %v7553
      %v7589 = vunpack.c.l.b16 %v7554
      %v7590 = vunpack.c.l.b16 %v7555
      %v7591 = vunpack.c.l.b16 %v7556
      %v7592 = vunpack.c.l.b16 %v7557
      %v7593 = vunpack.c.l.b16 %v7558
      %v7594 = vunpack.c.l.b16 %v7559
      %v7595 = vunpack.c.l.b16 %v7560
      %v7596 = vpack.c.b16 %v7581, %v7580
      %v7597 = vpack.c.b16 %v7583, %v7582
      %v7598 = vpack.c.b16 %v7585, %v7584
      %v7599 = vpack.c.b16 %v7587, %v7586
      %v7600 = vpack.c.b16 %v7589, %v7588
      %v7601 = vpack.c.b16 %v7591, %v7590
      %v7602 = vpack.c.b16 %v7593, %v7592
      %v7603 = vpack.c.b16 %v7595, %v7594
      %7612 = vmatpush.bf16.msra.mxu0 %v7603
      %7613 = vmatpush.bf16.msra.mxu0 %v7602
      %7614 = vmatpush.bf16.msra.mxu0 %v7601
      %7615 = vmatpush.bf16.msra.mxu0 %v7600
      %7616 = vmatpush.bf16.msra.mxu0 %v7599
      %7617 = vmatpush.bf16.msra.mxu0 %v7598
      %7618 = vmatpush.bf16.msra.mxu0 %v7597
      %7619 = vmatpush.bf16.msra.mxu0 %v7596
      %7620 = vmatmul.bf16.gmra.mxu0 %v7561
      %v7621 = vpop.f32.mrf.mxu0
      %v7622 = vadd.f32 %v7563, %v7621
      %v7623 = vpop.f32.mrf.mxu0
      %7624 = vdwg.mxu0
      %v7625 = vmax.f32 %v7622, 0.0
      %v7626 = vld [vmem:[%s2 + $0x40] sm:$0xf]
      %v7627 = vld [vmem:[%s2 + $0x44] sm:$0xf]
      %v7628 = vld [vmem:[%s2 + $0x48] sm:$0xf]
      %v7629 = vld [vmem:[%s2 + $0x4c] sm:$0xf]
      %v7630 = vld [vmem:[%s2 + $0x50] sm:$0xf]
      %v7631 = vld [vmem:[%s2 + $0x54] sm:$0xf]
      %v7632 = vld [vmem:[%s2 + $0x58] sm:$0xf]
      %v7633 = vld [vmem:[%s2 + $0x5c] sm:$0xf]
      %v7634 = vld [vmem:[%s2 + $0x60] sm:$0xf]
      %v7635 = vld [vmem:[%s2 + $0x64] sm:$0xf]
      %v7636 = vld [vmem:[%s2 + $0x68] sm:$0xf]
      %v7637 = vld [vmem:[%s2 + $0x6c] sm:$0xf]
      %v7638 = vld [vmem:[%s2 + $0x70] sm:$0xf]
      %v7639 = vld [vmem:[%s2 + $0x74] sm:$0xf]
      %v7640 = vld [vmem:[%s2 + $0x78] sm:$0xf]
      %v7641 = vld [vmem:[%s2 + $0x7c] sm:$0xf]
      %v7642 = vpack.c.bf16 %v7625, %v7625
      %v7643 = vld [vmem:[%s4 + $0x2] sm:$0x1]
      %v7644 = vperm.slane %v7643, 0
      %v7661 = vunpack.c.l.b16 %v7626
      %v7662 = vunpack.c.l.b16 %v7627
      %v7663 = vunpack.c.l.b16 %v7628
      %v7664 = vunpack.c.l.b16 %v7629
      %v7665 = vunpack.c.l.b16 %v7630
      %v7666 = vunpack.c.l.b16 %v7631
      %v7667 = vunpack.c.l.b16 %v7632
      %v7668 = vunpack.c.l.b16 %v7633
      %v7669 = vunpack.c.l.b16 %v7634
      %v7670 = vunpack.c.l.b16 %v7635
      %v7671 = vunpack.c.l.b16 %v7636
      %v7672 = vunpack.c.l.b16 %v7637
      %v7673 = vunpack.c.l.b16 %v7638
      %v7674 = vunpack.c.l.b16 %v7639
      %v7675 = vunpack.c.l.b16 %v7640
      %v7676 = vunpack.c.l.b16 %v7641
      %v7677 = vpack.c.b16 %v7662, %v7661
      %v7678 = vpack.c.b16 %v7664, %v7663
      %v7679 = vpack.c.b16 %v7666, %v7665
      %v7680 = vpack.c.b16 %v7668, %v7667
      %v7681 = vpack.c.b16 %v7670, %v7669
      %v7682 = vpack.c.b16 %v7672, %v7671
      %v7683 = vpack.c.b16 %v7674, %v7673
      %v7684 = vpack.c.b16 %v7676, %v7675
      %7693 = vmatpush.bf16.msra.mxu0 %v7684
      %7694 = vmatpush.bf16.msra.mxu0 %v7683
      %7695 = vmatpush.bf16.msra.mxu0 %v7682
      %7696 = vmatpush.bf16.msra.mxu0 %v7681
      %7697 = vmatpush.bf16.msra.mxu0 %v7680
      %7698 = vmatpush.bf16.msra.mxu0 %v7679
      %7699 = vmatpush.bf16.msra.mxu0 %v7678
      %7700 = vmatpush.bf16.msra.mxu0 %v7677
      %7701 = vmatmul.bf16.gmra.mxu0 %v7642
      %v7702 = vpop.f32.mrf.mxu0
      %v7703 = vadd.f32 %v7644, %v7702
      %v7704 = vpop.f32.mrf.mxu0
      %7705 = vdwg.mxu0
      %v7706 = vmax.f32 %v7703, 0.0
      %v7707 = vld [vmem:[%s2 + $0x80] sm:$0xf]
      %v7708 = vld [vmem:[%s2 + $0x84] sm:$0xf]
      %v7709 = vld [vmem:[%s2 + $0x88] sm:$0xf]
      %v7710 = vld [vmem:[%s2 + $0x8c] sm:$0xf]
      %v7711 = vld [vmem:[%s2 + $0x90] sm:$0xf]
      %v7712 = vld [vmem:[%s2 + $0x94] sm:$0xf]
      %v7713 = vld [vmem:[%s2 + $0x98] sm:$0xf]
      %v7714 = vld [vmem:[%s2 + $0x9c] sm:$0xf]
      %v7715 = vld [vmem:[%s2 + $0xa0] sm:$0xf]
      %v7716 = vld [vmem:[%s2 + $0xa4] sm:$0xf]
      %v7717 = vld [vmem:[%s2 + $0xa8] sm:$0xf]
      %v7718 = vld [vmem:[%s2 + $0xac] sm:$0xf]
      %v7719 = vld [vmem:[%s2 + $0xb0] sm:$0xf]
      %v7720 = vld [vmem:[%s2 + $0xb4] sm:$0xf]
      %v7721 = vld [vmem:[%s2 + $0xb8] sm:$0xf]
      %v7722 = vld [vmem:[%s2 + $0xbc] sm:$0xf]
      %v7723 = vpack.c.bf16 %v7706, %v7706
      %v7724 = vld [vmem:[%s4 + $0x3] sm:$0x1]
      %v7725 = vperm.slane %v7724, 0
      %v7742 = vunpack.c.l.b16 %v7707
      %v7743 = vunpack.c.l.b16 %v7708
      %v7744 = vunpack.c.l.b16 %v7709
      %v7745 = vunpack.c.l.b16 %v7710
      %v7746 = vunpack.c.l.b16 %v7711
      %v7747 = vunpack.c.l.b16 %v7712
      %v7748 = vunpack.c.l.b16 %v7713
      %v7749 = vunpack.c.l.b16 %v7714
      %v7750 = vunpack.c.l.b16 %v7715
      %v7751 = vunpack.c.l.b16 %v7716
      %v7752 = vunpack.c.l.b16 %v7717
      %v7753 = vunpack.c.l.b16 %v7718
      %v7754 = vunpack.c.l.b16 %v7719
      %v7755 = vunpack.c.l.b16 %v7720
      %v7756 = vunpack.c.l.b16 %v7721
      %v7757 = vunpack.c.l.b16 %v7722
      %v7758 = vpack.c.b16 %v7743, %v7742
      %v7759 = vpack.c.b16 %v7745, %v7744
      %v7760 = vpack.c.b16 %v7747, %v7746
      %v7761 = vpack.c.b16 %v7749, %v7748
      %v7762 = vpack.c.b16 %v7751, %v7750
      %v7763 = vpack.c.b16 %v7753, %v7752
      %v7764 = vpack.c.b16 %v7755, %v7754
      %v7765 = vpack.c.b16 %v7757, %v7756
      %7774 = vmatpush.bf16.msra.mxu0 %v7765
      %7775 = vmatpush.bf16.msra.mxu0 %v7764
      %7776 = vmatpush.bf16.msra.mxu0 %v7763
      %7777 = vmatpush.bf16.msra.mxu0 %v7762
      %7778 = vmatpush.bf16.msra.mxu0 %v7761
      %7779 = vmatpush.bf16.msra.mxu0 %v7760
      %7780 = vmatpush.bf16.msra.mxu0 %v7759
      %7781 = vmatpush.bf16.msra.mxu0 %v7758
      %7782 = vmatmul.bf16.gmra.mxu0 %v7723
      %v7783 = vpop.f32.mrf.mxu0
      %v7784 = vadd.f32 %v7725, %v7783
      %v7785 = vpop.f32.mrf.mxu0
      %7786 = vdwg.mxu0
      %v7787 = vmax.f32 %v7784, 0.0
      %v7788 = vld [vmem:[%s2 + $0xc0] sm:$0xf]
      %v7789 = vld [vmem:[%s2 + $0xc4] sm:$0xf]
      %v7790 = vld [vmem:[%s2 + $0xc8] sm:$0xf]
      %v7791 = vld [vmem:[%s2 + $0xcc] sm:$0xf]
      %v7792 = vld [vmem:[%s2 + $0xd0] sm:$0xf]
      %v7793 = vld [vmem:[%s2 + $0xd4] sm:$0xf]
      %v7794 = vld [vmem:[%s2 + $0xd8] sm:$0xf]
      %v7795 = vld [vmem:[%s2 + $0xdc] sm:$0xf]
      %v7796 = vld [vmem:[%s2 + $0xe0] sm:$0xf]
      %v7797 = vld [vmem:[%s2 + $0xe4] sm:$0xf]
      %v7798 = vld [vmem:[%s2 + $0xe8] sm:$0xf]
      %v7799 = vld [vmem:[%s2 + $0xec] sm:$0xf]
      %v7800 = vld [vmem:[%s2 + $0xf0] sm:$0xf]
      %v7801 = vld [vmem:[%s2 + $0xf4] sm:$0xf]
      %v7802 = vld [vmem:[%s2 + $0xf8] sm:$0xf]
      %v7803 = vld [vmem:[%s2 + $0xfc] sm:$0xf]
      %v7804 = vpack.c.bf16 %v7787, %v7787
      %v7805 = vld [vmem:[%s4 + $0x4] sm:$0x1]
      %v7806 = vperm.slane %v7805, 0
      %v7823 = vunpack.c.l.b16 %v7788
      %v7824 = vunpack.c.l.b16 %v7789
      %v7825 = vunpack.c.l.b16 %v7790
      %v7826 = vunpack.c.l.b16 %v7791
      %v7827 = vunpack.c.l.b16 %v7792
      %v7828 = vunpack.c.l.b16 %v7793
      %v7829 = vunpack.c.l.b16 %v7794
      %v7830 = vunpack.c.l.b16 %v7795
      %v7831 = vunpack.c.l.b16 %v7796
      %v7832 = vunpack.c.l.b16 %v7797
      %v7833 = vunpack.c.l.b16 %v7798
      %v7834 = vunpack.c.l.b16 %v7799
      %v7835 = vunpack.c.l.b16 %v7800
      %v7836 = vunpack.c.l.b16 %v7801
      %v7837 = vunpack.c.l.b16 %v7802
      %v7838 = vunpack.c.l.b16 %v7803
      %v7839 = vpack.c.b16 %v7824, %v7823
      %v7840 = vpack.c.b16 %v7826, %v7825
      %v7841 = vpack.c.b16 %v7828, %v7827
      %v7842 = vpack.c.b16 %v7830, %v7829
      %v7843 = vpack.c.b16 %v7832, %v7831
      %v7844 = vpack.c.b16 %v7834, %v7833
      %v7845 = vpack.c.b16 %v7836, %v7835
      %v7846 = vpack.c.b16 %v7838, %v7837
      %7855 = vmatpush.bf16.msra.mxu0 %v7846
      %7856 = vmatpush.bf16.msra.mxu0 %v7845
      %7857 = vmatpush.bf16.msra.mxu0 %v7844
      %7858 = vmatpush.bf16.msra.mxu0 %v7843
      %7859 = vmatpush.bf16.msra.mxu0 %v7842
      %7860 = vmatpush.bf16.msra.mxu0 %v7841
      %7861 = vmatpush.bf16.msra.mxu0 %v7840
      %7862 = vmatpush.bf16.msra.mxu0 %v7839
      %7863 = vmatmul.bf16.gmra.mxu0 %v7804
      %v7864 = vpop.f32.mrf.mxu0
      %v7865 = vadd.f32 %v7806, %v7864
      %v7866 = vpop.f32.mrf.mxu0
      %7867 = vdwg.mxu0
      %v7868 = vld [vmem:[%s2 + $0x100] sm:$0xf]
      %v7869 = vld [vmem:[%s2 + $0x104] sm:$0xf]
      %v7870 = vld [vmem:[%s2 + $0x108] sm:$0xf]
      %v7871 = vld [vmem:[%s2 + $0x10c] sm:$0xf]
      %v7872 = vld [vmem:[%s2 + $0x110] sm:$0xf]
      %v7873 = vld [vmem:[%s2 + $0x114] sm:$0xf]
      %v7874 = vld [vmem:[%s2 + $0x118] sm:$0xf]
      %v7875 = vld [vmem:[%s2 + $0x11c] sm:$0xf]
      %v7876 = vld [vmem:[%s2 + $0x120] sm:$0xf]
      %v7877 = vld [vmem:[%s2 + $0x124] sm:$0xf]
      %v7878 = vld [vmem:[%s2 + $0x128] sm:$0xf]
      %v7879 = vld [vmem:[%s2 + $0x12c] sm:$0xf]
      %v7880 = vld [vmem:[%s2 + $0x130] sm:$0xf]
      %v7881 = vld [vmem:[%s2 + $0x134] sm:$0xf]
      %v7882 = vld [vmem:[%s2 + $0x138] sm:$0xf]
      %v7883 = vld [vmem:[%s2 + $0x13c] sm:$0xf]
      %v7884 = vpack.c.bf16 %v7865, %v7865
      %v7885 = vld [vmem:[%s4 + $0x5] sm:$0x1]
      %v7886 = vperm.slane %v7885, 0
      %v7903 = vunpack.c.l.b16 %v7868
      %v7904 = vunpack.c.l.b16 %v7869
      %v7905 = vunpack.c.l.b16 %v7870
      %v7906 = vunpack.c.l.b16 %v7871
      %v7907 = vunpack.c.l.b16 %v7872
      %v7908 = vunpack.c.l.b16 %v7873
      %v7909 = vunpack.c.l.b16 %v7874
      %v7910 = vunpack.c.l.b16 %v7875
      %v7911 = vunpack.c.l.b16 %v7876
      %v7912 = vunpack.c.l.b16 %v7877
      %v7913 = vunpack.c.l.b16 %v7878
      %v7914 = vunpack.c.l.b16 %v7879
      %v7915 = vunpack.c.l.b16 %v7880
      %v7916 = vunpack.c.l.b16 %v7881
      %v7917 = vunpack.c.l.b16 %v7882
      %v7918 = vunpack.c.l.b16 %v7883
      %v7919 = vpack.c.b16 %v7904, %v7903
      %v7920 = vpack.c.b16 %v7906, %v7905
      %v7921 = vpack.c.b16 %v7908, %v7907
      %v7922 = vpack.c.b16 %v7910, %v7909
      %v7923 = vpack.c.b16 %v7912, %v7911
      %v7924 = vpack.c.b16 %v7914, %v7913
      %v7925 = vpack.c.b16 %v7916, %v7915
      %v7926 = vpack.c.b16 %v7918, %v7917
      %7935 = vmatpush.bf16.msra.mxu0 %v7926
      %7936 = vmatpush.bf16.msra.mxu0 %v7925
      %7937 = vmatpush.bf16.msra.mxu0 %v7924
      %7938 = vmatpush.bf16.msra.mxu0 %v7923
      %7939 = vmatpush.bf16.msra.mxu0 %v7922
      %7940 = vmatpush.bf16.msra.mxu0 %v7921
      %7941 = vmatpush.bf16.msra.mxu0 %v7920
      %7942 = vmatpush.bf16.msra.mxu0 %v7919
      %7943 = vmatmul.bf16.gmra.mxu0 %v7884
      %v7944 = vpop.f32.mrf.mxu0
      %v7945 = vadd.f32 %v7886, %v7944
      %v7946 = vpop.f32.mrf.mxu0
      %7947 = vdwg.mxu0
      %v7948 = vmax.f32 %v7945, 0.0
      %v7949 = vld [vmem:[%s2 + $0x140] sm:$0xf]
      %v7950 = vld [vmem:[%s2 + $0x144] sm:$0xf]
      %v7951 = vld [vmem:[%s2 + $0x148] sm:$0xf]
      %v7952 = vld [vmem:[%s2 + $0x14c] sm:$0xf]
      %v7953 = vld [vmem:[%s2 + $0x150] sm:$0xf]
      %v7954 = vld [vmem:[%s2 + $0x154] sm:$0xf]
      %v7955 = vld [vmem:[%s2 + $0x158] sm:$0xf]
      %v7956 = vld [vmem:[%s2 + $0x15c] sm:$0xf]
      %v7957 = vld [vmem:[%s2 + $0x160] sm:$0xf]
      %v7958 = vld [vmem:[%s2 + $0x164] sm:$0xf]
      %v7959 = vld [vmem:[%s2 + $0x168] sm:$0xf]
      %v7960 = vld [vmem:[%s2 + $0x16c] sm:$0xf]
      %v7961 = vld [vmem:[%s2 + $0x170] sm:$0xf]
      %v7962 = vld [vmem:[%s2 + $0x174] sm:$0xf]
      %v7963 = vld [vmem:[%s2 + $0x178] sm:$0xf]
      %v7964 = vld [vmem:[%s2 + $0x17c] sm:$0xf]
      %v7965 = vpack.c.bf16 %v7948, %v7948
      %v7966 = vld [vmem:[%s4 + $0x6] sm:$0x1]
      %v7967 = vperm.slane %v7966, 0
      %v7984 = vunpack.c.l.b16 %v7949
      %v7985 = vunpack.c.l.b16 %v7950
      %v7986 = vunpack.c.l.b16 %v7951
      %v7987 = vunpack.c.l.b16 %v7952
      %v7988 = vunpack.c.l.b16 %v7953
      %v7989 = vunpack.c.l.b16 %v7954
      %v7990 = vunpack.c.l.b16 %v7955
      %v7991 = vunpack.c.l.b16 %v7956
      %v7992 = vunpack.c.l.b16 %v7957
      %v7993 = vunpack.c.l.b16 %v7958
      %v7994 = vunpack.c.l.b16 %v7959
      %v7995 = vunpack.c.l.b16 %v7960
      %v7996 = vunpack.c.l.b16 %v7961
      %v7997 = vunpack.c.l.b16 %v7962
      %v7998 = vunpack.c.l.b16 %v7963
      %v7999 = vunpack.c.l.b16 %v7964
      %v8000 = vpack.c.b16 %v7985, %v7984
      %v8001 = vpack.c.b16 %v7987, %v7986
      %v8002 = vpack.c.b16 %v7989, %v7988
      %v8003 = vpack.c.b16 %v7991, %v7990
      %v8004 = vpack.c.b16 %v7993, %v7992
      %v8005 = vpack.c.b16 %v7995, %v7994
      %v8006 = vpack.c.b16 %v7997, %v7996
      %v8007 = vpack.c.b16 %v7999, %v7998
      %8016 = vmatpush.bf16.msra.mxu0 %v8007
      %8017 = vmatpush.bf16.msra.mxu0 %v8006
      %8018 = vmatpush.bf16.msra.mxu0 %v8005
      %8019 = vmatpush.bf16.msra.mxu0 %v8004
      %8020 = vmatpush.bf16.msra.mxu0 %v8003
      %8021 = vmatpush.bf16.msra.mxu0 %v8002
      %8022 = vmatpush.bf16.msra.mxu0 %v8001
      %8023 = vmatpush.bf16.msra.mxu0 %v8000
      %8024 = vmatmul.bf16.gmra.mxu0 %v7965
      %v8025 = vpop.f32.mrf.mxu0
      %v8026 = vadd.f32 %v7967, %v8025
      %v8027 = vpop.f32.mrf.mxu0
      %8028 = vdwg.mxu0
      %v8029 = vmax.f32 %v8026, 0.0
      %v8030 = vld [vmem:[%s2 + $0x180] sm:$0xf]
      %v8031 = vld [vmem:[%s2 + $0x184] sm:$0xf]
      %v8032 = vld [vmem:[%s2 + $0x188] sm:$0xf]
      %v8033 = vld [vmem:[%s2 + $0x18c] sm:$0xf]
      %v8034 = vld [vmem:[%s2 + $0x190] sm:$0xf]
      %v8035 = vld [vmem:[%s2 + $0x194] sm:$0xf]
      %v8036 = vld [vmem:[%s2 + $0x198] sm:$0xf]
      %v8037 = vld [vmem:[%s2 + $0x19c] sm:$0xf]
      %v8038 = vld [vmem:[%s2 + $0x1a0] sm:$0xf]
      %v8039 = vld [vmem:[%s2 + $0x1a4] sm:$0xf]
      %v8040 = vld [vmem:[%s2 + $0x1a8] sm:$0xf]
      %v8041 = vld [vmem:[%s2 + $0x1ac] sm:$0xf]
      %v8042 = vld [vmem:[%s2 + $0x1b0] sm:$0xf]
      %v8043 = vld [vmem:[%s2 + $0x1b4] sm:$0xf]
      %v8044 = vld [vmem:[%s2 + $0x1b8] sm:$0xf]
      %v8045 = vld [vmem:[%s2 + $0x1bc] sm:$0xf]
      %v8046 = vpack.c.bf16 %v8029, %v8029
      %v8047 = vld [vmem:[%s4 + $0x7] sm:$0x1]
      %v8048 = vperm.slane %v8047, 0
      %v8065 = vunpack.c.l.b16 %v8030
      %v8066 = vunpack.c.l.b16 %v8031
      %v8067 = vunpack.c.l.b16 %v8032
      %v8068 = vunpack.c.l.b16 %v8033
      %v8069 = vunpack.c.l.b16 %v8034
      %v8070 = vunpack.c.l.b16 %v8035
      %v8071 = vunpack.c.l.b16 %v8036
      %v8072 = vunpack.c.l.b16 %v8037
      %v8073 = vunpack.c.l.b16 %v8038
      %v8074 = vunpack.c.l.b16 %v8039
      %v8075 = vunpack.c.l.b16 %v8040
      %v8076 = vunpack.c.l.b16 %v8041
      %v8077 = vunpack.c.l.b16 %v8042
      %v8078 = vunpack.c.l.b16 %v8043
      %v8079 = vunpack.c.l.b16 %v8044
      %v8080 = vunpack.c.l.b16 %v8045
      %v8081 = vpack.c.b16 %v8066, %v8065
      %v8082 = vpack.c.b16 %v8068, %v8067
      %v8083 = vpack.c.b16 %v8070, %v8069
      %v8084 = vpack.c.b16 %v8072, %v8071
      %v8085 = vpack.c.b16 %v8074, %v8073
      %v8086 = vpack.c.b16 %v8076, %v8075
      %v8087 = vpack.c.b16 %v8078, %v8077
      %v8088 = vpack.c.b16 %v8080, %v8079
      %8097 = vmatpush.bf16.msra.mxu0 %v8088
      %8098 = vmatpush.bf16.msra.mxu0 %v8087
      %8099 = vmatpush.bf16.msra.mxu0 %v8086
      %8100 = vmatpush.bf16.msra.mxu0 %v8085
      %8101 = vmatpush.bf16.msra.mxu0 %v8084
      %8102 = vmatpush.bf16.msra.mxu0 %v8083
      %8103 = vmatpush.bf16.msra.mxu0 %v8082
      %8104 = vmatpush.bf16.msra.mxu0 %v8081
      %8105 = vmatmul.bf16.gmra.mxu0 %v8046
      %v8106 = vpop.f32.mrf.mxu0
      %v8107 = vadd.f32 %v8048, %v8106
      %v8108 = vpop.f32.mrf.mxu0
      %8109 = vdwg.mxu0
      %v8110 = vmax.f32 %v8107, 0.0
      %v8111 = vld [vmem:[%s2 + $0x1c0] sm:$0xf]
      %v8112 = vld [vmem:[%s2 + $0x1c4] sm:$0xf]
      %v8113 = vld [vmem:[%s2 + $0x1c8] sm:$0xf]
      %v8114 = vld [vmem:[%s2 + $0x1cc] sm:$0xf]
      %v8115 = vld [vmem:[%s2 + $0x1d0] sm:$0xf]
      %v8116 = vld [vmem:[%s2 + $0x1d4] sm:$0xf]
      %v8117 = vld [vmem:[%s2 + $0x1d8] sm:$0xf]
      %v8118 = vld [vmem:[%s2 + $0x1dc] sm:$0xf]
      %v8119 = vld [vmem:[%s2 + $0x1e0] sm:$0xf]
      %v8120 = vld [vmem:[%s2 + $0x1e4] sm:$0xf]
      %v8121 = vld [vmem:[%s2 + $0x1e8] sm:$0xf]
      %v8122 = vld [vmem:[%s2 + $0x1ec] sm:$0xf]
      %v8123 = vld [vmem:[%s2 + $0x1f0] sm:$0xf]
      %v8124 = vld [vmem:[%s2 + $0x1f4] sm:$0xf]
      %v8125 = vld [vmem:[%s2 + $0x1f8] sm:$0xf]
      %v8126 = vld [vmem:[%s2 + $0x1fc] sm:$0xf]
      %v8127 = vpack.c.bf16 %v8110, %v8110
      %v8128 = vld [vmem:[%s4 + $0x8] sm:$0x1]
      %v8129 = vperm.slane %v8128, 0
      %v8146 = vunpack.c.l.b16 %v8111
      %v8147 = vunpack.c.l.b16 %v8112
      %v8148 = vunpack.c.l.b16 %v8113
      %v8149 = vunpack.c.l.b16 %v8114
      %v8150 = vunpack.c.l.b16 %v8115
      %v8151 = vunpack.c.l.b16 %v8116
      %v8152 = vunpack.c.l.b16 %v8117
      %v8153 = vunpack.c.l.b16 %v8118
      %v8154 = vunpack.c.l.b16 %v8119
      %v8155 = vunpack.c.l.b16 %v8120
      %v8156 = vunpack.c.l.b16 %v8121
      %v8157 = vunpack.c.l.b16 %v8122
      %v8158 = vunpack.c.l.b16 %v8123
      %v8159 = vunpack.c.l.b16 %v8124
      %v8160 = vunpack.c.l.b16 %v8125
      %v8161 = vunpack.c.l.b16 %v8126
      %v8162 = vpack.c.b16 %v8147, %v8146
      %v8163 = vpack.c.b16 %v8149, %v8148
      %v8164 = vpack.c.b16 %v8151, %v8150
      %v8165 = vpack.c.b16 %v8153, %v8152
      %v8166 = vpack.c.b16 %v8155, %v8154
      %v8167 = vpack.c.b16 %v8157, %v8156
      %v8168 = vpack.c.b16 %v8159, %v8158
      %v8169 = vpack.c.b16 %v8161, %v8160
      %8178 = vmatpush.bf16.msra.mxu0 %v8169
      %8179 = vmatpush.bf16.msra.mxu0 %v8168
      %8180 = vmatpush.bf16.msra.mxu0 %v8167
      %8181 = vmatpush.bf16.msra.mxu0 %v8166
      %8182 = vmatpush.bf16.msra.mxu0 %v8165
      %8183 = vmatpush.bf16.msra.mxu0 %v8164
      %8184 = vmatpush.bf16.msra.mxu0 %v8163
      %8185 = vmatpush.bf16.msra.mxu0 %v8162
      %8186 = vmatmul.bf16.gmra.mxu0 %v8127
      %v8187 = vpop.f32.mrf.mxu0
      %v8188 = vadd.f32 %v8129, %v8187
      %v8189 = vpop.f32.mrf.mxu0
      %8190 = vdwg.mxu0
      %v8191 = vmax.f32 %v8188, 0.0
      %v8192 = vpack.c.bf16 %v8191, %v8191
      %v8193 = vld [vmem:[%s3] sm:$0xff]
      %v8194 = vld [vmem:[%s3 + $0x8] sm:$0xff]
      %v8195 = vld [vmem:[%s3 + $0x10] sm:$0xff]
      %v8196 = vld [vmem:[%s3 + $0x18] sm:$0xff]
      %v8197 = vld [vmem:[%s3 + $0x20] sm:$0xf]
      %v8198 = vld [vmem:[%s3 + $0x168] sm:$0xff]
      %v8199 = vld [vmem:[%s3 + $0x170] sm:$0xff]
      %v8200 = vld [vmem:[%s3 + $0x178] sm:$0xff]
      %v8201 = vld [vmem:[%s3 + $0x180] sm:$0xff]
      %v8202 = vld [vmem:[%s3 + $0x188] sm:$0xf]
      %v8203 = vld [vmem:[%s3 + $0x2d0] sm:$0xff]
      %v8204 = vld [vmem:[%s3 + $0x2d8] sm:$0xff]
      %v8205 = vld [vmem:[%s3 + $0x2e0] sm:$0xff]
      %v8206 = vld [vmem:[%s3 + $0x2e8] sm:$0xff]
      %v8207 = vld [vmem:[%s3 + $0x2f0] sm:$0xf]
      %v8208 = vld [vmem:[%s3 + $0x438] sm:$0xff]
      %v8209 = vld [vmem:[%s3 + $0x440] sm:$0xff]
      %v8210 = vld [vmem:[%s3 + $0x448] sm:$0xff]
      %v8211 = vld [vmem:[%s3 + $0x450] sm:$0xff]
      %v8212 = vld [vmem:[%s3 + $0x458] sm:$0xf]
      %v8213 = vld [vmem:[%s3 + $0x5a0] sm:$0xff]
      %v8214 = vld [vmem:[%s3 + $0x5a8] sm:$0xff]
      %v8215 = vld [vmem:[%s3 + $0x5b0] sm:$0xff]
      %v8216 = vld [vmem:[%s3 + $0x5b8] sm:$0xff]
      %v8217 = vld [vmem:[%s3 + $0x5c0] sm:$0xf]
      %v8218 = vld [vmem:[%s3 + $0x708] sm:$0xff]
      %v8219 = vld [vmem:[%s3 + $0x710] sm:$0xff]
      %v8220 = vld [vmem:[%s3 + $0x718] sm:$0xff]
      %v8221 = vld [vmem:[%s3 + $0x720] sm:$0xff]
      %v8222 = vld [vmem:[%s3 + $0x728] sm:$0xf]
      %v8223 = vld [vmem:[%s3 + $0x870] sm:$0xff]
      %v8224 = vld [vmem:[%s3 + $0x878] sm:$0xff]
      %v8225 = vld [vmem:[%s3 + $0x880] sm:$0xff]
      %v8226 = vld [vmem:[%s3 + $0x888] sm:$0xff]
      %v8227 = vld [vmem:[%s3 + $0x890] sm:$0xf]
      %v8228 = vld [vmem:[%s3 + $0x9d8] sm:$0xff]
      %v8229 = vld [vmem:[%s3 + $0x9e0] sm:$0xff]
      %v8230 = vld [vmem:[%s3 + $0x9e8] sm:$0xff]
      %v8231 = vld [vmem:[%s3 + $0x9f0] sm:$0xff]
      %v8232 = vld [vmem:[%s3 + $0x9f8] sm:$0xf]
      %v8233 = vld [vmem:[%s3 + $0xb40] sm:$0xff]
      %v8234 = vld [vmem:[%s3 + $0xb48] sm:$0xff]
      %v8235 = vld [vmem:[%s3 + $0xb50] sm:$0xff]
      %v8236 = vld [vmem:[%s3 + $0xb58] sm:$0xff]
      %v8237 = vld [vmem:[%s3 + $0xb60] sm:$0xf]
      %v8238 = vld [vmem:[%s3 + $0xca8] sm:$0xff]
      %v8239 = vld [vmem:[%s3 + $0xcb0] sm:$0xff]
      %v8240 = vld [vmem:[%s3 + $0xcb8] sm:$0xff]
      %v8241 = vld [vmem:[%s3 + $0xcc0] sm:$0xff]
      %v8242 = vld [vmem:[%s3 + $0xcc8] sm:$0xf]
      %v8243 = vld [vmem:[%s3 + $0xe10] sm:$0xff]
      %v8244 = vld [vmem:[%s3 + $0xe18] sm:$0xff]
      %v8245 = vld [vmem:[%s3 + $0xe20] sm:$0xff]
      %v8246 = vld [vmem:[%s3 + $0xe28] sm:$0xff]
      %v8247 = vld [vmem:[%s3 + $0xe30] sm:$0xf]
      %v8248 = vld [vmem:[%s3 + $0xf78] sm:$0xff]
      %v8249 = vld [vmem:[%s3 + $0xf80] sm:$0xff]
      %v8250 = vld [vmem:[%s3 + $0xf88] sm:$0xff]
      %v8251 = vld [vmem:[%s3 + $0xf90] sm:$0xff]
      %v8252 = vld [vmem:[%s3 + $0xf98] sm:$0xf]
      %v8253 = vld [vmem:[%s3 + $0x10e0] sm:$0xff]
      %v8254 = vld [vmem:[%s3 + $0x10e8] sm:$0xff]
      %v8255 = vld [vmem:[%s3 + $0x10f0] sm:$0xff]
      %v8256 = vld [vmem:[%s3 + $0x10f8] sm:$0xff]
      %v8257 = vld [vmem:[%s3 + $0x1100] sm:$0xf]
      %v8258 = vld [vmem:[%s3 + $0x1248] sm:$0xff]
      %v8259 = vld [vmem:[%s3 + $0x1250] sm:$0xff]
      %v8260 = vld [vmem:[%s3 + $0x1258] sm:$0xff]
      %v8261 = vld [vmem:[%s3 + $0x1260] sm:$0xff]
      %v8262 = vld [vmem:[%s3 + $0x1268] sm:$0xf]
      %v8263 = vld [vmem:[%s3 + $0x13b0] sm:$0xff]
      %v8264 = vld [vmem:[%s3 + $0x13b8] sm:$0xff]
      %v8265 = vld [vmem:[%s3 + $0x13c0] sm:$0xff]
      %v8266 = vld [vmem:[%s3 + $0x13c8] sm:$0xff]
      %v8267 = vld [vmem:[%s3 + $0x13d0] sm:$0xf]
      %v8268 = vld [vmem:[%s3 + $0x1518] sm:$0xff]
      %v8269 = vld [vmem:[%s3 + $0x1520] sm:$0xff]
      %v8270 = vld [vmem:[%s3 + $0x1528] sm:$0xff]
      %v8271 = vld [vmem:[%s3 + $0x1530] sm:$0xff]
      %v8272 = vld [vmem:[%s3 + $0x1538] sm:$0xf]
      %v8273 = vld [vmem:[%s5] sm:$0xff]
      %v8274 = vld [vmem:[%s5 + $0x8] sm:$0x1]
      %v8277 = vperm.slane %v8273, 0
      %v8278 = vperm.slane %v8273, 1
      %v8279 = vperm.slane %v8273, 2
      %v8280 = vperm.slane %v8273, 3
      %v8281 = vperm.slane %v8273, 4
      %v8282 = vperm.slane %v8273, 5
      %v8283 = vperm.slane %v8273, 6
      %v8284 = vperm.slane %v8273, 7
      %v8285 = vperm.slane %v8274, 0
      %v8375 = vunpack.c.l.b16 %v8193
      %v8376 = vunpack.c.h.b16 %v8193
      %v8377 = vunpack.c.l.b16 %v8194
      %v8378 = vunpack.c.h.b16 %v8194
      %v8379 = vunpack.c.l.b16 %v8195
      %v8380 = vunpack.c.h.b16 %v8195
      %v8381 = vunpack.c.l.b16 %v8196
      %v8382 = vunpack.c.h.b16 %v8196
      %v8383 = vunpack.c.l.b16 %v8197
      %v8384 = vunpack.c.l.b16 %v8198
      %v8385 = vunpack.c.h.b16 %v8198
      %v8386 = vunpack.c.l.b16 %v8199
      %v8387 = vunpack.c.h.b16 %v8199
      %v8388 = vunpack.c.l.b16 %v8200
      %v8389 = vunpack.c.h.b16 %v8200
      %v8390 = vunpack.c.l.b16 %v8201
      %v8391 = vunpack.c.h.b16 %v8201
      %v8392 = vunpack.c.l.b16 %v8202
      %v8393 = vunpack.c.l.b16 %v8203
      %v8394 = vunpack.c.h.b16 %v8203
      %v8395 = vunpack.c.l.b16 %v8204
      %v8396 = vunpack.c.h.b16 %v8204
      %v8397 = vunpack.c.l.b16 %v8205
      %v8398 = vunpack.c.h.b16 %v8205
      %v8399 = vunpack.c.l.b16 %v8206
      %v8400 = vunpack.c.h.b16 %v8206
      %v8401 = vunpack.c.l.b16 %v8207
      %v8402 = vunpack.c.l.b16 %v8208
      %v8403 = vunpack.c.h.b16 %v8208
      %v8404 = vunpack.c.l.b16 %v8209
      %v8405 = vunpack.c.h.b16 %v8209
      %v8406 = vunpack.c.l.b16 %v8210
      %v8407 = vunpack.c.h.b16 %v8210
      %v8408 = vunpack.c.l.b16 %v8211
      %v8409 = vunpack.c.h.b16 %v8211
      %v8410 = vunpack.c.l.b16 %v8212
      %v8411 = vunpack.c.l.b16 %v8213
      %v8412 = vunpack.c.h.b16 %v8213
      %v8413 = vunpack.c.l.b16 %v8214
      %v8414 = vunpack.c.h.b16 %v8214
      %v8415 = vunpack.c.l.b16 %v8215
      %v8416 = vunpack.c.h.b16 %v8215
      %v8417 = vunpack.c.l.b16 %v8216
      %v8418 = vunpack.c.h.b16 %v8216
      %v8419 = vunpack.c.l.b16 %v8217
      %v8420 = vunpack.c.l.b16 %v8218
      %v8421 = vunpack.c.h.b16 %v8218
      %v8422 = vunpack.c.l.b16 %v8219
      %v8423 = vunpack.c.h.b16 %v8219
      %v8424 = vunpack.c.l.b16 %v8220
      %v8425 = vunpack.c.h.b16 %v8220
      %v8426 = vunpack.c.l.b16 %v8221
      %v8427 = vunpack.c.h.b16 %v8221
      %v8428 = vunpack.c.l.b16 %v8222
      %v8429 = vunpack.c.l.b16 %v8223
      %v8430 = vunpack.c.h.b16 %v8223
      %v8431 = vunpack.c.l.b16 %v8224
      %v8432 = vunpack.c.h.b16 %v8224
      %v8433 = vunpack.c.l.b16 %v8225
      %v8434 = vunpack.c.h.b16 %v8225
      %v8435 = vunpack.c.l.b16 %v8226
      %v8436 = vunpack.c.h.b16 %v8226
      %v8437 = vunpack.c.l.b16 %v8227
      %v8438 = vunpack.c.l.b16 %v8228
      %v8439 = vunpack.c.h.b16 %v8228
      %v8440 = vunpack.c.l.b16 %v8229
      %v8441 = vunpack.c.h.b16 %v8229
      %v8442 = vunpack.c.l.b16 %v8230
      %v8443 = vunpack.c.h.b16 %v8230
      %v8444 = vunpack.c.l.b16 %v8231
      %v8445 = vunpack.c.h.b16 %v8231
      %v8446 = vunpack.c.l.b16 %v8232
      %v8447 = vunpack.c.l.b16 %v8233
      %v8448 = vunpack.c.h.b16 %v8233
      %v8449 = vunpack.c.l.b16 %v8234
      %v8450 = vunpack.c.h.b16 %v8234
      %v8451 = vunpack.c.l.b16 %v8235
      %v8452 = vunpack.c.h.b16 %v8235
      %v8453 = vunpack.c.l.b16 %v8236
      %v8454 = vunpack.c.h.b16 %v8236
      %v8455 = vunpack.c.l.b16 %v8237
      %v8456 = vunpack.c.l.b16 %v8238
      %v8457 = vunpack.c.h.b16 %v8238
      %v8458 = vunpack.c.l.b16 %v8239
      %v8459 = vunpack.c.h.b16 %v8239
      %v8460 = vunpack.c.l.b16 %v8240
      %v8461 = vunpack.c.h.b16 %v8240
      %v8462 = vunpack.c.l.b16 %v8241
      %v8463 = vunpack.c.h.b16 %v8241
      %v8464 = vunpack.c.l.b16 %v8242
      %v8465 = vunpack.c.l.b16 %v8243
      %v8466 = vunpack.c.h.b16 %v8243
      %v8467 = vunpack.c.l.b16 %v8244
      %v8468 = vunpack.c.h.b16 %v8244
      %v8469 = vunpack.c.l.b16 %v8245
      %v8470 = vunpack.c.h.b16 %v8245
      %v8471 = vunpack.c.l.b16 %v8246
      %v8472 = vunpack.c.h.b16 %v8246
      %v8473 = vunpack.c.l.b16 %v8247
      %v8474 = vunpack.c.l.b16 %v8248
      %v8475 = vunpack.c.h.b16 %v8248
      %v8476 = vunpack.c.l.b16 %v8249
      %v8477 = vunpack.c.h.b16 %v8249
      %v8478 = vunpack.c.l.b16 %v8250
      %v8479 = vunpack.c.h.b16 %v8250
      %v8480 = vunpack.c.l.b16 %v8251
      %v8481 = vunpack.c.h.b16 %v8251
      %v8482 = vunpack.c.l.b16 %v8252
      %v8483 = vunpack.c.l.b16 %v8253
      %v8484 = vunpack.c.h.b16 %v8253
      %v8485 = vunpack.c.l.b16 %v8254
      %v8486 = vunpack.c.h.b16 %v8254
      %v8487 = vunpack.c.l.b16 %v8255
      %v8488 = vunpack.c.h.b16 %v8255
      %v8489 = vunpack.c.l.b16 %v8256
      %v8490 = vunpack.c.h.b16 %v8256
      %v8491 = vunpack.c.l.b16 %v8257
      %v8492 = vunpack.c.l.b16 %v8258
      %v8493 = vunpack.c.h.b16 %v8258
      %v8494 = vunpack.c.l.b16 %v8259
      %v8495 = vunpack.c.h.b16 %v8259
      %v8496 = vunpack.c.l.b16 %v8260
      %v8497 = vunpack.c.h.b16 %v8260
      %v8498 = vunpack.c.l.b16 %v8261
      %v8499 = vunpack.c.h.b16 %v8261
      %v8500 = vunpack.c.l.b16 %v8262
      %v8501 = vunpack.c.l.b16 %v8263
      %v8502 = vunpack.c.h.b16 %v8263
      %v8503 = vunpack.c.l.b16 %v8264
      %v8504 = vunpack.c.h.b16 %v8264
      %v8505 = vunpack.c.l.b16 %v8265
      %v8506 = vunpack.c.h.b16 %v8265
      %v8507 = vunpack.c.l.b16 %v8266
      %v8508 = vunpack.c.h.b16 %v8266
      %v8509 = vunpack.c.l.b16 %v8267
      %v8510 = vunpack.c.l.b16 %v8268
      %v8511 = vunpack.c.h.b16 %v8268
      %v8512 = vunpack.c.l.b16 %v8269
      %v8513 = vunpack.c.h.b16 %v8269
      %v8514 = vunpack.c.l.b16 %v8270
      %v8515 = vunpack.c.h.b16 %v8270
      %v8516 = vunpack.c.l.b16 %v8271
      %v8517 = vunpack.c.h.b16 %v8271
      %v8518 = vunpack.c.l.b16 %v8272
      %v8519 = vpack.c.b16 %v8384, %v8375
      %v8520 = vpack.c.b16 %v8385, %v8376
      %v8521 = vpack.c.b16 %v8386, %v8377
      %v8522 = vpack.c.b16 %v8387, %v8378
      %v8523 = vpack.c.b16 %v8388, %v8379
      %v8524 = vpack.c.b16 %v8389, %v8380
      %v8525 = vpack.c.b16 %v8390, %v8381
      %v8526 = vpack.c.b16 %v8391, %v8382
      %v8527 = vpack.c.b16 %v8392, %v8383
      %v8528 = vpack.c.b16 %v8402, %v8393
      %v8529 = vpack.c.b16 %v8403, %v8394
      %v8530 = vpack.c.b16 %v8404, %v8395
      %v8531 = vpack.c.b16 %v8405, %v8396
      %v8532 = vpack.c.b16 %v8406, %v8397
      %v8533 = vpack.c.b16 %v8407, %v8398
      %v8534 = vpack.c.b16 %v8408, %v8399
      %v8535 = vpack.c.b16 %v8409, %v8400
      %v8536 = vpack.c.b16 %v8410, %v8401
      %v8537 = vpack.c.b16 %v8420, %v8411
      %v8538 = vpack.c.b16 %v8421, %v8412
      %v8539 = vpack.c.b16 %v8422, %v8413
      %v8540 = vpack.c.b16 %v8423, %v8414
      %v8541 = vpack.c.b16 %v8424, %v8415
      %v8542 = vpack.c.b16 %v8425, %v8416
      %v8543 = vpack.c.b16 %v8426, %v8417
      %v8544 = vpack.c.b16 %v8427, %v8418
      %v8545 = vpack.c.b16 %v8428, %v8419
      %v8546 = vpack.c.b16 %v8438, %v8429
      %v8547 = vpack.c.b16 %v8439, %v8430
      %v8548 = vpack.c.b16 %v8440, %v8431
      %v8549 = vpack.c.b16 %v8441, %v8432
      %v8550 = vpack.c.b16 %v8442, %v8433
      %v8551 = vpack.c.b16 %v8443, %v8434
      %v8552 = vpack.c.b16 %v8444, %v8435
      %v8553 = vpack.c.b16 %v8445, %v8436
      %v8554 = vpack.c.b16 %v8446, %v8437
      %v8555 = vpack.c.b16 %v8456, %v8447
      %v8556 = vpack.c.b16 %v8457, %v8448
      %v8557 = vpack.c.b16 %v8458, %v8449
      %v8558 = vpack.c.b16 %v8459, %v8450
      %v8559 = vpack.c.b16 %v8460, %v8451
      %v8560 = vpack.c.b16 %v8461, %v8452
      %v8561 = vpack.c.b16 %v8462, %v8453
      %v8562 = vpack.c.b16 %v8463, %v8454
      %v8563 = vpack.c.b16 %v8464, %v8455
      %v8564 = vpack.c.b16 %v8474, %v8465
      %v8565 = vpack.c.b16 %v8475, %v8466
      %v8566 = vpack.c.b16 %v8476, %v8467
      %v8567 = vpack.c.b16 %v8477, %v8468
      %v8568 = vpack.c.b16 %v8478, %v8469
      %v8569 = vpack.c.b16 %v8479, %v8470
      %v8570 = vpack.c.b16 %v8480, %v8471
      %v8571 = vpack.c.b16 %v8481, %v8472
      %v8572 = vpack.c.b16 %v8482, %v8473
      %v8573 = vpack.c.b16 %v8492, %v8483
      %v8574 = vpack.c.b16 %v8493, %v8484
      %v8575 = vpack.c.b16 %v8494, %v8485
      %v8576 = vpack.c.b16 %v8495, %v8486
      %v8577 = vpack.c.b16 %v8496, %v8487
      %v8578 = vpack.c.b16 %v8497, %v8488
      %v8579 = vpack.c.b16 %v8498, %v8489
      %v8580 = vpack.c.b16 %v8499, %v8490
      %v8581 = vpack.c.b16 %v8500, %v8491
      %v8582 = vpack.c.b16 %v8510, %v8501
      %v8583 = vpack.c.b16 %v8511, %v8502
      %v8584 = vpack.c.b16 %v8512, %v8503
      %v8585 = vpack.c.b16 %v8513, %v8504
      %v8586 = vpack.c.b16 %v8514, %v8505
      %v8587 = vpack.c.b16 %v8515, %v8506
      %v8588 = vpack.c.b16 %v8516, %v8507
      %v8589 = vpack.c.b16 %v8517, %v8508
      %v8590 = vpack.c.b16 %v8518, %v8509
      %8663 = vmatpush.bf16.msra.mxu0 %v8582
      %8664 = vmatpush.bf16.msra.mxu0 %v8573
      %8665 = vmatpush.bf16.msra.mxu0 %v8564
      %8666 = vmatpush.bf16.msra.mxu0 %v8555
      %8667 = vmatpush.bf16.msra.mxu0 %v8546
      %8668 = vmatpush.bf16.msra.mxu0 %v8537
      %8669 = vmatpush.bf16.msra.mxu0 %v8528
      %8670 = vmatpush.bf16.msra.mxu0 %v8519
      %8671 = vmatmul.bf16.gmra.mxu0 %v8192
      %v8672 = vpop.f32.mrf.mxu0
      %v8673 = vadd.f32 %v8277, %v8672
      %v8674 = vpop.f32.mrf.mxu0
      %8675 = vdwg.mxu0
      %8676 = vmatpush.bf16.msra.mxu0 %v8583
      %8677 = vmatpush.bf16.msra.mxu0 %v8574
      %8678 = vmatpush.bf16.msra.mxu0 %v8565
      %8679 = vmatpush.bf16.msra.mxu0 %v8556
      %8680 = vmatpush.bf16.msra.mxu0 %v8547
      %8681 = vmatpush.bf16.msra.mxu0 %v8538
      %8682 = vmatpush.bf16.msra.mxu0 %v8529
      %8683 = vmatpush.bf16.msra.mxu0 %v8520
      %8684 = vmatmul.bf16.gmra.mxu0 %v8192
      %v8685 = vpop.f32.mrf.mxu0
      %v8686 = vadd.f32 %v8278, %v8685
      %v8687 = vpop.f32.mrf.mxu0
      %8688 = vdwg.mxu0
      %8689 = vmatpush.bf16.msra.mxu0 %v8584
      %8690 = vmatpush.bf16.msra.mxu0 %v8575
      %8691 = vmatpush.bf16.msra.mxu0 %v8566
      %8692 = vmatpush.bf16.msra.mxu0 %v8557
      %8693 = vmatpush.bf16.msra.mxu0 %v8548
      %8694 = vmatpush.bf16.msra.mxu0 %v8539
      %8695 = vmatpush.bf16.msra.mxu0 %v8530
      %8696 = vmatpush.bf16.msra.mxu0 %v8521
      %8697 = vmatmul.bf16.gmra.mxu0 %v8192
      %v8698 = vpop.f32.mrf.mxu0
      %v8699 = vadd.f32 %v8279, %v8698
      %v8700 = vpop.f32.mrf.mxu0
      %8701 = vdwg.mxu0
      %8702 = vmatpush.bf16.msra.mxu0 %v8585
      %8703 = vmatpush.bf16.msra.mxu0 %v8576
      %8704 = vmatpush.bf16.msra.mxu0 %v8567
      %8705 = vmatpush.bf16.msra.mxu0 %v8558
      %8706 = vmatpush.bf16.msra.mxu0 %v8549
      %8707 = vmatpush.bf16.msra.mxu0 %v8540
      %8708 = vmatpush.bf16.msra.mxu0 %v8531
      %8709 = vmatpush.bf16.msra.mxu0 %v8522
      %8710 = vmatmul.bf16.gmra.mxu0 %v8192
      %v8711 = vpop.f32.mrf.mxu0
      %v8712 = vadd.f32 %v8280, %v8711
      %v8713 = vpop.f32.mrf.mxu0
      %8714 = vdwg.mxu0
      %8715 = vmatpush.bf16.msra.mxu0 %v8586
      %8716 = vmatpush.bf16.msra.mxu0 %v8577
      %8717 = vmatpush.bf16.msra.mxu0 %v8568
      %8718 = vmatpush.bf16.msra.mxu0 %v8559
      %8719 = vmatpush.bf16.msra.mxu0 %v8550
      %8720 = vmatpush.bf16.msra.mxu0 %v8541
      %8721 = vmatpush.bf16.msra.mxu0 %v8532
      %8722 = vmatpush.bf16.msra.mxu0 %v8523
      %8723 = vmatmul.bf16.gmra.mxu0 %v8192
      %v8724 = vpop.f32.mrf.mxu0
      %v8725 = vadd.f32 %v8281, %v8724
      %v8726 = vpop.f32.mrf.mxu0
      %8727 = vdwg.mxu0
      %8728 = vmatpush.bf16.msra.mxu0 %v8587
      %8729 = vmatpush.bf16.msra.mxu0 %v8578
      %8730 = vmatpush.bf16.msra.mxu0 %v8569
      %8731 = vmatpush.bf16.msra.mxu0 %v8560
      %8732 = vmatpush.bf16.msra.mxu0 %v8551
      %8733 = vmatpush.bf16.msra.mxu0 %v8542
      %8734 = vmatpush.bf16.msra.mxu0 %v8533
      %8735 = vmatpush.bf16.msra.mxu0 %v8524
      %8736 = vmatmul.bf16.gmra.mxu0 %v8192
      %v8737 = vpop.f32.mrf.mxu0
      %v8738 = vadd.f32 %v8282, %v8737
      %v8739 = vpop.f32.mrf.mxu0
      %8740 = vdwg.mxu0
      %8741 = vmatpush.bf16.msra.mxu0 %v8588
      %8742 = vmatpush.bf16.msra.mxu0 %v8579
      %8743 = vmatpush.bf16.msra.mxu0 %v8570
      %8744 = vmatpush.bf16.msra.mxu0 %v8561
      %8745 = vmatpush.bf16.msra.mxu0 %v8552
      %8746 = vmatpush.bf16.msra.mxu0 %v8543
      %8747 = vmatpush.bf16.msra.mxu0 %v8534
      %8748 = vmatpush.bf16.msra.mxu0 %v8525
      %8749 = vmatmul.bf16.gmra.mxu0 %v8192
      %v8750 = vpop.f32.mrf.mxu0
      %v8751 = vadd.f32 %v8283, %v8750
      %v8752 = vpop.f32.mrf.mxu0
      %8753 = vdwg.mxu0
      %8754 = vmatpush.bf16.msra.mxu0 %v8589
      %8755 = vmatpush.bf16.msra.mxu0 %v8580
      %8756 = vmatpush.bf16.msra.mxu0 %v8571
      %8757 = vmatpush.bf16.msra.mxu0 %v8562
      %8758 = vmatpush.bf16.msra.mxu0 %v8553
      %8759 = vmatpush.bf16.msra.mxu0 %v8544
      %8760 = vmatpush.bf16.msra.mxu0 %v8535
      %8761 = vmatpush.bf16.msra.mxu0 %v8526
      %8762 = vmatmul.bf16.gmra.mxu0 %v8192
      %v8763 = vpop.f32.mrf.mxu0
      %v8764 = vadd.f32 %v8284, %v8763
      %v8765 = vpop.f32.mrf.mxu0
      %8766 = vdwg.mxu0
      %8767 = vmatpush.bf16.msra.mxu0 %v8590
      %8768 = vmatpush.bf16.msra.mxu0 %v8581
      %8769 = vmatpush.bf16.msra.mxu0 %v8572
      %8770 = vmatpush.bf16.msra.mxu0 %v8563
      %8771 = vmatpush.bf16.msra.mxu0 %v8554
      %8772 = vmatpush.bf16.msra.mxu0 %v8545
      %8773 = vmatpush.bf16.msra.mxu0 %v8536
      %8774 = vmatpush.bf16.msra.mxu0 %v8527
      %8775 = vmatmul.bf16.gmra.mxu0 %v8192
      %v8776 = vpop.f32.mrf.mxu0
      %v8777 = vadd.f32 %v8285, %v8776
      %v8778 = vpop.f32.mrf.mxu0
      %8779 = vdwg.mxu0
      %v8780 = vmul.f32 %v8673, 0.5
      %v8781 = vmul.f32 %v8686, 0.5
      %v8782 = vmul.f32 %v8699, 0.5
      %v8783 = vmul.f32 %v8712, 0.5
      %v8784 = vmul.f32 %v8725, 0.5
      %v8785 = vmul.f32 %v8738, 0.5
      %v8786 = vmul.f32 %v8751, 0.5
      %v8787 = vmul.f32 %v8764, 0.5
      %v8788 = vmul.f32 %v8777, 0.5
      %v8789 = vtanh.pop %v8780
      %v8790 = vtanh.pop %v8781
      %v8791 = vtanh.pop %v8782
      %v8792 = vtanh.pop %v8783
      %v8793 = vtanh.pop %v8784
      %v8794 = vtanh.pop %v8785
      %v8795 = vtanh.pop %v8786
      %v8796 = vtanh.pop %v8787
      %v8797 = vtanh.pop %v8788
      %v8798 = vmul.f32 %v8789, 0.5
      %v8799 = vmul.f32 %v8790, 0.5
      %v8800 = vmul.f32 %v8791, 0.5
      %v8801 = vmul.f32 %v8792, 0.5
      %v8802 = vmul.f32 %v8793, 0.5
      %v8803 = vmul.f32 %v8794, 0.5
      %v8804 = vmul.f32 %v8795, 0.5
      %v8805 = vmul.f32 %v8796, 0.5
      %v8806 = vmul.f32 %v8797, 0.5
      %v8807 = vadd.f32 %v8798, 0.5
      %v8808 = vadd.f32 %v8799, 0.5
      %v8809 = vadd.f32 %v8800, 0.5
      %v8810 = vadd.f32 %v8801, 0.5
      %v8811 = vadd.f32 %v8802, 0.5
      %v8812 = vadd.f32 %v8803, 0.5
      %v8813 = vadd.f32 %v8804, 0.5
      %v8814 = vadd.f32 %v8805, 0.5
      %v8815 = vadd.f32 %v8806, 0.5
      %8816 = vst [vmem:[%s251] sm:$0xff] %v8807
      %8817 = vst [vmem:[%s251 + $0x8] sm:$0xff] %v8808
      %8818 = vst [vmem:[%s251 + $0x10] sm:$0xff] %v8809
      %8819 = vst [vmem:[%s251 + $0x18] sm:$0xff] %v8810
      %8820 = vst [vmem:[%s251 + $0x20] sm:$0xff] %v8811
      %8821 = vst [vmem:[%s251 + $0x28] sm:$0xff] %v8812
      %8822 = vst [vmem:[%s251 + $0x30] sm:$0xff] %v8813
      %8823 = vst [vmem:[%s251 + $0x38] sm:$0xff] %v8814
      %8824 = vst [vmem:[%s251 + $0x40] sm:$0xff] %v8815
      %v8825 = vld [vmem:[%s3 + $0x24] sm:$0xff]
      %v8826 = vld [vmem:[%s3 + $0x2c] sm:$0xff]
      %v8827 = vld [vmem:[%s3 + $0x34] sm:$0xff]
      %v8828 = vld [vmem:[%s3 + $0x3c] sm:$0xff]
      %v8829 = vld [vmem:[%s3 + $0x44] sm:$0xf]
      %v8830 = vld [vmem:[%s3 + $0x18c] sm:$0xff]
      %v8831 = vld [vmem:[%s3 + $0x194] sm:$0xff]
      %v8832 = vld [vmem:[%s3 + $0x19c] sm:$0xff]
      %v8833 = vld [vmem:[%s3 + $0x1a4] sm:$0xff]
      %v8834 = vld [vmem:[%s3 + $0x1ac] sm:$0xf]
      %v8835 = vld [vmem:[%s3 + $0x2f4] sm:$0xff]
      %v8836 = vld [vmem:[%s3 + $0x2fc] sm:$0xff]
      %v8837 = vld [vmem:[%s3 + $0x304] sm:$0xff]
      %v8838 = vld [vmem:[%s3 + $0x30c] sm:$0xff]
      %v8839 = vld [vmem:[%s3 + $0x314] sm:$0xf]
      %v8840 = vld [vmem:[%s3 + $0x45c] sm:$0xff]
      %v8841 = vld [vmem:[%s3 + $0x464] sm:$0xff]
      %v8842 = vld [vmem:[%s3 + $0x46c] sm:$0xff]
      %v8843 = vld [vmem:[%s3 + $0x474] sm:$0xff]
      %v8844 = vld [vmem:[%s3 + $0x47c] sm:$0xf]
      %v8845 = vld [vmem:[%s3 + $0x5c4] sm:$0xff]
      %v8846 = vld [vmem:[%s3 + $0x5cc] sm:$0xff]
      %v8847 = vld [vmem:[%s3 + $0x5d4] sm:$0xff]
      %v8848 = vld [vmem:[%s3 + $0x5dc] sm:$0xff]
      %v8849 = vld [vmem:[%s3 + $0x5e4] sm:$0xf]
      %v8850 = vld [vmem:[%s3 + $0x72c] sm:$0xff]
      %v8851 = vld [vmem:[%s3 + $0x734] sm:$0xff]
      %v8852 = vld [vmem:[%s3 + $0x73c] sm:$0xff]
      %v8853 = vld [vmem:[%s3 + $0x744] sm:$0xff]
      %v8854 = vld [vmem:[%s3 + $0x74c] sm:$0xf]
      %v8855 = vld [vmem:[%s3 + $0x894] sm:$0xff]
      %v8856 = vld [vmem:[%s3 + $0x89c] sm:$0xff]
      %v8857 = vld [vmem:[%s3 + $0x8a4] sm:$0xff]
      %v8858 = vld [vmem:[%s3 + $0x8ac] sm:$0xff]
      %v8859 = vld [vmem:[%s3 + $0x8b4] sm:$0xf]
      %v8860 = vld [vmem:[%s3 + $0x9fc] sm:$0xff]
      %v8861 = vld [vmem:[%s3 + $0xa04] sm:$0xff]
      %v8862 = vld [vmem:[%s3 + $0xa0c] sm:$0xff]
      %v8863 = vld [vmem:[%s3 + $0xa14] sm:$0xff]
      %v8864 = vld [vmem:[%s3 + $0xa1c] sm:$0xf]
      %v8865 = vld [vmem:[%s3 + $0xb64] sm:$0xff]
      %v8866 = vld [vmem:[%s3 + $0xb6c] sm:$0xff]
      %v8867 = vld [vmem:[%s3 + $0xb74] sm:$0xff]
      %v8868 = vld [vmem:[%s3 + $0xb7c] sm:$0xff]
      %v8869 = vld [vmem:[%s3 + $0xb84] sm:$0xf]
      %v8870 = vld [vmem:[%s3 + $0xccc] sm:$0xff]
      %v8871 = vld [vmem:[%s3 + $0xcd4] sm:$0xff]
      %v8872 = vld [vmem:[%s3 + $0xcdc] sm:$0xff]
      %v8873 = vld [vmem:[%s3 + $0xce4] sm:$0xff]
      %v8874 = vld [vmem:[%s3 + $0xcec] sm:$0xf]
      %v8875 = vld [vmem:[%s3 + $0xe34] sm:$0xff]
      %v8876 = vld [vmem:[%s3 + $0xe3c] sm:$0xff]
      %v8877 = vld [vmem:[%s3 + $0xe44] sm:$0xff]
      %v8878 = vld [vmem:[%s3 + $0xe4c] sm:$0xff]
      %v8879 = vld [vmem:[%s3 + $0xe54] sm:$0xf]
      %v8880 = vld [vmem:[%s3 + $0xf9c] sm:$0xff]
      %v8881 = vld [vmem:[%s3 + $0xfa4] sm:$0xff]
      %v8882 = vld [vmem:[%s3 + $0xfac] sm:$0xff]
      %v8883 = vld [vmem:[%s3 + $0xfb4] sm:$0xff]
      %v8884 = vld [vmem:[%s3 + $0xfbc] sm:$0xf]
      %v8885 = vld [vmem:[%s3 + $0x1104] sm:$0xff]
      %v8886 = vld [vmem:[%s3 + $0x110c] sm:$0xff]
      %v8887 = vld [vmem:[%s3 + $0x1114] sm:$0xff]
      %v8888 = vld [vmem:[%s3 + $0x111c] sm:$0xff]
      %v8889 = vld [vmem:[%s3 + $0x1124] sm:$0xf]
      %v8890 = vld [vmem:[%s3 + $0x126c] sm:$0xff]
      %v8891 = vld [vmem:[%s3 + $0x1274] sm:$0xff]
      %v8892 = vld [vmem:[%s3 + $0x127c] sm:$0xff]
      %v8893 = vld [vmem:[%s3 + $0x1284] sm:$0xff]
      %v8894 = vld [vmem:[%s3 + $0x128c] sm:$0xf]
      %v8895 = vld [vmem:[%s3 + $0x13d4] sm:$0xff]
      %v8896 = vld [vmem:[%s3 + $0x13dc] sm:$0xff]
      %v8897 = vld [vmem:[%s3 + $0x13e4] sm:$0xff]
      %v8898 = vld [vmem:[%s3 + $0x13ec] sm:$0xff]
      %v8899 = vld [vmem:[%s3 + $0x13f4] sm:$0xf]
      %v8900 = vld [vmem:[%s3 + $0x153c] sm:$0xff]
      %v8901 = vld [vmem:[%s3 + $0x1544] sm:$0xff]
      %v8902 = vld [vmem:[%s3 + $0x154c] sm:$0xff]
      %v8903 = vld [vmem:[%s3 + $0x1554] sm:$0xff]
      %v8904 = vld [vmem:[%s3 + $0x155c] sm:$0xf]
      %v8905 = vld [vmem:[%s5 + $0x9] sm:$0xff]
      %v8906 = vld [vmem:[%s5 + $0x11] sm:$0x1]
      %v8909 = vperm.slane %v8905, 0
      %v8910 = vperm.slane %v8905, 1
      %v8911 = vperm.slane %v8905, 2
      %v8912 = vperm.slane %v8905, 3
      %v8913 = vperm.slane %v8905, 4
      %v8914 = vperm.slane %v8905, 5
      %v8915 = vperm.slane %v8905, 6
      %v8916 = vperm.slane %v8905, 7
      %v8917 = vperm.slane %v8906, 0
      %v9007 = vunpack.c.l.b16 %v8825
      %v9008 = vunpack.c.h.b16 %v8825
      %v9009 = vunpack.c.l.b16 %v8826
      %v9010 = vunpack.c.h.b16 %v8826
      %v9011 = vunpack.c.l.b16 %v8827
      %v9012 = vunpack.c.h.b16 %v8827
      %v9013 = vunpack.c.l.b16 %v8828
      %v9014 = vunpack.c.h.b16 %v8828
      %v9015 = vunpack.c.l.b16 %v8829
      %v9016 = vunpack.c.l.b16 %v8830
      %v9017 = vunpack.c.h.b16 %v8830
      %v9018 = vunpack.c.l.b16 %v8831
      %v9019 = vunpack.c.h.b16 %v8831
      %v9020 = vunpack.c.l.b16 %v8832
      %v9021 = vunpack.c.h.b16 %v8832
      %v9022 = vunpack.c.l.b16 %v8833
      %v9023 = vunpack.c.h.b16 %v8833
      %v9024 = vunpack.c.l.b16 %v8834
      %v9025 = vunpack.c.l.b16 %v8835
      %v9026 = vunpack.c.h.b16 %v8835
      %v9027 = vunpack.c.l.b16 %v8836
      %v9028 = vunpack.c.h.b16 %v8836
      %v9029 = vunpack.c.l.b16 %v8837
      %v9030 = vunpack.c.h.b16 %v8837
      %v9031 = vunpack.c.l.b16 %v8838
      %v9032 = vunpack.c.h.b16 %v8838
      %v9033 = vunpack.c.l.b16 %v8839
      %v9034 = vunpack.c.l.b16 %v8840
      %v9035 = vunpack.c.h.b16 %v8840
      %v9036 = vunpack.c.l.b16 %v8841
      %v9037 = vunpack.c.h.b16 %v8841
      %v9038 = vunpack.c.l.b16 %v8842
      %v9039 = vunpack.c.h.b16 %v8842
      %v9040 = vunpack.c.l.b16 %v8843
      %v9041 = vunpack.c.h.b16 %v8843
      %v9042 = vunpack.c.l.b16 %v8844
      %v9043 = vunpack.c.l.b16 %v8845
      %v9044 = vunpack.c.h.b16 %v8845
      %v9045 = vunpack.c.l.b16 %v8846
      %v9046 = vunpack.c.h.b16 %v8846
      %v9047 = vunpack.c.l.b16 %v8847
      %v9048 = vunpack.c.h.b16 %v8847
      %v9049 = vunpack.c.l.b16 %v8848
      %v9050 = vunpack.c.h.b16 %v8848
      %v9051 = vunpack.c.l.b16 %v8849
      %v9052 = vunpack.c.l.b16 %v8850
      %v9053 = vunpack.c.h.b16 %v8850
      %v9054 = vunpack.c.l.b16 %v8851
      %v9055 = vunpack.c.h.b16 %v8851
      %v9056 = vunpack.c.l.b16 %v8852
      %v9057 = vunpack.c.h.b16 %v8852
      %v9058 = vunpack.c.l.b16 %v8853
      %v9059 = vunpack.c.h.b16 %v8853
      %v9060 = vunpack.c.l.b16 %v8854
      %v9061 = vunpack.c.l.b16 %v8855
      %v9062 = vunpack.c.h.b16 %v8855
      %v9063 = vunpack.c.l.b16 %v8856
      %v9064 = vunpack.c.h.b16 %v8856
      %v9065 = vunpack.c.l.b16 %v8857
      %v9066 = vunpack.c.h.b16 %v8857
      %v9067 = vunpack.c.l.b16 %v8858
      %v9068 = vunpack.c.h.b16 %v8858
      %v9069 = vunpack.c.l.b16 %v8859
      %v9070 = vunpack.c.l.b16 %v8860
      %v9071 = vunpack.c.h.b16 %v8860
      %v9072 = vunpack.c.l.b16 %v8861
      %v9073 = vunpack.c.h.b16 %v8861
      %v9074 = vunpack.c.l.b16 %v8862
      %v9075 = vunpack.c.h.b16 %v8862
      %v9076 = vunpack.c.l.b16 %v8863
      %v9077 = vunpack.c.h.b16 %v8863
      %v9078 = vunpack.c.l.b16 %v8864
      %v9079 = vunpack.c.l.b16 %v8865
      %v9080 = vunpack.c.h.b16 %v8865
      %v9081 = vunpack.c.l.b16 %v8866
      %v9082 = vunpack.c.h.b16 %v8866
      %v9083 = vunpack.c.l.b16 %v8867
      %v9084 = vunpack.c.h.b16 %v8867
      %v9085 = vunpack.c.l.b16 %v8868
      %v9086 = vunpack.c.h.b16 %v8868
      %v9087 = vunpack.c.l.b16 %v8869
      %v9088 = vunpack.c.l.b16 %v8870
      %v9089 = vunpack.c.h.b16 %v8870
      %v9090 = vunpack.c.l.b16 %v8871
      %v9091 = vunpack.c.h.b16 %v8871
      %v9092 = vunpack.c.l.b16 %v8872
      %v9093 = vunpack.c.h.b16 %v8872
      %v9094 = vunpack.c.l.b16 %v8873
      %v9095 = vunpack.c.h.b16 %v8873
      %v9096 = vunpack.c.l.b16 %v8874
      %v9097 = vunpack.c.l.b16 %v8875
      %v9098 = vunpack.c.h.b16 %v8875
      %v9099 = vunpack.c.l.b16 %v8876
      %v9100 = vunpack.c.h.b16 %v8876
      %v9101 = vunpack.c.l.b16 %v8877
      %v9102 = vunpack.c.h.b16 %v8877
      %v9103 = vunpack.c.l.b16 %v8878
      %v9104 = vunpack.c.h.b16 %v8878
      %v9105 = vunpack.c.l.b16 %v8879
      %v9106 = vunpack.c.l.b16 %v8880
      %v9107 = vunpack.c.h.b16 %v8880
      %v9108 = vunpack.c.l.b16 %v8881
      %v9109 = vunpack.c.h.b16 %v8881
      %v9110 = vunpack.c.l.b16 %v8882
      %v9111 = vunpack.c.h.b16 %v8882
      %v9112 = vunpack.c.l.b16 %v8883
      %v9113 = vunpack.c.h.b16 %v8883
      %v9114 = vunpack.c.l.b16 %v8884
      %v9115 = vunpack.c.l.b16 %v8885
      %v9116 = vunpack.c.h.b16 %v8885
      %v9117 = vunpack.c.l.b16 %v8886
      %v9118 = vunpack.c.h.b16 %v8886
      %v9119 = vunpack.c.l.b16 %v8887
      %v9120 = vunpack.c.h.b16 %v8887
      %v9121 = vunpack.c.l.b16 %v8888
      %v9122 = vunpack.c.h.b16 %v8888
      %v9123 = vunpack.c.l.b16 %v8889
      %v9124 = vunpack.c.l.b16 %v8890
      %v9125 = vunpack.c.h.b16 %v8890
      %v9126 = vunpack.c.l.b16 %v8891
      %v9127 = vunpack.c.h.b16 %v8891
      %v9128 = vunpack.c.l.b16 %v8892
      %v9129 = vunpack.c.h.b16 %v8892
      %v9130 = vunpack.c.l.b16 %v8893
      %v9131 = vunpack.c.h.b16 %v8893
      %v9132 = vunpack.c.l.b16 %v8894
      %v9133 = vunpack.c.l.b16 %v8895
      %v9134 = vunpack.c.h.b16 %v8895
      %v9135 = vunpack.c.l.b16 %v8896
      %v9136 = vunpack.c.h.b16 %v8896
      %v9137 = vunpack.c.l.b16 %v8897
      %v9138 = vunpack.c.h.b16 %v8897
      %v9139 = vunpack.c.l.b16 %v8898
      %v9140 = vunpack.c.h.b16 %v8898
      %v9141 = vunpack.c.l.b16 %v8899
      %v9142 = vunpack.c.l.b16 %v8900
      %v9143 = vunpack.c.h.b16 %v8900
      %v9144 = vunpack.c.l.b16 %v8901
      %v9145 = vunpack.c.h.b16 %v8901
      %v9146 = vunpack.c.l.b16 %v8902
      %v9147 = vunpack.c.h.b16 %v8902
      %v9148 = vunpack.c.l.b16 %v8903
      %v9149 = vunpack.c.h.b16 %v8903
      %v9150 = vunpack.c.l.b16 %v8904
      %v9151 = vpack.c.b16 %v9016, %v9007
      %v9152 = vpack.c.b16 %v9017, %v9008
      %v9153 = vpack.c.b16 %v9018, %v9009
      %v9154 = vpack.c.b16 %v9019, %v9010
      %v9155 = vpack.c.b16 %v9020, %v9011
      %v9156 = vpack.c.b16 %v9021, %v9012
      %v9157 = vpack.c.b16 %v9022, %v9013
      %v9158 = vpack.c.b16 %v9023, %v9014
      %v9159 = vpack.c.b16 %v9024, %v9015
      %v9160 = vpack.c.b16 %v9034, %v9025
      %v9161 = vpack.c.b16 %v9035, %v9026
      %v9162 = vpack.c.b16 %v9036, %v9027
      %v9163 = vpack.c.b16 %v9037, %v9028
      %v9164 = vpack.c.b16 %v9038, %v9029
      %v9165 = vpack.c.b16 %v9039, %v9030
      %v9166 = vpack.c.b16 %v9040, %v9031
      %v9167 = vpack.c.b16 %v9041, %v9032
      %v9168 = vpack.c.b16 %v9042, %v9033
      %v9169 = vpack.c.b16 %v9052, %v9043
      %v9170 = vpack.c.b16 %v9053, %v9044
      %v9171 = vpack.c.b16 %v9054, %v9045
      %v9172 = vpack.c.b16 %v9055, %v9046
      %v9173 = vpack.c.b16 %v9056, %v9047
      %v9174 = vpack.c.b16 %v9057, %v9048
      %v9175 = vpack.c.b16 %v9058, %v9049
      %v9176 = vpack.c.b16 %v9059, %v9050
      %v9177 = vpack.c.b16 %v9060, %v9051
      %v9178 = vpack.c.b16 %v9070, %v9061
      %v9179 = vpack.c.b16 %v9071, %v9062
      %v9180 = vpack.c.b16 %v9072, %v9063
      %v9181 = vpack.c.b16 %v9073, %v9064
      %v9182 = vpack.c.b16 %v9074, %v9065
      %v9183 = vpack.c.b16 %v9075, %v9066
      %v9184 = vpack.c.b16 %v9076, %v9067
      %v9185 = vpack.c.b16 %v9077, %v9068
      %v9186 = vpack.c.b16 %v9078, %v9069
      %v9187 = vpack.c.b16 %v9088, %v9079
      %v9188 = vpack.c.b16 %v9089, %v9080
      %v9189 = vpack.c.b16 %v9090, %v9081
      %v9190 = vpack.c.b16 %v9091, %v9082
      %v9191 = vpack.c.b16 %v9092, %v9083
      %v9192 = vpack.c.b16 %v9093, %v9084
      %v9193 = vpack.c.b16 %v9094, %v9085
      %v9194 = vpack.c.b16 %v9095, %v9086
      %v9195 = vpack.c.b16 %v9096, %v9087
      %v9196 = vpack.c.b16 %v9106, %v9097
      %v9197 = vpack.c.b16 %v9107, %v9098
      %v9198 = vpack.c.b16 %v9108, %v9099
      %v9199 = vpack.c.b16 %v9109, %v9100
      %v9200 = vpack.c.b16 %v9110, %v9101
      %v9201 = vpack.c.b16 %v9111, %v9102
      %v9202 = vpack.c.b16 %v9112, %v9103
      %v9203 = vpack.c.b16 %v9113, %v9104
      %v9204 = vpack.c.b16 %v9114, %v9105
      %v9205 = vpack.c.b16 %v9124, %v9115
      %v9206 = vpack.c.b16 %v9125, %v9116
      %v9207 = vpack.c.b16 %v9126, %v9117
      %v9208 = vpack.c.b16 %v9127, %v9118
      %v9209 = vpack.c.b16 %v9128, %v9119
      %v9210 = vpack.c.b16 %v9129, %v9120
      %v9211 = vpack.c.b16 %v9130, %v9121
      %v9212 = vpack.c.b16 %v9131, %v9122
      %v9213 = vpack.c.b16 %v9132, %v9123
      %v9214 = vpack.c.b16 %v9142, %v9133
      %v9215 = vpack.c.b16 %v9143, %v9134
      %v9216 = vpack.c.b16 %v9144, %v9135
      %v9217 = vpack.c.b16 %v9145, %v9136
      %v9218 = vpack.c.b16 %v9146, %v9137
      %v9219 = vpack.c.b16 %v9147, %v9138
      %v9220 = vpack.c.b16 %v9148, %v9139
      %v9221 = vpack.c.b16 %v9149, %v9140
      %v9222 = vpack.c.b16 %v9150, %v9141
      %9295 = vmatpush.bf16.msra.mxu0 %v9214
      %9296 = vmatpush.bf16.msra.mxu0 %v9205
      %9297 = vmatpush.bf16.msra.mxu0 %v9196
      %9298 = vmatpush.bf16.msra.mxu0 %v9187
      %9299 = vmatpush.bf16.msra.mxu0 %v9178
      %9300 = vmatpush.bf16.msra.mxu0 %v9169
      %9301 = vmatpush.bf16.msra.mxu0 %v9160
      %9302 = vmatpush.bf16.msra.mxu0 %v9151
      %9303 = vmatmul.bf16.gmra.mxu0 %v8192
      %v9304 = vpop.f32.mrf.mxu0
      %v9305 = vadd.f32 %v8909, %v9304
      %v9306 = vpop.f32.mrf.mxu0
      %9307 = vdwg.mxu0
      %9308 = vmatpush.bf16.msra.mxu0 %v9215
      %9309 = vmatpush.bf16.msra.mxu0 %v9206
      %9310 = vmatpush.bf16.msra.mxu0 %v9197
      %9311 = vmatpush.bf16.msra.mxu0 %v9188
      %9312 = vmatpush.bf16.msra.mxu0 %v9179
      %9313 = vmatpush.bf16.msra.mxu0 %v9170
      %9314 = vmatpush.bf16.msra.mxu0 %v9161
      %9315 = vmatpush.bf16.msra.mxu0 %v9152
      %9316 = vmatmul.bf16.gmra.mxu0 %v8192
      %v9317 = vpop.f32.mrf.mxu0
      %v9318 = vadd.f32 %v8910, %v9317
      %v9319 = vpop.f32.mrf.mxu0
      %9320 = vdwg.mxu0
      %9321 = vmatpush.bf16.msra.mxu0 %v9216
      %9322 = vmatpush.bf16.msra.mxu0 %v9207
      %9323 = vmatpush.bf16.msra.mxu0 %v9198
      %9324 = vmatpush.bf16.msra.mxu0 %v9189
      %9325 = vmatpush.bf16.msra.mxu0 %v9180
      %9326 = vmatpush.bf16.msra.mxu0 %v9171
      %9327 = vmatpush.bf16.msra.mxu0 %v9162
      %9328 = vmatpush.bf16.msra.mxu0 %v9153
      %9329 = vmatmul.bf16.gmra.mxu0 %v8192
      %v9330 = vpop.f32.mrf.mxu0
      %v9331 = vadd.f32 %v8911, %v9330
      %v9332 = vpop.f32.mrf.mxu0
      %9333 = vdwg.mxu0
      %9334 = vmatpush.bf16.msra.mxu0 %v9217
      %9335 = vmatpush.bf16.msra.mxu0 %v9208
      %9336 = vmatpush.bf16.msra.mxu0 %v9199
      %9337 = vmatpush.bf16.msra.mxu0 %v9190
      %9338 = vmatpush.bf16.msra.mxu0 %v9181
      %9339 = vmatpush.bf16.msra.mxu0 %v9172
      %9340 = vmatpush.bf16.msra.mxu0 %v9163
      %9341 = vmatpush.bf16.msra.mxu0 %v9154
      %9342 = vmatmul.bf16.gmra.mxu0 %v8192
      %v9343 = vpop.f32.mrf.mxu0
      %v9344 = vadd.f32 %v8912, %v9343
      %v9345 = vpop.f32.mrf.mxu0
      %9346 = vdwg.mxu0
      %9347 = vmatpush.bf16.msra.mxu0 %v9218
      %9348 = vmatpush.bf16.msra.mxu0 %v9209
      %9349 = vmatpush.bf16.msra.mxu0 %v9200
      %9350 = vmatpush.bf16.msra.mxu0 %v9191
      %9351 = vmatpush.bf16.msra.mxu0 %v9182
      %9352 = vmatpush.bf16.msra.mxu0 %v9173
      %9353 = vmatpush.bf16.msra.mxu0 %v9164
      %9354 = vmatpush.bf16.msra.mxu0 %v9155
      %9355 = vmatmul.bf16.gmra.mxu0 %v8192
      %v9356 = vpop.f32.mrf.mxu0
      %v9357 = vadd.f32 %v8913, %v9356
      %v9358 = vpop.f32.mrf.mxu0
      %9359 = vdwg.mxu0
      %9360 = vmatpush.bf16.msra.mxu0 %v9219
      %9361 = vmatpush.bf16.msra.mxu0 %v9210
      %9362 = vmatpush.bf16.msra.mxu0 %v9201
      %9363 = vmatpush.bf16.msra.mxu0 %v9192
      %9364 = vmatpush.bf16.msra.mxu0 %v9183
      %9365 = vmatpush.bf16.msra.mxu0 %v9174
      %9366 = vmatpush.bf16.msra.mxu0 %v9165
      %9367 = vmatpush.bf16.msra.mxu0 %v9156
      %9368 = vmatmul.bf16.gmra.mxu0 %v8192
      %v9369 = vpop.f32.mrf.mxu0
      %v9370 = vadd.f32 %v8914, %v9369
      %v9371 = vpop.f32.mrf.mxu0
      %9372 = vdwg.mxu0
      %9373 = vmatpush.bf16.msra.mxu0 %v9220
      %9374 = vmatpush.bf16.msra.mxu0 %v9211
      %9375 = vmatpush.bf16.msra.mxu0 %v9202
      %9376 = vmatpush.bf16.msra.mxu0 %v9193
      %9377 = vmatpush.bf16.msra.mxu0 %v9184
      %9378 = vmatpush.bf16.msra.mxu0 %v9175
      %9379 = vmatpush.bf16.msra.mxu0 %v9166
      %9380 = vmatpush.bf16.msra.mxu0 %v9157
      %9381 = vmatmul.bf16.gmra.mxu0 %v8192
      %v9382 = vpop.f32.mrf.mxu0
      %v9383 = vadd.f32 %v8915, %v9382
      %v9384 = vpop.f32.mrf.mxu0
      %9385 = vdwg.mxu0
      %9386 = vmatpush.bf16.msra.mxu0 %v9221
      %9387 = vmatpush.bf16.msra.mxu0 %v9212
      %9388 = vmatpush.bf16.msra.mxu0 %v9203
      %9389 = vmatpush.bf16.msra.mxu0 %v9194
      %9390 = vmatpush.bf16.msra.mxu0 %v9185
      %9391 = vmatpush.bf16.msra.mxu0 %v9176
      %9392 = vmatpush.bf16.msra.mxu0 %v9167
      %9393 = vmatpush.bf16.msra.mxu0 %v9158
      %9394 = vmatmul.bf16.gmra.mxu0 %v8192
      %v9395 = vpop.f32.mrf.mxu0
      %v9396 = vadd.f32 %v8916, %v9395
      %v9397 = vpop.f32.mrf.mxu0
      %9398 = vdwg.mxu0
      %9399 = vmatpush.bf16.msra.mxu0 %v9222
      %9400 = vmatpush.bf16.msra.mxu0 %v9213
      %9401 = vmatpush.bf16.msra.mxu0 %v9204
      %9402 = vmatpush.bf16.msra.mxu0 %v9195
      %9403 = vmatpush.bf16.msra.mxu0 %v9186
      %9404 = vmatpush.bf16.msra.mxu0 %v9177
      %9405 = vmatpush.bf16.msra.mxu0 %v9168
      %9406 = vmatpush.bf16.msra.mxu0 %v9159
      %9407 = vmatmul.bf16.gmra.mxu0 %v8192
      %v9408 = vpop.f32.mrf.mxu0
      %v9409 = vadd.f32 %v8917, %v9408
      %v9410 = vpop.f32.mrf.mxu0
      %9411 = vdwg.mxu0
      %v9412 = vmul.f32 %v9305, 0.5
      %v9413 = vmul.f32 %v9318, 0.5
      %v9414 = vmul.f32 %v9331, 0.5
      %v9415 = vmul.f32 %v9344, 0.5
      %v9416 = vmul.f32 %v9357, 0.5
      %v9417 = vmul.f32 %v9370, 0.5
      %v9418 = vmul.f32 %v9383, 0.5
      %v9419 = vmul.f32 %v9396, 0.5
      %v9420 = vmul.f32 %v9409, 0.5
      %v9421 = vtanh.pop %v9412
      %v9422 = vtanh.pop %v9413
      %v9423 = vtanh.pop %v9414
      %v9424 = vtanh.pop %v9415
      %v9425 = vtanh.pop %v9416
      %v9426 = vtanh.pop %v9417
      %v9427 = vtanh.pop %v9418
      %v9428 = vtanh.pop %v9419
      %v9429 = vtanh.pop %v9420
      %v9430 = vmul.f32 %v9421, 0.5
      %v9431 = vmul.f32 %v9422, 0.5
      %v9432 = vmul.f32 %v9423, 0.5
      %v9433 = vmul.f32 %v9424, 0.5
      %v9434 = vmul.f32 %v9425, 0.5
      %v9435 = vmul.f32 %v9426, 0.5
      %v9436 = vmul.f32 %v9427, 0.5
      %v9437 = vmul.f32 %v9428, 0.5
      %v9438 = vmul.f32 %v9429, 0.5
      %v9439 = vadd.f32 %v9430, 0.5
      %v9440 = vadd.f32 %v9431, 0.5
      %v9441 = vadd.f32 %v9432, 0.5
      %v9442 = vadd.f32 %v9433, 0.5
      %v9443 = vadd.f32 %v9434, 0.5
      %v9444 = vadd.f32 %v9435, 0.5
      %v9445 = vadd.f32 %v9436, 0.5
      %v9446 = vadd.f32 %v9437, 0.5
      %v9447 = vadd.f32 %v9438, 0.5
      %9448 = vst [vmem:[%s251 + $0x48] sm:$0xff] %v9439
      %9449 = vst [vmem:[%s251 + $0x50] sm:$0xff] %v9440
      %9450 = vst [vmem:[%s251 + $0x58] sm:$0xff] %v9441
      %9451 = vst [vmem:[%s251 + $0x60] sm:$0xff] %v9442
      %9452 = vst [vmem:[%s251 + $0x68] sm:$0xff] %v9443
      %9453 = vst [vmem:[%s251 + $0x70] sm:$0xff] %v9444
      %9454 = vst [vmem:[%s251 + $0x78] sm:$0xff] %v9445
      %9455 = vst [vmem:[%s251 + $0x80] sm:$0xff] %v9446
      %9456 = vst [vmem:[%s251 + $0x88] sm:$0xff] %v9447
      %v9457 = vld [vmem:[%s3 + $0x48] sm:$0xff]
      %v9458 = vld [vmem:[%s3 + $0x50] sm:$0xff]
      %v9459 = vld [vmem:[%s3 + $0x58] sm:$0xff]
      %v9460 = vld [vmem:[%s3 + $0x60] sm:$0xff]
      %v9461 = vld [vmem:[%s3 + $0x68] sm:$0xf]
      %v9462 = vld [vmem:[%s3 + $0x1b0] sm:$0xff]
      %v9463 = vld [vmem:[%s3 + $0x1b8] sm:$0xff]
      %v9464 = vld [vmem:[%s3 + $0x1c0] sm:$0xff]
      %v9465 = vld [vmem:[%s3 + $0x1c8] sm:$0xff]
      %v9466 = vld [vmem:[%s3 + $0x1d0] sm:$0xf]
      %v9467 = vld [vmem:[%s3 + $0x318] sm:$0xff]
      %v9468 = vld [vmem:[%s3 + $0x320] sm:$0xff]
      %v9469 = vld [vmem:[%s3 + $0x328] sm:$0xff]
      %v9470 = vld [vmem:[%s3 + $0x330] sm:$0xff]
      %v9471 = vld [vmem:[%s3 + $0x338] sm:$0xf]
      %v9472 = vld [vmem:[%s3 + $0x480] sm:$0xff]
      %v9473 = vld [vmem:[%s3 + $0x488] sm:$0xff]
      %v9474 = vld [vmem:[%s3 + $0x490] sm:$0xff]
      %v9475 = vld [vmem:[%s3 + $0x498] sm:$0xff]
      %v9476 = vld [vmem:[%s3 + $0x4a0] sm:$0xf]
      %v9477 = vld [vmem:[%s3 + $0x5e8] sm:$0xff]
      %v9478 = vld [vmem:[%s3 + $0x5f0] sm:$0xff]
      %v9479 = vld [vmem:[%s3 + $0x5f8] sm:$0xff]
      %v9480 = vld [vmem:[%s3 + $0x600] sm:$0xff]
      %v9481 = vld [vmem:[%s3 + $0x608] sm:$0xf]
      %v9482 = vld [vmem:[%s3 + $0x750] sm:$0xff]
      %v9483 = vld [vmem:[%s3 + $0x758] sm:$0xff]
      %v9484 = vld [vmem:[%s3 + $0x760] sm:$0xff]
      %v9485 = vld [vmem:[%s3 + $0x768] sm:$0xff]
      %v9486 = vld [vmem:[%s3 + $0x770] sm:$0xf]
      %v9487 = vld [vmem:[%s3 + $0x8b8] sm:$0xff]
      %v9488 = vld [vmem:[%s3 + $0x8c0] sm:$0xff]
      %v9489 = vld [vmem:[%s3 + $0x8c8] sm:$0xff]
      %v9490 = vld [vmem:[%s3 + $0x8d0] sm:$0xff]
      %v9491 = vld [vmem:[%s3 + $0x8d8] sm:$0xf]
      %v9492 = vld [vmem:[%s3 + $0xa20] sm:$0xff]
      %v9493 = vld [vmem:[%s3 + $0xa28] sm:$0xff]
      %v9494 = vld [vmem:[%s3 + $0xa30] sm:$0xff]
      %v9495 = vld [vmem:[%s3 + $0xa38] sm:$0xff]
      %v9496 = vld [vmem:[%s3 + $0xa40] sm:$0xf]
      %v9497 = vld [vmem:[%s3 + $0xb88] sm:$0xff]
      %v9498 = vld [vmem:[%s3 + $0xb90] sm:$0xff]
      %v9499 = vld [vmem:[%s3 + $0xb98] sm:$0xff]
      %v9500 = vld [vmem:[%s3 + $0xba0] sm:$0xff]
      %v9501 = vld [vmem:[%s3 + $0xba8] sm:$0xf]
      %v9502 = vld [vmem:[%s3 + $0xcf0] sm:$0xff]
      %v9503 = vld [vmem:[%s3 + $0xcf8] sm:$0xff]
      %v9504 = vld [vmem:[%s3 + $0xd00] sm:$0xff]
      %v9505 = vld [vmem:[%s3 + $0xd08] sm:$0xff]
      %v9506 = vld [vmem:[%s3 + $0xd10] sm:$0xf]
      %v9507 = vld [vmem:[%s3 + $0xe58] sm:$0xff]
      %v9508 = vld [vmem:[%s3 + $0xe60] sm:$0xff]
      %v9509 = vld [vmem:[%s3 + $0xe68] sm:$0xff]
      %v9510 = vld [vmem:[%s3 + $0xe70] sm:$0xff]
      %v9511 = vld [vmem:[%s3 + $0xe78] sm:$0xf]
      %v9512 = vld [vmem:[%s3 + $0xfc0] sm:$0xff]
      %v9513 = vld [vmem:[%s3 + $0xfc8] sm:$0xff]
      %v9514 = vld [vmem:[%s3 + $0xfd0] sm:$0xff]
      %v9515 = vld [vmem:[%s3 + $0xfd8] sm:$0xff]
      %v9516 = vld [vmem:[%s3 + $0xfe0] sm:$0xf]
      %v9517 = vld [vmem:[%s3 + $0x1128] sm:$0xff]
      %v9518 = vld [vmem:[%s3 + $0x1130] sm:$0xff]
      %v9519 = vld [vmem:[%s3 + $0x1138] sm:$0xff]
      %v9520 = vld [vmem:[%s3 + $0x1140] sm:$0xff]
      %v9521 = vld [vmem:[%s3 + $0x1148] sm:$0xf]
      %v9522 = vld [vmem:[%s3 + $0x1290] sm:$0xff]
      %v9523 = vld [vmem:[%s3 + $0x1298] sm:$0xff]
      %v9524 = vld [vmem:[%s3 + $0x12a0] sm:$0xff]
      %v9525 = vld [vmem:[%s3 + $0x12a8] sm:$0xff]
      %v9526 = vld [vmem:[%s3 + $0x12b0] sm:$0xf]
      %v9527 = vld [vmem:[%s3 + $0x13f8] sm:$0xff]
      %v9528 = vld [vmem:[%s3 + $0x1400] sm:$0xff]
      %v9529 = vld [vmem:[%s3 + $0x1408] sm:$0xff]
      %v9530 = vld [vmem:[%s3 + $0x1410] sm:$0xff]
      %v9531 = vld [vmem:[%s3 + $0x1418] sm:$0xf]
      %v9532 = vld [vmem:[%s3 + $0x1560] sm:$0xff]
      %v9533 = vld [vmem:[%s3 + $0x1568] sm:$0xff]
      %v9534 = vld [vmem:[%s3 + $0x1570] sm:$0xff]
      %v9535 = vld [vmem:[%s3 + $0x1578] sm:$0xff]
      %v9536 = vld [vmem:[%s3 + $0x1580] sm:$0xf]
      %v9537 = vld [vmem:[%s5 + $0x12] sm:$0xff]
      %v9538 = vld [vmem:[%s5 + $0x1a] sm:$0x1]
      %v9541 = vperm.slane %v9537, 0
      %v9542 = vperm.slane %v9537, 1
      %v9543 = vperm.slane %v9537, 2
      %v9544 = vperm.slane %v9537, 3
      %v9545 = vperm.slane %v9537, 4
      %v9546 = vperm.slane %v9537, 5
      %v9547 = vperm.slane %v9537, 6
      %v9548 = vperm.slane %v9537, 7
      %v9549 = vperm.slane %v9538, 0
      %v9639 = vunpack.c.l.b16 %v9457
      %v9640 = vunpack.c.h.b16 %v9457
      %v9641 = vunpack.c.l.b16 %v9458
      %v9642 = vunpack.c.h.b16 %v9458
      %v9643 = vunpack.c.l.b16 %v9459
      %v9644 = vunpack.c.h.b16 %v9459
      %v9645 = vunpack.c.l.b16 %v9460
      %v9646 = vunpack.c.h.b16 %v9460
      %v9647 = vunpack.c.l.b16 %v9461
      %v9648 = vunpack.c.l.b16 %v9462
      %v9649 = vunpack.c.h.b16 %v9462
      %v9650 = vunpack.c.l.b16 %v9463
      %v9651 = vunpack.c.h.b16 %v9463
      %v9652 = vunpack.c.l.b16 %v9464
      %v9653 = vunpack.c.h.b16 %v9464
      %v9654 = vunpack.c.l.b16 %v9465
      %v9655 = vunpack.c.h.b16 %v9465
      %v9656 = vunpack.c.l.b16 %v9466
      %v9657 = vunpack.c.l.b16 %v9467
      %v9658 = vunpack.c.h.b16 %v9467
      %v9659 = vunpack.c.l.b16 %v9468
      %v9660 = vunpack.c.h.b16 %v9468
      %v9661 = vunpack.c.l.b16 %v9469
      %v9662 = vunpack.c.h.b16 %v9469
      %v9663 = vunpack.c.l.b16 %v9470
      %v9664 = vunpack.c.h.b16 %v9470
      %v9665 = vunpack.c.l.b16 %v9471
      %v9666 = vunpack.c.l.b16 %v9472
      %v9667 = vunpack.c.h.b16 %v9472
      %v9668 = vunpack.c.l.b16 %v9473
      %v9669 = vunpack.c.h.b16 %v9473
      %v9670 = vunpack.c.l.b16 %v9474
      %v9671 = vunpack.c.h.b16 %v9474
      %v9672 = vunpack.c.l.b16 %v9475
      %v9673 = vunpack.c.h.b16 %v9475
      %v9674 = vunpack.c.l.b16 %v9476
      %v9675 = vunpack.c.l.b16 %v9477
      %v9676 = vunpack.c.h.b16 %v9477
      %v9677 = vunpack.c.l.b16 %v9478
      %v9678 = vunpack.c.h.b16 %v9478
      %v9679 = vunpack.c.l.b16 %v9479
      %v9680 = vunpack.c.h.b16 %v9479
      %v9681 = vunpack.c.l.b16 %v9480
      %v9682 = vunpack.c.h.b16 %v9480
      %v9683 = vunpack.c.l.b16 %v9481
      %v9684 = vunpack.c.l.b16 %v9482
      %v9685 = vunpack.c.h.b16 %v9482
      %v9686 = vunpack.c.l.b16 %v9483
      %v9687 = vunpack.c.h.b16 %v9483
      %v9688 = vunpack.c.l.b16 %v9484
      %v9689 = vunpack.c.h.b16 %v9484
      %v9690 = vunpack.c.l.b16 %v9485
      %v9691 = vunpack.c.h.b16 %v9485
      %v9692 = vunpack.c.l.b16 %v9486
      %v9693 = vunpack.c.l.b16 %v9487
      %v9694 = vunpack.c.h.b16 %v9487
      %v9695 = vunpack.c.l.b16 %v9488
      %v9696 = vunpack.c.h.b16 %v9488
      %v9697 = vunpack.c.l.b16 %v9489
      %v9698 = vunpack.c.h.b16 %v9489
      %v9699 = vunpack.c.l.b16 %v9490
      %v9700 = vunpack.c.h.b16 %v9490
      %v9701 = vunpack.c.l.b16 %v9491
      %v9702 = vunpack.c.l.b16 %v9492
      %v9703 = vunpack.c.h.b16 %v9492
      %v9704 = vunpack.c.l.b16 %v9493
      %v9705 = vunpack.c.h.b16 %v9493
      %v9706 = vunpack.c.l.b16 %v9494
      %v9707 = vunpack.c.h.b16 %v9494
      %v9708 = vunpack.c.l.b16 %v9495
      %v9709 = vunpack.c.h.b16 %v9495
      %v9710 = vunpack.c.l.b16 %v9496
      %v9711 = vunpack.c.l.b16 %v9497
      %v9712 = vunpack.c.h.b16 %v9497
      %v9713 = vunpack.c.l.b16 %v9498
      %v9714 = vunpack.c.h.b16 %v9498
      %v9715 = vunpack.c.l.b16 %v9499
      %v9716 = vunpack.c.h.b16 %v9499
      %v9717 = vunpack.c.l.b16 %v9500
      %v9718 = vunpack.c.h.b16 %v9500
      %v9719 = vunpack.c.l.b16 %v9501
      %v9720 = vunpack.c.l.b16 %v9502
      %v9721 = vunpack.c.h.b16 %v9502
      %v9722 = vunpack.c.l.b16 %v9503
      %v9723 = vunpack.c.h.b16 %v9503
      %v9724 = vunpack.c.l.b16 %v9504
      %v9725 = vunpack.c.h.b16 %v9504
      %v9726 = vunpack.c.l.b16 %v9505
      %v9727 = vunpack.c.h.b16 %v9505
      %v9728 = vunpack.c.l.b16 %v9506
      %v9729 = vunpack.c.l.b16 %v9507
      %v9730 = vunpack.c.h.b16 %v9507
      %v9731 = vunpack.c.l.b16 %v9508
      %v9732 = vunpack.c.h.b16 %v9508
      %v9733 = vunpack.c.l.b16 %v9509
      %v9734 = vunpack.c.h.b16 %v9509
      %v9735 = vunpack.c.l.b16 %v9510
      %v9736 = vunpack.c.h.b16 %v9510
      %v9737 = vunpack.c.l.b16 %v9511
      %v9738 = vunpack.c.l.b16 %v9512
      %v9739 = vunpack.c.h.b16 %v9512
      %v9740 = vunpack.c.l.b16 %v9513
      %v9741 = vunpack.c.h.b16 %v9513
      %v9742 = vunpack.c.l.b16 %v9514
      %v9743 = vunpack.c.h.b16 %v9514
      %v9744 = vunpack.c.l.b16 %v9515
      %v9745 = vunpack.c.h.b16 %v9515
      %v9746 = vunpack.c.l.b16 %v9516
      %v9747 = vunpack.c.l.b16 %v9517
      %v9748 = vunpack.c.h.b16 %v9517
      %v9749 = vunpack.c.l.b16 %v9518
      %v9750 = vunpack.c.h.b16 %v9518
      %v9751 = vunpack.c.l.b16 %v9519
      %v9752 = vunpack.c.h.b16 %v9519
      %v9753 = vunpack.c.l.b16 %v9520
      %v9754 = vunpack.c.h.b16 %v9520
      %v9755 = vunpack.c.l.b16 %v9521
      %v9756 = vunpack.c.l.b16 %v9522
      %v9757 = vunpack.c.h.b16 %v9522
      %v9758 = vunpack.c.l.b16 %v9523
      %v9759 = vunpack.c.h.b16 %v9523
      %v9760 = vunpack.c.l.b16 %v9524
      %v9761 = vunpack.c.h.b16 %v9524
      %v9762 = vunpack.c.l.b16 %v9525
      %v9763 = vunpack.c.h.b16 %v9525
      %v9764 = vunpack.c.l.b16 %v9526
      %v9765 = vunpack.c.l.b16 %v9527
      %v9766 = vunpack.c.h.b16 %v9527
      %v9767 = vunpack.c.l.b16 %v9528
      %v9768 = vunpack.c.h.b16 %v9528
      %v9769 = vunpack.c.l.b16 %v9529
      %v9770 = vunpack.c.h.b16 %v9529
      %v9771 = vunpack.c.l.b16 %v9530
      %v9772 = vunpack.c.h.b16 %v9530
      %v9773 = vunpack.c.l.b16 %v9531
      %v9774 = vunpack.c.l.b16 %v9532
      %v9775 = vunpack.c.h.b16 %v9532
      %v9776 = vunpack.c.l.b16 %v9533
      %v9777 = vunpack.c.h.b16 %v9533
      %v9778 = vunpack.c.l.b16 %v9534
      %v9779 = vunpack.c.h.b16 %v9534
      %v9780 = vunpack.c.l.b16 %v9535
      %v9781 = vunpack.c.h.b16 %v9535
      %v9782 = vunpack.c.l.b16 %v9536
      %v9783 = vpack.c.b16 %v9648, %v9639
      %v9784 = vpack.c.b16 %v9649, %v9640
      %v9785 = vpack.c.b16 %v9650, %v9641
      %v9786 = vpack.c.b16 %v9651, %v9642
      %v9787 = vpack.c.b16 %v9652, %v9643
      %v9788 = vpack.c.b16 %v9653, %v9644
      %v9789 = vpack.c.b16 %v9654, %v9645
      %v9790 = vpack.c.b16 %v9655, %v9646
      %v9791 = vpack.c.b16 %v9656, %v9647
      %v9792 = vpack.c.b16 %v9666, %v9657
      %v9793 = vpack.c.b16 %v9667, %v9658
      %v9794 = vpack.c.b16 %v9668, %v9659
      %v9795 = vpack.c.b16 %v9669, %v9660
      %v9796 = vpack.c.b16 %v9670, %v9661
      %v9797 = vpack.c.b16 %v9671, %v9662
      %v9798 = vpack.c.b16 %v9672, %v9663
      %v9799 = vpack.c.b16 %v9673, %v9664
      %v9800 = vpack.c.b16 %v9674, %v9665
      %v9801 = vpack.c.b16 %v9684, %v9675
      %v9802 = vpack.c.b16 %v9685, %v9676
      %v9803 = vpack.c.b16 %v9686, %v9677
      %v9804 = vpack.c.b16 %v9687, %v9678
      %v9805 = vpack.c.b16 %v9688, %v9679
      %v9806 = vpack.c.b16 %v9689, %v9680
      %v9807 = vpack.c.b16 %v9690, %v9681
      %v9808 = vpack.c.b16 %v9691, %v9682
      %v9809 = vpack.c.b16 %v9692, %v9683
      %v9810 = vpack.c.b16 %v9702, %v9693
      %v9811 = vpack.c.b16 %v9703, %v9694
      %v9812 = vpack.c.b16 %v9704, %v9695
      %v9813 = vpack.c.b16 %v9705, %v9696
      %v9814 = vpack.c.b16 %v9706, %v9697
      %v9815 = vpack.c.b16 %v9707, %v9698
      %v9816 = vpack.c.b16 %v9708, %v9699
      %v9817 = vpack.c.b16 %v9709, %v9700
      %v9818 = vpack.c.b16 %v9710, %v9701
      %v9819 = vpack.c.b16 %v9720, %v9711
      %v9820 = vpack.c.b16 %v9721, %v9712
      %v9821 = vpack.c.b16 %v9722, %v9713
      %v9822 = vpack.c.b16 %v9723, %v9714
      %v9823 = vpack.c.b16 %v9724, %v9715
      %v9824 = vpack.c.b16 %v9725, %v9716
      %v9825 = vpack.c.b16 %v9726, %v9717
      %v9826 = vpack.c.b16 %v9727, %v9718
      %v9827 = vpack.c.b16 %v9728, %v9719
      %v9828 = vpack.c.b16 %v9738, %v9729
      %v9829 = vpack.c.b16 %v9739, %v9730
      %v9830 = vpack.c.b16 %v9740, %v9731
      %v9831 = vpack.c.b16 %v9741, %v9732
      %v9832 = vpack.c.b16 %v9742, %v9733
      %v9833 = vpack.c.b16 %v9743, %v9734
      %v9834 = vpack.c.b16 %v9744, %v9735
      %v9835 = vpack.c.b16 %v9745, %v9736
      %v9836 = vpack.c.b16 %v9746, %v9737
      %v9837 = vpack.c.b16 %v9756, %v9747
      %v9838 = vpack.c.b16 %v9757, %v9748
      %v9839 = vpack.c.b16 %v9758, %v9749
      %v9840 = vpack.c.b16 %v9759, %v9750
      %v9841 = vpack.c.b16 %v9760, %v9751
      %v9842 = vpack.c.b16 %v9761, %v9752
      %v9843 = vpack.c.b16 %v9762, %v9753
      %v9844 = vpack.c.b16 %v9763, %v9754
      %v9845 = vpack.c.b16 %v9764, %v9755
      %v9846 = vpack.c.b16 %v9774, %v9765
      %v9847 = vpack.c.b16 %v9775, %v9766
      %v9848 = vpack.c.b16 %v9776, %v9767
      %v9849 = vpack.c.b16 %v9777, %v9768
      %v9850 = vpack.c.b16 %v9778, %v9769
      %v9851 = vpack.c.b16 %v9779, %v9770
      %v9852 = vpack.c.b16 %v9780, %v9771
      %v9853 = vpack.c.b16 %v9781, %v9772
      %v9854 = vpack.c.b16 %v9782, %v9773
      %9927 = vmatpush.bf16.msra.mxu0 %v9846
      %9928 = vmatpush.bf16.msra.mxu0 %v9837
      %9929 = vmatpush.bf16.msra.mxu0 %v9828
      %9930 = vmatpush.bf16.msra.mxu0 %v9819
      %9931 = vmatpush.bf16.msra.mxu0 %v9810
      %9932 = vmatpush.bf16.msra.mxu0 %v9801
      %9933 = vmatpush.bf16.msra.mxu0 %v9792
      %9934 = vmatpush.bf16.msra.mxu0 %v9783
      %9935 = vmatmul.bf16.gmra.mxu0 %v8192
      %v9936 = vpop.f32.mrf.mxu0
      %v9937 = vadd.f32 %v9541, %v9936
      %v9938 = vpop.f32.mrf.mxu0
      %9939 = vdwg.mxu0
      %9940 = vmatpush.bf16.msra.mxu0 %v9847
      %9941 = vmatpush.bf16.msra.mxu0 %v9838
      %9942 = vmatpush.bf16.msra.mxu0 %v9829
      %9943 = vmatpush.bf16.msra.mxu0 %v9820
      %9944 = vmatpush.bf16.msra.mxu0 %v9811
      %9945 = vmatpush.bf16.msra.mxu0 %v9802
      %9946 = vmatpush.bf16.msra.mxu0 %v9793
      %9947 = vmatpush.bf16.msra.mxu0 %v9784
      %9948 = vmatmul.bf16.gmra.mxu0 %v8192
      %v9949 = vpop.f32.mrf.mxu0
      %v9950 = vadd.f32 %v9542, %v9949
      %v9951 = vpop.f32.mrf.mxu0
      %9952 = vdwg.mxu0
      %9953 = vmatpush.bf16.msra.mxu0 %v9848
      %9954 = vmatpush.bf16.msra.mxu0 %v9839
      %9955 = vmatpush.bf16.msra.mxu0 %v9830
      %9956 = vmatpush.bf16.msra.mxu0 %v9821
      %9957 = vmatpush.bf16.msra.mxu0 %v9812
      %9958 = vmatpush.bf16.msra.mxu0 %v9803
      %9959 = vmatpush.bf16.msra.mxu0 %v9794
      %9960 = vmatpush.bf16.msra.mxu0 %v9785
      %9961 = vmatmul.bf16.gmra.mxu0 %v8192
      %v9962 = vpop.f32.mrf.mxu0
      %v9963 = vadd.f32 %v9543, %v9962
      %v9964 = vpop.f32.mrf.mxu0
      %9965 = vdwg.mxu0
      %9966 = vmatpush.bf16.msra.mxu0 %v9849
      %9967 = vmatpush.bf16.msra.mxu0 %v9840
      %9968 = vmatpush.bf16.msra.mxu0 %v9831
      %9969 = vmatpush.bf16.msra.mxu0 %v9822
      %9970 = vmatpush.bf16.msra.mxu0 %v9813
      %9971 = vmatpush.bf16.msra.mxu0 %v9804
      %9972 = vmatpush.bf16.msra.mxu0 %v9795
      %9973 = vmatpush.bf16.msra.mxu0 %v9786
      %9974 = vmatmul.bf16.gmra.mxu0 %v8192
      %v9975 = vpop.f32.mrf.mxu0
      %v9976 = vadd.f32 %v9544, %v9975
      %v9977 = vpop.f32.mrf.mxu0
      %9978 = vdwg.mxu0
      %9979 = vmatpush.bf16.msra.mxu0 %v9850
      %9980 = vmatpush.bf16.msra.mxu0 %v9841
      %9981 = vmatpush.bf16.msra.mxu0 %v9832
      %9982 = vmatpush.bf16.msra.mxu0 %v9823
      %9983 = vmatpush.bf16.msra.mxu0 %v9814
      %9984 = vmatpush.bf16.msra.mxu0 %v9805
      %9985 = vmatpush.bf16.msra.mxu0 %v9796
      %9986 = vmatpush.bf16.msra.mxu0 %v9787
      %9987 = vmatmul.bf16.gmra.mxu0 %v8192
      %v9988 = vpop.f32.mrf.mxu0
      %v9989 = vadd.f32 %v9545, %v9988
      %v9990 = vpop.f32.mrf.mxu0
      %9991 = vdwg.mxu0
      %9992 = vmatpush.bf16.msra.mxu0 %v9851
      %9993 = vmatpush.bf16.msra.mxu0 %v9842
      %9994 = vmatpush.bf16.msra.mxu0 %v9833
      %9995 = vmatpush.bf16.msra.mxu0 %v9824
      %9996 = vmatpush.bf16.msra.mxu0 %v9815
      %9997 = vmatpush.bf16.msra.mxu0 %v9806
      %9998 = vmatpush.bf16.msra.mxu0 %v9797
      %9999 = vmatpush.bf16.msra.mxu0 %v9788
      %10000 = vmatmul.bf16.gmra.mxu0 %v8192
      %v10001 = vpop.f32.mrf.mxu0
      %v10002 = vadd.f32 %v9546, %v10001
      %v10003 = vpop.f32.mrf.mxu0
      %10004 = vdwg.mxu0
      %10005 = vmatpush.bf16.msra.mxu0 %v9852
      %10006 = vmatpush.bf16.msra.mxu0 %v9843
      %10007 = vmatpush.bf16.msra.mxu0 %v9834
      %10008 = vmatpush.bf16.msra.mxu0 %v9825
      %10009 = vmatpush.bf16.msra.mxu0 %v9816
      %10010 = vmatpush.bf16.msra.mxu0 %v9807
      %10011 = vmatpush.bf16.msra.mxu0 %v9798
      %10012 = vmatpush.bf16.msra.mxu0 %v9789
      %10013 = vmatmul.bf16.gmra.mxu0 %v8192
      %v10014 = vpop.f32.mrf.mxu0
      %v10015 = vadd.f32 %v9547, %v10014
      %v10016 = vpop.f32.mrf.mxu0
      %10017 = vdwg.mxu0
      %10018 = vmatpush.bf16.msra.mxu0 %v9853
      %10019 = vmatpush.bf16.msra.mxu0 %v9844
      %10020 = vmatpush.bf16.msra.mxu0 %v9835
      %10021 = vmatpush.bf16.msra.mxu0 %v9826
      %10022 = vmatpush.bf16.msra.mxu0 %v9817
      %10023 = vmatpush.bf16.msra.mxu0 %v9808
      %10024 = vmatpush.bf16.msra.mxu0 %v9799
      %10025 = vmatpush.bf16.msra.mxu0 %v9790
      %10026 = vmatmul.bf16.gmra.mxu0 %v8192
      %v10027 = vpop.f32.mrf.mxu0
      %v10028 = vadd.f32 %v9548, %v10027
      %v10029 = vpop.f32.mrf.mxu0
      %10030 = vdwg.mxu0
      %10031 = vmatpush.bf16.msra.mxu0 %v9854
      %10032 = vmatpush.bf16.msra.mxu0 %v9845
      %10033 = vmatpush.bf16.msra.mxu0 %v9836
      %10034 = vmatpush.bf16.msra.mxu0 %v9827
      %10035 = vmatpush.bf16.msra.mxu0 %v9818
      %10036 = vmatpush.bf16.msra.mxu0 %v9809
      %10037 = vmatpush.bf16.msra.mxu0 %v9800
      %10038 = vmatpush.bf16.msra.mxu0 %v9791
      %10039 = vmatmul.bf16.gmra.mxu0 %v8192
      %v10040 = vpop.f32.mrf.mxu0
      %v10041 = vadd.f32 %v9549, %v10040
      %v10042 = vpop.f32.mrf.mxu0
      %10043 = vdwg.mxu0
      %v10044 = vmul.f32 %v9937, 0.5
      %v10045 = vmul.f32 %v9950, 0.5
      %v10046 = vmul.f32 %v9963, 0.5
      %v10047 = vmul.f32 %v9976, 0.5
      %v10048 = vmul.f32 %v9989, 0.5
      %v10049 = vmul.f32 %v10002, 0.5
      %v10050 = vmul.f32 %v10015, 0.5
      %v10051 = vmul.f32 %v10028, 0.5
      %v10052 = vmul.f32 %v10041, 0.5
      %v10053 = vtanh.pop %v10044
      %v10054 = vtanh.pop %v10045
      %v10055 = vtanh.pop %v10046
      %v10056 = vtanh.pop %v10047
      %v10057 = vtanh.pop %v10048
      %v10058 = vtanh.pop %v10049
      %v10059 = vtanh.pop %v10050
      %v10060 = vtanh.pop %v10051
      %v10061 = vtanh.pop %v10052
      %v10062 = vmul.f32 %v10053, 0.5
      %v10063 = vmul.f32 %v10054, 0.5
      %v10064 = vmul.f32 %v10055, 0.5
      %v10065 = vmul.f32 %v10056, 0.5
      %v10066 = vmul.f32 %v10057, 0.5
      %v10067 = vmul.f32 %v10058, 0.5
      %v10068 = vmul.f32 %v10059, 0.5
      %v10069 = vmul.f32 %v10060, 0.5
      %v10070 = vmul.f32 %v10061, 0.5
      %v10071 = vadd.f32 %v10062, 0.5
      %v10072 = vadd.f32 %v10063, 0.5
      %v10073 = vadd.f32 %v10064, 0.5
      %v10074 = vadd.f32 %v10065, 0.5
      %v10075 = vadd.f32 %v10066, 0.5
      %v10076 = vadd.f32 %v10067, 0.5
      %v10077 = vadd.f32 %v10068, 0.5
      %v10078 = vadd.f32 %v10069, 0.5
      %v10079 = vadd.f32 %v10070, 0.5
      %10080 = vst [vmem:[%s251 + $0x90] sm:$0xff] %v10071
      %10081 = vst [vmem:[%s251 + $0x98] sm:$0xff] %v10072
      %10082 = vst [vmem:[%s251 + $0xa0] sm:$0xff] %v10073
      %10083 = vst [vmem:[%s251 + $0xa8] sm:$0xff] %v10074
      %10084 = vst [vmem:[%s251 + $0xb0] sm:$0xff] %v10075
      %10085 = vst [vmem:[%s251 + $0xb8] sm:$0xff] %v10076
      %10086 = vst [vmem:[%s251 + $0xc0] sm:$0xff] %v10077
      %10087 = vst [vmem:[%s251 + $0xc8] sm:$0xff] %v10078
      %10088 = vst [vmem:[%s251 + $0xd0] sm:$0xff] %v10079
      %v10089 = vld [vmem:[%s3 + $0x6c] sm:$0xff]
      %v10090 = vld [vmem:[%s3 + $0x74] sm:$0xff]
      %v10091 = vld [vmem:[%s3 + $0x7c] sm:$0xff]
      %v10092 = vld [vmem:[%s3 + $0x84] sm:$0xff]
      %v10093 = vld [vmem:[%s3 + $0x8c] sm:$0xf]
      %v10094 = vld [vmem:[%s3 + $0x1d4] sm:$0xff]
      %v10095 = vld [vmem:[%s3 + $0x1dc] sm:$0xff]
      %v10096 = vld [vmem:[%s3 + $0x1e4] sm:$0xff]
      %v10097 = vld [vmem:[%s3 + $0x1ec] sm:$0xff]
      %v10098 = vld [vmem:[%s3 + $0x1f4] sm:$0xf]
      %v10099 = vld [vmem:[%s3 + $0x33c] sm:$0xff]
      %v10100 = vld [vmem:[%s3 + $0x344] sm:$0xff]
      %v10101 = vld [vmem:[%s3 + $0x34c] sm:$0xff]
      %v10102 = vld [vmem:[%s3 + $0x354] sm:$0xff]
      %v10103 = vld [vmem:[%s3 + $0x35c] sm:$0xf]
      %v10104 = vld [vmem:[%s3 + $0x4a4] sm:$0xff]
      %v10105 = vld [vmem:[%s3 + $0x4ac] sm:$0xff]
      %v10106 = vld [vmem:[%s3 + $0x4b4] sm:$0xff]
      %v10107 = vld [vmem:[%s3 + $0x4bc] sm:$0xff]
      %v10108 = vld [vmem:[%s3 + $0x4c4] sm:$0xf]
      %v10109 = vld [vmem:[%s3 + $0x60c] sm:$0xff]
      %v10110 = vld [vmem:[%s3 + $0x614] sm:$0xff]
      %v10111 = vld [vmem:[%s3 + $0x61c] sm:$0xff]
      %v10112 = vld [vmem:[%s3 + $0x624] sm:$0xff]
      %v10113 = vld [vmem:[%s3 + $0x62c] sm:$0xf]
      %v10114 = vld [vmem:[%s3 + $0x774] sm:$0xff]
      %v10115 = vld [vmem:[%s3 + $0x77c] sm:$0xff]
      %v10116 = vld [vmem:[%s3 + $0x784] sm:$0xff]
      %v10117 = vld [vmem:[%s3 + $0x78c] sm:$0xff]
      %v10118 = vld [vmem:[%s3 + $0x794] sm:$0xf]
      %v10119 = vld [vmem:[%s3 + $0x8dc] sm:$0xff]
      %v10120 = vld [vmem:[%s3 + $0x8e4] sm:$0xff]
      %v10121 = vld [vmem:[%s3 + $0x8ec] sm:$0xff]
      %v10122 = vld [vmem:[%s3 + $0x8f4] sm:$0xff]
      %v10123 = vld [vmem:[%s3 + $0x8fc] sm:$0xf]
      %v10124 = vld [vmem:[%s3 + $0xa44] sm:$0xff]
      %v10125 = vld [vmem:[%s3 + $0xa4c] sm:$0xff]
      %v10126 = vld [vmem:[%s3 + $0xa54] sm:$0xff]
      %v10127 = vld [vmem:[%s3 + $0xa5c] sm:$0xff]
      %v10128 = vld [vmem:[%s3 + $0xa64] sm:$0xf]
      %v10129 = vld [vmem:[%s3 + $0xbac] sm:$0xff]
      %v10130 = vld [vmem:[%s3 + $0xbb4] sm:$0xff]
      %v10131 = vld [vmem:[%s3 + $0xbbc] sm:$0xff]
      %v10132 = vld [vmem:[%s3 + $0xbc4] sm:$0xff]
      %v10133 = vld [vmem:[%s3 + $0xbcc] sm:$0xf]
      %v10134 = vld [vmem:[%s3 + $0xd14] sm:$0xff]
      %v10135 = vld [vmem:[%s3 + $0xd1c] sm:$0xff]
      %v10136 = vld [vmem:[%s3 + $0xd24] sm:$0xff]
      %v10137 = vld [vmem:[%s3 + $0xd2c] sm:$0xff]
      %v10138 = vld [vmem:[%s3 + $0xd34] sm:$0xf]
      %v10139 = vld [vmem:[%s3 + $0xe7c] sm:$0xff]
      %v10140 = vld [vmem:[%s3 + $0xe84] sm:$0xff]
      %v10141 = vld [vmem:[%s3 + $0xe8c] sm:$0xff]
      %v10142 = vld [vmem:[%s3 + $0xe94] sm:$0xff]
      %v10143 = vld [vmem:[%s3 + $0xe9c] sm:$0xf]
      %v10144 = vld [vmem:[%s3 + $0xfe4] sm:$0xff]
      %v10145 = vld [vmem:[%s3 + $0xfec] sm:$0xff]
      %v10146 = vld [vmem:[%s3 + $0xff4] sm:$0xff]
      %v10147 = vld [vmem:[%s3 + $0xffc] sm:$0xff]
      %v10148 = vld [vmem:[%s3 + $0x1004] sm:$0xf]
      %v10149 = vld [vmem:[%s3 + $0x114c] sm:$0xff]
      %v10150 = vld [vmem:[%s3 + $0x1154] sm:$0xff]
      %v10151 = vld [vmem:[%s3 + $0x115c] sm:$0xff]
      %v10152 = vld [vmem:[%s3 + $0x1164] sm:$0xff]
      %v10153 = vld [vmem:[%s3 + $0x116c] sm:$0xf]
      %v10154 = vld [vmem:[%s3 + $0x12b4] sm:$0xff]
      %v10155 = vld [vmem:[%s3 + $0x12bc] sm:$0xff]
      %v10156 = vld [vmem:[%s3 + $0x12c4] sm:$0xff]
      %v10157 = vld [vmem:[%s3 + $0x12cc] sm:$0xff]
      %v10158 = vld [vmem:[%s3 + $0x12d4] sm:$0xf]
      %v10159 = vld [vmem:[%s3 + $0x141c] sm:$0xff]
      %v10160 = vld [vmem:[%s3 + $0x1424] sm:$0xff]
      %v10161 = vld [vmem:[%s3 + $0x142c] sm:$0xff]
      %v10162 = vld [vmem:[%s3 + $0x1434] sm:$0xff]
      %v10163 = vld [vmem:[%s3 + $0x143c] sm:$0xf]
      %v10164 = vld [vmem:[%s3 + $0x1584] sm:$0xff]
      %v10165 = vld [vmem:[%s3 + $0x158c] sm:$0xff]
      %v10166 = vld [vmem:[%s3 + $0x1594] sm:$0xff]
      %v10167 = vld [vmem:[%s3 + $0x159c] sm:$0xff]
      %v10168 = vld [vmem:[%s3 + $0x15a4] sm:$0xf]
      %v10169 = vld [vmem:[%s5 + $0x1b] sm:$0xff]
      %v10170 = vld [vmem:[%s5 + $0x23] sm:$0x1]
      %v10173 = vperm.slane %v10169, 0
      %v10174 = vperm.slane %v10169, 1
      %v10175 = vperm.slane %v10169, 2
      %v10176 = vperm.slane %v10169, 3
      %v10177 = vperm.slane %v10169, 4
      %v10178 = vperm.slane %v10169, 5
      %v10179 = vperm.slane %v10169, 6
      %v10180 = vperm.slane %v10169, 7
      %v10181 = vperm.slane %v10170, 0
      %v10271 = vunpack.c.l.b16 %v10089
      %v10272 = vunpack.c.h.b16 %v10089
      %v10273 = vunpack.c.l.b16 %v10090
      %v10274 = vunpack.c.h.b16 %v10090
      %v10275 = vunpack.c.l.b16 %v10091
      %v10276 = vunpack.c.h.b16 %v10091
      %v10277 = vunpack.c.l.b16 %v10092
      %v10278 = vunpack.c.h.b16 %v10092
      %v10279 = vunpack.c.l.b16 %v10093
      %v10280 = vunpack.c.l.b16 %v10094
      %v10281 = vunpack.c.h.b16 %v10094
      %v10282 = vunpack.c.l.b16 %v10095
      %v10283 = vunpack.c.h.b16 %v10095
      %v10284 = vunpack.c.l.b16 %v10096
      %v10285 = vunpack.c.h.b16 %v10096
      %v10286 = vunpack.c.l.b16 %v10097
      %v10287 = vunpack.c.h.b16 %v10097
      %v10288 = vunpack.c.l.b16 %v10098
      %v10289 = vunpack.c.l.b16 %v10099
      %v10290 = vunpack.c.h.b16 %v10099
      %v10291 = vunpack.c.l.b16 %v10100
      %v10292 = vunpack.c.h.b16 %v10100
      %v10293 = vunpack.c.l.b16 %v10101
      %v10294 = vunpack.c.h.b16 %v10101
      %v10295 = vunpack.c.l.b16 %v10102
      %v10296 = vunpack.c.h.b16 %v10102
      %v10297 = vunpack.c.l.b16 %v10103
      %v10298 = vunpack.c.l.b16 %v10104
      %v10299 = vunpack.c.h.b16 %v10104
      %v10300 = vunpack.c.l.b16 %v10105
      %v10301 = vunpack.c.h.b16 %v10105
      %v10302 = vunpack.c.l.b16 %v10106
      %v10303 = vunpack.c.h.b16 %v10106
      %v10304 = vunpack.c.l.b16 %v10107
      %v10305 = vunpack.c.h.b16 %v10107
      %v10306 = vunpack.c.l.b16 %v10108
      %v10307 = vunpack.c.l.b16 %v10109
      %v10308 = vunpack.c.h.b16 %v10109
      %v10309 = vunpack.c.l.b16 %v10110
      %v10310 = vunpack.c.h.b16 %v10110
      %v10311 = vunpack.c.l.b16 %v10111
      %v10312 = vunpack.c.h.b16 %v10111
      %v10313 = vunpack.c.l.b16 %v10112
      %v10314 = vunpack.c.h.b16 %v10112
      %v10315 = vunpack.c.l.b16 %v10113
      %v10316 = vunpack.c.l.b16 %v10114
      %v10317 = vunpack.c.h.b16 %v10114
      %v10318 = vunpack.c.l.b16 %v10115
      %v10319 = vunpack.c.h.b16 %v10115
      %v10320 = vunpack.c.l.b16 %v10116
      %v10321 = vunpack.c.h.b16 %v10116
      %v10322 = vunpack.c.l.b16 %v10117
      %v10323 = vunpack.c.h.b16 %v10117
      %v10324 = vunpack.c.l.b16 %v10118
      %v10325 = vunpack.c.l.b16 %v10119
      %v10326 = vunpack.c.h.b16 %v10119
      %v10327 = vunpack.c.l.b16 %v10120
      %v10328 = vunpack.c.h.b16 %v10120
      %v10329 = vunpack.c.l.b16 %v10121
      %v10330 = vunpack.c.h.b16 %v10121
      %v10331 = vunpack.c.l.b16 %v10122
      %v10332 = vunpack.c.h.b16 %v10122
      %v10333 = vunpack.c.l.b16 %v10123
      %v10334 = vunpack.c.l.b16 %v10124
      %v10335 = vunpack.c.h.b16 %v10124
      %v10336 = vunpack.c.l.b16 %v10125
      %v10337 = vunpack.c.h.b16 %v10125
      %v10338 = vunpack.c.l.b16 %v10126
      %v10339 = vunpack.c.h.b16 %v10126
      %v10340 = vunpack.c.l.b16 %v10127
      %v10341 = vunpack.c.h.b16 %v10127
      %v10342 = vunpack.c.l.b16 %v10128
      %v10343 = vunpack.c.l.b16 %v10129
      %v10344 = vunpack.c.h.b16 %v10129
      %v10345 = vunpack.c.l.b16 %v10130
      %v10346 = vunpack.c.h.b16 %v10130
      %v10347 = vunpack.c.l.b16 %v10131
      %v10348 = vunpack.c.h.b16 %v10131
      %v10349 = vunpack.c.l.b16 %v10132
      %v10350 = vunpack.c.h.b16 %v10132
      %v10351 = vunpack.c.l.b16 %v10133
      %v10352 = vunpack.c.l.b16 %v10134
      %v10353 = vunpack.c.h.b16 %v10134
      %v10354 = vunpack.c.l.b16 %v10135
      %v10355 = vunpack.c.h.b16 %v10135
      %v10356 = vunpack.c.l.b16 %v10136
      %v10357 = vunpack.c.h.b16 %v10136
      %v10358 = vunpack.c.l.b16 %v10137
      %v10359 = vunpack.c.h.b16 %v10137
      %v10360 = vunpack.c.l.b16 %v10138
      %v10361 = vunpack.c.l.b16 %v10139
      %v10362 = vunpack.c.h.b16 %v10139
      %v10363 = vunpack.c.l.b16 %v10140
      %v10364 = vunpack.c.h.b16 %v10140
      %v10365 = vunpack.c.l.b16 %v10141
      %v10366 = vunpack.c.h.b16 %v10141
      %v10367 = vunpack.c.l.b16 %v10142
      %v10368 = vunpack.c.h.b16 %v10142
      %v10369 = vunpack.c.l.b16 %v10143
      %v10370 = vunpack.c.l.b16 %v10144
      %v10371 = vunpack.c.h.b16 %v10144
      %v10372 = vunpack.c.l.b16 %v10145
      %v10373 = vunpack.c.h.b16 %v10145
      %v10374 = vunpack.c.l.b16 %v10146
      %v10375 = vunpack.c.h.b16 %v10146
      %v10376 = vunpack.c.l.b16 %v10147
      %v10377 = vunpack.c.h.b16 %v10147
      %v10378 = vunpack.c.l.b16 %v10148
      %v10379 = vunpack.c.l.b16 %v10149
      %v10380 = vunpack.c.h.b16 %v10149
      %v10381 = vunpack.c.l.b16 %v10150
      %v10382 = vunpack.c.h.b16 %v10150
      %v10383 = vunpack.c.l.b16 %v10151
      %v10384 = vunpack.c.h.b16 %v10151
      %v10385 = vunpack.c.l.b16 %v10152
      %v10386 = vunpack.c.h.b16 %v10152
      %v10387 = vunpack.c.l.b16 %v10153
      %v10388 = vunpack.c.l.b16 %v10154
      %v10389 = vunpack.c.h.b16 %v10154
      %v10390 = vunpack.c.l.b16 %v10155
      %v10391 = vunpack.c.h.b16 %v10155
      %v10392 = vunpack.c.l.b16 %v10156
      %v10393 = vunpack.c.h.b16 %v10156
      %v10394 = vunpack.c.l.b16 %v10157
      %v10395 = vunpack.c.h.b16 %v10157
      %v10396 = vunpack.c.l.b16 %v10158
      %v10397 = vunpack.c.l.b16 %v10159
      %v10398 = vunpack.c.h.b16 %v10159
      %v10399 = vunpack.c.l.b16 %v10160
      %v10400 = vunpack.c.h.b16 %v10160
      %v10401 = vunpack.c.l.b16 %v10161
      %v10402 = vunpack.c.h.b16 %v10161
      %v10403 = vunpack.c.l.b16 %v10162
      %v10404 = vunpack.c.h.b16 %v10162
      %v10405 = vunpack.c.l.b16 %v10163
      %v10406 = vunpack.c.l.b16 %v10164
      %v10407 = vunpack.c.h.b16 %v10164
      %v10408 = vunpack.c.l.b16 %v10165
      %v10409 = vunpack.c.h.b16 %v10165
      %v10410 = vunpack.c.l.b16 %v10166
      %v10411 = vunpack.c.h.b16 %v10166
      %v10412 = vunpack.c.l.b16 %v10167
      %v10413 = vunpack.c.h.b16 %v10167
      %v10414 = vunpack.c.l.b16 %v10168
      %v10415 = vpack.c.b16 %v10280, %v10271
      %v10416 = vpack.c.b16 %v10281, %v10272
      %v10417 = vpack.c.b16 %v10282, %v10273
      %v10418 = vpack.c.b16 %v10283, %v10274
      %v10419 = vpack.c.b16 %v10284, %v10275
      %v10420 = vpack.c.b16 %v10285, %v10276
      %v10421 = vpack.c.b16 %v10286, %v10277
      %v10422 = vpack.c.b16 %v10287, %v10278
      %v10423 = vpack.c.b16 %v10288, %v10279
      %v10424 = vpack.c.b16 %v10298, %v10289
      %v10425 = vpack.c.b16 %v10299, %v10290
      %v10426 = vpack.c.b16 %v10300, %v10291
      %v10427 = vpack.c.b16 %v10301, %v10292
      %v10428 = vpack.c.b16 %v10302, %v10293
      %v10429 = vpack.c.b16 %v10303, %v10294
      %v10430 = vpack.c.b16 %v10304, %v10295
      %v10431 = vpack.c.b16 %v10305, %v10296
      %v10432 = vpack.c.b16 %v10306, %v10297
      %v10433 = vpack.c.b16 %v10316, %v10307
      %v10434 = vpack.c.b16 %v10317, %v10308
      %v10435 = vpack.c.b16 %v10318, %v10309
      %v10436 = vpack.c.b16 %v10319, %v10310
      %v10437 = vpack.c.b16 %v10320, %v10311
      %v10438 = vpack.c.b16 %v10321, %v10312
      %v10439 = vpack.c.b16 %v10322, %v10313
      %v10440 = vpack.c.b16 %v10323, %v10314
      %v10441 = vpack.c.b16 %v10324, %v10315
      %v10442 = vpack.c.b16 %v10334, %v10325
      %v10443 = vpack.c.b16 %v10335, %v10326
      %v10444 = vpack.c.b16 %v10336, %v10327
      %v10445 = vpack.c.b16 %v10337, %v10328
      %v10446 = vpack.c.b16 %v10338, %v10329
      %v10447 = vpack.c.b16 %v10339, %v10330
      %v10448 = vpack.c.b16 %v10340, %v10331
      %v10449 = vpack.c.b16 %v10341, %v10332
      %v10450 = vpack.c.b16 %v10342, %v10333
      %v10451 = vpack.c.b16 %v10352, %v10343
      %v10452 = vpack.c.b16 %v10353, %v10344
      %v10453 = vpack.c.b16 %v10354, %v10345
      %v10454 = vpack.c.b16 %v10355, %v10346
      %v10455 = vpack.c.b16 %v10356, %v10347
      %v10456 = vpack.c.b16 %v10357, %v10348
      %v10457 = vpack.c.b16 %v10358, %v10349
      %v10458 = vpack.c.b16 %v10359, %v10350
      %v10459 = vpack.c.b16 %v10360, %v10351
      %v10460 = vpack.c.b16 %v10370, %v10361
      %v10461 = vpack.c.b16 %v10371, %v10362
      %v10462 = vpack.c.b16 %v10372, %v10363
      %v10463 = vpack.c.b16 %v10373, %v10364
      %v10464 = vpack.c.b16 %v10374, %v10365
      %v10465 = vpack.c.b16 %v10375, %v10366
      %v10466 = vpack.c.b16 %v10376, %v10367
      %v10467 = vpack.c.b16 %v10377, %v10368
      %v10468 = vpack.c.b16 %v10378, %v10369
      %v10469 = vpack.c.b16 %v10388, %v10379
      %v10470 = vpack.c.b16 %v10389, %v10380
      %v10471 = vpack.c.b16 %v10390, %v10381
      %v10472 = vpack.c.b16 %v10391, %v10382
      %v10473 = vpack.c.b16 %v10392, %v10383
      %v10474 = vpack.c.b16 %v10393, %v10384
      %v10475 = vpack.c.b16 %v10394, %v10385
      %v10476 = vpack.c.b16 %v10395, %v10386
      %v10477 = vpack.c.b16 %v10396, %v10387
      %v10478 = vpack.c.b16 %v10406, %v10397
      %v10479 = vpack.c.b16 %v10407, %v10398
      %v10480 = vpack.c.b16 %v10408, %v10399
      %v10481 = vpack.c.b16 %v10409, %v10400
      %v10482 = vpack.c.b16 %v10410, %v10401
      %v10483 = vpack.c.b16 %v10411, %v10402
      %v10484 = vpack.c.b16 %v10412, %v10403
      %v10485 = vpack.c.b16 %v10413, %v10404
      %v10486 = vpack.c.b16 %v10414, %v10405
      %10559 = vmatpush.bf16.msra.mxu0 %v10478
      %10560 = vmatpush.bf16.msra.mxu0 %v10469
      %10561 = vmatpush.bf16.msra.mxu0 %v10460
      %10562 = vmatpush.bf16.msra.mxu0 %v10451
      %10563 = vmatpush.bf16.msra.mxu0 %v10442
      %10564 = vmatpush.bf16.msra.mxu0 %v10433
      %10565 = vmatpush.bf16.msra.mxu0 %v10424
      %10566 = vmatpush.bf16.msra.mxu0 %v10415
      %10567 = vmatmul.bf16.gmra.mxu0 %v8192
      %v10568 = vpop.f32.mrf.mxu0
      %v10569 = vadd.f32 %v10173, %v10568
      %v10570 = vpop.f32.mrf.mxu0
      %10571 = vdwg.mxu0
      %10572 = vmatpush.bf16.msra.mxu0 %v10479
      %10573 = vmatpush.bf16.msra.mxu0 %v10470
      %10574 = vmatpush.bf16.msra.mxu0 %v10461
      %10575 = vmatpush.bf16.msra.mxu0 %v10452
      %10576 = vmatpush.bf16.msra.mxu0 %v10443
      %10577 = vmatpush.bf16.msra.mxu0 %v10434
      %10578 = vmatpush.bf16.msra.mxu0 %v10425
      %10579 = vmatpush.bf16.msra.mxu0 %v10416
      %10580 = vmatmul.bf16.gmra.mxu0 %v8192
      %v10581 = vpop.f32.mrf.mxu0
      %v10582 = vadd.f32 %v10174, %v10581
      %v10583 = vpop.f32.mrf.mxu0
      %10584 = vdwg.mxu0
      %10585 = vmatpush.bf16.msra.mxu0 %v10480
      %10586 = vmatpush.bf16.msra.mxu0 %v10471
      %10587 = vmatpush.bf16.msra.mxu0 %v10462
      %10588 = vmatpush.bf16.msra.mxu0 %v10453
      %10589 = vmatpush.bf16.msra.mxu0 %v10444
      %10590 = vmatpush.bf16.msra.mxu0 %v10435
      %10591 = vmatpush.bf16.msra.mxu0 %v10426
      %10592 = vmatpush.bf16.msra.mxu0 %v10417
      %10593 = vmatmul.bf16.gmra.mxu0 %v8192
      %v10594 = vpop.f32.mrf.mxu0
      %v10595 = vadd.f32 %v10175, %v10594
      %v10596 = vpop.f32.mrf.mxu0
      %10597 = vdwg.mxu0
      %10598 = vmatpush.bf16.msra.mxu0 %v10481
      %10599 = vmatpush.bf16.msra.mxu0 %v10472
      %10600 = vmatpush.bf16.msra.mxu0 %v10463
      %10601 = vmatpush.bf16.msra.mxu0 %v10454
      %10602 = vmatpush.bf16.msra.mxu0 %v10445
      %10603 = vmatpush.bf16.msra.mxu0 %v10436
      %10604 = vmatpush.bf16.msra.mxu0 %v10427
      %10605 = vmatpush.bf16.msra.mxu0 %v10418
      %10606 = vmatmul.bf16.gmra.mxu0 %v8192
      %v10607 = vpop.f32.mrf.mxu0
      %v10608 = vadd.f32 %v10176, %v10607
      %v10609 = vpop.f32.mrf.mxu0
      %10610 = vdwg.mxu0
      %10611 = vmatpush.bf16.msra.mxu0 %v10482
      %10612 = vmatpush.bf16.msra.mxu0 %v10473
      %10613 = vmatpush.bf16.msra.mxu0 %v10464
      %10614 = vmatpush.bf16.msra.mxu0 %v10455
      %10615 = vmatpush.bf16.msra.mxu0 %v10446
      %10616 = vmatpush.bf16.msra.mxu0 %v10437
      %10617 = vmatpush.bf16.msra.mxu0 %v10428
      %10618 = vmatpush.bf16.msra.mxu0 %v10419
      %10619 = vmatmul.bf16.gmra.mxu0 %v8192
      %v10620 = vpop.f32.mrf.mxu0
      %v10621 = vadd.f32 %v10177, %v10620
      %v10622 = vpop.f32.mrf.mxu0
      %10623 = vdwg.mxu0
      %10624 = vmatpush.bf16.msra.mxu0 %v10483
      %10625 = vmatpush.bf16.msra.mxu0 %v10474
      %10626 = vmatpush.bf16.msra.mxu0 %v10465
      %10627 = vmatpush.bf16.msra.mxu0 %v10456
      %10628 = vmatpush.bf16.msra.mxu0 %v10447
      %10629 = vmatpush.bf16.msra.mxu0 %v10438
      %10630 = vmatpush.bf16.msra.mxu0 %v10429
      %10631 = vmatpush.bf16.msra.mxu0 %v10420
      %10632 = vmatmul.bf16.gmra.mxu0 %v8192
      %v10633 = vpop.f32.mrf.mxu0
      %v10634 = vadd.f32 %v10178, %v10633
      %v10635 = vpop.f32.mrf.mxu0
      %10636 = vdwg.mxu0
      %10637 = vmatpush.bf16.msra.mxu0 %v10484
      %10638 = vmatpush.bf16.msra.mxu0 %v10475
      %10639 = vmatpush.bf16.msra.mxu0 %v10466
      %10640 = vmatpush.bf16.msra.mxu0 %v10457
      %10641 = vmatpush.bf16.msra.mxu0 %v10448
      %10642 = vmatpush.bf16.msra.mxu0 %v10439
      %10643 = vmatpush.bf16.msra.mxu0 %v10430
      %10644 = vmatpush.bf16.msra.mxu0 %v10421
      %10645 = vmatmul.bf16.gmra.mxu0 %v8192
      %v10646 = vpop.f32.mrf.mxu0
      %v10647 = vadd.f32 %v10179, %v10646
      %v10648 = vpop.f32.mrf.mxu0
      %10649 = vdwg.mxu0
      %10650 = vmatpush.bf16.msra.mxu0 %v10485
      %10651 = vmatpush.bf16.msra.mxu0 %v10476
      %10652 = vmatpush.bf16.msra.mxu0 %v10467
      %10653 = vmatpush.bf16.msra.mxu0 %v10458
      %10654 = vmatpush.bf16.msra.mxu0 %v10449
      %10655 = vmatpush.bf16.msra.mxu0 %v10440
      %10656 = vmatpush.bf16.msra.mxu0 %v10431
      %10657 = vmatpush.bf16.msra.mxu0 %v10422
      %10658 = vmatmul.bf16.gmra.mxu0 %v8192
      %v10659 = vpop.f32.mrf.mxu0
      %v10660 = vadd.f32 %v10180, %v10659
      %v10661 = vpop.f32.mrf.mxu0
      %10662 = vdwg.mxu0
      %10663 = vmatpush.bf16.msra.mxu0 %v10486
      %10664 = vmatpush.bf16.msra.mxu0 %v10477
      %10665 = vmatpush.bf16.msra.mxu0 %v10468
      %10666 = vmatpush.bf16.msra.mxu0 %v10459
      %10667 = vmatpush.bf16.msra.mxu0 %v10450
      %10668 = vmatpush.bf16.msra.mxu0 %v10441
      %10669 = vmatpush.bf16.msra.mxu0 %v10432
      %10670 = vmatpush.bf16.msra.mxu0 %v10423
      %10671 = vmatmul.bf16.gmra.mxu0 %v8192
      %v10672 = vpop.f32.mrf.mxu0
      %v10673 = vadd.f32 %v10181, %v10672
      %v10674 = vpop.f32.mrf.mxu0
      %10675 = vdwg.mxu0
      %v10676 = vmul.f32 %v10569, 0.5
      %v10677 = vmul.f32 %v10582, 0.5
      %v10678 = vmul.f32 %v10595, 0.5
      %v10679 = vmul.f32 %v10608, 0.5
      %v10680 = vmul.f32 %v10621, 0.5
      %v10681 = vmul.f32 %v10634, 0.5
      %v10682 = vmul.f32 %v10647, 0.5
      %v10683 = vmul.f32 %v10660, 0.5
      %v10684 = vmul.f32 %v10673, 0.5
      %v10685 = vtanh.pop %v10676
      %v10686 = vtanh.pop %v10677
      %v10687 = vtanh.pop %v10678
      %v10688 = vtanh.pop %v10679
      %v10689 = vtanh.pop %v10680
      %v10690 = vtanh.pop %v10681
      %v10691 = vtanh.pop %v10682
      %v10692 = vtanh.pop %v10683
      %v10693 = vtanh.pop %v10684
      %v10694 = vmul.f32 %v10685, 0.5
      %v10695 = vmul.f32 %v10686, 0.5
      %v10696 = vmul.f32 %v10687, 0.5
      %v10697 = vmul.f32 %v10688, 0.5
      %v10698 = vmul.f32 %v10689, 0.5
      %v10699 = vmul.f32 %v10690, 0.5
      %v10700 = vmul.f32 %v10691, 0.5
      %v10701 = vmul.f32 %v10692, 0.5
      %v10702 = vmul.f32 %v10693, 0.5
      %v10703 = vadd.f32 %v10694, 0.5
      %v10704 = vadd.f32 %v10695, 0.5
      %v10705 = vadd.f32 %v10696, 0.5
      %v10706 = vadd.f32 %v10697, 0.5
      %v10707 = vadd.f32 %v10698, 0.5
      %v10708 = vadd.f32 %v10699, 0.5
      %v10709 = vadd.f32 %v10700, 0.5
      %v10710 = vadd.f32 %v10701, 0.5
      %v10711 = vadd.f32 %v10702, 0.5
      %10712 = vst [vmem:[%s251 + $0xd8] sm:$0xff] %v10703
      %10713 = vst [vmem:[%s251 + $0xe0] sm:$0xff] %v10704
      %10714 = vst [vmem:[%s251 + $0xe8] sm:$0xff] %v10705
      %10715 = vst [vmem:[%s251 + $0xf0] sm:$0xff] %v10706
      %10716 = vst [vmem:[%s251 + $0xf8] sm:$0xff] %v10707
      %10717 = vst [vmem:[%s251 + $0x100] sm:$0xff] %v10708
      %10718 = vst [vmem:[%s251 + $0x108] sm:$0xff] %v10709
      %10719 = vst [vmem:[%s251 + $0x110] sm:$0xff] %v10710
      %10720 = vst [vmem:[%s251 + $0x118] sm:$0xff] %v10711
      %v10721 = vld [vmem:[%s3 + $0x90] sm:$0xff]
      %v10722 = vld [vmem:[%s3 + $0x98] sm:$0xff]
      %v10723 = vld [vmem:[%s3 + $0xa0] sm:$0xff]
      %v10724 = vld [vmem:[%s3 + $0xa8] sm:$0xff]
      %v10725 = vld [vmem:[%s3 + $0xb0] sm:$0xf]
      %v10726 = vld [vmem:[%s3 + $0x1f8] sm:$0xff]
      %v10727 = vld [vmem:[%s3 + $0x200] sm:$0xff]
      %v10728 = vld [vmem:[%s3 + $0x208] sm:$0xff]
      %v10729 = vld [vmem:[%s3 + $0x210] sm:$0xff]
      %v10730 = vld [vmem:[%s3 + $0x218] sm:$0xf]
      %v10731 = vld [vmem:[%s3 + $0x360] sm:$0xff]
      %v10732 = vld [vmem:[%s3 + $0x368] sm:$0xff]
      %v10733 = vld [vmem:[%s3 + $0x370] sm:$0xff]
      %v10734 = vld [vmem:[%s3 + $0x378] sm:$0xff]
      %v10735 = vld [vmem:[%s3 + $0x380] sm:$0xf]
      %v10736 = vld [vmem:[%s3 + $0x4c8] sm:$0xff]
      %v10737 = vld [vmem:[%s3 + $0x4d0] sm:$0xff]
      %v10738 = vld [vmem:[%s3 + $0x4d8] sm:$0xff]
      %v10739 = vld [vmem:[%s3 + $0x4e0] sm:$0xff]
      %v10740 = vld [vmem:[%s3 + $0x4e8] sm:$0xf]
      %v10741 = vld [vmem:[%s3 + $0x630] sm:$0xff]
      %v10742 = vld [vmem:[%s3 + $0x638] sm:$0xff]
      %v10743 = vld [vmem:[%s3 + $0x640] sm:$0xff]
      %v10744 = vld [vmem:[%s3 + $0x648] sm:$0xff]
      %v10745 = vld [vmem:[%s3 + $0x650] sm:$0xf]
      %v10746 = vld [vmem:[%s3 + $0x798] sm:$0xff]
      %v10747 = vld [vmem:[%s3 + $0x7a0] sm:$0xff]
      %v10748 = vld [vmem:[%s3 + $0x7a8] sm:$0xff]
      %v10749 = vld [vmem:[%s3 + $0x7b0] sm:$0xff]
      %v10750 = vld [vmem:[%s3 + $0x7b8] sm:$0xf]
      %v10751 = vld [vmem:[%s3 + $0x900] sm:$0xff]
      %v10752 = vld [vmem:[%s3 + $0x908] sm:$0xff]
      %v10753 = vld [vmem:[%s3 + $0x910] sm:$0xff]
      %v10754 = vld [vmem:[%s3 + $0x918] sm:$0xff]
      %v10755 = vld [vmem:[%s3 + $0x920] sm:$0xf]
      %v10756 = vld [vmem:[%s3 + $0xa68] sm:$0xff]
      %v10757 = vld [vmem:[%s3 + $0xa70] sm:$0xff]
      %v10758 = vld [vmem:[%s3 + $0xa78] sm:$0xff]
      %v10759 = vld [vmem:[%s3 + $0xa80] sm:$0xff]
      %v10760 = vld [vmem:[%s3 + $0xa88] sm:$0xf]
      %v10761 = vld [vmem:[%s3 + $0xbd0] sm:$0xff]
      %v10762 = vld [vmem:[%s3 + $0xbd8] sm:$0xff]
      %v10763 = vld [vmem:[%s3 + $0xbe0] sm:$0xff]
      %v10764 = vld [vmem:[%s3 + $0xbe8] sm:$0xff]
      %v10765 = vld [vmem:[%s3 + $0xbf0] sm:$0xf]
      %v10766 = vld [vmem:[%s3 + $0xd38] sm:$0xff]
      %v10767 = vld [vmem:[%s3 + $0xd40] sm:$0xff]
      %v10768 = vld [vmem:[%s3 + $0xd48] sm:$0xff]
      %v10769 = vld [vmem:[%s3 + $0xd50] sm:$0xff]
      %v10770 = vld [vmem:[%s3 + $0xd58] sm:$0xf]
      %v10771 = vld [vmem:[%s3 + $0xea0] sm:$0xff]
      %v10772 = vld [vmem:[%s3 + $0xea8] sm:$0xff]
      %v10773 = vld [vmem:[%s3 + $0xeb0] sm:$0xff]
      %v10774 = vld [vmem:[%s3 + $0xeb8] sm:$0xff]
      %v10775 = vld [vmem:[%s3 + $0xec0] sm:$0xf]
      %v10776 = vld [vmem:[%s3 + $0x1008] sm:$0xff]
      %v10777 = vld [vmem:[%s3 + $0x1010] sm:$0xff]
      %v10778 = vld [vmem:[%s3 + $0x1018] sm:$0xff]
      %v10779 = vld [vmem:[%s3 + $0x1020] sm:$0xff]
      %v10780 = vld [vmem:[%s3 + $0x1028] sm:$0xf]
      %v10781 = vld [vmem:[%s3 + $0x1170] sm:$0xff]
      %v10782 = vld [vmem:[%s3 + $0x1178] sm:$0xff]
      %v10783 = vld [vmem:[%s3 + $0x1180] sm:$0xff]
      %v10784 = vld [vmem:[%s3 + $0x1188] sm:$0xff]
      %v10785 = vld [vmem:[%s3 + $0x1190] sm:$0xf]
      %v10786 = vld [vmem:[%s3 + $0x12d8] sm:$0xff]
      %v10787 = vld [vmem:[%s3 + $0x12e0] sm:$0xff]
      %v10788 = vld [vmem:[%s3 + $0x12e8] sm:$0xff]
      %v10789 = vld [vmem:[%s3 + $0x12f0] sm:$0xff]
      %v10790 = vld [vmem:[%s3 + $0x12f8] sm:$0xf]
      %v10791 = vld [vmem:[%s3 + $0x1440] sm:$0xff]
      %v10792 = vld [vmem:[%s3 + $0x1448] sm:$0xff]
      %v10793 = vld [vmem:[%s3 + $0x1450] sm:$0xff]
      %v10794 = vld [vmem:[%s3 + $0x1458] sm:$0xff]
      %v10795 = vld [vmem:[%s3 + $0x1460] sm:$0xf]
      %v10796 = vld [vmem:[%s3 + $0x15a8] sm:$0xff]
      %v10797 = vld [vmem:[%s3 + $0x15b0] sm:$0xff]
      %v10798 = vld [vmem:[%s3 + $0x15b8] sm:$0xff]
      %v10799 = vld [vmem:[%s3 + $0x15c0] sm:$0xff]
      %v10800 = vld [vmem:[%s3 + $0x15c8] sm:$0xf]
      %v10801 = vld [vmem:[%s5 + $0x24] sm:$0xff]
      %v10802 = vld [vmem:[%s5 + $0x2c] sm:$0x1]
      %v10805 = vperm.slane %v10801, 0
      %v10806 = vperm.slane %v10801, 1
      %v10807 = vperm.slane %v10801, 2
      %v10808 = vperm.slane %v10801, 3
      %v10809 = vperm.slane %v10801, 4
      %v10810 = vperm.slane %v10801, 5
      %v10811 = vperm.slane %v10801, 6
      %v10812 = vperm.slane %v10801, 7
      %v10813 = vperm.slane %v10802, 0
      %v10903 = vunpack.c.l.b16 %v10721
      %v10904 = vunpack.c.h.b16 %v10721
      %v10905 = vunpack.c.l.b16 %v10722
      %v10906 = vunpack.c.h.b16 %v10722
      %v10907 = vunpack.c.l.b16 %v10723
      %v10908 = vunpack.c.h.b16 %v10723
      %v10909 = vunpack.c.l.b16 %v10724
      %v10910 = vunpack.c.h.b16 %v10724
      %v10911 = vunpack.c.l.b16 %v10725
      %v10912 = vunpack.c.l.b16 %v10726
      %v10913 = vunpack.c.h.b16 %v10726
      %v10914 = vunpack.c.l.b16 %v10727
      %v10915 = vunpack.c.h.b16 %v10727
      %v10916 = vunpack.c.l.b16 %v10728
      %v10917 = vunpack.c.h.b16 %v10728
      %v10918 = vunpack.c.l.b16 %v10729
      %v10919 = vunpack.c.h.b16 %v10729
      %v10920 = vunpack.c.l.b16 %v10730
      %v10921 = vunpack.c.l.b16 %v10731
      %v10922 = vunpack.c.h.b16 %v10731
      %v10923 = vunpack.c.l.b16 %v10732
      %v10924 = vunpack.c.h.b16 %v10732
      %v10925 = vunpack.c.l.b16 %v10733
      %v10926 = vunpack.c.h.b16 %v10733
      %v10927 = vunpack.c.l.b16 %v10734
      %v10928 = vunpack.c.h.b16 %v10734
      %v10929 = vunpack.c.l.b16 %v10735
      %v10930 = vunpack.c.l.b16 %v10736
      %v10931 = vunpack.c.h.b16 %v10736
      %v10932 = vunpack.c.l.b16 %v10737
      %v10933 = vunpack.c.h.b16 %v10737
      %v10934 = vunpack.c.l.b16 %v10738
      %v10935 = vunpack.c.h.b16 %v10738
      %v10936 = vunpack.c.l.b16 %v10739
      %v10937 = vunpack.c.h.b16 %v10739
      %v10938 = vunpack.c.l.b16 %v10740
      %v10939 = vunpack.c.l.b16 %v10741
      %v10940 = vunpack.c.h.b16 %v10741
      %v10941 = vunpack.c.l.b16 %v10742
      %v10942 = vunpack.c.h.b16 %v10742
      %v10943 = vunpack.c.l.b16 %v10743
      %v10944 = vunpack.c.h.b16 %v10743
      %v10945 = vunpack.c.l.b16 %v10744
      %v10946 = vunpack.c.h.b16 %v10744
      %v10947 = vunpack.c.l.b16 %v10745
      %v10948 = vunpack.c.l.b16 %v10746
      %v10949 = vunpack.c.h.b16 %v10746
      %v10950 = vunpack.c.l.b16 %v10747
      %v10951 = vunpack.c.h.b16 %v10747
      %v10952 = vunpack.c.l.b16 %v10748
      %v10953 = vunpack.c.h.b16 %v10748
      %v10954 = vunpack.c.l.b16 %v10749
      %v10955 = vunpack.c.h.b16 %v10749
      %v10956 = vunpack.c.l.b16 %v10750
      %v10957 = vunpack.c.l.b16 %v10751
      %v10958 = vunpack.c.h.b16 %v10751
      %v10959 = vunpack.c.l.b16 %v10752
      %v10960 = vunpack.c.h.b16 %v10752
      %v10961 = vunpack.c.l.b16 %v10753
      %v10962 = vunpack.c.h.b16 %v10753
      %v10963 = vunpack.c.l.b16 %v10754
      %v10964 = vunpack.c.h.b16 %v10754
      %v10965 = vunpack.c.l.b16 %v10755
      %v10966 = vunpack.c.l.b16 %v10756
      %v10967 = vunpack.c.h.b16 %v10756
      %v10968 = vunpack.c.l.b16 %v10757
      %v10969 = vunpack.c.h.b16 %v10757
      %v10970 = vunpack.c.l.b16 %v10758
      %v10971 = vunpack.c.h.b16 %v10758
      %v10972 = vunpack.c.l.b16 %v10759
      %v10973 = vunpack.c.h.b16 %v10759
      %v10974 = vunpack.c.l.b16 %v10760
      %v10975 = vunpack.c.l.b16 %v10761
      %v10976 = vunpack.c.h.b16 %v10761
      %v10977 = vunpack.c.l.b16 %v10762
      %v10978 = vunpack.c.h.b16 %v10762
      %v10979 = vunpack.c.l.b16 %v10763
      %v10980 = vunpack.c.h.b16 %v10763
      %v10981 = vunpack.c.l.b16 %v10764
      %v10982 = vunpack.c.h.b16 %v10764
      %v10983 = vunpack.c.l.b16 %v10765
      %v10984 = vunpack.c.l.b16 %v10766
      %v10985 = vunpack.c.h.b16 %v10766
      %v10986 = vunpack.c.l.b16 %v10767
      %v10987 = vunpack.c.h.b16 %v10767
      %v10988 = vunpack.c.l.b16 %v10768
      %v10989 = vunpack.c.h.b16 %v10768
      %v10990 = vunpack.c.l.b16 %v10769
      %v10991 = vunpack.c.h.b16 %v10769
      %v10992 = vunpack.c.l.b16 %v10770
      %v10993 = vunpack.c.l.b16 %v10771
      %v10994 = vunpack.c.h.b16 %v10771
      %v10995 = vunpack.c.l.b16 %v10772
      %v10996 = vunpack.c.h.b16 %v10772
      %v10997 = vunpack.c.l.b16 %v10773
      %v10998 = vunpack.c.h.b16 %v10773
      %v10999 = vunpack.c.l.b16 %v10774
      %v11000 = vunpack.c.h.b16 %v10774
      %v11001 = vunpack.c.l.b16 %v10775
      %v11002 = vunpack.c.l.b16 %v10776
      %v11003 = vunpack.c.h.b16 %v10776
      %v11004 = vunpack.c.l.b16 %v10777
      %v11005 = vunpack.c.h.b16 %v10777
      %v11006 = vunpack.c.l.b16 %v10778
      %v11007 = vunpack.c.h.b16 %v10778
      %v11008 = vunpack.c.l.b16 %v10779
      %v11009 = vunpack.c.h.b16 %v10779
      %v11010 = vunpack.c.l.b16 %v10780
      %v11011 = vunpack.c.l.b16 %v10781
      %v11012 = vunpack.c.h.b16 %v10781
      %v11013 = vunpack.c.l.b16 %v10782
      %v11014 = vunpack.c.h.b16 %v10782
      %v11015 = vunpack.c.l.b16 %v10783
      %v11016 = vunpack.c.h.b16 %v10783
      %v11017 = vunpack.c.l.b16 %v10784
      %v11018 = vunpack.c.h.b16 %v10784
      %v11019 = vunpack.c.l.b16 %v10785
      %v11020 = vunpack.c.l.b16 %v10786
      %v11021 = vunpack.c.h.b16 %v10786
      %v11022 = vunpack.c.l.b16 %v10787
      %v11023 = vunpack.c.h.b16 %v10787
      %v11024 = vunpack.c.l.b16 %v10788
      %v11025 = vunpack.c.h.b16 %v10788
      %v11026 = vunpack.c.l.b16 %v10789
      %v11027 = vunpack.c.h.b16 %v10789
      %v11028 = vunpack.c.l.b16 %v10790
      %v11029 = vunpack.c.l.b16 %v10791
      %v11030 = vunpack.c.h.b16 %v10791
      %v11031 = vunpack.c.l.b16 %v10792
      %v11032 = vunpack.c.h.b16 %v10792
      %v11033 = vunpack.c.l.b16 %v10793
      %v11034 = vunpack.c.h.b16 %v10793
      %v11035 = vunpack.c.l.b16 %v10794
      %v11036 = vunpack.c.h.b16 %v10794
      %v11037 = vunpack.c.l.b16 %v10795
      %v11038 = vunpack.c.l.b16 %v10796
      %v11039 = vunpack.c.h.b16 %v10796
      %v11040 = vunpack.c.l.b16 %v10797
      %v11041 = vunpack.c.h.b16 %v10797
      %v11042 = vunpack.c.l.b16 %v10798
      %v11043 = vunpack.c.h.b16 %v10798
      %v11044 = vunpack.c.l.b16 %v10799
      %v11045 = vunpack.c.h.b16 %v10799
      %v11046 = vunpack.c.l.b16 %v10800
      %v11047 = vpack.c.b16 %v10912, %v10903
      %v11048 = vpack.c.b16 %v10913, %v10904
      %v11049 = vpack.c.b16 %v10914, %v10905
      %v11050 = vpack.c.b16 %v10915, %v10906
      %v11051 = vpack.c.b16 %v10916, %v10907
      %v11052 = vpack.c.b16 %v10917, %v10908
      %v11053 = vpack.c.b16 %v10918, %v10909
      %v11054 = vpack.c.b16 %v10919, %v10910
      %v11055 = vpack.c.b16 %v10920, %v10911
      %v11056 = vpack.c.b16 %v10930, %v10921
      %v11057 = vpack.c.b16 %v10931, %v10922
      %v11058 = vpack.c.b16 %v10932, %v10923
      %v11059 = vpack.c.b16 %v10933, %v10924
      %v11060 = vpack.c.b16 %v10934, %v10925
      %v11061 = vpack.c.b16 %v10935, %v10926
      %v11062 = vpack.c.b16 %v10936, %v10927
      %v11063 = vpack.c.b16 %v10937, %v10928
      %v11064 = vpack.c.b16 %v10938, %v10929
      %v11065 = vpack.c.b16 %v10948, %v10939
      %v11066 = vpack.c.b16 %v10949, %v10940
      %v11067 = vpack.c.b16 %v10950, %v10941
      %v11068 = vpack.c.b16 %v10951, %v10942
      %v11069 = vpack.c.b16 %v10952, %v10943
      %v11070 = vpack.c.b16 %v10953, %v10944
      %v11071 = vpack.c.b16 %v10954, %v10945
      %v11072 = vpack.c.b16 %v10955, %v10946
      %v11073 = vpack.c.b16 %v10956, %v10947
      %v11074 = vpack.c.b16 %v10966, %v10957
      %v11075 = vpack.c.b16 %v10967, %v10958
      %v11076 = vpack.c.b16 %v10968, %v10959
      %v11077 = vpack.c.b16 %v10969, %v10960
      %v11078 = vpack.c.b16 %v10970, %v10961
      %v11079 = vpack.c.b16 %v10971, %v10962
      %v11080 = vpack.c.b16 %v10972, %v10963
      %v11081 = vpack.c.b16 %v10973, %v10964
      %v11082 = vpack.c.b16 %v10974, %v10965
      %v11083 = vpack.c.b16 %v10984, %v10975
      %v11084 = vpack.c.b16 %v10985, %v10976
      %v11085 = vpack.c.b16 %v10986, %v10977
      %v11086 = vpack.c.b16 %v10987, %v10978
      %v11087 = vpack.c.b16 %v10988, %v10979
      %v11088 = vpack.c.b16 %v10989, %v10980
      %v11089 = vpack.c.b16 %v10990, %v10981
      %v11090 = vpack.c.b16 %v10991, %v10982
      %v11091 = vpack.c.b16 %v10992, %v10983
      %v11092 = vpack.c.b16 %v11002, %v10993
      %v11093 = vpack.c.b16 %v11003, %v10994
      %v11094 = vpack.c.b16 %v11004, %v10995
      %v11095 = vpack.c.b16 %v11005, %v10996
      %v11096 = vpack.c.b16 %v11006, %v10997
      %v11097 = vpack.c.b16 %v11007, %v10998
      %v11098 = vpack.c.b16 %v11008, %v10999
      %v11099 = vpack.c.b16 %v11009, %v11000
      %v11100 = vpack.c.b16 %v11010, %v11001
      %v11101 = vpack.c.b16 %v11020, %v11011
      %v11102 = vpack.c.b16 %v11021, %v11012
      %v11103 = vpack.c.b16 %v11022, %v11013
      %v11104 = vpack.c.b16 %v11023, %v11014
      %v11105 = vpack.c.b16 %v11024, %v11015
      %v11106 = vpack.c.b16 %v11025, %v11016
      %v11107 = vpack.c.b16 %v11026, %v11017
      %v11108 = vpack.c.b16 %v11027, %v11018
      %v11109 = vpack.c.b16 %v11028, %v11019
      %v11110 = vpack.c.b16 %v11038, %v11029
      %v11111 = vpack.c.b16 %v11039, %v11030
      %v11112 = vpack.c.b16 %v11040, %v11031
      %v11113 = vpack.c.b16 %v11041, %v11032
      %v11114 = vpack.c.b16 %v11042, %v11033
      %v11115 = vpack.c.b16 %v11043, %v11034
      %v11116 = vpack.c.b16 %v11044, %v11035
      %v11117 = vpack.c.b16 %v11045, %v11036
      %v11118 = vpack.c.b16 %v11046, %v11037
      %11191 = vmatpush.bf16.msra.mxu0 %v11110
      %11192 = vmatpush.bf16.msra.mxu0 %v11101
      %11193 = vmatpush.bf16.msra.mxu0 %v11092
      %11194 = vmatpush.bf16.msra.mxu0 %v11083
      %11195 = vmatpush.bf16.msra.mxu0 %v11074
      %11196 = vmatpush.bf16.msra.mxu0 %v11065
      %11197 = vmatpush.bf16.msra.mxu0 %v11056
      %11198 = vmatpush.bf16.msra.mxu0 %v11047
      %11199 = vmatmul.bf16.gmra.mxu0 %v8192
      %v11200 = vpop.f32.mrf.mxu0
      %v11201 = vadd.f32 %v10805, %v11200
      %v11202 = vpop.f32.mrf.mxu0
      %11203 = vdwg.mxu0
      %11204 = vmatpush.bf16.msra.mxu0 %v11111
      %11205 = vmatpush.bf16.msra.mxu0 %v11102
      %11206 = vmatpush.bf16.msra.mxu0 %v11093
      %11207 = vmatpush.bf16.msra.mxu0 %v11084
      %11208 = vmatpush.bf16.msra.mxu0 %v11075
      %11209 = vmatpush.bf16.msra.mxu0 %v11066
      %11210 = vmatpush.bf16.msra.mxu0 %v11057
      %11211 = vmatpush.bf16.msra.mxu0 %v11048
      %11212 = vmatmul.bf16.gmra.mxu0 %v8192
      %v11213 = vpop.f32.mrf.mxu0
      %v11214 = vadd.f32 %v10806, %v11213
      %v11215 = vpop.f32.mrf.mxu0
      %11216 = vdwg.mxu0
      %11217 = vmatpush.bf16.msra.mxu0 %v11112
      %11218 = vmatpush.bf16.msra.mxu0 %v11103
      %11219 = vmatpush.bf16.msra.mxu0 %v11094
      %11220 = vmatpush.bf16.msra.mxu0 %v11085
      %11221 = vmatpush.bf16.msra.mxu0 %v11076
      %11222 = vmatpush.bf16.msra.mxu0 %v11067
      %11223 = vmatpush.bf16.msra.mxu0 %v11058
      %11224 = vmatpush.bf16.msra.mxu0 %v11049
      %11225 = vmatmul.bf16.gmra.mxu0 %v8192
      %v11226 = vpop.f32.mrf.mxu0
      %v11227 = vadd.f32 %v10807, %v11226
      %v11228 = vpop.f32.mrf.mxu0
      %11229 = vdwg.mxu0
      %11230 = vmatpush.bf16.msra.mxu0 %v11113
      %11231 = vmatpush.bf16.msra.mxu0 %v11104
      %11232 = vmatpush.bf16.msra.mxu0 %v11095
      %11233 = vmatpush.bf16.msra.mxu0 %v11086
      %11234 = vmatpush.bf16.msra.mxu0 %v11077
      %11235 = vmatpush.bf16.msra.mxu0 %v11068
      %11236 = vmatpush.bf16.msra.mxu0 %v11059
      %11237 = vmatpush.bf16.msra.mxu0 %v11050
      %11238 = vmatmul.bf16.gmra.mxu0 %v8192
      %v11239 = vpop.f32.mrf.mxu0
      %v11240 = vadd.f32 %v10808, %v11239
      %v11241 = vpop.f32.mrf.mxu0
      %11242 = vdwg.mxu0
      %11243 = vmatpush.bf16.msra.mxu0 %v11114
      %11244 = vmatpush.bf16.msra.mxu0 %v11105
      %11245 = vmatpush.bf16.msra.mxu0 %v11096
      %11246 = vmatpush.bf16.msra.mxu0 %v11087
      %11247 = vmatpush.bf16.msra.mxu0 %v11078
      %11248 = vmatpush.bf16.msra.mxu0 %v11069
      %11249 = vmatpush.bf16.msra.mxu0 %v11060
      %11250 = vmatpush.bf16.msra.mxu0 %v11051
      %11251 = vmatmul.bf16.gmra.mxu0 %v8192
      %v11252 = vpop.f32.mrf.mxu0
      %v11253 = vadd.f32 %v10809, %v11252
      %v11254 = vpop.f32.mrf.mxu0
      %11255 = vdwg.mxu0
      %11256 = vmatpush.bf16.msra.mxu0 %v11115
      %11257 = vmatpush.bf16.msra.mxu0 %v11106
      %11258 = vmatpush.bf16.msra.mxu0 %v11097
      %11259 = vmatpush.bf16.msra.mxu0 %v11088
      %11260 = vmatpush.bf16.msra.mxu0 %v11079
      %11261 = vmatpush.bf16.msra.mxu0 %v11070
      %11262 = vmatpush.bf16.msra.mxu0 %v11061
      %11263 = vmatpush.bf16.msra.mxu0 %v11052
      %11264 = vmatmul.bf16.gmra.mxu0 %v8192
      %v11265 = vpop.f32.mrf.mxu0
      %v11266 = vadd.f32 %v10810, %v11265
      %v11267 = vpop.f32.mrf.mxu0
      %11268 = vdwg.mxu0
      %11269 = vmatpush.bf16.msra.mxu0 %v11116
      %11270 = vmatpush.bf16.msra.mxu0 %v11107
      %11271 = vmatpush.bf16.msra.mxu0 %v11098
      %11272 = vmatpush.bf16.msra.mxu0 %v11089
      %11273 = vmatpush.bf16.msra.mxu0 %v11080
      %11274 = vmatpush.bf16.msra.mxu0 %v11071
      %11275 = vmatpush.bf16.msra.mxu0 %v11062
      %11276 = vmatpush.bf16.msra.mxu0 %v11053
      %11277 = vmatmul.bf16.gmra.mxu0 %v8192
      %v11278 = vpop.f32.mrf.mxu0
      %v11279 = vadd.f32 %v10811, %v11278
      %v11280 = vpop.f32.mrf.mxu0
      %11281 = vdwg.mxu0
      %11282 = vmatpush.bf16.msra.mxu0 %v11117
      %11283 = vmatpush.bf16.msra.mxu0 %v11108
      %11284 = vmatpush.bf16.msra.mxu0 %v11099
      %11285 = vmatpush.bf16.msra.mxu0 %v11090
      %11286 = vmatpush.bf16.msra.mxu0 %v11081
      %11287 = vmatpush.bf16.msra.mxu0 %v11072
      %11288 = vmatpush.bf16.msra.mxu0 %v11063
      %11289 = vmatpush.bf16.msra.mxu0 %v11054
      %11290 = vmatmul.bf16.gmra.mxu0 %v8192
      %v11291 = vpop.f32.mrf.mxu0
      %v11292 = vadd.f32 %v10812, %v11291
      %v11293 = vpop.f32.mrf.mxu0
      %11294 = vdwg.mxu0
      %11295 = vmatpush.bf16.msra.mxu0 %v11118
      %11296 = vmatpush.bf16.msra.mxu0 %v11109
      %11297 = vmatpush.bf16.msra.mxu0 %v11100
      %11298 = vmatpush.bf16.msra.mxu0 %v11091
      %11299 = vmatpush.bf16.msra.mxu0 %v11082
      %11300 = vmatpush.bf16.msra.mxu0 %v11073
      %11301 = vmatpush.bf16.msra.mxu0 %v11064
      %11302 = vmatpush.bf16.msra.mxu0 %v11055
      %11303 = vmatmul.bf16.gmra.mxu0 %v8192
      %v11304 = vpop.f32.mrf.mxu0
      %v11305 = vadd.f32 %v10813, %v11304
      %v11306 = vpop.f32.mrf.mxu0
      %11307 = vdwg.mxu0
      %v11308 = vmul.f32 %v11201, 0.5
      %v11309 = vmul.f32 %v11214, 0.5
      %v11310 = vmul.f32 %v11227, 0.5
      %v11311 = vmul.f32 %v11240, 0.5
      %v11312 = vmul.f32 %v11253, 0.5
      %v11313 = vmul.f32 %v11266, 0.5
      %v11314 = vmul.f32 %v11279, 0.5
      %v11315 = vmul.f32 %v11292, 0.5
      %v11316 = vmul.f32 %v11305, 0.5
      %v11317 = vtanh.pop %v11308
      %v11318 = vtanh.pop %v11309
      %v11319 = vtanh.pop %v11310
      %v11320 = vtanh.pop %v11311
      %v11321 = vtanh.pop %v11312
      %v11322 = vtanh.pop %v11313
      %v11323 = vtanh.pop %v11314
      %v11324 = vtanh.pop %v11315
      %v11325 = vtanh.pop %v11316
      %v11326 = vmul.f32 %v11317, 0.5
      %v11327 = vmul.f32 %v11318, 0.5
      %v11328 = vmul.f32 %v11319, 0.5
      %v11329 = vmul.f32 %v11320, 0.5
      %v11330 = vmul.f32 %v11321, 0.5
      %v11331 = vmul.f32 %v11322, 0.5
      %v11332 = vmul.f32 %v11323, 0.5
      %v11333 = vmul.f32 %v11324, 0.5
      %v11334 = vmul.f32 %v11325, 0.5
      %v11335 = vadd.f32 %v11326, 0.5
      %v11336 = vadd.f32 %v11327, 0.5
      %v11337 = vadd.f32 %v11328, 0.5
      %v11338 = vadd.f32 %v11329, 0.5
      %v11339 = vadd.f32 %v11330, 0.5
      %v11340 = vadd.f32 %v11331, 0.5
      %v11341 = vadd.f32 %v11332, 0.5
      %v11342 = vadd.f32 %v11333, 0.5
      %v11343 = vadd.f32 %v11334, 0.5
      %11344 = vst [vmem:[%s251 + $0x120] sm:$0xff] %v11335
      %11345 = vst [vmem:[%s251 + $0x128] sm:$0xff] %v11336
      %11346 = vst [vmem:[%s251 + $0x130] sm:$0xff] %v11337
      %11347 = vst [vmem:[%s251 + $0x138] sm:$0xff] %v11338
      %11348 = vst [vmem:[%s251 + $0x140] sm:$0xff] %v11339
      %11349 = vst [vmem:[%s251 + $0x148] sm:$0xff] %v11340
      %11350 = vst [vmem:[%s251 + $0x150] sm:$0xff] %v11341
      %11351 = vst [vmem:[%s251 + $0x158] sm:$0xff] %v11342
      %11352 = vst [vmem:[%s251 + $0x160] sm:$0xff] %v11343
      %v11353 = vld [vmem:[%s3 + $0xb4] sm:$0xff]
      %v11354 = vld [vmem:[%s3 + $0xbc] sm:$0xff]
      %v11355 = vld [vmem:[%s3 + $0xc4] sm:$0xff]
      %v11356 = vld [vmem:[%s3 + $0xcc] sm:$0xff]
      %v11357 = vld [vmem:[%s3 + $0xd4] sm:$0xf]
      %v11358 = vld [vmem:[%s3 + $0x21c] sm:$0xff]
      %v11359 = vld [vmem:[%s3 + $0x224] sm:$0xff]
      %v11360 = vld [vmem:[%s3 + $0x22c] sm:$0xff]
      %v11361 = vld [vmem:[%s3 + $0x234] sm:$0xff]
      %v11362 = vld [vmem:[%s3 + $0x23c] sm:$0xf]
      %v11363 = vld [vmem:[%s3 + $0x384] sm:$0xff]
      %v11364 = vld [vmem:[%s3 + $0x38c] sm:$0xff]
      %v11365 = vld [vmem:[%s3 + $0x394] sm:$0xff]
      %v11366 = vld [vmem:[%s3 + $0x39c] sm:$0xff]
      %v11367 = vld [vmem:[%s3 + $0x3a4] sm:$0xf]
      %v11368 = vld [vmem:[%s3 + $0x4ec] sm:$0xff]
      %v11369 = vld [vmem:[%s3 + $0x4f4] sm:$0xff]
      %v11370 = vld [vmem:[%s3 + $0x4fc] sm:$0xff]
      %v11371 = vld [vmem:[%s3 + $0x504] sm:$0xff]
      %v11372 = vld [vmem:[%s3 + $0x50c] sm:$0xf]
      %v11373 = vld [vmem:[%s3 + $0x654] sm:$0xff]
      %v11374 = vld [vmem:[%s3 + $0x65c] sm:$0xff]
      %v11375 = vld [vmem:[%s3 + $0x664] sm:$0xff]
      %v11376 = vld [vmem:[%s3 + $0x66c] sm:$0xff]
      %v11377 = vld [vmem:[%s3 + $0x674] sm:$0xf]
      %v11378 = vld [vmem:[%s3 + $0x7bc] sm:$0xff]
      %v11379 = vld [vmem:[%s3 + $0x7c4] sm:$0xff]
      %v11380 = vld [vmem:[%s3 + $0x7cc] sm:$0xff]
      %v11381 = vld [vmem:[%s3 + $0x7d4] sm:$0xff]
      %v11382 = vld [vmem:[%s3 + $0x7dc] sm:$0xf]
      %v11383 = vld [vmem:[%s3 + $0x924] sm:$0xff]
      %v11384 = vld [vmem:[%s3 + $0x92c] sm:$0xff]
      %v11385 = vld [vmem:[%s3 + $0x934] sm:$0xff]
      %v11386 = vld [vmem:[%s3 + $0x93c] sm:$0xff]
      %v11387 = vld [vmem:[%s3 + $0x944] sm:$0xf]
      %v11388 = vld [vmem:[%s3 + $0xa8c] sm:$0xff]
      %v11389 = vld [vmem:[%s3 + $0xa94] sm:$0xff]
      %v11390 = vld [vmem:[%s3 + $0xa9c] sm:$0xff]
      %v11391 = vld [vmem:[%s3 + $0xaa4] sm:$0xff]
      %v11392 = vld [vmem:[%s3 + $0xaac] sm:$0xf]
      %v11393 = vld [vmem:[%s3 + $0xbf4] sm:$0xff]
      %v11394 = vld [vmem:[%s3 + $0xbfc] sm:$0xff]
      %v11395 = vld [vmem:[%s3 + $0xc04] sm:$0xff]
      %v11396 = vld [vmem:[%s3 + $0xc0c] sm:$0xff]
      %v11397 = vld [vmem:[%s3 + $0xc14] sm:$0xf]
      %v11398 = vld [vmem:[%s3 + $0xd5c] sm:$0xff]
      %v11399 = vld [vmem:[%s3 + $0xd64] sm:$0xff]
      %v11400 = vld [vmem:[%s3 + $0xd6c] sm:$0xff]
      %v11401 = vld [vmem:[%s3 + $0xd74] sm:$0xff]
      %v11402 = vld [vmem:[%s3 + $0xd7c] sm:$0xf]
      %v11403 = vld [vmem:[%s3 + $0xec4] sm:$0xff]
      %v11404 = vld [vmem:[%s3 + $0xecc] sm:$0xff]
      %v11405 = vld [vmem:[%s3 + $0xed4] sm:$0xff]
      %v11406 = vld [vmem:[%s3 + $0xedc] sm:$0xff]
      %v11407 = vld [vmem:[%s3 + $0xee4] sm:$0xf]
      %v11408 = vld [vmem:[%s3 + $0x102c] sm:$0xff]
      %v11409 = vld [vmem:[%s3 + $0x1034] sm:$0xff]
      %v11410 = vld [vmem:[%s3 + $0x103c] sm:$0xff]
      %v11411 = vld [vmem:[%s3 + $0x1044] sm:$0xff]
      %v11412 = vld [vmem:[%s3 + $0x104c] sm:$0xf]
      %v11413 = vld [vmem:[%s3 + $0x1194] sm:$0xff]
      %v11414 = vld [vmem:[%s3 + $0x119c] sm:$0xff]
      %v11415 = vld [vmem:[%s3 + $0x11a4] sm:$0xff]
      %v11416 = vld [vmem:[%s3 + $0x11ac] sm:$0xff]
      %v11417 = vld [vmem:[%s3 + $0x11b4] sm:$0xf]
      %v11418 = vld [vmem:[%s3 + $0x12fc] sm:$0xff]
      %v11419 = vld [vmem:[%s3 + $0x1304] sm:$0xff]
      %v11420 = vld [vmem:[%s3 + $0x130c] sm:$0xff]
      %v11421 = vld [vmem:[%s3 + $0x1314] sm:$0xff]
      %v11422 = vld [vmem:[%s3 + $0x131c] sm:$0xf]
      %v11423 = vld [vmem:[%s3 + $0x1464] sm:$0xff]
      %v11424 = vld [vmem:[%s3 + $0x146c] sm:$0xff]
      %v11425 = vld [vmem:[%s3 + $0x1474] sm:$0xff]
      %v11426 = vld [vmem:[%s3 + $0x147c] sm:$0xff]
      %v11427 = vld [vmem:[%s3 + $0x1484] sm:$0xf]
      %v11428 = vld [vmem:[%s3 + $0x15cc] sm:$0xff]
      %v11429 = vld [vmem:[%s3 + $0x15d4] sm:$0xff]
      %v11430 = vld [vmem:[%s3 + $0x15dc] sm:$0xff]
      %v11431 = vld [vmem:[%s3 + $0x15e4] sm:$0xff]
      %v11432 = vld [vmem:[%s3 + $0x15ec] sm:$0xf]
      %v11433 = vld [vmem:[%s5 + $0x2d] sm:$0xff]
      %v11434 = vld [vmem:[%s5 + $0x35] sm:$0x1]
      %v11437 = vperm.slane %v11433, 0
      %v11438 = vperm.slane %v11433, 1
      %v11439 = vperm.slane %v11433, 2
      %v11440 = vperm.slane %v11433, 3
      %v11441 = vperm.slane %v11433, 4
      %v11442 = vperm.slane %v11433, 5
      %v11443 = vperm.slane %v11433, 6
      %v11444 = vperm.slane %v11433, 7
      %v11445 = vperm.slane %v11434, 0
      %v11535 = vunpack.c.l.b16 %v11353
      %v11536 = vunpack.c.h.b16 %v11353
      %v11537 = vunpack.c.l.b16 %v11354
      %v11538 = vunpack.c.h.b16 %v11354
      %v11539 = vunpack.c.l.b16 %v11355
      %v11540 = vunpack.c.h.b16 %v11355
      %v11541 = vunpack.c.l.b16 %v11356
      %v11542 = vunpack.c.h.b16 %v11356
      %v11543 = vunpack.c.l.b16 %v11357
      %v11544 = vunpack.c.l.b16 %v11358
      %v11545 = vunpack.c.h.b16 %v11358
      %v11546 = vunpack.c.l.b16 %v11359
      %v11547 = vunpack.c.h.b16 %v11359
      %v11548 = vunpack.c.l.b16 %v11360
      %v11549 = vunpack.c.h.b16 %v11360
      %v11550 = vunpack.c.l.b16 %v11361
      %v11551 = vunpack.c.h.b16 %v11361
      %v11552 = vunpack.c.l.b16 %v11362
      %v11553 = vunpack.c.l.b16 %v11363
      %v11554 = vunpack.c.h.b16 %v11363
      %v11555 = vunpack.c.l.b16 %v11364
      %v11556 = vunpack.c.h.b16 %v11364
      %v11557 = vunpack.c.l.b16 %v11365
      %v11558 = vunpack.c.h.b16 %v11365
      %v11559 = vunpack.c.l.b16 %v11366
      %v11560 = vunpack.c.h.b16 %v11366
      %v11561 = vunpack.c.l.b16 %v11367
      %v11562 = vunpack.c.l.b16 %v11368
      %v11563 = vunpack.c.h.b16 %v11368
      %v11564 = vunpack.c.l.b16 %v11369
      %v11565 = vunpack.c.h.b16 %v11369
      %v11566 = vunpack.c.l.b16 %v11370
      %v11567 = vunpack.c.h.b16 %v11370
      %v11568 = vunpack.c.l.b16 %v11371
      %v11569 = vunpack.c.h.b16 %v11371
      %v11570 = vunpack.c.l.b16 %v11372
      %v11571 = vunpack.c.l.b16 %v11373
      %v11572 = vunpack.c.h.b16 %v11373
      %v11573 = vunpack.c.l.b16 %v11374
      %v11574 = vunpack.c.h.b16 %v11374
      %v11575 = vunpack.c.l.b16 %v11375
      %v11576 = vunpack.c.h.b16 %v11375
      %v11577 = vunpack.c.l.b16 %v11376
      %v11578 = vunpack.c.h.b16 %v11376
      %v11579 = vunpack.c.l.b16 %v11377
      %v11580 = vunpack.c.l.b16 %v11378
      %v11581 = vunpack.c.h.b16 %v11378
      %v11582 = vunpack.c.l.b16 %v11379
      %v11583 = vunpack.c.h.b16 %v11379
      %v11584 = vunpack.c.l.b16 %v11380
      %v11585 = vunpack.c.h.b16 %v11380
      %v11586 = vunpack.c.l.b16 %v11381
      %v11587 = vunpack.c.h.b16 %v11381
      %v11588 = vunpack.c.l.b16 %v11382
      %v11589 = vunpack.c.l.b16 %v11383
      %v11590 = vunpack.c.h.b16 %v11383
      %v11591 = vunpack.c.l.b16 %v11384
      %v11592 = vunpack.c.h.b16 %v11384
      %v11593 = vunpack.c.l.b16 %v11385
      %v11594 = vunpack.c.h.b16 %v11385
      %v11595 = vunpack.c.l.b16 %v11386
      %v11596 = vunpack.c.h.b16 %v11386
      %v11597 = vunpack.c.l.b16 %v11387
      %v11598 = vunpack.c.l.b16 %v11388
      %v11599 = vunpack.c.h.b16 %v11388
      %v11600 = vunpack.c.l.b16 %v11389
      %v11601 = vunpack.c.h.b16 %v11389
      %v11602 = vunpack.c.l.b16 %v11390
      %v11603 = vunpack.c.h.b16 %v11390
      %v11604 = vunpack.c.l.b16 %v11391
      %v11605 = vunpack.c.h.b16 %v11391
      %v11606 = vunpack.c.l.b16 %v11392
      %v11607 = vunpack.c.l.b16 %v11393
      %v11608 = vunpack.c.h.b16 %v11393
      %v11609 = vunpack.c.l.b16 %v11394
      %v11610 = vunpack.c.h.b16 %v11394
      %v11611 = vunpack.c.l.b16 %v11395
      %v11612 = vunpack.c.h.b16 %v11395
      %v11613 = vunpack.c.l.b16 %v11396
      %v11614 = vunpack.c.h.b16 %v11396
      %v11615 = vunpack.c.l.b16 %v11397
      %v11616 = vunpack.c.l.b16 %v11398
      %v11617 = vunpack.c.h.b16 %v11398
      %v11618 = vunpack.c.l.b16 %v11399
      %v11619 = vunpack.c.h.b16 %v11399
      %v11620 = vunpack.c.l.b16 %v11400
      %v11621 = vunpack.c.h.b16 %v11400
      %v11622 = vunpack.c.l.b16 %v11401
      %v11623 = vunpack.c.h.b16 %v11401
      %v11624 = vunpack.c.l.b16 %v11402
      %v11625 = vunpack.c.l.b16 %v11403
      %v11626 = vunpack.c.h.b16 %v11403
      %v11627 = vunpack.c.l.b16 %v11404
      %v11628 = vunpack.c.h.b16 %v11404
      %v11629 = vunpack.c.l.b16 %v11405
      %v11630 = vunpack.c.h.b16 %v11405
      %v11631 = vunpack.c.l.b16 %v11406
      %v11632 = vunpack.c.h.b16 %v11406
      %v11633 = vunpack.c.l.b16 %v11407
      %v11634 = vunpack.c.l.b16 %v11408
      %v11635 = vunpack.c.h.b16 %v11408
      %v11636 = vunpack.c.l.b16 %v11409
      %v11637 = vunpack.c.h.b16 %v11409
      %v11638 = vunpack.c.l.b16 %v11410
      %v11639 = vunpack.c.h.b16 %v11410
      %v11640 = vunpack.c.l.b16 %v11411
      %v11641 = vunpack.c.h.b16 %v11411
      %v11642 = vunpack.c.l.b16 %v11412
      %v11643 = vunpack.c.l.b16 %v11413
      %v11644 = vunpack.c.h.b16 %v11413
      %v11645 = vunpack.c.l.b16 %v11414
      %v11646 = vunpack.c.h.b16 %v11414
      %v11647 = vunpack.c.l.b16 %v11415
      %v11648 = vunpack.c.h.b16 %v11415
      %v11649 = vunpack.c.l.b16 %v11416
      %v11650 = vunpack.c.h.b16 %v11416
      %v11651 = vunpack.c.l.b16 %v11417
      %v11652 = vunpack.c.l.b16 %v11418
      %v11653 = vunpack.c.h.b16 %v11418
      %v11654 = vunpack.c.l.b16 %v11419
      %v11655 = vunpack.c.h.b16 %v11419
      %v11656 = vunpack.c.l.b16 %v11420
      %v11657 = vunpack.c.h.b16 %v11420
      %v11658 = vunpack.c.l.b16 %v11421
      %v11659 = vunpack.c.h.b16 %v11421
      %v11660 = vunpack.c.l.b16 %v11422
      %v11661 = vunpack.c.l.b16 %v11423
      %v11662 = vunpack.c.h.b16 %v11423
      %v11663 = vunpack.c.l.b16 %v11424
      %v11664 = vunpack.c.h.b16 %v11424
      %v11665 = vunpack.c.l.b16 %v11425
      %v11666 = vunpack.c.h.b16 %v11425
      %v11667 = vunpack.c.l.b16 %v11426
      %v11668 = vunpack.c.h.b16 %v11426
      %v11669 = vunpack.c.l.b16 %v11427
      %v11670 = vunpack.c.l.b16 %v11428
      %v11671 = vunpack.c.h.b16 %v11428
      %v11672 = vunpack.c.l.b16 %v11429
      %v11673 = vunpack.c.h.b16 %v11429
      %v11674 = vunpack.c.l.b16 %v11430
      %v11675 = vunpack.c.h.b16 %v11430
      %v11676 = vunpack.c.l.b16 %v11431
      %v11677 = vunpack.c.h.b16 %v11431
      %v11678 = vunpack.c.l.b16 %v11432
      %v11679 = vpack.c.b16 %v11544, %v11535
      %v11680 = vpack.c.b16 %v11545, %v11536
      %v11681 = vpack.c.b16 %v11546, %v11537
      %v11682 = vpack.c.b16 %v11547, %v11538
      %v11683 = vpack.c.b16 %v11548, %v11539
      %v11684 = vpack.c.b16 %v11549, %v11540
      %v11685 = vpack.c.b16 %v11550, %v11541
      %v11686 = vpack.c.b16 %v11551, %v11542
      %v11687 = vpack.c.b16 %v11552, %v11543
      %v11688 = vpack.c.b16 %v11562, %v11553
      %v11689 = vpack.c.b16 %v11563, %v11554
      %v11690 = vpack.c.b16 %v11564, %v11555
      %v11691 = vpack.c.b16 %v11565, %v11556
      %v11692 = vpack.c.b16 %v11566, %v11557
      %v11693 = vpack.c.b16 %v11567, %v11558
      %v11694 = vpack.c.b16 %v11568, %v11559
      %v11695 = vpack.c.b16 %v11569, %v11560
      %v11696 = vpack.c.b16 %v11570, %v11561
      %v11697 = vpack.c.b16 %v11580, %v11571
      %v11698 = vpack.c.b16 %v11581, %v11572
      %v11699 = vpack.c.b16 %v11582, %v11573
      %v11700 = vpack.c.b16 %v11583, %v11574
      %v11701 = vpack.c.b16 %v11584, %v11575
      %v11702 = vpack.c.b16 %v11585, %v11576
      %v11703 = vpack.c.b16 %v11586, %v11577
      %v11704 = vpack.c.b16 %v11587, %v11578
      %v11705 = vpack.c.b16 %v11588, %v11579
      %v11706 = vpack.c.b16 %v11598, %v11589
      %v11707 = vpack.c.b16 %v11599, %v11590
      %v11708 = vpack.c.b16 %v11600, %v11591
      %v11709 = vpack.c.b16 %v11601, %v11592
      %v11710 = vpack.c.b16 %v11602, %v11593
      %v11711 = vpack.c.b16 %v11603, %v11594
      %v11712 = vpack.c.b16 %v11604, %v11595
      %v11713 = vpack.c.b16 %v11605, %v11596
      %v11714 = vpack.c.b16 %v11606, %v11597
      %v11715 = vpack.c.b16 %v11616, %v11607
      %v11716 = vpack.c.b16 %v11617, %v11608
      %v11717 = vpack.c.b16 %v11618, %v11609
      %v11718 = vpack.c.b16 %v11619, %v11610
      %v11719 = vpack.c.b16 %v11620, %v11611
      %v11720 = vpack.c.b16 %v11621, %v11612
      %v11721 = vpack.c.b16 %v11622, %v11613
      %v11722 = vpack.c.b16 %v11623, %v11614
      %v11723 = vpack.c.b16 %v11624, %v11615
      %v11724 = vpack.c.b16 %v11634, %v11625
      %v11725 = vpack.c.b16 %v11635, %v11626
      %v11726 = vpack.c.b16 %v11636, %v11627
      %v11727 = vpack.c.b16 %v11637, %v11628
      %v11728 = vpack.c.b16 %v11638, %v11629
      %v11729 = vpack.c.b16 %v11639, %v11630
      %v11730 = vpack.c.b16 %v11640, %v11631
      %v11731 = vpack.c.b16 %v11641, %v11632
      %v11732 = vpack.c.b16 %v11642, %v11633
      %v11733 = vpack.c.b16 %v11652, %v11643
      %v11734 = vpack.c.b16 %v11653, %v11644
      %v11735 = vpack.c.b16 %v11654, %v11645
      %v11736 = vpack.c.b16 %v11655, %v11646
      %v11737 = vpack.c.b16 %v11656, %v11647
      %v11738 = vpack.c.b16 %v11657, %v11648
      %v11739 = vpack.c.b16 %v11658, %v11649
      %v11740 = vpack.c.b16 %v11659, %v11650
      %v11741 = vpack.c.b16 %v11660, %v11651
      %v11742 = vpack.c.b16 %v11670, %v11661
      %v11743 = vpack.c.b16 %v11671, %v11662
      %v11744 = vpack.c.b16 %v11672, %v11663
      %v11745 = vpack.c.b16 %v11673, %v11664
      %v11746 = vpack.c.b16 %v11674, %v11665
      %v11747 = vpack.c.b16 %v11675, %v11666
      %v11748 = vpack.c.b16 %v11676, %v11667
      %v11749 = vpack.c.b16 %v11677, %v11668
      %v11750 = vpack.c.b16 %v11678, %v11669
      %11823 = vmatpush.bf16.msra.mxu0 %v11742
      %11824 = vmatpush.bf16.msra.mxu0 %v11733
      %11825 = vmatpush.bf16.msra.mxu0 %v11724
      %11826 = vmatpush.bf16.msra.mxu0 %v11715
      %11827 = vmatpush.bf16.msra.mxu0 %v11706
      %11828 = vmatpush.bf16.msra.mxu0 %v11697
      %11829 = vmatpush.bf16.msra.mxu0 %v11688
      %11830 = vmatpush.bf16.msra.mxu0 %v11679
      %11831 = vmatmul.bf16.gmra.mxu0 %v8192
      %v11832 = vpop.f32.mrf.mxu0
      %v11833 = vadd.f32 %v11437, %v11832
      %v11834 = vpop.f32.mrf.mxu0
      %11835 = vdwg.mxu0
      %11836 = vmatpush.bf16.msra.mxu0 %v11743
      %11837 = vmatpush.bf16.msra.mxu0 %v11734
      %11838 = vmatpush.bf16.msra.mxu0 %v11725
      %11839 = vmatpush.bf16.msra.mxu0 %v11716
      %11840 = vmatpush.bf16.msra.mxu0 %v11707
      %11841 = vmatpush.bf16.msra.mxu0 %v11698
      %11842 = vmatpush.bf16.msra.mxu0 %v11689
      %11843 = vmatpush.bf16.msra.mxu0 %v11680
      %11844 = vmatmul.bf16.gmra.mxu0 %v8192
      %v11845 = vpop.f32.mrf.mxu0
      %v11846 = vadd.f32 %v11438, %v11845
      %v11847 = vpop.f32.mrf.mxu0
      %11848 = vdwg.mxu0
      %11849 = vmatpush.bf16.msra.mxu0 %v11744
      %11850 = vmatpush.bf16.msra.mxu0 %v11735
      %11851 = vmatpush.bf16.msra.mxu0 %v11726
      %11852 = vmatpush.bf16.msra.mxu0 %v11717
      %11853 = vmatpush.bf16.msra.mxu0 %v11708
      %11854 = vmatpush.bf16.msra.mxu0 %v11699
      %11855 = vmatpush.bf16.msra.mxu0 %v11690
      %11856 = vmatpush.bf16.msra.mxu0 %v11681
      %11857 = vmatmul.bf16.gmra.mxu0 %v8192
      %v11858 = vpop.f32.mrf.mxu0
      %v11859 = vadd.f32 %v11439, %v11858
      %v11860 = vpop.f32.mrf.mxu0
      %11861 = vdwg.mxu0
      %11862 = vmatpush.bf16.msra.mxu0 %v11745
      %11863 = vmatpush.bf16.msra.mxu0 %v11736
      %11864 = vmatpush.bf16.msra.mxu0 %v11727
      %11865 = vmatpush.bf16.msra.mxu0 %v11718
      %11866 = vmatpush.bf16.msra.mxu0 %v11709
      %11867 = vmatpush.bf16.msra.mxu0 %v11700
      %11868 = vmatpush.bf16.msra.mxu0 %v11691
      %11869 = vmatpush.bf16.msra.mxu0 %v11682
      %11870 = vmatmul.bf16.gmra.mxu0 %v8192
      %v11871 = vpop.f32.mrf.mxu0
      %v11872 = vadd.f32 %v11440, %v11871
      %v11873 = vpop.f32.mrf.mxu0
      %11874 = vdwg.mxu0
      %11875 = vmatpush.bf16.msra.mxu0 %v11746
      %11876 = vmatpush.bf16.msra.mxu0 %v11737
      %11877 = vmatpush.bf16.msra.mxu0 %v11728
      %11878 = vmatpush.bf16.msra.mxu0 %v11719
      %11879 = vmatpush.bf16.msra.mxu0 %v11710
      %11880 = vmatpush.bf16.msra.mxu0 %v11701
      %11881 = vmatpush.bf16.msra.mxu0 %v11692
      %11882 = vmatpush.bf16.msra.mxu0 %v11683
      %11883 = vmatmul.bf16.gmra.mxu0 %v8192
      %v11884 = vpop.f32.mrf.mxu0
      %v11885 = vadd.f32 %v11441, %v11884
      %v11886 = vpop.f32.mrf.mxu0
      %11887 = vdwg.mxu0
      %11888 = vmatpush.bf16.msra.mxu0 %v11747
      %11889 = vmatpush.bf16.msra.mxu0 %v11738
      %11890 = vmatpush.bf16.msra.mxu0 %v11729
      %11891 = vmatpush.bf16.msra.mxu0 %v11720
      %11892 = vmatpush.bf16.msra.mxu0 %v11711
      %11893 = vmatpush.bf16.msra.mxu0 %v11702
      %11894 = vmatpush.bf16.msra.mxu0 %v11693
      %11895 = vmatpush.bf16.msra.mxu0 %v11684
      %11896 = vmatmul.bf16.gmra.mxu0 %v8192
      %v11897 = vpop.f32.mrf.mxu0
      %v11898 = vadd.f32 %v11442, %v11897
      %v11899 = vpop.f32.mrf.mxu0
      %11900 = vdwg.mxu0
      %11901 = vmatpush.bf16.msra.mxu0 %v11748
      %11902 = vmatpush.bf16.msra.mxu0 %v11739
      %11903 = vmatpush.bf16.msra.mxu0 %v11730
      %11904 = vmatpush.bf16.msra.mxu0 %v11721
      %11905 = vmatpush.bf16.msra.mxu0 %v11712
      %11906 = vmatpush.bf16.msra.mxu0 %v11703
      %11907 = vmatpush.bf16.msra.mxu0 %v11694
      %11908 = vmatpush.bf16.msra.mxu0 %v11685
      %11909 = vmatmul.bf16.gmra.mxu0 %v8192
      %v11910 = vpop.f32.mrf.mxu0
      %v11911 = vadd.f32 %v11443, %v11910
      %v11912 = vpop.f32.mrf.mxu0
      %11913 = vdwg.mxu0
      %11914 = vmatpush.bf16.msra.mxu0 %v11749
      %11915 = vmatpush.bf16.msra.mxu0 %v11740
      %11916 = vmatpush.bf16.msra.mxu0 %v11731
      %11917 = vmatpush.bf16.msra.mxu0 %v11722
      %11918 = vmatpush.bf16.msra.mxu0 %v11713
      %11919 = vmatpush.bf16.msra.mxu0 %v11704
      %11920 = vmatpush.bf16.msra.mxu0 %v11695
      %11921 = vmatpush.bf16.msra.mxu0 %v11686
      %11922 = vmatmul.bf16.gmra.mxu0 %v8192
      %v11923 = vpop.f32.mrf.mxu0
      %v11924 = vadd.f32 %v11444, %v11923
      %v11925 = vpop.f32.mrf.mxu0
      %11926 = vdwg.mxu0
      %11927 = vmatpush.bf16.msra.mxu0 %v11750
      %11928 = vmatpush.bf16.msra.mxu0 %v11741
      %11929 = vmatpush.bf16.msra.mxu0 %v11732
      %11930 = vmatpush.bf16.msra.mxu0 %v11723
      %11931 = vmatpush.bf16.msra.mxu0 %v11714
      %11932 = vmatpush.bf16.msra.mxu0 %v11705
      %11933 = vmatpush.bf16.msra.mxu0 %v11696
      %11934 = vmatpush.bf16.msra.mxu0 %v11687
      %11935 = vmatmul.bf16.gmra.mxu0 %v8192
      %v11936 = vpop.f32.mrf.mxu0
      %v11937 = vadd.f32 %v11445, %v11936
      %v11938 = vpop.f32.mrf.mxu0
      %11939 = vdwg.mxu0
      %v11940 = vmul.f32 %v11833, 0.5
      %v11941 = vmul.f32 %v11846, 0.5
      %v11942 = vmul.f32 %v11859, 0.5
      %v11943 = vmul.f32 %v11872, 0.5
      %v11944 = vmul.f32 %v11885, 0.5
      %v11945 = vmul.f32 %v11898, 0.5
      %v11946 = vmul.f32 %v11911, 0.5
      %v11947 = vmul.f32 %v11924, 0.5
      %v11948 = vmul.f32 %v11937, 0.5
      %v11949 = vtanh.pop %v11940
      %v11950 = vtanh.pop %v11941
      %v11951 = vtanh.pop %v11942
      %v11952 = vtanh.pop %v11943
      %v11953 = vtanh.pop %v11944
      %v11954 = vtanh.pop %v11945
      %v11955 = vtanh.pop %v11946
      %v11956 = vtanh.pop %v11947
      %v11957 = vtanh.pop %v11948
      %v11958 = vmul.f32 %v11949, 0.5
      %v11959 = vmul.f32 %v11950, 0.5
      %v11960 = vmul.f32 %v11951, 0.5
      %v11961 = vmul.f32 %v11952, 0.5
      %v11962 = vmul.f32 %v11953, 0.5
      %v11963 = vmul.f32 %v11954, 0.5
      %v11964 = vmul.f32 %v11955, 0.5
      %v11965 = vmul.f32 %v11956, 0.5
      %v11966 = vmul.f32 %v11957, 0.5
      %v11967 = vadd.f32 %v11958, 0.5
      %v11968 = vadd.f32 %v11959, 0.5
      %v11969 = vadd.f32 %v11960, 0.5
      %v11970 = vadd.f32 %v11961, 0.5
      %v11971 = vadd.f32 %v11962, 0.5
      %v11972 = vadd.f32 %v11963, 0.5
      %v11973 = vadd.f32 %v11964, 0.5
      %v11974 = vadd.f32 %v11965, 0.5
      %v11975 = vadd.f32 %v11966, 0.5
      %11976 = vst [vmem:[%s251 + $0x168] sm:$0xff] %v11967
      %11977 = vst [vmem:[%s251 + $0x170] sm:$0xff] %v11968
      %11978 = vst [vmem:[%s251 + $0x178] sm:$0xff] %v11969
      %11979 = vst [vmem:[%s251 + $0x180] sm:$0xff] %v11970
      %11980 = vst [vmem:[%s251 + $0x188] sm:$0xff] %v11971
      %11981 = vst [vmem:[%s251 + $0x190] sm:$0xff] %v11972
      %11982 = vst [vmem:[%s251 + $0x198] sm:$0xff] %v11973
      %11983 = vst [vmem:[%s251 + $0x1a0] sm:$0xff] %v11974
      %11984 = vst [vmem:[%s251 + $0x1a8] sm:$0xff] %v11975
      %v11985 = vld [vmem:[%s3 + $0xd8] sm:$0xff]
      %v11986 = vld [vmem:[%s3 + $0xe0] sm:$0xff]
      %v11987 = vld [vmem:[%s3 + $0xe8] sm:$0xff]
      %v11988 = vld [vmem:[%s3 + $0xf0] sm:$0xff]
      %v11989 = vld [vmem:[%s3 + $0xf8] sm:$0xf]
      %v11990 = vld [vmem:[%s3 + $0x240] sm:$0xff]
      %v11991 = vld [vmem:[%s3 + $0x248] sm:$0xff]
      %v11992 = vld [vmem:[%s3 + $0x250] sm:$0xff]
      %v11993 = vld [vmem:[%s3 + $0x258] sm:$0xff]
      %v11994 = vld [vmem:[%s3 + $0x260] sm:$0xf]
      %v11995 = vld [vmem:[%s3 + $0x3a8] sm:$0xff]
      %v11996 = vld [vmem:[%s3 + $0x3b0] sm:$0xff]
      %v11997 = vld [vmem:[%s3 + $0x3b8] sm:$0xff]
      %v11998 = vld [vmem:[%s3 + $0x3c0] sm:$0xff]
      %v11999 = vld [vmem:[%s3 + $0x3c8] sm:$0xf]
      %v12000 = vld [vmem:[%s3 + $0x510] sm:$0xff]
      %v12001 = vld [vmem:[%s3 + $0x518] sm:$0xff]
      %v12002 = vld [vmem:[%s3 + $0x520] sm:$0xff]
      %v12003 = vld [vmem:[%s3 + $0x528] sm:$0xff]
      %v12004 = vld [vmem:[%s3 + $0x530] sm:$0xf]
      %v12005 = vld [vmem:[%s3 + $0x678] sm:$0xff]
      %v12006 = vld [vmem:[%s3 + $0x680] sm:$0xff]
      %v12007 = vld [vmem:[%s3 + $0x688] sm:$0xff]
      %v12008 = vld [vmem:[%s3 + $0x690] sm:$0xff]
      %v12009 = vld [vmem:[%s3 + $0x698] sm:$0xf]
      %v12010 = vld [vmem:[%s3 + $0x7e0] sm:$0xff]
      %v12011 = vld [vmem:[%s3 + $0x7e8] sm:$0xff]
      %v12012 = vld [vmem:[%s3 + $0x7f0] sm:$0xff]
      %v12013 = vld [vmem:[%s3 + $0x7f8] sm:$0xff]
      %v12014 = vld [vmem:[%s3 + $0x800] sm:$0xf]
      %v12015 = vld [vmem:[%s3 + $0x948] sm:$0xff]
      %v12016 = vld [vmem:[%s3 + $0x950] sm:$0xff]
      %v12017 = vld [vmem:[%s3 + $0x958] sm:$0xff]
      %v12018 = vld [vmem:[%s3 + $0x960] sm:$0xff]
      %v12019 = vld [vmem:[%s3 + $0x968] sm:$0xf]
      %v12020 = vld [vmem:[%s3 + $0xab0] sm:$0xff]
      %v12021 = vld [vmem:[%s3 + $0xab8] sm:$0xff]
      %v12022 = vld [vmem:[%s3 + $0xac0] sm:$0xff]
      %v12023 = vld [vmem:[%s3 + $0xac8] sm:$0xff]
      %v12024 = vld [vmem:[%s3 + $0xad0] sm:$0xf]
      %v12025 = vld [vmem:[%s3 + $0xc18] sm:$0xff]
      %v12026 = vld [vmem:[%s3 + $0xc20] sm:$0xff]
      %v12027 = vld [vmem:[%s3 + $0xc28] sm:$0xff]
      %v12028 = vld [vmem:[%s3 + $0xc30] sm:$0xff]
      %v12029 = vld [vmem:[%s3 + $0xc38] sm:$0xf]
      %v12030 = vld [vmem:[%s3 + $0xd80] sm:$0xff]
      %v12031 = vld [vmem:[%s3 + $0xd88] sm:$0xff]
      %v12032 = vld [vmem:[%s3 + $0xd90] sm:$0xff]
      %v12033 = vld [vmem:[%s3 + $0xd98] sm:$0xff]
      %v12034 = vld [vmem:[%s3 + $0xda0] sm:$0xf]
      %v12035 = vld [vmem:[%s3 + $0xee8] sm:$0xff]
      %v12036 = vld [vmem:[%s3 + $0xef0] sm:$0xff]
      %v12037 = vld [vmem:[%s3 + $0xef8] sm:$0xff]
      %v12038 = vld [vmem:[%s3 + $0xf00] sm:$0xff]
      %v12039 = vld [vmem:[%s3 + $0xf08] sm:$0xf]
      %v12040 = vld [vmem:[%s3 + $0x1050] sm:$0xff]
      %v12041 = vld [vmem:[%s3 + $0x1058] sm:$0xff]
      %v12042 = vld [vmem:[%s3 + $0x1060] sm:$0xff]
      %v12043 = vld [vmem:[%s3 + $0x1068] sm:$0xff]
      %v12044 = vld [vmem:[%s3 + $0x1070] sm:$0xf]
      %v12045 = vld [vmem:[%s3 + $0x11b8] sm:$0xff]
      %v12046 = vld [vmem:[%s3 + $0x11c0] sm:$0xff]
      %v12047 = vld [vmem:[%s3 + $0x11c8] sm:$0xff]
      %v12048 = vld [vmem:[%s3 + $0x11d0] sm:$0xff]
      %v12049 = vld [vmem:[%s3 + $0x11d8] sm:$0xf]
      %v12050 = vld [vmem:[%s3 + $0x1320] sm:$0xff]
      %v12051 = vld [vmem:[%s3 + $0x1328] sm:$0xff]
      %v12052 = vld [vmem:[%s3 + $0x1330] sm:$0xff]
      %v12053 = vld [vmem:[%s3 + $0x1338] sm:$0xff]
      %v12054 = vld [vmem:[%s3 + $0x1340] sm:$0xf]
      %v12055 = vld [vmem:[%s3 + $0x1488] sm:$0xff]
      %v12056 = vld [vmem:[%s3 + $0x1490] sm:$0xff]
      %v12057 = vld [vmem:[%s3 + $0x1498] sm:$0xff]
      %v12058 = vld [vmem:[%s3 + $0x14a0] sm:$0xff]
      %v12059 = vld [vmem:[%s3 + $0x14a8] sm:$0xf]
      %v12060 = vld [vmem:[%s3 + $0x15f0] sm:$0xff]
      %v12061 = vld [vmem:[%s3 + $0x15f8] sm:$0xff]
      %v12062 = vld [vmem:[%s3 + $0x1600] sm:$0xff]
      %v12063 = vld [vmem:[%s3 + $0x1608] sm:$0xff]
      %v12064 = vld [vmem:[%s3 + $0x1610] sm:$0xf]
      %v12065 = vld [vmem:[%s5 + $0x36] sm:$0xff]
      %v12066 = vld [vmem:[%s5 + $0x3e] sm:$0x1]
      %v12069 = vperm.slane %v12065, 0
      %v12070 = vperm.slane %v12065, 1
      %v12071 = vperm.slane %v12065, 2
      %v12072 = vperm.slane %v12065, 3
      %v12073 = vperm.slane %v12065, 4
      %v12074 = vperm.slane %v12065, 5
      %v12075 = vperm.slane %v12065, 6
      %v12076 = vperm.slane %v12065, 7
      %v12077 = vperm.slane %v12066, 0
      %v12167 = vunpack.c.l.b16 %v11985
      %v12168 = vunpack.c.h.b16 %v11985
      %v12169 = vunpack.c.l.b16 %v11986
      %v12170 = vunpack.c.h.b16 %v11986
      %v12171 = vunpack.c.l.b16 %v11987
      %v12172 = vunpack.c.h.b16 %v11987
      %v12173 = vunpack.c.l.b16 %v11988
      %v12174 = vunpack.c.h.b16 %v11988
      %v12175 = vunpack.c.l.b16 %v11989
      %v12176 = vunpack.c.l.b16 %v11990
      %v12177 = vunpack.c.h.b16 %v11990
      %v12178 = vunpack.c.l.b16 %v11991
      %v12179 = vunpack.c.h.b16 %v11991
      %v12180 = vunpack.c.l.b16 %v11992
      %v12181 = vunpack.c.h.b16 %v11992
      %v12182 = vunpack.c.l.b16 %v11993
      %v12183 = vunpack.c.h.b16 %v11993
      %v12184 = vunpack.c.l.b16 %v11994
      %v12185 = vunpack.c.l.b16 %v11995
      %v12186 = vunpack.c.h.b16 %v11995
      %v12187 = vunpack.c.l.b16 %v11996
      %v12188 = vunpack.c.h.b16 %v11996
      %v12189 = vunpack.c.l.b16 %v11997
      %v12190 = vunpack.c.h.b16 %v11997
      %v12191 = vunpack.c.l.b16 %v11998
      %v12192 = vunpack.c.h.b16 %v11998
      %v12193 = vunpack.c.l.b16 %v11999
      %v12194 = vunpack.c.l.b16 %v12000
      %v12195 = vunpack.c.h.b16 %v12000
      %v12196 = vunpack.c.l.b16 %v12001
      %v12197 = vunpack.c.h.b16 %v12001
      %v12198 = vunpack.c.l.b16 %v12002
      %v12199 = vunpack.c.h.b16 %v12002
      %v12200 = vunpack.c.l.b16 %v12003
      %v12201 = vunpack.c.h.b16 %v12003
      %v12202 = vunpack.c.l.b16 %v12004
      %v12203 = vunpack.c.l.b16 %v12005
      %v12204 = vunpack.c.h.b16 %v12005
      %v12205 = vunpack.c.l.b16 %v12006
      %v12206 = vunpack.c.h.b16 %v12006
      %v12207 = vunpack.c.l.b16 %v12007
      %v12208 = vunpack.c.h.b16 %v12007
      %v12209 = vunpack.c.l.b16 %v12008
      %v12210 = vunpack.c.h.b16 %v12008
      %v12211 = vunpack.c.l.b16 %v12009
      %v12212 = vunpack.c.l.b16 %v12010
      %v12213 = vunpack.c.h.b16 %v12010
      %v12214 = vunpack.c.l.b16 %v12011
      %v12215 = vunpack.c.h.b16 %v12011
      %v12216 = vunpack.c.l.b16 %v12012
      %v12217 = vunpack.c.h.b16 %v12012
      %v12218 = vunpack.c.l.b16 %v12013
      %v12219 = vunpack.c.h.b16 %v12013
      %v12220 = vunpack.c.l.b16 %v12014
      %v12221 = vunpack.c.l.b16 %v12015
      %v12222 = vunpack.c.h.b16 %v12015
      %v12223 = vunpack.c.l.b16 %v12016
      %v12224 = vunpack.c.h.b16 %v12016
      %v12225 = vunpack.c.l.b16 %v12017
      %v12226 = vunpack.c.h.b16 %v12017
      %v12227 = vunpack.c.l.b16 %v12018
      %v12228 = vunpack.c.h.b16 %v12018
      %v12229 = vunpack.c.l.b16 %v12019
      %v12230 = vunpack.c.l.b16 %v12020
      %v12231 = vunpack.c.h.b16 %v12020
      %v12232 = vunpack.c.l.b16 %v12021
      %v12233 = vunpack.c.h.b16 %v12021
      %v12234 = vunpack.c.l.b16 %v12022
      %v12235 = vunpack.c.h.b16 %v12022
      %v12236 = vunpack.c.l.b16 %v12023
      %v12237 = vunpack.c.h.b16 %v12023
      %v12238 = vunpack.c.l.b16 %v12024
      %v12239 = vunpack.c.l.b16 %v12025
      %v12240 = vunpack.c.h.b16 %v12025
      %v12241 = vunpack.c.l.b16 %v12026
      %v12242 = vunpack.c.h.b16 %v12026
      %v12243 = vunpack.c.l.b16 %v12027
      %v12244 = vunpack.c.h.b16 %v12027
      %v12245 = vunpack.c.l.b16 %v12028
      %v12246 = vunpack.c.h.b16 %v12028
      %v12247 = vunpack.c.l.b16 %v12029
      %v12248 = vunpack.c.l.b16 %v12030
      %v12249 = vunpack.c.h.b16 %v12030
      %v12250 = vunpack.c.l.b16 %v12031
      %v12251 = vunpack.c.h.b16 %v12031
      %v12252 = vunpack.c.l.b16 %v12032
      %v12253 = vunpack.c.h.b16 %v12032
      %v12254 = vunpack.c.l.b16 %v12033
      %v12255 = vunpack.c.h.b16 %v12033
      %v12256 = vunpack.c.l.b16 %v12034
      %v12257 = vunpack.c.l.b16 %v12035
      %v12258 = vunpack.c.h.b16 %v12035
      %v12259 = vunpack.c.l.b16 %v12036
      %v12260 = vunpack.c.h.b16 %v12036
      %v12261 = vunpack.c.l.b16 %v12037
      %v12262 = vunpack.c.h.b16 %v12037
      %v12263 = vunpack.c.l.b16 %v12038
      %v12264 = vunpack.c.h.b16 %v12038
      %v12265 = vunpack.c.l.b16 %v12039
      %v12266 = vunpack.c.l.b16 %v12040
      %v12267 = vunpack.c.h.b16 %v12040
      %v12268 = vunpack.c.l.b16 %v12041
      %v12269 = vunpack.c.h.b16 %v12041
      %v12270 = vunpack.c.l.b16 %v12042
      %v12271 = vunpack.c.h.b16 %v12042
      %v12272 = vunpack.c.l.b16 %v12043
      %v12273 = vunpack.c.h.b16 %v12043
      %v12274 = vunpack.c.l.b16 %v12044
      %v12275 = vunpack.c.l.b16 %v12045
      %v12276 = vunpack.c.h.b16 %v12045
      %v12277 = vunpack.c.l.b16 %v12046
      %v12278 = vunpack.c.h.b16 %v12046
      %v12279 = vunpack.c.l.b16 %v12047
      %v12280 = vunpack.c.h.b16 %v12047
      %v12281 = vunpack.c.l.b16 %v12048
      %v12282 = vunpack.c.h.b16 %v12048
      %v12283 = vunpack.c.l.b16 %v12049
      %v12284 = vunpack.c.l.b16 %v12050
      %v12285 = vunpack.c.h.b16 %v12050
      %v12286 = vunpack.c.l.b16 %v12051
      %v12287 = vunpack.c.h.b16 %v12051
      %v12288 = vunpack.c.l.b16 %v12052
      %v12289 = vunpack.c.h.b16 %v12052
      %v12290 = vunpack.c.l.b16 %v12053
      %v12291 = vunpack.c.h.b16 %v12053
      %v12292 = vunpack.c.l.b16 %v12054
      %v12293 = vunpack.c.l.b16 %v12055
      %v12294 = vunpack.c.h.b16 %v12055
      %v12295 = vunpack.c.l.b16 %v12056
      %v12296 = vunpack.c.h.b16 %v12056
      %v12297 = vunpack.c.l.b16 %v12057
      %v12298 = vunpack.c.h.b16 %v12057
      %v12299 = vunpack.c.l.b16 %v12058
      %v12300 = vunpack.c.h.b16 %v12058
      %v12301 = vunpack.c.l.b16 %v12059
      %v12302 = vunpack.c.l.b16 %v12060
      %v12303 = vunpack.c.h.b16 %v12060
      %v12304 = vunpack.c.l.b16 %v12061
      %v12305 = vunpack.c.h.b16 %v12061
      %v12306 = vunpack.c.l.b16 %v12062
      %v12307 = vunpack.c.h.b16 %v12062
      %v12308 = vunpack.c.l.b16 %v12063
      %v12309 = vunpack.c.h.b16 %v12063
      %v12310 = vunpack.c.l.b16 %v12064
      %v12311 = vpack.c.b16 %v12176, %v12167
      %v12312 = vpack.c.b16 %v12177, %v12168
      %v12313 = vpack.c.b16 %v12178, %v12169
      %v12314 = vpack.c.b16 %v12179, %v12170
      %v12315 = vpack.c.b16 %v12180, %v12171
      %v12316 = vpack.c.b16 %v12181, %v12172
      %v12317 = vpack.c.b16 %v12182, %v12173
      %v12318 = vpack.c.b16 %v12183, %v12174
      %v12319 = vpack.c.b16 %v12184, %v12175
      %v12320 = vpack.c.b16 %v12194, %v12185
      %v12321 = vpack.c.b16 %v12195, %v12186
      %v12322 = vpack.c.b16 %v12196, %v12187
      %v12323 = vpack.c.b16 %v12197, %v12188
      %v12324 = vpack.c.b16 %v12198, %v12189
      %v12325 = vpack.c.b16 %v12199, %v12190
      %v12326 = vpack.c.b16 %v12200, %v12191
      %v12327 = vpack.c.b16 %v12201, %v12192
      %v12328 = vpack.c.b16 %v12202, %v12193
      %v12329 = vpack.c.b16 %v12212, %v12203
      %v12330 = vpack.c.b16 %v12213, %v12204
      %v12331 = vpack.c.b16 %v12214, %v12205
      %v12332 = vpack.c.b16 %v12215, %v12206
      %v12333 = vpack.c.b16 %v12216, %v12207
      %v12334 = vpack.c.b16 %v12217, %v12208
      %v12335 = vpack.c.b16 %v12218, %v12209
      %v12336 = vpack.c.b16 %v12219, %v12210
      %v12337 = vpack.c.b16 %v12220, %v12211
      %v12338 = vpack.c.b16 %v12230, %v12221
      %v12339 = vpack.c.b16 %v12231, %v12222
      %v12340 = vpack.c.b16 %v12232, %v12223
      %v12341 = vpack.c.b16 %v12233, %v12224
      %v12342 = vpack.c.b16 %v12234, %v12225
      %v12343 = vpack.c.b16 %v12235, %v12226
      %v12344 = vpack.c.b16 %v12236, %v12227
      %v12345 = vpack.c.b16 %v12237, %v12228
      %v12346 = vpack.c.b16 %v12238, %v12229
      %v12347 = vpack.c.b16 %v12248, %v12239
      %v12348 = vpack.c.b16 %v12249, %v12240
      %v12349 = vpack.c.b16 %v12250, %v12241
      %v12350 = vpack.c.b16 %v12251, %v12242
      %v12351 = vpack.c.b16 %v12252, %v12243
      %v12352 = vpack.c.b16 %v12253, %v12244
      %v12353 = vpack.c.b16 %v12254, %v12245
      %v12354 = vpack.c.b16 %v12255, %v12246
      %v12355 = vpack.c.b16 %v12256, %v12247
      %v12356 = vpack.c.b16 %v12266, %v12257
      %v12357 = vpack.c.b16 %v12267, %v12258
      %v12358 = vpack.c.b16 %v12268, %v12259
      %v12359 = vpack.c.b16 %v12269, %v12260
      %v12360 = vpack.c.b16 %v12270, %v12261
      %v12361 = vpack.c.b16 %v12271, %v12262
      %v12362 = vpack.c.b16 %v12272, %v12263
      %v12363 = vpack.c.b16 %v12273, %v12264
      %v12364 = vpack.c.b16 %v12274, %v12265
      %v12365 = vpack.c.b16 %v12284, %v12275
      %v12366 = vpack.c.b16 %v12285, %v12276
      %v12367 = vpack.c.b16 %v12286, %v12277
      %v12368 = vpack.c.b16 %v12287, %v12278
      %v12369 = vpack.c.b16 %v12288, %v12279
      %v12370 = vpack.c.b16 %v12289, %v12280
      %v12371 = vpack.c.b16 %v12290, %v12281
      %v12372 = vpack.c.b16 %v12291, %v12282
      %v12373 = vpack.c.b16 %v12292, %v12283
      %v12374 = vpack.c.b16 %v12302, %v12293
      %v12375 = vpack.c.b16 %v12303, %v12294
      %v12376 = vpack.c.b16 %v12304, %v12295
      %v12377 = vpack.c.b16 %v12305, %v12296
      %v12378 = vpack.c.b16 %v12306, %v12297
      %v12379 = vpack.c.b16 %v12307, %v12298
      %v12380 = vpack.c.b16 %v12308, %v12299
      %v12381 = vpack.c.b16 %v12309, %v12300
      %v12382 = vpack.c.b16 %v12310, %v12301
      %12455 = vmatpush.bf16.msra.mxu0 %v12374
      %12456 = vmatpush.bf16.msra.mxu0 %v12365
      %12457 = vmatpush.bf16.msra.mxu0 %v12356
      %12458 = vmatpush.bf16.msra.mxu0 %v12347
      %12459 = vmatpush.bf16.msra.mxu0 %v12338
      %12460 = vmatpush.bf16.msra.mxu0 %v12329
      %12461 = vmatpush.bf16.msra.mxu0 %v12320
      %12462 = vmatpush.bf16.msra.mxu0 %v12311
      %12463 = vmatmul.bf16.gmra.mxu0 %v8192
      %v12464 = vpop.f32.mrf.mxu0
      %v12465 = vadd.f32 %v12069, %v12464
      %v12466 = vpop.f32.mrf.mxu0
      %12467 = vdwg.mxu0
      %12468 = vmatpush.bf16.msra.mxu0 %v12375
      %12469 = vmatpush.bf16.msra.mxu0 %v12366
      %12470 = vmatpush.bf16.msra.mxu0 %v12357
      %12471 = vmatpush.bf16.msra.mxu0 %v12348
      %12472 = vmatpush.bf16.msra.mxu0 %v12339
      %12473 = vmatpush.bf16.msra.mxu0 %v12330
      %12474 = vmatpush.bf16.msra.mxu0 %v12321
      %12475 = vmatpush.bf16.msra.mxu0 %v12312
      %12476 = vmatmul.bf16.gmra.mxu0 %v8192
      %v12477 = vpop.f32.mrf.mxu0
      %v12478 = vadd.f32 %v12070, %v12477
      %v12479 = vpop.f32.mrf.mxu0
      %12480 = vdwg.mxu0
      %12481 = vmatpush.bf16.msra.mxu0 %v12376
      %12482 = vmatpush.bf16.msra.mxu0 %v12367
      %12483 = vmatpush.bf16.msra.mxu0 %v12358
      %12484 = vmatpush.bf16.msra.mxu0 %v12349
      %12485 = vmatpush.bf16.msra.mxu0 %v12340
      %12486 = vmatpush.bf16.msra.mxu0 %v12331
      %12487 = vmatpush.bf16.msra.mxu0 %v12322
      %12488 = vmatpush.bf16.msra.mxu0 %v12313
      %12489 = vmatmul.bf16.gmra.mxu0 %v8192
      %v12490 = vpop.f32.mrf.mxu0
      %v12491 = vadd.f32 %v12071, %v12490
      %v12492 = vpop.f32.mrf.mxu0
      %12493 = vdwg.mxu0
      %12494 = vmatpush.bf16.msra.mxu0 %v12377
      %12495 = vmatpush.bf16.msra.mxu0 %v12368
      %12496 = vmatpush.bf16.msra.mxu0 %v12359
      %12497 = vmatpush.bf16.msra.mxu0 %v12350
      %12498 = vmatpush.bf16.msra.mxu0 %v12341
      %12499 = vmatpush.bf16.msra.mxu0 %v12332
      %12500 = vmatpush.bf16.msra.mxu0 %v12323
      %12501 = vmatpush.bf16.msra.mxu0 %v12314
      %12502 = vmatmul.bf16.gmra.mxu0 %v8192
      %v12503 = vpop.f32.mrf.mxu0
      %v12504 = vadd.f32 %v12072, %v12503
      %v12505 = vpop.f32.mrf.mxu0
      %12506 = vdwg.mxu0
      %12507 = vmatpush.bf16.msra.mxu0 %v12378
      %12508 = vmatpush.bf16.msra.mxu0 %v12369
      %12509 = vmatpush.bf16.msra.mxu0 %v12360
      %12510 = vmatpush.bf16.msra.mxu0 %v12351
      %12511 = vmatpush.bf16.msra.mxu0 %v12342
      %12512 = vmatpush.bf16.msra.mxu0 %v12333
      %12513 = vmatpush.bf16.msra.mxu0 %v12324
      %12514 = vmatpush.bf16.msra.mxu0 %v12315
      %12515 = vmatmul.bf16.gmra.mxu0 %v8192
      %v12516 = vpop.f32.mrf.mxu0
      %v12517 = vadd.f32 %v12073, %v12516
      %v12518 = vpop.f32.mrf.mxu0
      %12519 = vdwg.mxu0
      %12520 = vmatpush.bf16.msra.mxu0 %v12379
      %12521 = vmatpush.bf16.msra.mxu0 %v12370
      %12522 = vmatpush.bf16.msra.mxu0 %v12361
      %12523 = vmatpush.bf16.msra.mxu0 %v12352
      %12524 = vmatpush.bf16.msra.mxu0 %v12343
      %12525 = vmatpush.bf16.msra.mxu0 %v12334
      %12526 = vmatpush.bf16.msra.mxu0 %v12325
      %12527 = vmatpush.bf16.msra.mxu0 %v12316
      %12528 = vmatmul.bf16.gmra.mxu0 %v8192
      %v12529 = vpop.f32.mrf.mxu0
      %v12530 = vadd.f32 %v12074, %v12529
      %v12531 = vpop.f32.mrf.mxu0
      %12532 = vdwg.mxu0
      %12533 = vmatpush.bf16.msra.mxu0 %v12380
      %12534 = vmatpush.bf16.msra.mxu0 %v12371
      %12535 = vmatpush.bf16.msra.mxu0 %v12362
      %12536 = vmatpush.bf16.msra.mxu0 %v12353
      %12537 = vmatpush.bf16.msra.mxu0 %v12344
      %12538 = vmatpush.bf16.msra.mxu0 %v12335
      %12539 = vmatpush.bf16.msra.mxu0 %v12326
      %12540 = vmatpush.bf16.msra.mxu0 %v12317
      %12541 = vmatmul.bf16.gmra.mxu0 %v8192
      %v12542 = vpop.f32.mrf.mxu0
      %v12543 = vadd.f32 %v12075, %v12542
      %v12544 = vpop.f32.mrf.mxu0
      %12545 = vdwg.mxu0
      %12546 = vmatpush.bf16.msra.mxu0 %v12381
      %12547 = vmatpush.bf16.msra.mxu0 %v12372
      %12548 = vmatpush.bf16.msra.mxu0 %v12363
      %12549 = vmatpush.bf16.msra.mxu0 %v12354
      %12550 = vmatpush.bf16.msra.mxu0 %v12345
      %12551 = vmatpush.bf16.msra.mxu0 %v12336
      %12552 = vmatpush.bf16.msra.mxu0 %v12327
      %12553 = vmatpush.bf16.msra.mxu0 %v12318
      %12554 = vmatmul.bf16.gmra.mxu0 %v8192
      %v12555 = vpop.f32.mrf.mxu0
      %v12556 = vadd.f32 %v12076, %v12555
      %v12557 = vpop.f32.mrf.mxu0
      %12558 = vdwg.mxu0
      %12559 = vmatpush.bf16.msra.mxu0 %v12382
      %12560 = vmatpush.bf16.msra.mxu0 %v12373
      %12561 = vmatpush.bf16.msra.mxu0 %v12364
      %12562 = vmatpush.bf16.msra.mxu0 %v12355
      %12563 = vmatpush.bf16.msra.mxu0 %v12346
      %12564 = vmatpush.bf16.msra.mxu0 %v12337
      %12565 = vmatpush.bf16.msra.mxu0 %v12328
      %12566 = vmatpush.bf16.msra.mxu0 %v12319
      %12567 = vmatmul.bf16.gmra.mxu0 %v8192
      %v12568 = vpop.f32.mrf.mxu0
      %v12569 = vadd.f32 %v12077, %v12568
      %v12570 = vpop.f32.mrf.mxu0
      %12571 = vdwg.mxu0
      %v12572 = vmul.f32 %v12465, 0.5
      %v12573 = vmul.f32 %v12478, 0.5
      %v12574 = vmul.f32 %v12491, 0.5
      %v12575 = vmul.f32 %v12504, 0.5
      %v12576 = vmul.f32 %v12517, 0.5
      %v12577 = vmul.f32 %v12530, 0.5
      %v12578 = vmul.f32 %v12543, 0.5
      %v12579 = vmul.f32 %v12556, 0.5
      %v12580 = vmul.f32 %v12569, 0.5
      %v12581 = vtanh.pop %v12572
      %v12582 = vtanh.pop %v12573
      %v12583 = vtanh.pop %v12574
      %v12584 = vtanh.pop %v12575
      %v12585 = vtanh.pop %v12576
      %v12586 = vtanh.pop %v12577
      %v12587 = vtanh.pop %v12578
      %v12588 = vtanh.pop %v12579
      %v12589 = vtanh.pop %v12580
      %v12590 = vmul.f32 %v12581, 0.5
      %v12591 = vmul.f32 %v12582, 0.5
      %v12592 = vmul.f32 %v12583, 0.5
      %v12593 = vmul.f32 %v12584, 0.5
      %v12594 = vmul.f32 %v12585, 0.5
      %v12595 = vmul.f32 %v12586, 0.5
      %v12596 = vmul.f32 %v12587, 0.5
      %v12597 = vmul.f32 %v12588, 0.5
      %v12598 = vmul.f32 %v12589, 0.5
      %v12599 = vadd.f32 %v12590, 0.5
      %v12600 = vadd.f32 %v12591, 0.5
      %v12601 = vadd.f32 %v12592, 0.5
      %v12602 = vadd.f32 %v12593, 0.5
      %v12603 = vadd.f32 %v12594, 0.5
      %v12604 = vadd.f32 %v12595, 0.5
      %v12605 = vadd.f32 %v12596, 0.5
      %v12606 = vadd.f32 %v12597, 0.5
      %v12607 = vadd.f32 %v12598, 0.5
      %12608 = vst [vmem:[%s251 + $0x1b0] sm:$0xff] %v12599
      %12609 = vst [vmem:[%s251 + $0x1b8] sm:$0xff] %v12600
      %12610 = vst [vmem:[%s251 + $0x1c0] sm:$0xff] %v12601
      %12611 = vst [vmem:[%s251 + $0x1c8] sm:$0xff] %v12602
      %12612 = vst [vmem:[%s251 + $0x1d0] sm:$0xff] %v12603
      %12613 = vst [vmem:[%s251 + $0x1d8] sm:$0xff] %v12604
      %12614 = vst [vmem:[%s251 + $0x1e0] sm:$0xff] %v12605
      %12615 = vst [vmem:[%s251 + $0x1e8] sm:$0xff] %v12606
      %12616 = vst [vmem:[%s251 + $0x1f0] sm:$0xff] %v12607
      %v12617 = vld [vmem:[%s3 + $0xfc] sm:$0xff]
      %v12618 = vld [vmem:[%s3 + $0x104] sm:$0xff]
      %v12619 = vld [vmem:[%s3 + $0x10c] sm:$0xff]
      %v12620 = vld [vmem:[%s3 + $0x114] sm:$0xff]
      %v12621 = vld [vmem:[%s3 + $0x11c] sm:$0xf]
      %v12622 = vld [vmem:[%s3 + $0x264] sm:$0xff]
      %v12623 = vld [vmem:[%s3 + $0x26c] sm:$0xff]
      %v12624 = vld [vmem:[%s3 + $0x274] sm:$0xff]
      %v12625 = vld [vmem:[%s3 + $0x27c] sm:$0xff]
      %v12626 = vld [vmem:[%s3 + $0x284] sm:$0xf]
      %v12627 = vld [vmem:[%s3 + $0x3cc] sm:$0xff]
      %v12628 = vld [vmem:[%s3 + $0x3d4] sm:$0xff]
      %v12629 = vld [vmem:[%s3 + $0x3dc] sm:$0xff]
      %v12630 = vld [vmem:[%s3 + $0x3e4] sm:$0xff]
      %v12631 = vld [vmem:[%s3 + $0x3ec] sm:$0xf]
      %v12632 = vld [vmem:[%s3 + $0x534] sm:$0xff]
      %v12633 = vld [vmem:[%s3 + $0x53c] sm:$0xff]
      %v12634 = vld [vmem:[%s3 + $0x544] sm:$0xff]
      %v12635 = vld [vmem:[%s3 + $0x54c] sm:$0xff]
      %v12636 = vld [vmem:[%s3 + $0x554] sm:$0xf]
      %v12637 = vld [vmem:[%s3 + $0x69c] sm:$0xff]
      %v12638 = vld [vmem:[%s3 + $0x6a4] sm:$0xff]
      %v12639 = vld [vmem:[%s3 + $0x6ac] sm:$0xff]
      %v12640 = vld [vmem:[%s3 + $0x6b4] sm:$0xff]
      %v12641 = vld [vmem:[%s3 + $0x6bc] sm:$0xf]
      %v12642 = vld [vmem:[%s3 + $0x804] sm:$0xff]
      %v12643 = vld [vmem:[%s3 + $0x80c] sm:$0xff]
      %v12644 = vld [vmem:[%s3 + $0x814] sm:$0xff]
      %v12645 = vld [vmem:[%s3 + $0x81c] sm:$0xff]
      %v12646 = vld [vmem:[%s3 + $0x824] sm:$0xf]
      %v12647 = vld [vmem:[%s3 + $0x96c] sm:$0xff]
      %v12648 = vld [vmem:[%s3 + $0x974] sm:$0xff]
      %v12649 = vld [vmem:[%s3 + $0x97c] sm:$0xff]
      %v12650 = vld [vmem:[%s3 + $0x984] sm:$0xff]
      %v12651 = vld [vmem:[%s3 + $0x98c] sm:$0xf]
      %v12652 = vld [vmem:[%s3 + $0xad4] sm:$0xff]
      %v12653 = vld [vmem:[%s3 + $0xadc] sm:$0xff]
      %v12654 = vld [vmem:[%s3 + $0xae4] sm:$0xff]
      %v12655 = vld [vmem:[%s3 + $0xaec] sm:$0xff]
      %v12656 = vld [vmem:[%s3 + $0xaf4] sm:$0xf]
      %v12657 = vld [vmem:[%s3 + $0xc3c] sm:$0xff]
      %v12658 = vld [vmem:[%s3 + $0xc44] sm:$0xff]
      %v12659 = vld [vmem:[%s3 + $0xc4c] sm:$0xff]
      %v12660 = vld [vmem:[%s3 + $0xc54] sm:$0xff]
      %v12661 = vld [vmem:[%s3 + $0xc5c] sm:$0xf]
      %v12662 = vld [vmem:[%s3 + $0xda4] sm:$0xff]
      %v12663 = vld [vmem:[%s3 + $0xdac] sm:$0xff]
      %v12664 = vld [vmem:[%s3 + $0xdb4] sm:$0xff]
      %v12665 = vld [vmem:[%s3 + $0xdbc] sm:$0xff]
      %v12666 = vld [vmem:[%s3 + $0xdc4] sm:$0xf]
      %v12667 = vld [vmem:[%s3 + $0xf0c] sm:$0xff]
      %v12668 = vld [vmem:[%s3 + $0xf14] sm:$0xff]
      %v12669 = vld [vmem:[%s3 + $0xf1c] sm:$0xff]
      %v12670 = vld [vmem:[%s3 + $0xf24] sm:$0xff]
      %v12671 = vld [vmem:[%s3 + $0xf2c] sm:$0xf]
      %v12672 = vld [vmem:[%s3 + $0x1074] sm:$0xff]
      %v12673 = vld [vmem:[%s3 + $0x107c] sm:$0xff]
      %v12674 = vld [vmem:[%s3 + $0x1084] sm:$0xff]
      %v12675 = vld [vmem:[%s3 + $0x108c] sm:$0xff]
      %v12676 = vld [vmem:[%s3 + $0x1094] sm:$0xf]
      %v12677 = vld [vmem:[%s3 + $0x11dc] sm:$0xff]
      %v12678 = vld [vmem:[%s3 + $0x11e4] sm:$0xff]
      %v12679 = vld [vmem:[%s3 + $0x11ec] sm:$0xff]
      %v12680 = vld [vmem:[%s3 + $0x11f4] sm:$0xff]
      %v12681 = vld [vmem:[%s3 + $0x11fc] sm:$0xf]
      %v12682 = vld [vmem:[%s3 + $0x1344] sm:$0xff]
      %v12683 = vld [vmem:[%s3 + $0x134c] sm:$0xff]
      %v12684 = vld [vmem:[%s3 + $0x1354] sm:$0xff]
      %v12685 = vld [vmem:[%s3 + $0x135c] sm:$0xff]
      %v12686 = vld [vmem:[%s3 + $0x1364] sm:$0xf]
      %v12687 = vld [vmem:[%s3 + $0x14ac] sm:$0xff]
      %v12688 = vld [vmem:[%s3 + $0x14b4] sm:$0xff]
      %v12689 = vld [vmem:[%s3 + $0x14bc] sm:$0xff]
      %v12690 = vld [vmem:[%s3 + $0x14c4] sm:$0xff]
      %v12691 = vld [vmem:[%s3 + $0x14cc] sm:$0xf]
      %v12692 = vld [vmem:[%s3 + $0x1614] sm:$0xff]
      %v12693 = vld [vmem:[%s3 + $0x161c] sm:$0xff]
      %v12694 = vld [vmem:[%s3 + $0x1624] sm:$0xff]
      %v12695 = vld [vmem:[%s3 + $0x162c] sm:$0xff]
      %v12696 = vld [vmem:[%s3 + $0x1634] sm:$0xf]
      %v12697 = vld [vmem:[%s5 + $0x3f] sm:$0xff]
      %v12698 = vld [vmem:[%s5 + $0x47] sm:$0x1]
      %v12701 = vperm.slane %v12697, 0
      %v12702 = vperm.slane %v12697, 1
      %v12703 = vperm.slane %v12697, 2
      %v12704 = vperm.slane %v12697, 3
      %v12705 = vperm.slane %v12697, 4
      %v12706 = vperm.slane %v12697, 5
      %v12707 = vperm.slane %v12697, 6
      %v12708 = vperm.slane %v12697, 7
      %v12709 = vperm.slane %v12698, 0
      %v12799 = vunpack.c.l.b16 %v12617
      %v12800 = vunpack.c.h.b16 %v12617
      %v12801 = vunpack.c.l.b16 %v12618
      %v12802 = vunpack.c.h.b16 %v12618
      %v12803 = vunpack.c.l.b16 %v12619
      %v12804 = vunpack.c.h.b16 %v12619
      %v12805 = vunpack.c.l.b16 %v12620
      %v12806 = vunpack.c.h.b16 %v12620
      %v12807 = vunpack.c.l.b16 %v12621
      %v12808 = vunpack.c.l.b16 %v12622
      %v12809 = vunpack.c.h.b16 %v12622
      %v12810 = vunpack.c.l.b16 %v12623
      %v12811 = vunpack.c.h.b16 %v12623
      %v12812 = vunpack.c.l.b16 %v12624
      %v12813 = vunpack.c.h.b16 %v12624
      %v12814 = vunpack.c.l.b16 %v12625
      %v12815 = vunpack.c.h.b16 %v12625
      %v12816 = vunpack.c.l.b16 %v12626
      %v12817 = vunpack.c.l.b16 %v12627
      %v12818 = vunpack.c.h.b16 %v12627
      %v12819 = vunpack.c.l.b16 %v12628
      %v12820 = vunpack.c.h.b16 %v12628
      %v12821 = vunpack.c.l.b16 %v12629
      %v12822 = vunpack.c.h.b16 %v12629
      %v12823 = vunpack.c.l.b16 %v12630
      %v12824 = vunpack.c.h.b16 %v12630
      %v12825 = vunpack.c.l.b16 %v12631
      %v12826 = vunpack.c.l.b16 %v12632
      %v12827 = vunpack.c.h.b16 %v12632
      %v12828 = vunpack.c.l.b16 %v12633
      %v12829 = vunpack.c.h.b16 %v12633
      %v12830 = vunpack.c.l.b16 %v12634
      %v12831 = vunpack.c.h.b16 %v12634
      %v12832 = vunpack.c.l.b16 %v12635
      %v12833 = vunpack.c.h.b16 %v12635
      %v12834 = vunpack.c.l.b16 %v12636
      %v12835 = vunpack.c.l.b16 %v12637
      %v12836 = vunpack.c.h.b16 %v12637
      %v12837 = vunpack.c.l.b16 %v12638
      %v12838 = vunpack.c.h.b16 %v12638
      %v12839 = vunpack.c.l.b16 %v12639
      %v12840 = vunpack.c.h.b16 %v12639
      %v12841 = vunpack.c.l.b16 %v12640
      %v12842 = vunpack.c.h.b16 %v12640
      %v12843 = vunpack.c.l.b16 %v12641
      %v12844 = vunpack.c.l.b16 %v12642
      %v12845 = vunpack.c.h.b16 %v12642
      %v12846 = vunpack.c.l.b16 %v12643
      %v12847 = vunpack.c.h.b16 %v12643
      %v12848 = vunpack.c.l.b16 %v12644
      %v12849 = vunpack.c.h.b16 %v12644
      %v12850 = vunpack.c.l.b16 %v12645
      %v12851 = vunpack.c.h.b16 %v12645
      %v12852 = vunpack.c.l.b16 %v12646
      %v12853 = vunpack.c.l.b16 %v12647
      %v12854 = vunpack.c.h.b16 %v12647
      %v12855 = vunpack.c.l.b16 %v12648
      %v12856 = vunpack.c.h.b16 %v12648
      %v12857 = vunpack.c.l.b16 %v12649
      %v12858 = vunpack.c.h.b16 %v12649
      %v12859 = vunpack.c.l.b16 %v12650
      %v12860 = vunpack.c.h.b16 %v12650
      %v12861 = vunpack.c.l.b16 %v12651
      %v12862 = vunpack.c.l.b16 %v12652
      %v12863 = vunpack.c.h.b16 %v12652
      %v12864 = vunpack.c.l.b16 %v12653
      %v12865 = vunpack.c.h.b16 %v12653
      %v12866 = vunpack.c.l.b16 %v12654
      %v12867 = vunpack.c.h.b16 %v12654
      %v12868 = vunpack.c.l.b16 %v12655
      %v12869 = vunpack.c.h.b16 %v12655
      %v12870 = vunpack.c.l.b16 %v12656
      %v12871 = vunpack.c.l.b16 %v12657
      %v12872 = vunpack.c.h.b16 %v12657
      %v12873 = vunpack.c.l.b16 %v12658
      %v12874 = vunpack.c.h.b16 %v12658
      %v12875 = vunpack.c.l.b16 %v12659
      %v12876 = vunpack.c.h.b16 %v12659
      %v12877 = vunpack.c.l.b16 %v12660
      %v12878 = vunpack.c.h.b16 %v12660
      %v12879 = vunpack.c.l.b16 %v12661
      %v12880 = vunpack.c.l.b16 %v12662
      %v12881 = vunpack.c.h.b16 %v12662
      %v12882 = vunpack.c.l.b16 %v12663
      %v12883 = vunpack.c.h.b16 %v12663
      %v12884 = vunpack.c.l.b16 %v12664
      %v12885 = vunpack.c.h.b16 %v12664
      %v12886 = vunpack.c.l.b16 %v12665
      %v12887 = vunpack.c.h.b16 %v12665
      %v12888 = vunpack.c.l.b16 %v12666
      %v12889 = vunpack.c.l.b16 %v12667
      %v12890 = vunpack.c.h.b16 %v12667
      %v12891 = vunpack.c.l.b16 %v12668
      %v12892 = vunpack.c.h.b16 %v12668
      %v12893 = vunpack.c.l.b16 %v12669
      %v12894 = vunpack.c.h.b16 %v12669
      %v12895 = vunpack.c.l.b16 %v12670
      %v12896 = vunpack.c.h.b16 %v12670
      %v12897 = vunpack.c.l.b16 %v12671
      %v12898 = vunpack.c.l.b16 %v12672
      %v12899 = vunpack.c.h.b16 %v12672
      %v12900 = vunpack.c.l.b16 %v12673
      %v12901 = vunpack.c.h.b16 %v12673
      %v12902 = vunpack.c.l.b16 %v12674
      %v12903 = vunpack.c.h.b16 %v12674
      %v12904 = vunpack.c.l.b16 %v12675
      %v12905 = vunpack.c.h.b16 %v12675
      %v12906 = vunpack.c.l.b16 %v12676
      %v12907 = vunpack.c.l.b16 %v12677
      %v12908 = vunpack.c.h.b16 %v12677
      %v12909 = vunpack.c.l.b16 %v12678
      %v12910 = vunpack.c.h.b16 %v12678
      %v12911 = vunpack.c.l.b16 %v12679
      %v12912 = vunpack.c.h.b16 %v12679
      %v12913 = vunpack.c.l.b16 %v12680
      %v12914 = vunpack.c.h.b16 %v12680
      %v12915 = vunpack.c.l.b16 %v12681
      %v12916 = vunpack.c.l.b16 %v12682
      %v12917 = vunpack.c.h.b16 %v12682
      %v12918 = vunpack.c.l.b16 %v12683
      %v12919 = vunpack.c.h.b16 %v12683
      %v12920 = vunpack.c.l.b16 %v12684
      %v12921 = vunpack.c.h.b16 %v12684
      %v12922 = vunpack.c.l.b16 %v12685
      %v12923 = vunpack.c.h.b16 %v12685
      %v12924 = vunpack.c.l.b16 %v12686
      %v12925 = vunpack.c.l.b16 %v12687
      %v12926 = vunpack.c.h.b16 %v12687
      %v12927 = vunpack.c.l.b16 %v12688
      %v12928 = vunpack.c.h.b16 %v12688
      %v12929 = vunpack.c.l.b16 %v12689
      %v12930 = vunpack.c.h.b16 %v12689
      %v12931 = vunpack.c.l.b16 %v12690
      %v12932 = vunpack.c.h.b16 %v12690
      %v12933 = vunpack.c.l.b16 %v12691
      %v12934 = vunpack.c.l.b16 %v12692
      %v12935 = vunpack.c.h.b16 %v12692
      %v12936 = vunpack.c.l.b16 %v12693
      %v12937 = vunpack.c.h.b16 %v12693
      %v12938 = vunpack.c.l.b16 %v12694
      %v12939 = vunpack.c.h.b16 %v12694
      %v12940 = vunpack.c.l.b16 %v12695
      %v12941 = vunpack.c.h.b16 %v12695
      %v12942 = vunpack.c.l.b16 %v12696
      %v12943 = vpack.c.b16 %v12808, %v12799
      %v12944 = vpack.c.b16 %v12809, %v12800
      %v12945 = vpack.c.b16 %v12810, %v12801
      %v12946 = vpack.c.b16 %v12811, %v12802
      %v12947 = vpack.c.b16 %v12812, %v12803
      %v12948 = vpack.c.b16 %v12813, %v12804
      %v12949 = vpack.c.b16 %v12814, %v12805
      %v12950 = vpack.c.b16 %v12815, %v12806
      %v12951 = vpack.c.b16 %v12816, %v12807
      %v12952 = vpack.c.b16 %v12826, %v12817
      %v12953 = vpack.c.b16 %v12827, %v12818
      %v12954 = vpack.c.b16 %v12828, %v12819
      %v12955 = vpack.c.b16 %v12829, %v12820
      %v12956 = vpack.c.b16 %v12830, %v12821
      %v12957 = vpack.c.b16 %v12831, %v12822
      %v12958 = vpack.c.b16 %v12832, %v12823
      %v12959 = vpack.c.b16 %v12833, %v12824
      %v12960 = vpack.c.b16 %v12834, %v12825
      %v12961 = vpack.c.b16 %v12844, %v12835
      %v12962 = vpack.c.b16 %v12845, %v12836
      %v12963 = vpack.c.b16 %v12846, %v12837
      %v12964 = vpack.c.b16 %v12847, %v12838
      %v12965 = vpack.c.b16 %v12848, %v12839
      %v12966 = vpack.c.b16 %v12849, %v12840
      %v12967 = vpack.c.b16 %v12850, %v12841
      %v12968 = vpack.c.b16 %v12851, %v12842
      %v12969 = vpack.c.b16 %v12852, %v12843
      %v12970 = vpack.c.b16 %v12862, %v12853
      %v12971 = vpack.c.b16 %v12863, %v12854
      %v12972 = vpack.c.b16 %v12864, %v12855
      %v12973 = vpack.c.b16 %v12865, %v12856
      %v12974 = vpack.c.b16 %v12866, %v12857
      %v12975 = vpack.c.b16 %v12867, %v12858
      %v12976 = vpack.c.b16 %v12868, %v12859
      %v12977 = vpack.c.b16 %v12869, %v12860
      %v12978 = vpack.c.b16 %v12870, %v12861
      %v12979 = vpack.c.b16 %v12880, %v12871
      %v12980 = vpack.c.b16 %v12881, %v12872
      %v12981 = vpack.c.b16 %v12882, %v12873
      %v12982 = vpack.c.b16 %v12883, %v12874
      %v12983 = vpack.c.b16 %v12884, %v12875
      %v12984 = vpack.c.b16 %v12885, %v12876
      %v12985 = vpack.c.b16 %v12886, %v12877
      %v12986 = vpack.c.b16 %v12887, %v12878
      %v12987 = vpack.c.b16 %v12888, %v12879
      %v12988 = vpack.c.b16 %v12898, %v12889
      %v12989 = vpack.c.b16 %v12899, %v12890
      %v12990 = vpack.c.b16 %v12900, %v12891
      %v12991 = vpack.c.b16 %v12901, %v12892
      %v12992 = vpack.c.b16 %v12902, %v12893
      %v12993 = vpack.c.b16 %v12903, %v12894
      %v12994 = vpack.c.b16 %v12904, %v12895
      %v12995 = vpack.c.b16 %v12905, %v12896
      %v12996 = vpack.c.b16 %v12906, %v12897
      %v12997 = vpack.c.b16 %v12916, %v12907
      %v12998 = vpack.c.b16 %v12917, %v12908
      %v12999 = vpack.c.b16 %v12918, %v12909
      %v13000 = vpack.c.b16 %v12919, %v12910
      %v13001 = vpack.c.b16 %v12920, %v12911
      %v13002 = vpack.c.b16 %v12921, %v12912
      %v13003 = vpack.c.b16 %v12922, %v12913
      %v13004 = vpack.c.b16 %v12923, %v12914
      %v13005 = vpack.c.b16 %v12924, %v12915
      %v13006 = vpack.c.b16 %v12934, %v12925
      %v13007 = vpack.c.b16 %v12935, %v12926
      %v13008 = vpack.c.b16 %v12936, %v12927
      %v13009 = vpack.c.b16 %v12937, %v12928
      %v13010 = vpack.c.b16 %v12938, %v12929
      %v13011 = vpack.c.b16 %v12939, %v12930
      %v13012 = vpack.c.b16 %v12940, %v12931
      %v13013 = vpack.c.b16 %v12941, %v12932
      %v13014 = vpack.c.b16 %v12942, %v12933
      %13087 = vmatpush.bf16.msra.mxu0 %v13006
      %13088 = vmatpush.bf16.msra.mxu0 %v12997
      %13089 = vmatpush.bf16.msra.mxu0 %v12988
      %13090 = vmatpush.bf16.msra.mxu0 %v12979
      %13091 = vmatpush.bf16.msra.mxu0 %v12970
      %13092 = vmatpush.bf16.msra.mxu0 %v12961
      %13093 = vmatpush.bf16.msra.mxu0 %v12952
      %13094 = vmatpush.bf16.msra.mxu0 %v12943
      %13095 = vmatmul.bf16.gmra.mxu0 %v8192
      %v13096 = vpop.f32.mrf.mxu0
      %v13097 = vadd.f32 %v12701, %v13096
      %v13098 = vpop.f32.mrf.mxu0
      %13099 = vdwg.mxu0
      %13100 = vmatpush.bf16.msra.mxu0 %v13007
      %13101 = vmatpush.bf16.msra.mxu0 %v12998
      %13102 = vmatpush.bf16.msra.mxu0 %v12989
      %13103 = vmatpush.bf16.msra.mxu0 %v12980
      %13104 = vmatpush.bf16.msra.mxu0 %v12971
      %13105 = vmatpush.bf16.msra.mxu0 %v12962
      %13106 = vmatpush.bf16.msra.mxu0 %v12953
      %13107 = vmatpush.bf16.msra.mxu0 %v12944
      %13108 = vmatmul.bf16.gmra.mxu0 %v8192
      %v13109 = vpop.f32.mrf.mxu0
      %v13110 = vadd.f32 %v12702, %v13109
      %v13111 = vpop.f32.mrf.mxu0
      %13112 = vdwg.mxu0
      %13113 = vmatpush.bf16.msra.mxu0 %v13008
      %13114 = vmatpush.bf16.msra.mxu0 %v12999
      %13115 = vmatpush.bf16.msra.mxu0 %v12990
      %13116 = vmatpush.bf16.msra.mxu0 %v12981
      %13117 = vmatpush.bf16.msra.mxu0 %v12972
      %13118 = vmatpush.bf16.msra.mxu0 %v12963
      %13119 = vmatpush.bf16.msra.mxu0 %v12954
      %13120 = vmatpush.bf16.msra.mxu0 %v12945
      %13121 = vmatmul.bf16.gmra.mxu0 %v8192
      %v13122 = vpop.f32.mrf.mxu0
      %v13123 = vadd.f32 %v12703, %v13122
      %v13124 = vpop.f32.mrf.mxu0
      %13125 = vdwg.mxu0
      %13126 = vmatpush.bf16.msra.mxu0 %v13009
      %13127 = vmatpush.bf16.msra.mxu0 %v13000
      %13128 = vmatpush.bf16.msra.mxu0 %v12991
      %13129 = vmatpush.bf16.msra.mxu0 %v12982
      %13130 = vmatpush.bf16.msra.mxu0 %v12973
      %13131 = vmatpush.bf16.msra.mxu0 %v12964
      %13132 = vmatpush.bf16.msra.mxu0 %v12955
      %13133 = vmatpush.bf16.msra.mxu0 %v12946
      %13134 = vmatmul.bf16.gmra.mxu0 %v8192
      %v13135 = vpop.f32.mrf.mxu0
      %v13136 = vadd.f32 %v12704, %v13135
      %v13137 = vpop.f32.mrf.mxu0
      %13138 = vdwg.mxu0
      %13139 = vmatpush.bf16.msra.mxu0 %v13010
      %13140 = vmatpush.bf16.msra.mxu0 %v13001
      %13141 = vmatpush.bf16.msra.mxu0 %v12992
      %13142 = vmatpush.bf16.msra.mxu0 %v12983
      %13143 = vmatpush.bf16.msra.mxu0 %v12974
      %13144 = vmatpush.bf16.msra.mxu0 %v12965
      %13145 = vmatpush.bf16.msra.mxu0 %v12956
      %13146 = vmatpush.bf16.msra.mxu0 %v12947
      %13147 = vmatmul.bf16.gmra.mxu0 %v8192
      %v13148 = vpop.f32.mrf.mxu0
      %v13149 = vadd.f32 %v12705, %v13148
      %v13150 = vpop.f32.mrf.mxu0
      %13151 = vdwg.mxu0
      %13152 = vmatpush.bf16.msra.mxu0 %v13011
      %13153 = vmatpush.bf16.msra.mxu0 %v13002
      %13154 = vmatpush.bf16.msra.mxu0 %v12993
      %13155 = vmatpush.bf16.msra.mxu0 %v12984
      %13156 = vmatpush.bf16.msra.mxu0 %v12975
      %13157 = vmatpush.bf16.msra.mxu0 %v12966
      %13158 = vmatpush.bf16.msra.mxu0 %v12957
      %13159 = vmatpush.bf16.msra.mxu0 %v12948
      %13160 = vmatmul.bf16.gmra.mxu0 %v8192
      %v13161 = vpop.f32.mrf.mxu0
      %v13162 = vadd.f32 %v12706, %v13161
      %v13163 = vpop.f32.mrf.mxu0
      %13164 = vdwg.mxu0
      %13165 = vmatpush.bf16.msra.mxu0 %v13012
      %13166 = vmatpush.bf16.msra.mxu0 %v13003
      %13167 = vmatpush.bf16.msra.mxu0 %v12994
      %13168 = vmatpush.bf16.msra.mxu0 %v12985
      %13169 = vmatpush.bf16.msra.mxu0 %v12976
      %13170 = vmatpush.bf16.msra.mxu0 %v12967
      %13171 = vmatpush.bf16.msra.mxu0 %v12958
      %13172 = vmatpush.bf16.msra.mxu0 %v12949
      %13173 = vmatmul.bf16.gmra.mxu0 %v8192
      %v13174 = vpop.f32.mrf.mxu0
      %v13175 = vadd.f32 %v12707, %v13174
      %v13176 = vpop.f32.mrf.mxu0
      %13177 = vdwg.mxu0
      %13178 = vmatpush.bf16.msra.mxu0 %v13013
      %13179 = vmatpush.bf16.msra.mxu0 %v13004
      %13180 = vmatpush.bf16.msra.mxu0 %v12995
      %13181 = vmatpush.bf16.msra.mxu0 %v12986
      %13182 = vmatpush.bf16.msra.mxu0 %v12977
      %13183 = vmatpush.bf16.msra.mxu0 %v12968
      %13184 = vmatpush.bf16.msra.mxu0 %v12959
      %13185 = vmatpush.bf16.msra.mxu0 %v12950
      %13186 = vmatmul.bf16.gmra.mxu0 %v8192
      %v13187 = vpop.f32.mrf.mxu0
      %v13188 = vadd.f32 %v12708, %v13187
      %v13189 = vpop.f32.mrf.mxu0
      %13190 = vdwg.mxu0
      %13191 = vmatpush.bf16.msra.mxu0 %v13014
      %13192 = vmatpush.bf16.msra.mxu0 %v13005
      %13193 = vmatpush.bf16.msra.mxu0 %v12996
      %13194 = vmatpush.bf16.msra.mxu0 %v12987
      %13195 = vmatpush.bf16.msra.mxu0 %v12978
      %13196 = vmatpush.bf16.msra.mxu0 %v12969
      %13197 = vmatpush.bf16.msra.mxu0 %v12960
      %13198 = vmatpush.bf16.msra.mxu0 %v12951
      %13199 = vmatmul.bf16.gmra.mxu0 %v8192
      %v13200 = vpop.f32.mrf.mxu0
      %v13201 = vadd.f32 %v12709, %v13200
      %v13202 = vpop.f32.mrf.mxu0
      %13203 = vdwg.mxu0
      %v13204 = vmul.f32 %v13097, 0.5
      %v13205 = vmul.f32 %v13110, 0.5
      %v13206 = vmul.f32 %v13123, 0.5
      %v13207 = vmul.f32 %v13136, 0.5
      %v13208 = vmul.f32 %v13149, 0.5
      %v13209 = vmul.f32 %v13162, 0.5
      %v13210 = vmul.f32 %v13175, 0.5
      %v13211 = vmul.f32 %v13188, 0.5
      %v13212 = vmul.f32 %v13201, 0.5
      %v13213 = vtanh.pop %v13204
      %v13214 = vtanh.pop %v13205
      %v13215 = vtanh.pop %v13206
      %v13216 = vtanh.pop %v13207
      %v13217 = vtanh.pop %v13208
      %v13218 = vtanh.pop %v13209
      %v13219 = vtanh.pop %v13210
      %v13220 = vtanh.pop %v13211
      %v13221 = vtanh.pop %v13212
      %v13222 = vmul.f32 %v13213, 0.5
      %v13223 = vmul.f32 %v13214, 0.5
      %v13224 = vmul.f32 %v13215, 0.5
      %v13225 = vmul.f32 %v13216, 0.5
      %v13226 = vmul.f32 %v13217, 0.5
      %v13227 = vmul.f32 %v13218, 0.5
      %v13228 = vmul.f32 %v13219, 0.5
      %v13229 = vmul.f32 %v13220, 0.5
      %v13230 = vmul.f32 %v13221, 0.5
      %v13231 = vadd.f32 %v13222, 0.5
      %v13232 = vadd.f32 %v13223, 0.5
      %v13233 = vadd.f32 %v13224, 0.5
      %v13234 = vadd.f32 %v13225, 0.5
      %v13235 = vadd.f32 %v13226, 0.5
      %v13236 = vadd.f32 %v13227, 0.5
      %v13237 = vadd.f32 %v13228, 0.5
      %v13238 = vadd.f32 %v13229, 0.5
      %v13239 = vadd.f32 %v13230, 0.5
      %13240 = vst [vmem:[%s251 + $0x1f8] sm:$0xff] %v13231
      %13241 = vst [vmem:[%s251 + $0x200] sm:$0xff] %v13232
      %13242 = vst [vmem:[%s251 + $0x208] sm:$0xff] %v13233
      %13243 = vst [vmem:[%s251 + $0x210] sm:$0xff] %v13234
      %13244 = vst [vmem:[%s251 + $0x218] sm:$0xff] %v13235
      %13245 = vst [vmem:[%s251 + $0x220] sm:$0xff] %v13236
      %13246 = vst [vmem:[%s251 + $0x228] sm:$0xff] %v13237
      %13247 = vst [vmem:[%s251 + $0x230] sm:$0xff] %v13238
      %13248 = vst [vmem:[%s251 + $0x238] sm:$0xff] %v13239
      %v13249 = vld [vmem:[%s3 + $0x120] sm:$0xff]
      %v13250 = vld [vmem:[%s3 + $0x128] sm:$0xff]
      %v13251 = vld [vmem:[%s3 + $0x130] sm:$0xff]
      %v13252 = vld [vmem:[%s3 + $0x138] sm:$0xff]
      %v13253 = vld [vmem:[%s3 + $0x140] sm:$0xf]
      %v13254 = vld [vmem:[%s3 + $0x288] sm:$0xff]
      %v13255 = vld [vmem:[%s3 + $0x290] sm:$0xff]
      %v13256 = vld [vmem:[%s3 + $0x298] sm:$0xff]
      %v13257 = vld [vmem:[%s3 + $0x2a0] sm:$0xff]
      %v13258 = vld [vmem:[%s3 + $0x2a8] sm:$0xf]
      %v13259 = vld [vmem:[%s3 + $0x3f0] sm:$0xff]
      %v13260 = vld [vmem:[%s3 + $0x3f8] sm:$0xff]
      %v13261 = vld [vmem:[%s3 + $0x400] sm:$0xff]
      %v13262 = vld [vmem:[%s3 + $0x408] sm:$0xff]
      %v13263 = vld [vmem:[%s3 + $0x410] sm:$0xf]
      %v13264 = vld [vmem:[%s3 + $0x558] sm:$0xff]
      %v13265 = vld [vmem:[%s3 + $0x560] sm:$0xff]
      %v13266 = vld [vmem:[%s3 + $0x568] sm:$0xff]
      %v13267 = vld [vmem:[%s3 + $0x570] sm:$0xff]
      %v13268 = vld [vmem:[%s3 + $0x578] sm:$0xf]
      %v13269 = vld [vmem:[%s3 + $0x6c0] sm:$0xff]
      %v13270 = vld [vmem:[%s3 + $0x6c8] sm:$0xff]
      %v13271 = vld [vmem:[%s3 + $0x6d0] sm:$0xff]
      %v13272 = vld [vmem:[%s3 + $0x6d8] sm:$0xff]
      %v13273 = vld [vmem:[%s3 + $0x6e0] sm:$0xf]
      %v13274 = vld [vmem:[%s3 + $0x828] sm:$0xff]
      %v13275 = vld [vmem:[%s3 + $0x830] sm:$0xff]
      %v13276 = vld [vmem:[%s3 + $0x838] sm:$0xff]
      %v13277 = vld [vmem:[%s3 + $0x840] sm:$0xff]
      %v13278 = vld [vmem:[%s3 + $0x848] sm:$0xf]
      %v13279 = vld [vmem:[%s3 + $0x990] sm:$0xff]
      %v13280 = vld [vmem:[%s3 + $0x998] sm:$0xff]
      %v13281 = vld [vmem:[%s3 + $0x9a0] sm:$0xff]
      %v13282 = vld [vmem:[%s3 + $0x9a8] sm:$0xff]
      %v13283 = vld [vmem:[%s3 + $0x9b0] sm:$0xf]
      %v13284 = vld [vmem:[%s3 + $0xaf8] sm:$0xff]
      %v13285 = vld [vmem:[%s3 + $0xb00] sm:$0xff]
      %v13286 = vld [vmem:[%s3 + $0xb08] sm:$0xff]
      %v13287 = vld [vmem:[%s3 + $0xb10] sm:$0xff]
      %v13288 = vld [vmem:[%s3 + $0xb18] sm:$0xf]
      %v13289 = vld [vmem:[%s3 + $0xc60] sm:$0xff]
      %v13290 = vld [vmem:[%s3 + $0xc68] sm:$0xff]
      %v13291 = vld [vmem:[%s3 + $0xc70] sm:$0xff]
      %v13292 = vld [vmem:[%s3 + $0xc78] sm:$0xff]
      %v13293 = vld [vmem:[%s3 + $0xc80] sm:$0xf]
      %v13294 = vld [vmem:[%s3 + $0xdc8] sm:$0xff]
      %v13295 = vld [vmem:[%s3 + $0xdd0] sm:$0xff]
      %v13296 = vld [vmem:[%s3 + $0xdd8] sm:$0xff]
      %v13297 = vld [vmem:[%s3 + $0xde0] sm:$0xff]
      %v13298 = vld [vmem:[%s3 + $0xde8] sm:$0xf]
      %v13299 = vld [vmem:[%s3 + $0xf30] sm:$0xff]
      %v13300 = vld [vmem:[%s3 + $0xf38] sm:$0xff]
      %v13301 = vld [vmem:[%s3 + $0xf40] sm:$0xff]
      %v13302 = vld [vmem:[%s3 + $0xf48] sm:$0xff]
      %v13303 = vld [vmem:[%s3 + $0xf50] sm:$0xf]
      %v13304 = vld [vmem:[%s3 + $0x1098] sm:$0xff]
      %v13305 = vld [vmem:[%s3 + $0x10a0] sm:$0xff]
      %v13306 = vld [vmem:[%s3 + $0x10a8] sm:$0xff]
      %v13307 = vld [vmem:[%s3 + $0x10b0] sm:$0xff]
      %v13308 = vld [vmem:[%s3 + $0x10b8] sm:$0xf]
      %v13309 = vld [vmem:[%s3 + $0x1200] sm:$0xff]
      %v13310 = vld [vmem:[%s3 + $0x1208] sm:$0xff]
      %v13311 = vld [vmem:[%s3 + $0x1210] sm:$0xff]
      %v13312 = vld [vmem:[%s3 + $0x1218] sm:$0xff]
      %v13313 = vld [vmem:[%s3 + $0x1220] sm:$0xf]
      %v13314 = vld [vmem:[%s3 + $0x1368] sm:$0xff]
      %v13315 = vld [vmem:[%s3 + $0x1370] sm:$0xff]
      %v13316 = vld [vmem:[%s3 + $0x1378] sm:$0xff]
      %v13317 = vld [vmem:[%s3 + $0x1380] sm:$0xff]
      %v13318 = vld [vmem:[%s3 + $0x1388] sm:$0xf]
      %v13319 = vld [vmem:[%s3 + $0x14d0] sm:$0xff]
      %v13320 = vld [vmem:[%s3 + $0x14d8] sm:$0xff]
      %v13321 = vld [vmem:[%s3 + $0x14e0] sm:$0xff]
      %v13322 = vld [vmem:[%s3 + $0x14e8] sm:$0xff]
      %v13323 = vld [vmem:[%s3 + $0x14f0] sm:$0xf]
      %v13324 = vld [vmem:[%s3 + $0x1638] sm:$0xff]
      %v13325 = vld [vmem:[%s3 + $0x1640] sm:$0xff]
      %v13326 = vld [vmem:[%s3 + $0x1648] sm:$0xff]
      %v13327 = vld [vmem:[%s3 + $0x1650] sm:$0xff]
      %v13328 = vld [vmem:[%s3 + $0x1658] sm:$0xf]
      %v13329 = vld [vmem:[%s5 + $0x48] sm:$0xff]
      %v13330 = vld [vmem:[%s5 + $0x50] sm:$0x1]
      %v13333 = vperm.slane %v13329, 0
      %v13334 = vperm.slane %v13329, 1
      %v13335 = vperm.slane %v13329, 2
      %v13336 = vperm.slane %v13329, 3
      %v13337 = vperm.slane %v13329, 4
      %v13338 = vperm.slane %v13329, 5
      %v13339 = vperm.slane %v13329, 6
      %v13340 = vperm.slane %v13329, 7
      %v13341 = vperm.slane %v13330, 0
      %v13431 = vunpack.c.l.b16 %v13249
      %v13432 = vunpack.c.h.b16 %v13249
      %v13433 = vunpack.c.l.b16 %v13250
      %v13434 = vunpack.c.h.b16 %v13250
      %v13435 = vunpack.c.l.b16 %v13251
      %v13436 = vunpack.c.h.b16 %v13251
      %v13437 = vunpack.c.l.b16 %v13252
      %v13438 = vunpack.c.h.b16 %v13252
      %v13439 = vunpack.c.l.b16 %v13253
      %v13440 = vunpack.c.l.b16 %v13254
      %v13441 = vunpack.c.h.b16 %v13254
      %v13442 = vunpack.c.l.b16 %v13255
      %v13443 = vunpack.c.h.b16 %v13255
      %v13444 = vunpack.c.l.b16 %v13256
      %v13445 = vunpack.c.h.b16 %v13256
      %v13446 = vunpack.c.l.b16 %v13257
      %v13447 = vunpack.c.h.b16 %v13257
      %v13448 = vunpack.c.l.b16 %v13258
      %v13449 = vunpack.c.l.b16 %v13259
      %v13450 = vunpack.c.h.b16 %v13259
      %v13451 = vunpack.c.l.b16 %v13260
      %v13452 = vunpack.c.h.b16 %v13260
      %v13453 = vunpack.c.l.b16 %v13261
      %v13454 = vunpack.c.h.b16 %v13261
      %v13455 = vunpack.c.l.b16 %v13262
      %v13456 = vunpack.c.h.b16 %v13262
      %v13457 = vunpack.c.l.b16 %v13263
      %v13458 = vunpack.c.l.b16 %v13264
      %v13459 = vunpack.c.h.b16 %v13264
      %v13460 = vunpack.c.l.b16 %v13265
      %v13461 = vunpack.c.h.b16 %v13265
      %v13462 = vunpack.c.l.b16 %v13266
      %v13463 = vunpack.c.h.b16 %v13266
      %v13464 = vunpack.c.l.b16 %v13267
      %v13465 = vunpack.c.h.b16 %v13267
      %v13466 = vunpack.c.l.b16 %v13268
      %v13467 = vunpack.c.l.b16 %v13269
      %v13468 = vunpack.c.h.b16 %v13269
      %v13469 = vunpack.c.l.b16 %v13270
      %v13470 = vunpack.c.h.b16 %v13270
      %v13471 = vunpack.c.l.b16 %v13271
      %v13472 = vunpack.c.h.b16 %v13271
      %v13473 = vunpack.c.l.b16 %v13272
      %v13474 = vunpack.c.h.b16 %v13272
      %v13475 = vunpack.c.l.b16 %v13273
      %v13476 = vunpack.c.l.b16 %v13274
      %v13477 = vunpack.c.h.b16 %v13274
      %v13478 = vunpack.c.l.b16 %v13275
      %v13479 = vunpack.c.h.b16 %v13275
      %v13480 = vunpack.c.l.b16 %v13276
      %v13481 = vunpack.c.h.b16 %v13276
      %v13482 = vunpack.c.l.b16 %v13277
      %v13483 = vunpack.c.h.b16 %v13277
      %v13484 = vunpack.c.l.b16 %v13278
      %v13485 = vunpack.c.l.b16 %v13279
      %v13486 = vunpack.c.h.b16 %v13279
      %v13487 = vunpack.c.l.b16 %v13280
      %v13488 = vunpack.c.h.b16 %v13280
      %v13489 = vunpack.c.l.b16 %v13281
      %v13490 = vunpack.c.h.b16 %v13281
      %v13491 = vunpack.c.l.b16 %v13282
      %v13492 = vunpack.c.h.b16 %v13282
      %v13493 = vunpack.c.l.b16 %v13283
      %v13494 = vunpack.c.l.b16 %v13284
      %v13495 = vunpack.c.h.b16 %v13284
      %v13496 = vunpack.c.l.b16 %v13285
      %v13497 = vunpack.c.h.b16 %v13285
      %v13498 = vunpack.c.l.b16 %v13286
      %v13499 = vunpack.c.h.b16 %v13286
      %v13500 = vunpack.c.l.b16 %v13287
      %v13501 = vunpack.c.h.b16 %v13287
      %v13502 = vunpack.c.l.b16 %v13288
      %v13503 = vunpack.c.l.b16 %v13289
      %v13504 = vunpack.c.h.b16 %v13289
      %v13505 = vunpack.c.l.b16 %v13290
      %v13506 = vunpack.c.h.b16 %v13290
      %v13507 = vunpack.c.l.b16 %v13291
      %v13508 = vunpack.c.h.b16 %v13291
      %v13509 = vunpack.c.l.b16 %v13292
      %v13510 = vunpack.c.h.b16 %v13292
      %v13511 = vunpack.c.l.b16 %v13293
      %v13512 = vunpack.c.l.b16 %v13294
      %v13513 = vunpack.c.h.b16 %v13294
      %v13514 = vunpack.c.l.b16 %v13295
      %v13515 = vunpack.c.h.b16 %v13295
      %v13516 = vunpack.c.l.b16 %v13296
      %v13517 = vunpack.c.h.b16 %v13296
      %v13518 = vunpack.c.l.b16 %v13297
      %v13519 = vunpack.c.h.b16 %v13297
      %v13520 = vunpack.c.l.b16 %v13298
      %v13521 = vunpack.c.l.b16 %v13299
      %v13522 = vunpack.c.h.b16 %v13299
      %v13523 = vunpack.c.l.b16 %v13300
      %v13524 = vunpack.c.h.b16 %v13300
      %v13525 = vunpack.c.l.b16 %v13301
      %v13526 = vunpack.c.h.b16 %v13301
      %v13527 = vunpack.c.l.b16 %v13302
      %v13528 = vunpack.c.h.b16 %v13302
      %v13529 = vunpack.c.l.b16 %v13303
      %v13530 = vunpack.c.l.b16 %v13304
      %v13531 = vunpack.c.h.b16 %v13304
      %v13532 = vunpack.c.l.b16 %v13305
      %v13533 = vunpack.c.h.b16 %v13305
      %v13534 = vunpack.c.l.b16 %v13306
      %v13535 = vunpack.c.h.b16 %v13306
      %v13536 = vunpack.c.l.b16 %v13307
      %v13537 = vunpack.c.h.b16 %v13307
      %v13538 = vunpack.c.l.b16 %v13308
      %v13539 = vunpack.c.l.b16 %v13309
      %v13540 = vunpack.c.h.b16 %v13309
      %v13541 = vunpack.c.l.b16 %v13310
      %v13542 = vunpack.c.h.b16 %v13310
      %v13543 = vunpack.c.l.b16 %v13311
      %v13544 = vunpack.c.h.b16 %v13311
      %v13545 = vunpack.c.l.b16 %v13312
      %v13546 = vunpack.c.h.b16 %v13312
      %v13547 = vunpack.c.l.b16 %v13313
      %v13548 = vunpack.c.l.b16 %v13314
      %v13549 = vunpack.c.h.b16 %v13314
      %v13550 = vunpack.c.l.b16 %v13315
      %v13551 = vunpack.c.h.b16 %v13315
      %v13552 = vunpack.c.l.b16 %v13316
      %v13553 = vunpack.c.h.b16 %v13316
      %v13554 = vunpack.c.l.b16 %v13317
      %v13555 = vunpack.c.h.b16 %v13317
      %v13556 = vunpack.c.l.b16 %v13318
      %v13557 = vunpack.c.l.b16 %v13319
      %v13558 = vunpack.c.h.b16 %v13319
      %v13559 = vunpack.c.l.b16 %v13320
      %v13560 = vunpack.c.h.b16 %v13320
      %v13561 = vunpack.c.l.b16 %v13321
      %v13562 = vunpack.c.h.b16 %v13321
      %v13563 = vunpack.c.l.b16 %v13322
      %v13564 = vunpack.c.h.b16 %v13322
      %v13565 = vunpack.c.l.b16 %v13323
      %v13566 = vunpack.c.l.b16 %v13324
      %v13567 = vunpack.c.h.b16 %v13324
      %v13568 = vunpack.c.l.b16 %v13325
      %v13569 = vunpack.c.h.b16 %v13325
      %v13570 = vunpack.c.l.b16 %v13326
      %v13571 = vunpack.c.h.b16 %v13326
      %v13572 = vunpack.c.l.b16 %v13327
      %v13573 = vunpack.c.h.b16 %v13327
      %v13574 = vunpack.c.l.b16 %v13328
      %v13575 = vpack.c.b16 %v13440, %v13431
      %v13576 = vpack.c.b16 %v13441, %v13432
      %v13577 = vpack.c.b16 %v13442, %v13433
      %v13578 = vpack.c.b16 %v13443, %v13434
      %v13579 = vpack.c.b16 %v13444, %v13435
      %v13580 = vpack.c.b16 %v13445, %v13436
      %v13581 = vpack.c.b16 %v13446, %v13437
      %v13582 = vpack.c.b16 %v13447, %v13438
      %v13583 = vpack.c.b16 %v13448, %v13439
      %v13584 = vpack.c.b16 %v13458, %v13449
      %v13585 = vpack.c.b16 %v13459, %v13450
      %v13586 = vpack.c.b16 %v13460, %v13451
      %v13587 = vpack.c.b16 %v13461, %v13452
      %v13588 = vpack.c.b16 %v13462, %v13453
      %v13589 = vpack.c.b16 %v13463, %v13454
      %v13590 = vpack.c.b16 %v13464, %v13455
      %v13591 = vpack.c.b16 %v13465, %v13456
      %v13592 = vpack.c.b16 %v13466, %v13457
      %v13593 = vpack.c.b16 %v13476, %v13467
      %v13594 = vpack.c.b16 %v13477, %v13468
      %v13595 = vpack.c.b16 %v13478, %v13469
      %v13596 = vpack.c.b16 %v13479, %v13470
      %v13597 = vpack.c.b16 %v13480, %v13471
      %v13598 = vpack.c.b16 %v13481, %v13472
      %v13599 = vpack.c.b16 %v13482, %v13473
      %v13600 = vpack.c.b16 %v13483, %v13474
      %v13601 = vpack.c.b16 %v13484, %v13475
      %v13602 = vpack.c.b16 %v13494, %v13485
      %v13603 = vpack.c.b16 %v13495, %v13486
      %v13604 = vpack.c.b16 %v13496, %v13487
      %v13605 = vpack.c.b16 %v13497, %v13488
      %v13606 = vpack.c.b16 %v13498, %v13489
      %v13607 = vpack.c.b16 %v13499, %v13490
      %v13608 = vpack.c.b16 %v13500, %v13491
      %v13609 = vpack.c.b16 %v13501, %v13492
      %v13610 = vpack.c.b16 %v13502, %v13493
      %v13611 = vpack.c.b16 %v13512, %v13503
      %v13612 = vpack.c.b16 %v13513, %v13504
      %v13613 = vpack.c.b16 %v13514, %v13505
      %v13614 = vpack.c.b16 %v13515, %v13506
      %v13615 = vpack.c.b16 %v13516, %v13507
      %v13616 = vpack.c.b16 %v13517, %v13508
      %v13617 = vpack.c.b16 %v13518, %v13509
      %v13618 = vpack.c.b16 %v13519, %v13510
      %v13619 = vpack.c.b16 %v13520, %v13511
      %v13620 = vpack.c.b16 %v13530, %v13521
      %v13621 = vpack.c.b16 %v13531, %v13522
      %v13622 = vpack.c.b16 %v13532, %v13523
      %v13623 = vpack.c.b16 %v13533, %v13524
      %v13624 = vpack.c.b16 %v13534, %v13525
      %v13625 = vpack.c.b16 %v13535, %v13526
      %v13626 = vpack.c.b16 %v13536, %v13527
      %v13627 = vpack.c.b16 %v13537, %v13528
      %v13628 = vpack.c.b16 %v13538, %v13529
      %v13629 = vpack.c.b16 %v13548, %v13539
      %v13630 = vpack.c.b16 %v13549, %v13540
      %v13631 = vpack.c.b16 %v13550, %v13541
      %v13632 = vpack.c.b16 %v13551, %v13542
      %v13633 = vpack.c.b16 %v13552, %v13543
      %v13634 = vpack.c.b16 %v13553, %v13544
      %v13635 = vpack.c.b16 %v13554, %v13545
      %v13636 = vpack.c.b16 %v13555, %v13546
      %v13637 = vpack.c.b16 %v13556, %v13547
      %v13638 = vpack.c.b16 %v13566, %v13557
      %v13639 = vpack.c.b16 %v13567, %v13558
      %v13640 = vpack.c.b16 %v13568, %v13559
      %v13641 = vpack.c.b16 %v13569, %v13560
      %v13642 = vpack.c.b16 %v13570, %v13561
      %v13643 = vpack.c.b16 %v13571, %v13562
      %v13644 = vpack.c.b16 %v13572, %v13563
      %v13645 = vpack.c.b16 %v13573, %v13564
      %v13646 = vpack.c.b16 %v13574, %v13565
      %13719 = vmatpush.bf16.msra.mxu0 %v13638
      %13720 = vmatpush.bf16.msra.mxu0 %v13629
      %13721 = vmatpush.bf16.msra.mxu0 %v13620
      %13722 = vmatpush.bf16.msra.mxu0 %v13611
      %13723 = vmatpush.bf16.msra.mxu0 %v13602
      %13724 = vmatpush.bf16.msra.mxu0 %v13593
      %13725 = vmatpush.bf16.msra.mxu0 %v13584
      %13726 = vmatpush.bf16.msra.mxu0 %v13575
      %13727 = vmatmul.bf16.gmra.mxu0 %v8192
      %v13728 = vpop.f32.mrf.mxu0
      %v13729 = vadd.f32 %v13333, %v13728
      %v13730 = vpop.f32.mrf.mxu0
      %13731 = vdwg.mxu0
      %13732 = vmatpush.bf16.msra.mxu0 %v13639
      %13733 = vmatpush.bf16.msra.mxu0 %v13630
      %13734 = vmatpush.bf16.msra.mxu0 %v13621
      %13735 = vmatpush.bf16.msra.mxu0 %v13612
      %13736 = vmatpush.bf16.msra.mxu0 %v13603
      %13737 = vmatpush.bf16.msra.mxu0 %v13594
      %13738 = vmatpush.bf16.msra.mxu0 %v13585
      %13739 = vmatpush.bf16.msra.mxu0 %v13576
      %13740 = vmatmul.bf16.gmra.mxu0 %v8192
      %v13741 = vpop.f32.mrf.mxu0
      %v13742 = vadd.f32 %v13334, %v13741
      %v13743 = vpop.f32.mrf.mxu0
      %13744 = vdwg.mxu0
      %13745 = vmatpush.bf16.msra.mxu0 %v13640
      %13746 = vmatpush.bf16.msra.mxu0 %v13631
      %13747 = vmatpush.bf16.msra.mxu0 %v13622
      %13748 = vmatpush.bf16.msra.mxu0 %v13613
      %13749 = vmatpush.bf16.msra.mxu0 %v13604
      %13750 = vmatpush.bf16.msra.mxu0 %v13595
      %13751 = vmatpush.bf16.msra.mxu0 %v13586
      %13752 = vmatpush.bf16.msra.mxu0 %v13577
      %13753 = vmatmul.bf16.gmra.mxu0 %v8192
      %v13754 = vpop.f32.mrf.mxu0
      %v13755 = vadd.f32 %v13335, %v13754
      %v13756 = vpop.f32.mrf.mxu0
      %13757 = vdwg.mxu0
      %13758 = vmatpush.bf16.msra.mxu0 %v13641
      %13759 = vmatpush.bf16.msra.mxu0 %v13632
      %13760 = vmatpush.bf16.msra.mxu0 %v13623
      %13761 = vmatpush.bf16.msra.mxu0 %v13614
      %13762 = vmatpush.bf16.msra.mxu0 %v13605
      %13763 = vmatpush.bf16.msra.mxu0 %v13596
      %13764 = vmatpush.bf16.msra.mxu0 %v13587
      %13765 = vmatpush.bf16.msra.mxu0 %v13578
      %13766 = vmatmul.bf16.gmra.mxu0 %v8192
      %v13767 = vpop.f32.mrf.mxu0
      %v13768 = vadd.f32 %v13336, %v13767
      %v13769 = vpop.f32.mrf.mxu0
      %13770 = vdwg.mxu0
      %13771 = vmatpush.bf16.msra.mxu0 %v13642
      %13772 = vmatpush.bf16.msra.mxu0 %v13633
      %13773 = vmatpush.bf16.msra.mxu0 %v13624
      %13774 = vmatpush.bf16.msra.mxu0 %v13615
      %13775 = vmatpush.bf16.msra.mxu0 %v13606
      %13776 = vmatpush.bf16.msra.mxu0 %v13597
      %13777 = vmatpush.bf16.msra.mxu0 %v13588
      %13778 = vmatpush.bf16.msra.mxu0 %v13579
      %13779 = vmatmul.bf16.gmra.mxu0 %v8192
      %v13780 = vpop.f32.mrf.mxu0
      %v13781 = vadd.f32 %v13337, %v13780
      %v13782 = vpop.f32.mrf.mxu0
      %13783 = vdwg.mxu0
      %13784 = vmatpush.bf16.msra.mxu0 %v13643
      %13785 = vmatpush.bf16.msra.mxu0 %v13634
      %13786 = vmatpush.bf16.msra.mxu0 %v13625
      %13787 = vmatpush.bf16.msra.mxu0 %v13616
      %13788 = vmatpush.bf16.msra.mxu0 %v13607
      %13789 = vmatpush.bf16.msra.mxu0 %v13598
      %13790 = vmatpush.bf16.msra.mxu0 %v13589
      %13791 = vmatpush.bf16.msra.mxu0 %v13580
      %13792 = vmatmul.bf16.gmra.mxu0 %v8192
      %v13793 = vpop.f32.mrf.mxu0
      %v13794 = vadd.f32 %v13338, %v13793
      %v13795 = vpop.f32.mrf.mxu0
      %13796 = vdwg.mxu0
      %13797 = vmatpush.bf16.msra.mxu0 %v13644
      %13798 = vmatpush.bf16.msra.mxu0 %v13635
      %13799 = vmatpush.bf16.msra.mxu0 %v13626
      %13800 = vmatpush.bf16.msra.mxu0 %v13617
      %13801 = vmatpush.bf16.msra.mxu0 %v13608
      %13802 = vmatpush.bf16.msra.mxu0 %v13599
      %13803 = vmatpush.bf16.msra.mxu0 %v13590
      %13804 = vmatpush.bf16.msra.mxu0 %v13581
      %13805 = vmatmul.bf16.gmra.mxu0 %v8192
      %v13806 = vpop.f32.mrf.mxu0
      %v13807 = vadd.f32 %v13339, %v13806
      %v13808 = vpop.f32.mrf.mxu0
      %13809 = vdwg.mxu0
      %13810 = vmatpush.bf16.msra.mxu0 %v13645
      %13811 = vmatpush.bf16.msra.mxu0 %v13636
      %13812 = vmatpush.bf16.msra.mxu0 %v13627
      %13813 = vmatpush.bf16.msra.mxu0 %v13618
      %13814 = vmatpush.bf16.msra.mxu0 %v13609
      %13815 = vmatpush.bf16.msra.mxu0 %v13600
      %13816 = vmatpush.bf16.msra.mxu0 %v13591
      %13817 = vmatpush.bf16.msra.mxu0 %v13582
      %13818 = vmatmul.bf16.gmra.mxu0 %v8192
      %v13819 = vpop.f32.mrf.mxu0
      %v13820 = vadd.f32 %v13340, %v13819
      %v13821 = vpop.f32.mrf.mxu0
      %13822 = vdwg.mxu0
      %13823 = vmatpush.bf16.msra.mxu0 %v13646
      %13824 = vmatpush.bf16.msra.mxu0 %v13637
      %13825 = vmatpush.bf16.msra.mxu0 %v13628
      %13826 = vmatpush.bf16.msra.mxu0 %v13619
      %13827 = vmatpush.bf16.msra.mxu0 %v13610
      %13828 = vmatpush.bf16.msra.mxu0 %v13601
      %13829 = vmatpush.bf16.msra.mxu0 %v13592
      %13830 = vmatpush.bf16.msra.mxu0 %v13583
      %13831 = vmatmul.bf16.gmra.mxu0 %v8192
      %v13832 = vpop.f32.mrf.mxu0
      %v13833 = vadd.f32 %v13341, %v13832
      %v13834 = vpop.f32.mrf.mxu0
      %13835 = vdwg.mxu0
      %v13836 = vmul.f32 %v13729, 0.5
      %v13837 = vmul.f32 %v13742, 0.5
      %v13838 = vmul.f32 %v13755, 0.5
      %v13839 = vmul.f32 %v13768, 0.5
      %v13840 = vmul.f32 %v13781, 0.5
      %v13841 = vmul.f32 %v13794, 0.5
      %v13842 = vmul.f32 %v13807, 0.5
      %v13843 = vmul.f32 %v13820, 0.5
      %v13844 = vmul.f32 %v13833, 0.5
      %v13845 = vtanh.pop %v13836
      %v13846 = vtanh.pop %v13837
      %v13847 = vtanh.pop %v13838
      %v13848 = vtanh.pop %v13839
      %v13849 = vtanh.pop %v13840
      %v13850 = vtanh.pop %v13841
      %v13851 = vtanh.pop %v13842
      %v13852 = vtanh.pop %v13843
      %v13853 = vtanh.pop %v13844
      %v13854 = vmul.f32 %v13845, 0.5
      %v13855 = vmul.f32 %v13846, 0.5
      %v13856 = vmul.f32 %v13847, 0.5
      %v13857 = vmul.f32 %v13848, 0.5
      %v13858 = vmul.f32 %v13849, 0.5
      %v13859 = vmul.f32 %v13850, 0.5
      %v13860 = vmul.f32 %v13851, 0.5
      %v13861 = vmul.f32 %v13852, 0.5
      %v13862 = vmul.f32 %v13853, 0.5
      %v13863 = vadd.f32 %v13854, 0.5
      %v13864 = vadd.f32 %v13855, 0.5
      %v13865 = vadd.f32 %v13856, 0.5
      %v13866 = vadd.f32 %v13857, 0.5
      %v13867 = vadd.f32 %v13858, 0.5
      %v13868 = vadd.f32 %v13859, 0.5
      %v13869 = vadd.f32 %v13860, 0.5
      %v13870 = vadd.f32 %v13861, 0.5
      %v13871 = vadd.f32 %v13862, 0.5
      %13872 = vst [vmem:[%s251 + $0x240] sm:$0xff] %v13863
      %13873 = vst [vmem:[%s251 + $0x248] sm:$0xff] %v13864
      %13874 = vst [vmem:[%s251 + $0x250] sm:$0xff] %v13865
      %13875 = vst [vmem:[%s251 + $0x258] sm:$0xff] %v13866
      %13876 = vst [vmem:[%s251 + $0x260] sm:$0xff] %v13867
      %13877 = vst [vmem:[%s251 + $0x268] sm:$0xff] %v13868
      %13878 = vst [vmem:[%s251 + $0x270] sm:$0xff] %v13869
      %13879 = vst [vmem:[%s251 + $0x278] sm:$0xff] %v13870
      %13880 = vst [vmem:[%s251 + $0x280] sm:$0xff] %v13871
      %v13881 = vld [vmem:[%s3 + $0x144] sm:$0xff]
      %v13882 = vld [vmem:[%s3 + $0x14c] sm:$0xff]
      %v13883 = vld [vmem:[%s3 + $0x154] sm:$0xff]
      %v13884 = vld [vmem:[%s3 + $0x15c] sm:$0xff]
      %v13885 = vld [vmem:[%s3 + $0x164] sm:$0xf]
      %v13886 = vld [vmem:[%s3 + $0x2ac] sm:$0xff]
      %v13887 = vld [vmem:[%s3 + $0x2b4] sm:$0xff]
      %v13888 = vld [vmem:[%s3 + $0x2bc] sm:$0xff]
      %v13889 = vld [vmem:[%s3 + $0x2c4] sm:$0xff]
      %v13890 = vld [vmem:[%s3 + $0x2cc] sm:$0xf]
      %v13891 = vld [vmem:[%s3 + $0x414] sm:$0xff]
      %v13892 = vld [vmem:[%s3 + $0x41c] sm:$0xff]
      %v13893 = vld [vmem:[%s3 + $0x424] sm:$0xff]
      %v13894 = vld [vmem:[%s3 + $0x42c] sm:$0xff]
      %v13895 = vld [vmem:[%s3 + $0x434] sm:$0xf]
      %v13896 = vld [vmem:[%s3 + $0x57c] sm:$0xff]
      %v13897 = vld [vmem:[%s3 + $0x584] sm:$0xff]
      %v13898 = vld [vmem:[%s3 + $0x58c] sm:$0xff]
      %v13899 = vld [vmem:[%s3 + $0x594] sm:$0xff]
      %v13900 = vld [vmem:[%s3 + $0x59c] sm:$0xf]
      %v13901 = vld [vmem:[%s3 + $0x6e4] sm:$0xff]
      %v13902 = vld [vmem:[%s3 + $0x6ec] sm:$0xff]
      %v13903 = vld [vmem:[%s3 + $0x6f4] sm:$0xff]
      %v13904 = vld [vmem:[%s3 + $0x6fc] sm:$0xff]
      %v13905 = vld [vmem:[%s3 + $0x704] sm:$0xf]
      %v13906 = vld [vmem:[%s3 + $0x84c] sm:$0xff]
      %v13907 = vld [vmem:[%s3 + $0x854] sm:$0xff]
      %v13908 = vld [vmem:[%s3 + $0x85c] sm:$0xff]
      %v13909 = vld [vmem:[%s3 + $0x864] sm:$0xff]
      %v13910 = vld [vmem:[%s3 + $0x86c] sm:$0xf]
      %v13911 = vld [vmem:[%s3 + $0x9b4] sm:$0xff]
      %v13912 = vld [vmem:[%s3 + $0x9bc] sm:$0xff]
      %v13913 = vld [vmem:[%s3 + $0x9c4] sm:$0xff]
      %v13914 = vld [vmem:[%s3 + $0x9cc] sm:$0xff]
      %v13915 = vld [vmem:[%s3 + $0x9d4] sm:$0xf]
      %v13916 = vld [vmem:[%s3 + $0xb1c] sm:$0xff]
      %v13917 = vld [vmem:[%s3 + $0xb24] sm:$0xff]
      %v13918 = vld [vmem:[%s3 + $0xb2c] sm:$0xff]
      %v13919 = vld [vmem:[%s3 + $0xb34] sm:$0xff]
      %v13920 = vld [vmem:[%s3 + $0xb3c] sm:$0xf]
      %v13921 = vld [vmem:[%s3 + $0xc84] sm:$0xff]
      %v13922 = vld [vmem:[%s3 + $0xc8c] sm:$0xff]
      %v13923 = vld [vmem:[%s3 + $0xc94] sm:$0xff]
      %v13924 = vld [vmem:[%s3 + $0xc9c] sm:$0xff]
      %v13925 = vld [vmem:[%s3 + $0xca4] sm:$0xf]
      %v13926 = vld [vmem:[%s3 + $0xdec] sm:$0xff]
      %v13927 = vld [vmem:[%s3 + $0xdf4] sm:$0xff]
      %v13928 = vld [vmem:[%s3 + $0xdfc] sm:$0xff]
      %v13929 = vld [vmem:[%s3 + $0xe04] sm:$0xff]
      %v13930 = vld [vmem:[%s3 + $0xe0c] sm:$0xf]
      %v13931 = vld [vmem:[%s3 + $0xf54] sm:$0xff]
      %v13932 = vld [vmem:[%s3 + $0xf5c] sm:$0xff]
      %v13933 = vld [vmem:[%s3 + $0xf64] sm:$0xff]
      %v13934 = vld [vmem:[%s3 + $0xf6c] sm:$0xff]
      %v13935 = vld [vmem:[%s3 + $0xf74] sm:$0xf]
      %v13936 = vld [vmem:[%s3 + $0x10bc] sm:$0xff]
      %v13937 = vld [vmem:[%s3 + $0x10c4] sm:$0xff]
      %v13938 = vld [vmem:[%s3 + $0x10cc] sm:$0xff]
      %v13939 = vld [vmem:[%s3 + $0x10d4] sm:$0xff]
      %v13940 = vld [vmem:[%s3 + $0x10dc] sm:$0xf]
      %v13941 = vld [vmem:[%s3 + $0x1224] sm:$0xff]
      %v13942 = vld [vmem:[%s3 + $0x122c] sm:$0xff]
      %v13943 = vld [vmem:[%s3 + $0x1234] sm:$0xff]
      %v13944 = vld [vmem:[%s3 + $0x123c] sm:$0xff]
      %v13945 = vld [vmem:[%s3 + $0x1244] sm:$0xf]
      %v13946 = vld [vmem:[%s3 + $0x138c] sm:$0xff]
      %v13947 = vld [vmem:[%s3 + $0x1394] sm:$0xff]
      %v13948 = vld [vmem:[%s3 + $0x139c] sm:$0xff]
      %v13949 = vld [vmem:[%s3 + $0x13a4] sm:$0xff]
      %v13950 = vld [vmem:[%s3 + $0x13ac] sm:$0xf]
      %v13951 = vld [vmem:[%s3 + $0x14f4] sm:$0xff]
      %v13952 = vld [vmem:[%s3 + $0x14fc] sm:$0xff]
      %v13953 = vld [vmem:[%s3 + $0x1504] sm:$0xff]
      %v13954 = vld [vmem:[%s3 + $0x150c] sm:$0xff]
      %v13955 = vld [vmem:[%s3 + $0x1514] sm:$0xf]
      %v13956 = vld [vmem:[%s3 + $0x165c] sm:$0xff]
      %v13957 = vld [vmem:[%s3 + $0x1664] sm:$0xff]
      %v13958 = vld [vmem:[%s3 + $0x166c] sm:$0xff]
      %v13959 = vld [vmem:[%s3 + $0x1674] sm:$0xff]
      %v13960 = vld [vmem:[%s3 + $0x167c] sm:$0xf]
      %v13961 = vld [vmem:[%s5 + $0x51] sm:$0xff]
      %v13962 = vld [vmem:[%s5 + $0x59] sm:$0x1]
      %v13965 = vperm.slane %v13961, 0
      %v13966 = vperm.slane %v13961, 1
      %v13967 = vperm.slane %v13961, 2
      %v13968 = vperm.slane %v13961, 3
      %v13969 = vperm.slane %v13961, 4
      %v13970 = vperm.slane %v13961, 5
      %v13971 = vperm.slane %v13961, 6
      %v13972 = vperm.slane %v13961, 7
      %v13973 = vperm.slane %v13962, 0
      %v14063 = vunpack.c.l.b16 %v13881
      %v14064 = vunpack.c.h.b16 %v13881
      %v14065 = vunpack.c.l.b16 %v13882
      %v14066 = vunpack.c.h.b16 %v13882
      %v14067 = vunpack.c.l.b16 %v13883
      %v14068 = vunpack.c.h.b16 %v13883
      %v14069 = vunpack.c.l.b16 %v13884
      %v14070 = vunpack.c.h.b16 %v13884
      %v14071 = vunpack.c.l.b16 %v13885
      %v14072 = vunpack.c.l.b16 %v13886
      %v14073 = vunpack.c.h.b16 %v13886
      %v14074 = vunpack.c.l.b16 %v13887
      %v14075 = vunpack.c.h.b16 %v13887
      %v14076 = vunpack.c.l.b16 %v13888
      %v14077 = vunpack.c.h.b16 %v13888
      %v14078 = vunpack.c.l.b16 %v13889
      %v14079 = vunpack.c.h.b16 %v13889
      %v14080 = vunpack.c.l.b16 %v13890
      %v14081 = vunpack.c.l.b16 %v13891
      %v14082 = vunpack.c.h.b16 %v13891
      %v14083 = vunpack.c.l.b16 %v13892
      %v14084 = vunpack.c.h.b16 %v13892
      %v14085 = vunpack.c.l.b16 %v13893
      %v14086 = vunpack.c.h.b16 %v13893
      %v14087 = vunpack.c.l.b16 %v13894
      %v14088 = vunpack.c.h.b16 %v13894
      %v14089 = vunpack.c.l.b16 %v13895
      %v14090 = vunpack.c.l.b16 %v13896
      %v14091 = vunpack.c.h.b16 %v13896
      %v14092 = vunpack.c.l.b16 %v13897
      %v14093 = vunpack.c.h.b16 %v13897
      %v14094 = vunpack.c.l.b16 %v13898
      %v14095 = vunpack.c.h.b16 %v13898
      %v14096 = vunpack.c.l.b16 %v13899
      %v14097 = vunpack.c.h.b16 %v13899
      %v14098 = vunpack.c.l.b16 %v13900
      %v14099 = vunpack.c.l.b16 %v13901
      %v14100 = vunpack.c.h.b16 %v13901
      %v14101 = vunpack.c.l.b16 %v13902
      %v14102 = vunpack.c.h.b16 %v13902
      %v14103 = vunpack.c.l.b16 %v13903
      %v14104 = vunpack.c.h.b16 %v13903
      %v14105 = vunpack.c.l.b16 %v13904
      %v14106 = vunpack.c.h.b16 %v13904
      %v14107 = vunpack.c.l.b16 %v13905
      %v14108 = vunpack.c.l.b16 %v13906
      %v14109 = vunpack.c.h.b16 %v13906
      %v14110 = vunpack.c.l.b16 %v13907
      %v14111 = vunpack.c.h.b16 %v13907
      %v14112 = vunpack.c.l.b16 %v13908
      %v14113 = vunpack.c.h.b16 %v13908
      %v14114 = vunpack.c.l.b16 %v13909
      %v14115 = vunpack.c.h.b16 %v13909
      %v14116 = vunpack.c.l.b16 %v13910
      %v14117 = vunpack.c.l.b16 %v13911
      %v14118 = vunpack.c.h.b16 %v13911
      %v14119 = vunpack.c.l.b16 %v13912
      %v14120 = vunpack.c.h.b16 %v13912
      %v14121 = vunpack.c.l.b16 %v13913
      %v14122 = vunpack.c.h.b16 %v13913
      %v14123 = vunpack.c.l.b16 %v13914
      %v14124 = vunpack.c.h.b16 %v13914
      %v14125 = vunpack.c.l.b16 %v13915
      %v14126 = vunpack.c.l.b16 %v13916
      %v14127 = vunpack.c.h.b16 %v13916
      %v14128 = vunpack.c.l.b16 %v13917
      %v14129 = vunpack.c.h.b16 %v13917
      %v14130 = vunpack.c.l.b16 %v13918
      %v14131 = vunpack.c.h.b16 %v13918
      %v14132 = vunpack.c.l.b16 %v13919
      %v14133 = vunpack.c.h.b16 %v13919
      %v14134 = vunpack.c.l.b16 %v13920
      %v14135 = vunpack.c.l.b16 %v13921
      %v14136 = vunpack.c.h.b16 %v13921
      %v14137 = vunpack.c.l.b16 %v13922
      %v14138 = vunpack.c.h.b16 %v13922
      %v14139 = vunpack.c.l.b16 %v13923
      %v14140 = vunpack.c.h.b16 %v13923
      %v14141 = vunpack.c.l.b16 %v13924
      %v14142 = vunpack.c.h.b16 %v13924
      %v14143 = vunpack.c.l.b16 %v13925
      %v14144 = vunpack.c.l.b16 %v13926
      %v14145 = vunpack.c.h.b16 %v13926
      %v14146 = vunpack.c.l.b16 %v13927
      %v14147 = vunpack.c.h.b16 %v13927
      %v14148 = vunpack.c.l.b16 %v13928
      %v14149 = vunpack.c.h.b16 %v13928
      %v14150 = vunpack.c.l.b16 %v13929
      %v14151 = vunpack.c.h.b16 %v13929
      %v14152 = vunpack.c.l.b16 %v13930
      %v14153 = vunpack.c.l.b16 %v13931
      %v14154 = vunpack.c.h.b16 %v13931
      %v14155 = vunpack.c.l.b16 %v13932
      %v14156 = vunpack.c.h.b16 %v13932
      %v14157 = vunpack.c.l.b16 %v13933
      %v14158 = vunpack.c.h.b16 %v13933
      %v14159 = vunpack.c.l.b16 %v13934
      %v14160 = vunpack.c.h.b16 %v13934
      %v14161 = vunpack.c.l.b16 %v13935
      %v14162 = vunpack.c.l.b16 %v13936
      %v14163 = vunpack.c.h.b16 %v13936
      %v14164 = vunpack.c.l.b16 %v13937
      %v14165 = vunpack.c.h.b16 %v13937
      %v14166 = vunpack.c.l.b16 %v13938
      %v14167 = vunpack.c.h.b16 %v13938
      %v14168 = vunpack.c.l.b16 %v13939
      %v14169 = vunpack.c.h.b16 %v13939
      %v14170 = vunpack.c.l.b16 %v13940
      %v14171 = vunpack.c.l.b16 %v13941
      %v14172 = vunpack.c.h.b16 %v13941
      %v14173 = vunpack.c.l.b16 %v13942
      %v14174 = vunpack.c.h.b16 %v13942
      %v14175 = vunpack.c.l.b16 %v13943
      %v14176 = vunpack.c.h.b16 %v13943
      %v14177 = vunpack.c.l.b16 %v13944
      %v14178 = vunpack.c.h.b16 %v13944
      %v14179 = vunpack.c.l.b16 %v13945
      %v14180 = vunpack.c.l.b16 %v13946
      %v14181 = vunpack.c.h.b16 %v13946
      %v14182 = vunpack.c.l.b16 %v13947
      %v14183 = vunpack.c.h.b16 %v13947
      %v14184 = vunpack.c.l.b16 %v13948
      %v14185 = vunpack.c.h.b16 %v13948
      %v14186 = vunpack.c.l.b16 %v13949
      %v14187 = vunpack.c.h.b16 %v13949
      %v14188 = vunpack.c.l.b16 %v13950
      %v14189 = vunpack.c.l.b16 %v13951
      %v14190 = vunpack.c.h.b16 %v13951
      %v14191 = vunpack.c.l.b16 %v13952
      %v14192 = vunpack.c.h.b16 %v13952
      %v14193 = vunpack.c.l.b16 %v13953
      %v14194 = vunpack.c.h.b16 %v13953
      %v14195 = vunpack.c.l.b16 %v13954
      %v14196 = vunpack.c.h.b16 %v13954
      %v14197 = vunpack.c.l.b16 %v13955
      %v14198 = vunpack.c.l.b16 %v13956
      %v14199 = vunpack.c.h.b16 %v13956
      %v14200 = vunpack.c.l.b16 %v13957
      %v14201 = vunpack.c.h.b16 %v13957
      %v14202 = vunpack.c.l.b16 %v13958
      %v14203 = vunpack.c.h.b16 %v13958
      %v14204 = vunpack.c.l.b16 %v13959
      %v14205 = vunpack.c.h.b16 %v13959
      %v14206 = vunpack.c.l.b16 %v13960
      %v14207 = vpack.c.b16 %v14072, %v14063
      %v14208 = vpack.c.b16 %v14073, %v14064
      %v14209 = vpack.c.b16 %v14074, %v14065
      %v14210 = vpack.c.b16 %v14075, %v14066
      %v14211 = vpack.c.b16 %v14076, %v14067
      %v14212 = vpack.c.b16 %v14077, %v14068
      %v14213 = vpack.c.b16 %v14078, %v14069
      %v14214 = vpack.c.b16 %v14079, %v14070
      %v14215 = vpack.c.b16 %v14080, %v14071
      %v14216 = vpack.c.b16 %v14090, %v14081
      %v14217 = vpack.c.b16 %v14091, %v14082
      %v14218 = vpack.c.b16 %v14092, %v14083
      %v14219 = vpack.c.b16 %v14093, %v14084
      %v14220 = vpack.c.b16 %v14094, %v14085
      %v14221 = vpack.c.b16 %v14095, %v14086
      %v14222 = vpack.c.b16 %v14096, %v14087
      %v14223 = vpack.c.b16 %v14097, %v14088
      %v14224 = vpack.c.b16 %v14098, %v14089
      %v14225 = vpack.c.b16 %v14108, %v14099
      %v14226 = vpack.c.b16 %v14109, %v14100
      %v14227 = vpack.c.b16 %v14110, %v14101
      %v14228 = vpack.c.b16 %v14111, %v14102
      %v14229 = vpack.c.b16 %v14112, %v14103
      %v14230 = vpack.c.b16 %v14113, %v14104
      %v14231 = vpack.c.b16 %v14114, %v14105
      %v14232 = vpack.c.b16 %v14115, %v14106
      %v14233 = vpack.c.b16 %v14116, %v14107
      %v14234 = vpack.c.b16 %v14126, %v14117
      %v14235 = vpack.c.b16 %v14127, %v14118
      %v14236 = vpack.c.b16 %v14128, %v14119
      %v14237 = vpack.c.b16 %v14129, %v14120
      %v14238 = vpack.c.b16 %v14130, %v14121
      %v14239 = vpack.c.b16 %v14131, %v14122
      %v14240 = vpack.c.b16 %v14132, %v14123
      %v14241 = vpack.c.b16 %v14133, %v14124
      %v14242 = vpack.c.b16 %v14134, %v14125
      %v14243 = vpack.c.b16 %v14144, %v14135
      %v14244 = vpack.c.b16 %v14145, %v14136
      %v14245 = vpack.c.b16 %v14146, %v14137
      %v14246 = vpack.c.b16 %v14147, %v14138
      %v14247 = vpack.c.b16 %v14148, %v14139
      %v14248 = vpack.c.b16 %v14149, %v14140
      %v14249 = vpack.c.b16 %v14150, %v14141
      %v14250 = vpack.c.b16 %v14151, %v14142
      %v14251 = vpack.c.b16 %v14152, %v14143
      %v14252 = vpack.c.b16 %v14162, %v14153
      %v14253 = vpack.c.b16 %v14163, %v14154
      %v14254 = vpack.c.b16 %v14164, %v14155
      %v14255 = vpack.c.b16 %v14165, %v14156
      %v14256 = vpack.c.b16 %v14166, %v14157
      %v14257 = vpack.c.b16 %v14167, %v14158
      %v14258 = vpack.c.b16 %v14168, %v14159
      %v14259 = vpack.c.b16 %v14169, %v14160
      %v14260 = vpack.c.b16 %v14170, %v14161
      %v14261 = vpack.c.b16 %v14180, %v14171
      %v14262 = vpack.c.b16 %v14181, %v14172
      %v14263 = vpack.c.b16 %v14182, %v14173
      %v14264 = vpack.c.b16 %v14183, %v14174
      %v14265 = vpack.c.b16 %v14184, %v14175
      %v14266 = vpack.c.b16 %v14185, %v14176
      %v14267 = vpack.c.b16 %v14186, %v14177
      %v14268 = vpack.c.b16 %v14187, %v14178
      %v14269 = vpack.c.b16 %v14188, %v14179
      %v14270 = vpack.c.b16 %v14198, %v14189
      %v14271 = vpack.c.b16 %v14199, %v14190
      %v14272 = vpack.c.b16 %v14200, %v14191
      %v14273 = vpack.c.b16 %v14201, %v14192
      %v14274 = vpack.c.b16 %v14202, %v14193
      %v14275 = vpack.c.b16 %v14203, %v14194
      %v14276 = vpack.c.b16 %v14204, %v14195
      %v14277 = vpack.c.b16 %v14205, %v14196
      %v14278 = vpack.c.b16 %v14206, %v14197
      %14351 = vmatpush.bf16.msra.mxu0 %v14270
      %14352 = vmatpush.bf16.msra.mxu0 %v14261
      %14353 = vmatpush.bf16.msra.mxu0 %v14252
      %14354 = vmatpush.bf16.msra.mxu0 %v14243
      %14355 = vmatpush.bf16.msra.mxu0 %v14234
      %14356 = vmatpush.bf16.msra.mxu0 %v14225
      %14357 = vmatpush.bf16.msra.mxu0 %v14216
      %14358 = vmatpush.bf16.msra.mxu0 %v14207
      %14359 = vmatmul.bf16.gmra.mxu0 %v8192
      %v14360 = vpop.f32.mrf.mxu0
      %v14361 = vadd.f32 %v13965, %v14360
      %v14362 = vpop.f32.mrf.mxu0
      %14363 = vdwg.mxu0
      %14364 = vmatpush.bf16.msra.mxu0 %v14271
      %14365 = vmatpush.bf16.msra.mxu0 %v14262
      %14366 = vmatpush.bf16.msra.mxu0 %v14253
      %14367 = vmatpush.bf16.msra.mxu0 %v14244
      %14368 = vmatpush.bf16.msra.mxu0 %v14235
      %14369 = vmatpush.bf16.msra.mxu0 %v14226
      %14370 = vmatpush.bf16.msra.mxu0 %v14217
      %14371 = vmatpush.bf16.msra.mxu0 %v14208
      %14372 = vmatmul.bf16.gmra.mxu0 %v8192
      %v14373 = vpop.f32.mrf.mxu0
      %v14374 = vadd.f32 %v13966, %v14373
      %v14375 = vpop.f32.mrf.mxu0
      %14376 = vdwg.mxu0
      %14377 = vmatpush.bf16.msra.mxu0 %v14272
      %14378 = vmatpush.bf16.msra.mxu0 %v14263
      %14379 = vmatpush.bf16.msra.mxu0 %v14254
      %14380 = vmatpush.bf16.msra.mxu0 %v14245
      %14381 = vmatpush.bf16.msra.mxu0 %v14236
      %14382 = vmatpush.bf16.msra.mxu0 %v14227
      %14383 = vmatpush.bf16.msra.mxu0 %v14218
      %14384 = vmatpush.bf16.msra.mxu0 %v14209
      %14385 = vmatmul.bf16.gmra.mxu0 %v8192
      %v14386 = vpop.f32.mrf.mxu0
      %v14387 = vadd.f32 %v13967, %v14386
      %v14388 = vpop.f32.mrf.mxu0
      %14389 = vdwg.mxu0
      %14390 = vmatpush.bf16.msra.mxu0 %v14273
      %14391 = vmatpush.bf16.msra.mxu0 %v14264
      %14392 = vmatpush.bf16.msra.mxu0 %v14255
      %14393 = vmatpush.bf16.msra.mxu0 %v14246
      %14394 = vmatpush.bf16.msra.mxu0 %v14237
      %14395 = vmatpush.bf16.msra.mxu0 %v14228
      %14396 = vmatpush.bf16.msra.mxu0 %v14219
      %14397 = vmatpush.bf16.msra.mxu0 %v14210
      %14398 = vmatmul.bf16.gmra.mxu0 %v8192
      %v14399 = vpop.f32.mrf.mxu0
      %v14400 = vadd.f32 %v13968, %v14399
      %v14401 = vpop.f32.mrf.mxu0
      %14402 = vdwg.mxu0
      %14403 = vmatpush.bf16.msra.mxu0 %v14274
      %14404 = vmatpush.bf16.msra.mxu0 %v14265
      %14405 = vmatpush.bf16.msra.mxu0 %v14256
      %14406 = vmatpush.bf16.msra.mxu0 %v14247
      %14407 = vmatpush.bf16.msra.mxu0 %v14238
      %14408 = vmatpush.bf16.msra.mxu0 %v14229
      %14409 = vmatpush.bf16.msra.mxu0 %v14220
      %14410 = vmatpush.bf16.msra.mxu0 %v14211
      %14411 = vmatmul.bf16.gmra.mxu0 %v8192
      %v14412 = vpop.f32.mrf.mxu0
      %v14413 = vadd.f32 %v13969, %v14412
      %v14414 = vpop.f32.mrf.mxu0
      %14415 = vdwg.mxu0
      %14416 = vmatpush.bf16.msra.mxu0 %v14275
      %14417 = vmatpush.bf16.msra.mxu0 %v14266
      %14418 = vmatpush.bf16.msra.mxu0 %v14257
      %14419 = vmatpush.bf16.msra.mxu0 %v14248
      %14420 = vmatpush.bf16.msra.mxu0 %v14239
      %14421 = vmatpush.bf16.msra.mxu0 %v14230
      %14422 = vmatpush.bf16.msra.mxu0 %v14221
      %14423 = vmatpush.bf16.msra.mxu0 %v14212
      %14424 = vmatmul.bf16.gmra.mxu0 %v8192
      %v14425 = vpop.f32.mrf.mxu0
      %v14426 = vadd.f32 %v13970, %v14425
      %v14427 = vpop.f32.mrf.mxu0
      %14428 = vdwg.mxu0
      %14429 = vmatpush.bf16.msra.mxu0 %v14276
      %14430 = vmatpush.bf16.msra.mxu0 %v14267
      %14431 = vmatpush.bf16.msra.mxu0 %v14258
      %14432 = vmatpush.bf16.msra.mxu0 %v14249
      %14433 = vmatpush.bf16.msra.mxu0 %v14240
      %14434 = vmatpush.bf16.msra.mxu0 %v14231
      %14435 = vmatpush.bf16.msra.mxu0 %v14222
      %14436 = vmatpush.bf16.msra.mxu0 %v14213
      %14437 = vmatmul.bf16.gmra.mxu0 %v8192
      %v14438 = vpop.f32.mrf.mxu0
      %v14439 = vadd.f32 %v13971, %v14438
      %v14440 = vpop.f32.mrf.mxu0
      %14441 = vdwg.mxu0
      %14442 = vmatpush.bf16.msra.mxu0 %v14277
      %14443 = vmatpush.bf16.msra.mxu0 %v14268
      %14444 = vmatpush.bf16.msra.mxu0 %v14259
      %14445 = vmatpush.bf16.msra.mxu0 %v14250
      %14446 = vmatpush.bf16.msra.mxu0 %v14241
      %14447 = vmatpush.bf16.msra.mxu0 %v14232
      %14448 = vmatpush.bf16.msra.mxu0 %v14223
      %14449 = vmatpush.bf16.msra.mxu0 %v14214
      %14450 = vmatmul.bf16.gmra.mxu0 %v8192
      %v14451 = vpop.f32.mrf.mxu0
      %v14452 = vadd.f32 %v13972, %v14451
      %v14453 = vpop.f32.mrf.mxu0
      %14454 = vdwg.mxu0
      %14455 = vmatpush.bf16.msra.mxu0 %v14278
      %14456 = vmatpush.bf16.msra.mxu0 %v14269
      %14457 = vmatpush.bf16.msra.mxu0 %v14260
      %14458 = vmatpush.bf16.msra.mxu0 %v14251
      %14459 = vmatpush.bf16.msra.mxu0 %v14242
      %14460 = vmatpush.bf16.msra.mxu0 %v14233
      %14461 = vmatpush.bf16.msra.mxu0 %v14224
      %14462 = vmatpush.bf16.msra.mxu0 %v14215
      %14463 = vmatmul.bf16.gmra.mxu0 %v8192
      %v14464 = vpop.f32.mrf.mxu0
      %v14465 = vadd.f32 %v13973, %v14464
      %v14466 = vpop.f32.mrf.mxu0
      %14467 = vdwg.mxu0
      %v14468 = vmul.f32 %v14361, 0.5
      %v14469 = vmul.f32 %v14374, 0.5
      %v14470 = vmul.f32 %v14387, 0.5
      %v14471 = vmul.f32 %v14400, 0.5
      %v14472 = vmul.f32 %v14413, 0.5
      %v14473 = vmul.f32 %v14426, 0.5
      %v14474 = vmul.f32 %v14439, 0.5
      %v14475 = vmul.f32 %v14452, 0.5
      %v14476 = vmul.f32 %v14465, 0.5
      %v14477 = vtanh.pop %v14468
      %v14478 = vtanh.pop %v14469
      %v14479 = vtanh.pop %v14470
      %v14480 = vtanh.pop %v14471
      %v14481 = vtanh.pop %v14472
      %v14482 = vtanh.pop %v14473
      %v14483 = vtanh.pop %v14474
      %v14484 = vtanh.pop %v14475
      %v14485 = vtanh.pop %v14476
      %v14486 = vmul.f32 %v14477, 0.5
      %v14487 = vmul.f32 %v14478, 0.5
      %v14488 = vmul.f32 %v14479, 0.5
      %v14489 = vmul.f32 %v14480, 0.5
      %v14490 = vmul.f32 %v14481, 0.5
      %v14491 = vmul.f32 %v14482, 0.5
      %v14492 = vmul.f32 %v14483, 0.5
      %v14493 = vmul.f32 %v14484, 0.5
      %v14494 = vmul.f32 %v14485, 0.5
      %v14495 = vadd.f32 %v14486, 0.5
      %v14496 = vadd.f32 %v14487, 0.5
      %v14497 = vadd.f32 %v14488, 0.5
      %v14498 = vadd.f32 %v14489, 0.5
      %v14499 = vadd.f32 %v14490, 0.5
      %v14500 = vadd.f32 %v14491, 0.5
      %v14501 = vadd.f32 %v14492, 0.5
      %v14502 = vadd.f32 %v14493, 0.5
      %v14503 = vadd.f32 %v14494, 0.5
      %14504 = vst [vmem:[%s251 + $0x288] sm:$0xff] %v14495
      %14505 = vst [vmem:[%s251 + $0x290] sm:$0xff] %v14496
      %14506 = vst [vmem:[%s251 + $0x298] sm:$0xff] %v14497
      %14507 = vst [vmem:[%s251 + $0x2a0] sm:$0xff] %v14498
      %14508 = vst [vmem:[%s251 + $0x2a8] sm:$0xff] %v14499
      %14509 = vst [vmem:[%s251 + $0x2b0] sm:$0xff] %v14500
      %14510 = vst [vmem:[%s251 + $0x2b8] sm:$0xff] %v14501
      %14511 = vst [vmem:[%s251 + $0x2c0] sm:$0xff] %v14502
      %14512 = vst [vmem:[%s251 + $0x2c8] sm:$0xff] %v14503
      %p14513 = scmp.lt.s32.totalorder %s17, 1
      %s14514 = scalar_select %p14513, %s17, 1
      %s14515 = smul.addr %s14514, 90
      %s14516 = smul.addr %s14515, 8
      %s14517 = scalar_lea.vmem %s6, %s14516
      // Predicated region
      $region45: #{conv2d_ae_forward.1} parent=43 // pred_check
        %p14518 = pneg %p166
      $region46: #{conv2d_ae_forward.1} parent=43 // pred_check_branch
        %14520 = sbr.rel (%p14518) target = $region48
      $region47: #{conv2d_ae_forward.1} parent=43 // pred_region
        _
      $region48: #{conv2d_ae_forward.1} parent=43 // pred_fallthru
        _
    $region44: #{conv2d_ae_forward.1} parent=5 // pred_fallthru
      _
    %p14521 = scmp.le.s32.totalorder 2, %s12
    // Predicated region
    $region49: #{conv2d_ae_forward.1} parent=5 // pred_check
      %p14522 = pneg %p14521
    $region50: #{conv2d_ae_forward.1} parent=5 // pred_check_branch
      %14524 = sbr.rel (%p14522) target = $region52
    $region51: #{conv2d_ae_forward.1} parent=5 // pred_region
      %s14525 = ssub.s32 %s12, 2
      // Predicated region
      $region53: #{conv2d_ae_forward.1} parent=51 // pred_check
        %p14526 = pneg %p172
      $region54: #{conv2d_ae_forward.1} parent=51 // pred_check_branch
        %14528 = sbr.rel (%p14526) target = $region56
      $region55: #{conv2d_ae_forward.1} parent=51 // pred_region
        %p14529 = scmp.lt.s32.totalorder %s18, 1
        %s14530 = scalar_select %p14529, %s18, 1
        %s14531 = smul.addr %s14530, 90
        %s14532 = smul.addr %s14531, 8
        %s14533 = scalar_lea.vmem %s6, %s14532
      $region56: #{conv2d_ae_forward.1} parent=51 // pred_fallthru
        _
    $region52: #{conv2d_ae_forward.1} parent=5 // pred_fallthru
      _
  $region6: #{conv2d_ae_forward.1} parent=0 // loop_footer
    %s16 = sadd.s32 1, %s12
  $region7: #{conv2d_ae_forward.1} parent=0 // loop_footer_branch
    %11 = sbr.rel target = $region3
  $region8: #{conv2d_ae_forward.1} parent=0 // loop_exit
    _

</llo_original>
